<compile_context>
chip_gen: v6e
topology: v6e:2x2x1
jax: 0.10.0
libtpu: 0.0.40
codegen_flags: <defaults>
</compile_context>

<pallas_src>
import numpy as np

import jax
import jax.numpy as jnp
from jax import lax
from jax.experimental import pallas as pl
from jax.experimental.pallas import tpu as pltpu

GROUPS = 32     # nn.GroupNorm(32, in_channels)
EPS = 1e-5


# ---------------------------------------------------------------------------
# Kernel 1: ConvTranspose3d(k=2,s=2,p=1) + bias + ReLU + GroupNorm + skip add
#           (parity-packed lanes: lane = (pd*4+ph*2+pw)*C + c)
# ---------------------------------------------------------------------------
def convt_relu_gn_add_kernel(xg_ref, skip_ref, w_ref, b_ref, g_ref, be_ref,
                             q_ref, o_ref, y_scr):
    # xg_ref:   (1, SM, 8C) bf16  parity-packed input windows (one sample)
    # skip_ref: (1, SM, 8C) f32   cropped skip, same parity-in-lanes packing
    # w_ref:    (8C, 8C)    bf16  block-diagonal transposed-conv weight
    # b/g/be:   (1, 8C)     f32   conv bias / GN gamma / GN beta (tiled 8x)
    # q_ref:    (8C, 8C)    f32   GN fold matrix (group mean, 1/count baked in)
    # o_ref:    (1, SM, 8C) f32
    # y_scr:    (SM, 8C)    f32   staged pre-norm activations
    y = jnp.dot(xg_ref[0], w_ref[...], preferred_element_type=jnp.float32)
    y = jnp.maximum(y + b_ref[...], 0.0)               # bias + ReLU
    y_scr[...] = y

    s = jnp.sum(y, axis=0, keepdims=True)              # (1, 8C) per-lane sums
    s2 = jnp.sum(y * y, axis=0, keepdims=True)
    mom = jnp.dot(jnp.concatenate([s, s2], axis=0), q_ref[...],
                  preferred_element_type=jnp.float32)  # fold groups + broadcast
    mean_t = mom[0:1]
    inv_t = lax.rsqrt(mom[1:2] - mean_t * mean_t + EPS)

    yn = (y_scr[...] - mean_t) * inv_t * g_ref[...] + be_ref[...]
    o_ref[0] = (yn + skip_ref[0]).astype(o_ref.dtype)


def conv_transpose_block(xg, skip, wbd, b, g, be, q):
    N, SM, PC = xg.shape
    return pl.pallas_call(
        convt_relu_gn_add_kernel,
        out_shape=jax.ShapeDtypeStruct((N, SM, PC), jnp.float32),
        grid_spec=pltpu.PrefetchScalarGridSpec(
            num_scalar_prefetch=0,
            grid=(N,),
            in_specs=[
                pl.BlockSpec((1, SM, PC), lambda n: (n, 0, 0)),
                pl.BlockSpec((1, SM, PC), lambda n: (n, 0, 0)),
                pl.BlockSpec((PC, PC), lambda n: (0, 0)),
                pl.BlockSpec((1, PC), lambda n: (0, 0)),
                pl.BlockSpec((1, PC), lambda n: (0, 0)),
                pl.BlockSpec((1, PC), lambda n: (0, 0)),
                pl.BlockSpec((PC, PC), lambda n: (0, 0)),
            ],
            out_specs=pl.BlockSpec((1, SM, PC), lambda n: (n, 0, 0)),
            scratch_shapes=[pltpu.VMEM((SM, PC), jnp.float32)],
        ),
        compiler_params=pltpu.CompilerParams(
            dimension_semantics=("parallel",)),
    )(xg, skip, wbd, b, g, be, q)


# ---------------------------------------------------------------------------
# Kernel 2: Conv3d(k=3, pad=1) + bias + ReLU + GroupNorm
#           (no im2col: 9 banded matmuls over the padded sample in VMEM)
# ---------------------------------------------------------------------------
def conv3_relu_gn_kernel(x_ref, m_ref, b_ref, g_ref, be_ref, q_ref,
                         o_ref, acc_ref):
    # x_ref:   (1, Dp, Hp, Wp*C) f32  zero-padded sample, (W, C) folded in lanes
    # m_ref:   (9, Wp*C, W*C)    bf16 banded tap weights, index = kd*3 + kh
    # b/g/be:  (1, W*C)          f32  channel params tiled across W
    # q_ref:   (W*C, W*C)        f32  GN fold matrix
    # o_ref:   (1, D*H, W*C)     f32
    # acc_ref: (D*H, W*C)        f32  conv accumulator / staged activations
    Dp, Hp, WpC = x_ref.shape[1], x_ref.shape[2], x_ref.shape[3]
    D, H = Dp - 2, Hp - 2

    acc_ref[...] = jnp.zeros_like(acc_ref)
    for kd in range(3):                      # static: 9 unrolled MXU GEMMs
        for kh in range(3):
            xs = x_ref[0, kd:kd + D, kh:kh + H, :]          # (D, H, WpC)
            xs = xs.reshape(D * H, WpC).astype(jnp.bfloat16)
            acc_ref[...] += jnp.dot(xs, m_ref[kd * 3 + kh],
                                    preferred_element_type=jnp.float32)

    y = jnp.maximum(acc_ref[...] + b_ref[...], 0.0)         # bias + ReLU
    acc_ref[...] = y
    s = jnp.sum(y, axis=0, keepdims=True)
    s2 = jnp.sum(y * y, axis=0, keepdims=True)
    mom = jnp.dot(jnp.concatenate([s, s2], axis=0), q_ref[...],
                  preferred_element_type=jnp.float32)
    mean_t = mom[0:1]
    inv_t = lax.rsqrt(mom[1:2] - mean_t * mean_t + EPS)
    o_ref[0] = ((acc_ref[...] - mean_t) * inv_t * g_ref[...]
                + be_ref[...]).astype(o_ref.dtype)


def conv3_gn_block(x, mbanded, b, g, be, q):
    # x: (N, D, H, W, C) f32 -> Conv3d(k=3, pad=1) + ReLU + GroupNorm (NDHWC)
    N, D, H, W, C = x.shape
    Dp, Hp, Wp = D + 2, H + 2, W + 2
    WC = W * C
    xp = jnp.pad(x, ((0, 0), (1, 1), (1, 1), (1, 1), (0, 0)))
    xp = xp.reshape(N, Dp, Hp, Wp * C)                       # fold (W, C) -> lanes

    out = pl.pallas_call(
        conv3_relu_gn_kernel,
        out_shape=jax.ShapeDtypeStruct((N, D * H, WC), jnp.float32),
        grid_spec=pltpu.PrefetchScalarGridSpec(
            num_scalar_prefetch=0,
            grid=(N,),
            in_specs=[
                pl.BlockSpec((1, Dp, Hp, Wp * C), lambda n: (n, 0, 0, 0)),
                pl.BlockSpec((9, Wp * C, WC), lambda n: (0, 0, 0)),
                pl.BlockSpec((1, WC), lambda n: (0, 0)),
                pl.BlockSpec((1, WC), lambda n: (0, 0)),
                pl.BlockSpec((1, WC), lambda n: (0, 0)),
                pl.BlockSpec((WC, WC), lambda n: (0, 0)),
            ],
            out_specs=pl.BlockSpec((1, D * H, WC), lambda n: (n, 0, 0)),
            scratch_shapes=[pltpu.VMEM((D * H, WC), jnp.float32)],
        ),
        compiler_params=pltpu.CompilerParams(
            dimension_semantics=("parallel",)),
    )(xp, mbanded, b, g, be, q)
    return out.reshape(N, D, H, W, C)


# ---------------------------------------------------------------------------
# Full UpBlock forward (NDHWC)
# ---------------------------------------------------------------------------
def upblock_forward(x, down_out, kp):
    # x: (N, D0, H0, W0, C) f32; down_out: (N, Dd, Hd, Wd, C) f32
    N, D0, H0, W0, C = x.shape
    Dm, Hm, Wm = D0 - 1, H0 - 1, W0 - 1
    Do, Ho, Wo = 2 * Dm, 2 * Hm, 2 * Wm        # ConvTranspose output spatial
    SM = Dm * Hm * Wm
    PC = 8 * C

    # conv1 glue: parity-packed gather, lane index = (pd*4+ph*2+pw)*C + c
    parts = []
    for pd in range(2):
        for ph in range(2):
            for pw in range(2):
                parts.append(
                    x[:, pd:pd + Dm, ph:ph + Hm, pw:pw + Wm, :].reshape(N, SM, C))
    xg = jnp.concatenate(parts, axis=-1).astype(jnp.bfloat16)       # (N, SM, 8C)

    # centre-crop the skip connection and pack it identically (stays f32)
    _, Dd, Hd, Wd, _ = down_out.shape
    d0, h0, w0 = (Dd - Do) // 2, (Hd - Ho) // 2, (Wd - Wo) // 2
    cropped = down_out[:, d0:d0 + Do, h0:h0 + Ho, w0:w0 + Wo, :]
    skip = cropped.reshape(N, Dm, 2, Hm, 2, Wm, 2, C).transpose(
        0, 1, 3, 5, 2, 4, 6, 7).reshape(N, SM, PC)

    # conv1 (+ skip add) fused kernel, then re-interleave parity lanes
    y1p = conv_transpose_block(xg, skip, kp["w1"], kp["b1"], kp["g1"],
                               kp["be1"], kp["q1"])                  # (N, SM, 8C)
    y1 = y1p.reshape(N, Dm, Hm, Wm, 2, 2, 2, C).transpose(
        0, 1, 4, 2, 5, 3, 6, 7).reshape(N, Do, Ho, Wo, C)

    # conv2, conv3
    y2 = conv3_gn_block(y1, kp["w2"], kp["b2"], kp["g2"], kp["be2"], kp["q2"])
    y3 = conv3_gn_block(y2, kp["w3"], kp["b3"], kp["g3"], kp["be3"], kp["q3"])
    return y3


# ---------------------------------------------------------------------------
# Parameter construction / conversion to kernel layouts
# ---------------------------------------------------------------------------
def init_params(key, C):
    ks = jax.random.split(key, 12)
    p = {}
    p["wt_t"] = 0.1 * jax.random.normal(ks[0], (C, C, 2, 2, 2), jnp.float32)   # ConvT (Cin,Cout,k,k,k)
    p["bt_t"] = 0.1 * jax.random.normal(ks[1], (C,), jnp.float32)
    p["g1_t"] = 1.0 + 0.1 * jax.random.normal(ks[2], (C,), jnp.float32)
    p["be1_t"] = 0.1 * jax.random.normal(ks[3], (C,), jnp.float32)
    p["w2_t"] = 0.05 * jax.random.normal(ks[4], (C, C, 3, 3, 3), jnp.float32)  # Conv3d (Cout,Cin,k,k,k)
    p["b2_t"] = 0.1 * jax.random.normal(ks[5], (C,), jnp.float32)
    p["g2_t"] = 1.0 + 0.1 * jax.random.normal(ks[6], (C,), jnp.float32)
    p["be2_t"] = 0.1 * jax.random.normal(ks[7], (C,), jnp.float32)
    p["w3_t"] = 0.05 * jax.random.normal(ks[8], (C, C, 3, 3, 3), jnp.float32)
    p["b3_t"] = 0.1 * jax.random.normal(ks[9], (C,), jnp.float32)
    p["g3_t"] = 1.0 + 0.1 * jax.random.normal(ks[10], (C,), jnp.float32)
    p["be3_t"] = 0.1 * jax.random.normal(ks[11], (C,), jnp.float32)
    return p


def _gn_fold_matrix(reps, C, groups, rows):
    """(reps*C, reps*C) matrix: (per-lane sums) @ Q = per-lane GroupNorm mean."""
    cg = C // groups
    ch = np.arange(C)
    same = (ch[:, None] // cg == ch[None, :] // cg).astype(np.float32)
    blk = same / float(rows * reps * cg)
    return jnp.asarray(np.tile(blk, (reps, reps)), jnp.float32)


def _banded_conv_weight(w_oidhw, s, C):
    """Conv3d weight (Cout,Cin,3,3,3) -> (9, (s+2)*C, s*C) banded matrices.

    Index kd*3+kh; the kw taps are folded into the contraction so each matmul
    consumes the (Wp, C)-in-lanes input slab and emits a lane-dense (W, C) row.
    (For large W one would tile W; at these sizes the full band fits VMEM.)
    """
    w = np.asarray(w_oidhw, np.float32)
    sp = s + 2
    m = np.zeros((9, sp * C, s * C), np.float32)
    for kd in range(3):
        for kh in range(3):
            for kw in range(3):
                blk = w[:, :, kd, kh, kw].T                 # (Cin, Cout)
                for iw in range(s):
                    m[kd * 3 + kh,
                      (iw + kw) * C:(iw + kw + 1) * C,
                      iw * C:(iw + 1) * C] = blk
    return jnp.asarray(m, jnp.bfloat16)


def kernel_params(p, C, d_in):
    """Convert PyTorch-layout params into the packed kernel layouts."""
    dm = d_in - 1              # conv1 half-spatial extent per dim
    sm = dm ** 3               # rows of the conv1 parity-packed layout
    s = 2 * dm                 # conv2/conv3 spatial extent per dim
    kp = {}

    # conv1: block-diagonal parity-packed weight; output parity (pd,ph,pw)
    # uses input offset (pd,ph,pw) and kernel tap (1-pd,1-ph,1-pw).
    wt = np.asarray(p["wt_t"], np.float32)                  # (Cin, Cout, 2,2,2)
    pc = 8 * C
    wbd = np.zeros((pc, pc), np.float32)
    for pd in range(2):
        for ph in range(2):
            for pw in range(2):
                pp = pd * 4 + ph * 2 + pw
                wbd[pp * C:(pp + 1) * C, pp * C:(pp + 1) * C] = \
                    wt[:, :, 1 - pd, 1 - ph, 1 - pw]
    kp["w1"] = jnp.asarray(wbd, jnp.bfloat16)
    kp["b1"] = jnp.tile(p["bt_t"].reshape(1, C), (1, 8))
    kp["g1"] = jnp.tile(p["g1_t"].reshape(1, C), (1, 8))
    kp["be1"] = jnp.tile(p["be1_t"].reshape(1, C), (1, 8))
    kp["q1"] = _gn_fold_matrix(8, C, GROUPS, sm)

    # conv2 / conv3: banded tap weights + W-tiled channel params
    kp["w2"] = _banded_conv_weight(p["w2_t"], s, C)
    kp["w3"] = _banded_conv_weight(p["w3_t"], s, C)
    for name in ("2", "3"):
        kp["b" + name] = jnp.tile(p["b" + name + "_t"].reshape(1, C), (1, s))
        kp["g" + name] = jnp.tile(p["g" + name + "_t"].reshape(1, C), (1, s))
        kp["be" + name] = jnp.tile(p["be" + name + "_t"].reshape(1, C), (1, s))
    q23 = _gn_fold_matrix(s, C, GROUPS, s * s)
    kp["q2"] = q23
    kp["q3"] = q23
    return kp


# ---------------------------------------------------------------------------
# Pure-JAX (NCDHW) reference, matching PyTorch semantics
# ---------------------------------------------------------------------------
def ref_group_norm(y, gamma, beta):
    N = y.shape[0]
    yg = y.reshape(N, GROUPS, -1)
    mean = jnp.mean(yg, axis=2, keepdims=True)
    var = jnp.mean((yg - mean) ** 2, axis=2, keepdims=True)
    yn = ((yg - mean) / jnp.sqrt(var + EPS)).reshape(y.shape)
    return yn * gamma[None, :, None, None, None] + beta[None, :, None, None, None]


def ref_conv_transpose(x, w, b):
    # ConvTranspose3d(k=2, s=2, p=1) == dilated conv with flipped/transposed w
    wf = jnp.flip(w, axis=(2, 3, 4)).transpose(1, 0, 2, 3, 4)   # (Cout,Cin,2,2,2)
    y = lax.conv_general_dilated(
        x, wf, window_strides=(1, 1, 1), padding=[(0, 0)] * 3,
        lhs_dilation=(2, 2, 2),
        dimension_numbers=("NCDHW", "OIDHW", "NCDHW"),
        precision=lax.Precision.HIGHEST)
    return y + b[None, :, None, None, None]


def ref_conv3(x, w, b):
    y = lax.conv_general_dilated(
        x, w, window_strides=(1, 1, 1), padding=[(1, 1)] * 3,
        dimension_numbers=("NCDHW", "OIDHW", "NCDHW"),
        precision=lax.Precision.HIGHEST)
    return y + b[None, :, None, None, None]


def ref_crop(t, target):
    _, _, td, th, tw = t.shape
    _, _, cd, ch, cw = target.shape
    left = (tw - cw) // 2
    top = (th - ch) // 2
    ds = (td - cd) // 2
    return t[:, :, ds:ds + cd, top:top + ch, left:left + cw]


def ref_upblock(x, down, p, quantize=False):
    # quantize=True rounds conv operands to bf16 (matching the kernel's MXU
    # numerics) while keeping accumulation / GN / skip-add in f32.
    q = (lambda t: t.astype(jnp.bfloat16).astype(jnp.float32)) if quantize \
        else (lambda t: t)
    y = ref_conv_transpose(q(x), q(p["wt_t"]), p["bt_t"])
    y = ref_group_norm(jnp.maximum(y, 0.0), p["g1_t"], p["be1_t"])
    y = ref_crop(down, y) + y
    y = ref_group_norm(jnp.maximum(ref_conv3(q(y), q(p["w2_t"]), p["b2_t"]), 0.0),
                       p["g2_t"], p["be2_t"])
    y = ref_group_norm(jnp.maximum(ref_conv3(q(y), q(p["w3_t"]), p["b3_t"]), 0.0),
                       p["g3_t"], p["be3_t"])
    return y


# ---------------------------------------------------------------------------
if __name__ == "__main__":
    key = jax.random.PRNGKey(0)
    kx, kdn, kpm = jax.random.split(key, 3)

    N, C = 4, 32            # GroupNorm(32, C) requires C % 32 == 0
    D = H = W = 5           # conv1 output spatial = 2*D - 2 = 8
    Dd = Hd = Wd = 12       # skip (down_out) spatial, centre-cropped to 8

    x_ncdhw = jax.random.normal(kx, (N, C, D, H, W), jnp.float32)
    down_ncdhw = jax.random.normal(kdn, (N, C, Dd, Hd, Wd), jnp.float32)

    tparams = init_params(kpm, C)
    kparams = kernel_params(tparams, C, D)

    # Pallas path runs channels-last NDHWC
    x = jnp.transpose(x_ncdhw, (0, 2, 3, 4, 1))
    down = jnp.transpose(down_ncdhw, (0, 2, 3, 4, 1))

    out = jax.jit(upblock_forward)(x, down, kparams)
    out = jax.block_until_ready(out)
    assert out.shape == (N, 2 * (D - 1), 2 * (H - 1), 2 * (W - 1), C), out.shape

    # correctness: tight check vs a bf16-operand-matched reference, and a
    # looser check vs the pure-f32 reference (bf16 MXU operands only).
    ref_q = jnp.transpose(ref_upblock(x_ncdhw, down_ncdhw, tparams, True),
                          (0, 2, 3, 4, 1))
    ref_f = jnp.transpose(ref_upblock(x_ncdhw, down_ncdhw, tparams, False),
                          (0, 2, 3, 4, 1))
    err_match = float(jnp.max(jnp.abs(out - ref_q)))
    err_f32 = float(jnp.max(jnp.abs(out - ref_f)))
    assert err_match < 1e-2, f"bf16-matched max abs error too large: {err_match}"
    assert err_f32 < 1.5e-1, f"f32 max abs error too large: {err_f32}"

    print("KERNEL_OK")
</pallas_src>

<mosaic_0001>
module attributes {stable_mosaic.version = 11 : i64} {
  func.func @convt_relu_gn_add_kernel(%arg0: i32, %arg1: memref<1x64x256xbf16, #tpu.memory_space<vmem>>, %arg2: memref<1x64x256xf32, #tpu.memory_space<vmem>>, %arg3: memref<256x256xbf16, #tpu.memory_space<vmem>>, %arg4: memref<1x256xf32, #tpu.memory_space<vmem>>, %arg5: memref<1x256xf32, #tpu.memory_space<vmem>>, %arg6: memref<1x256xf32, #tpu.memory_space<vmem>>, %arg7: memref<256x256xf32, #tpu.memory_space<vmem>>, %arg8: memref<1x64x256xf32, #tpu.memory_space<vmem>>, %arg9: memref<64x256xf32, #tpu.memory_space<vmem>>) attributes {dimension_semantics = [#tpu.dimension_semantics<parallel>], iteration_bounds = array<i64: 4>, scalar_prefetch = 0 : i64, scratch_operands = 1 : i64, tpu.core_type = #tpu.core_type<tc>, window_params = [{transform_indices = @transform_0, window_bounds = array<i64: 1, 64, 256>}, {transform_indices = @transform_1, window_bounds = array<i64: 1, 64, 256>}, {pipeline_mode = #tpu.pipeline_mode<synchronous>, transform_indices = @transform_2, window_bounds = array<i64: 256, 256>}, {pipeline_mode = #tpu.pipeline_mode<synchronous>, transform_indices = @transform_3, window_bounds = array<i64: 1, 256>}, {pipeline_mode = #tpu.pipeline_mode<synchronous>, transform_indices = @transform_4, window_bounds = array<i64: 1, 256>}, {pipeline_mode = #tpu.pipeline_mode<synchronous>, transform_indices = @transform_5, window_bounds = array<i64: 1, 256>}, {pipeline_mode = #tpu.pipeline_mode<synchronous>, transform_indices = @transform_6, window_bounds = array<i64: 256, 256>}, {transform_indices = @transform_7, window_bounds = array<i64: 1, 64, 256>}]} {
    %c0 = arith.constant 0 : index
    %c0_0 = arith.constant 0 : index
    %c0_1 = arith.constant 0 : index
    %0 = vector.load %arg1[%c0, %c0_0, %c0_1] : memref<1x64x256xbf16, #tpu.memory_space<vmem>>, vector<1x64x256xbf16>
    %1 = vector.shape_cast %0 : vector<1x64x256xbf16> to vector<64x256xbf16>
    %c0_2 = arith.constant 0 : index
    %c0_3 = arith.constant 0 : index
    %2 = vector.load %arg3[%c0_2, %c0_3] : memref<256x256xbf16, #tpu.memory_space<vmem>>, vector<256x256xbf16>
    %cst = arith.constant dense<0.000000e+00> : vector<64x256xf32>
    %3 = tpu.matmul %1, %2, %cst {dimension_numbers = #tpu.dot_dimension_numbers<[1], [0], [0], [1], [0, 0, 1, 1], [], []>} : vector<64x256xbf16>, vector<256x256xbf16>, vector<64x256xf32> -> vector<64x256xf32>
    %c0_4 = arith.constant 0 : index
    %c0_5 = arith.constant 0 : index
    %4 = vector.load %arg4[%c0_4, %c0_5] : memref<1x256xf32, #tpu.memory_space<vmem>>, vector<1x256xf32>
    %5 = vector.broadcast %4 : vector<1x256xf32> to vector<64x256xf32>
    %6 = arith.addf %3, %5 : vector<64x256xf32>
    %cst_6 = arith.constant 0.000000e+00 : f32
    %7 = vector.broadcast %cst_6 : f32 to vector<64x256xf32>
    %8 = arith.maximumf %6, %7 : vector<64x256xf32>
    %c0_7 = arith.constant 0 : index
    %c0_8 = arith.constant 0 : index
    %9 = vector.load %arg9[%c0_7, %c0_8] : memref<64x256xf32, #tpu.memory_space<vmem>>, vector<64x256xf32>
    tpu.vector_store %arg9[%c0_7, %c0_8], %8 {strides = array<i32>} : memref<64x256xf32, #tpu.memory_space<vmem>>, vector<64x256xf32>,
    %cst_9 = arith.constant dense<0.000000e+00> : vector<256xf32>
    %10 = vector.multi_reduction <add>, %8, %cst_9 [0] : vector<64x256xf32> to vector<256xf32>
    %11 = vector.shape_cast %10 : vector<256xf32> to vector<1x256xf32>
    %12 = arith.mulf %8, %8 : vector<64x256xf32>
    %cst_10 = arith.constant dense<0.000000e+00> : vector<256xf32>
    %13 = vector.multi_reduction <add>, %12, %cst_10 [0] : vector<64x256xf32> to vector<256xf32>
    %14 = vector.shape_cast %13 : vector<256xf32> to vector<1x256xf32>
    %15 = tpu.concatenate %11, %14 in 0 : vector<1x256xf32>, vector<1x256xf32> -> vector<2x256xf32>
    %c0_11 = arith.constant 0 : index
    %c0_12 = arith.constant 0 : index
    %16 = vector.load %arg7[%c0_11, %c0_12] : memref<256x256xf32, #tpu.memory_space<vmem>>, vector<256x256xf32>
    %cst_13 = arith.constant dense<0.000000e+00> : vector<2x256xf32>
    %17 = tpu.matmul %15, %16, %cst_13 {dimension_numbers = #tpu.dot_dimension_numbers<[1], [0], [0], [1], [0, 0, 1, 1], [], []>} : vector<2x256xf32>, vector<256x256xf32>, vector<2x256xf32> -> vector<2x256xf32>
    %18 = vector.extract_strided_slice %17 {offsets = [0, 0], sizes = [1, 256], strides = [1, 1]} : vector<2x256xf32> to vector<1x256xf32>
    %19 = vector.extract_strided_slice %17 {offsets = [1, 0], sizes = [1, 256], strides = [1, 1]} : vector<2x256xf32> to vector<1x256xf32>
    %20 = arith.mulf %18, %18 : vector<1x256xf32>
    %21 = arith.subf %19, %20 : vector<1x256xf32>
    %cst_14 = arith.constant 9.99999974E-6 : f32
    %22 = vector.broadcast %cst_14 : f32 to vector<1x256xf32>
    %23 = arith.addf %21, %22 : vector<1x256xf32>
    %24 = math.rsqrt %23 : vector<1x256xf32>
    %c0_15 = arith.constant 0 : index
    %c0_16 = arith.constant 0 : index
    %25 = vector.load %arg9[%c0_15, %c0_16] : memref<64x256xf32, #tpu.memory_space<vmem>>, vector<64x256xf32>
    %26 = vector.broadcast %18 : vector<1x256xf32> to vector<64x256xf32>
    %27 = arith.subf %25, %26 : vector<64x256xf32>
    %28 = vector.broadcast %24 : vector<1x256xf32> to vector<64x256xf32>
    %29 = arith.mulf %27, %28 : vector<64x256xf32>
    %c0_17 = arith.constant 0 : index
    %c0_18 = arith.constant 0 : index
    %30 = vector.load %arg5[%c0_17, %c0_18] : memref<1x256xf32, #tpu.memory_space<vmem>>, vector<1x256xf32>
    %31 = vector.broadcast %30 : vector<1x256xf32> to vector<64x256xf32>
    %32 = arith.mulf %29, %31 : vector<64x256xf32>
    %c0_19 = arith.constant 0 : index
    %c0_20 = arith.constant 0 : index
    %33 = vector.load %arg6[%c0_19, %c0_20] : memref<1x256xf32, #tpu.memory_space<vmem>>, vector<1x256xf32>
    %34 = vector.broadcast %33 : vector<1x256xf32> to vector<64x256xf32>
    %35 = arith.addf %32, %34 : vector<64x256xf32>
    %c0_21 = arith.constant 0 : index
    %c0_22 = arith.constant 0 : index
    %c0_23 = arith.constant 0 : index
    %36 = vector.load %arg2[%c0_21, %c0_22, %c0_23] : memref<1x64x256xf32, #tpu.memory_space<vmem>>, vector<1x64x256xf32>
    %37 = vector.shape_cast %36 : vector<1x64x256xf32> to vector<64x256xf32>
    %38 = arith.addf %35, %37 : vector<64x256xf32>
    %c0_24 = arith.constant 0 : index
    %c0_25 = arith.constant 0 : index
    %c0_26 = arith.constant 0 : index
    %39 = vector.load %arg8[%c0_24, %c0_25, %c0_26] : memref<1x64x256xf32, #tpu.memory_space<vmem>>, vector<1x64x256xf32>
    %40 = vector.shape_cast %39 : vector<1x64x256xf32> to vector<64x256xf32>
    %41 = vector.shape_cast %38 : vector<64x256xf32> to vector<1x64x256xf32>
    tpu.vector_store %arg8[%c0_24, %c0_25, %c0_26], %41 {strides = array<i32>} : memref<1x64x256xf32, #tpu.memory_space<vmem>>, vector<1x64x256xf32>,
    return
  }
  func.func @transform_0(%arg0: i32) -> (i32, i32, i32) {
    %c0_i32 = arith.constant 0 : i32
    %c0_i32_0 = arith.constant 0 : i32
    %c0_i32_1 = arith.constant 0 : i32
    return %arg0, %c0_i32, %c0_i32_0 : i32, i32, i32
  }
  func.func @transform_1(%arg0: i32) -> (i32, i32, i32) {
    %c0_i32 = arith.constant 0 : i32
    %c0_i32_0 = arith.constant 0 : i32
    %c0_i32_1 = arith.constant 0 : i32
    return %arg0, %c0_i32, %c0_i32_0 : i32, i32, i32
  }
  func.func @transform_2(%arg0: i32) -> (i32, i32) {
    %c0_i32 = arith.constant 0 : i32
    %c0_i32_0 = arith.constant 0 : i32
    %c0_i32_1 = arith.constant 0 : i32
    return %c0_i32, %c0_i32_0 : i32, i32
  }
  func.func @transform_3(%arg0: i32) -> (i32, i32) {
    %c0_i32 = arith.constant 0 : i32
    %c0_i32_0 = arith.constant 0 : i32
    %c0_i32_1 = arith.constant 0 : i32
    return %c0_i32, %c0_i32_0 : i32, i32
  }
  func.func @transform_4(%arg0: i32) -> (i32, i32) {
    %c0_i32 = arith.constant 0 : i32
    %c0_i32_0 = arith.constant 0 : i32
    %c0_i32_1 = arith.constant 0 : i32
    return %c0_i32, %c0_i32_0 : i32, i32
  }
  func.func @transform_5(%arg0: i32) -> (i32, i32) {
    %c0_i32 = arith.constant 0 : i32
    %c0_i32_0 = arith.constant 0 : i32
    %c0_i32_1 = arith.constant 0 : i32
    return %c0_i32, %c0_i32_0 : i32, i32
  }
  func.func @transform_6(%arg0: i32) -> (i32, i32) {
    %c0_i32 = arith.constant 0 : i32
    %c0_i32_0 = arith.constant 0 : i32
    %c0_i32_1 = arith.constant 0 : i32
    return %c0_i32, %c0_i32_0 : i32, i32
  }
  func.func @transform_7(%arg0: i32) -> (i32, i32, i32) {
    %c0_i32 = arith.constant 0 : i32
    %c0_i32_0 = arith.constant 0 : i32
    %c0_i32_1 = arith.constant 0 : i32
    return %arg0, %c0_i32, %c0_i32_0 : i32, i32, i32
  }
}

module attributes {stable_mosaic.version = 11 : i64} {
  func.func @conv3_relu_gn_kernel(%arg0: i32, %arg1: memref<1x10x10x320xf32, #tpu.memory_space<vmem>>, %arg2: memref<9x320x256xbf16, #tpu.memory_space<vmem>>, %arg3: memref<1x256xf32, #tpu.memory_space<vmem>>, %arg4: memref<1x256xf32, #tpu.memory_space<vmem>>, %arg5: memref<1x256xf32, #tpu.memory_space<vmem>>, %arg6: memref<256x256xf32, #tpu.memory_space<vmem>>, %arg7: memref<1x64x256xf32, #tpu.memory_space<vmem>>, %arg8: memref<64x256xf32, #tpu.memory_space<vmem>>) attributes {dimension_semantics = [#tpu.dimension_semantics<parallel>], iteration_bounds = array<i64: 4>, scalar_prefetch = 0 : i64, scratch_operands = 1 : i64, tpu.core_type = #tpu.core_type<tc>, window_params = [{transform_indices = @transform_0, window_bounds = array<i64: 1, 10, 10, 320>}, {pipeline_mode = #tpu.pipeline_mode<synchronous>, transform_indices = @transform_1, window_bounds = array<i64: 9, 320, 256>}, {pipeline_mode = #tpu.pipeline_mode<synchronous>, transform_indices = @transform_2, window_bounds = array<i64: 1, 256>}, {pipeline_mode = #tpu.pipeline_mode<synchronous>, transform_indices = @transform_3, window_bounds = array<i64: 1, 256>}, {pipeline_mode = #tpu.pipeline_mode<synchronous>, transform_indices = @transform_4, window_bounds = array<i64: 1, 256>}, {pipeline_mode = #tpu.pipeline_mode<synchronous>, transform_indices = @transform_5, window_bounds = array<i64: 256, 256>}, {transform_indices = @transform_6, window_bounds = array<i64: 1, 64, 256>}]} {
    %cst = arith.constant 0.000000e+00 : f32
    %0 = vector.broadcast %cst : f32 to vector<64x256xf32>
    %c0 = arith.constant 0 : index
    %c0_0 = arith.constant 0 : index
    %1 = vector.load %arg8[%c0, %c0_0] : memref<64x256xf32, #tpu.memory_space<vmem>>, vector<64x256xf32>
    tpu.vector_store %arg8[%c0, %c0_0], %0 {strides = array<i32>} : memref<64x256xf32, #tpu.memory_space<vmem>>, vector<64x256xf32>,
    %c0_1 = arith.constant 0 : index
    %c0_2 = arith.constant 0 : index
    %c0_3 = arith.constant 0 : index
    %c0_4 = arith.constant 0 : index
    %2 = vector.load %arg1[%c0_1, %c0_2, %c0_3, %c0_4] : memref<1x10x10x320xf32, #tpu.memory_space<vmem>>, vector<1x8x8x320xf32>
    %3 = vector.shape_cast %2 : vector<1x8x8x320xf32> to vector<8x8x320xf32>
    %4 = vector.shape_cast %3 : vector<8x8x320xf32> to vector<64x320xf32>
    %5 = arith.truncf %4 : vector<64x320xf32> to vector<64x320xbf16>
    %c0_5 = arith.constant 0 : index
    %c0_6 = arith.constant 0 : index
    %6 = vector.load %arg8[%c0_5, %c0_6] : memref<64x256xf32, #tpu.memory_space<vmem>>, vector<64x256xf32>
    %c0_7 = arith.constant 0 : index
    %c0_8 = arith.constant 0 : index
    %c0_9 = arith.constant 0 : index
    %7 = vector.load %arg2[%c0_7, %c0_8, %c0_9] : memref<9x320x256xbf16, #tpu.memory_space<vmem>>, vector<1x320x256xbf16>
    %8 = vector.shape_cast %7 : vector<1x320x256xbf16> to vector<320x256xbf16>
    %cst_10 = arith.constant dense<0.000000e+00> : vector<64x256xf32>
    %9 = tpu.matmul %5, %8, %cst_10 {dimension_numbers = #tpu.dot_dimension_numbers<[1], [0], [0], [1], [0, 0, 1, 1], [], []>} : vector<64x320xbf16>, vector<320x256xbf16>, vector<64x256xf32> -> vector<64x256xf32>
    %10 = arith.addf %6, %9 : vector<64x256xf32>
    %c0_11 = arith.constant 0 : index
    %c0_12 = arith.constant 0 : index
    %11 = vector.load %arg8[%c0_11, %c0_12] : memref<64x256xf32, #tpu.memory_space<vmem>>, vector<64x256xf32>
    tpu.vector_store %arg8[%c0_11, %c0_12], %10 {strides = array<i32>} : memref<64x256xf32, #tpu.memory_space<vmem>>, vector<64x256xf32>,
    %c0_13 = arith.constant 0 : index
    %c0_14 = arith.constant 0 : index
    %c1 = arith.constant 1 : index
    %c0_15 = arith.constant 0 : index
    %12 = vector.load %arg1[%c0_13, %c0_14, %c1, %c0_15] : memref<1x10x10x320xf32, #tpu.memory_space<vmem>>, vector<1x8x8x320xf32>
    %13 = vector.shape_cast %12 : vector<1x8x8x320xf32> to vector<8x8x320xf32>
    %14 = vector.shape_cast %13 : vector<8x8x320xf32> to vector<64x320xf32>
    %15 = arith.truncf %14 : vector<64x320xf32> to vector<64x320xbf16>
    %c0_16 = arith.constant 0 : index
    %c0_17 = arith.constant 0 : index
    %16 = vector.load %arg8[%c0_16, %c0_17] : memref<64x256xf32, #tpu.memory_space<vmem>>, vector<64x256xf32>
    %c1_18 = arith.constant 1 : index
    %c0_19 = arith.constant 0 : index
    %c0_20 = arith.constant 0 : index
    %17 = vector.load %arg2[%c1_18, %c0_19, %c0_20] : memref<9x320x256xbf16, #tpu.memory_space<vmem>>, vector<1x320x256xbf16>
    %18 = vector.shape_cast %17 : vector<1x320x256xbf16> to vector<320x256xbf16>
    %cst_21 = arith.constant dense<0.000000e+00> : vector<64x256xf32>
    %19 = tpu.matmul %15, %18, %cst_21 {dimension_numbers = #tpu.dot_dimension_numbers<[1], [0], [0], [1], [0, 0, 1, 1], [], []>} : vector<64x320xbf16>, vector<320x256xbf16>, vector<64x256xf32> -> vector<64x256xf32>
    %20 = arith.addf %16, %19 : vector<64x256xf32>
    %c0_22 = arith.constant 0 : index
    %c0_23 = arith.constant 0 : index
    %21 = vector.load %arg8[%c0_22, %c0_23] : memref<64x256xf32, #tpu.memory_space<vmem>>, vector<64x256xf32>
    tpu.vector_store %arg8[%c0_22, %c0_23], %20 {strides = array<i32>} : memref<64x256xf32, #tpu.memory_space<vmem>>, vector<64x256xf32>,
    %c0_24 = arith.constant 0 : index
    %c0_25 = arith.constant 0 : index
    %c2 = arith.constant 2 : index
    %c0_26 = arith.constant 0 : index
    %22 = vector.load %arg1[%c0_24, %c0_25, %c2, %c0_26] : memref<1x10x10x320xf32, #tpu.memory_space<vmem>>, vector<1x8x8x320xf32>
    %23 = vector.shape_cast %22 : vector<1x8x8x320xf32> to vector<8x8x320xf32>
    %24 = vector.shape_cast %23 : vector<8x8x320xf32> to vector<64x320xf32>
    %25 = arith.truncf %24 : vector<64x320xf32> to vector<64x320xbf16>
    %c0_27 = arith.constant 0 : index
    %c0_28 = arith.constant 0 : index
    %26 = vector.load %arg8[%c0_27, %c0_28] : memref<64x256xf32, #tpu.memory_space<vmem>>, vector<64x256xf32>
    %c2_29 = arith.constant 2 : index
    %c0_30 = arith.constant 0 : index
    %c0_31 = arith.constant 0 : index
    %27 = vector.load %arg2[%c2_29, %c0_30, %c0_31] : memref<9x320x256xbf16, #tpu.memory_space<vmem>>, vector<1x320x256xbf16>
    %28 = vector.shape_cast %27 : vector<1x320x256xbf16> to vector<320x256xbf16>
    %cst_32 = arith.constant dense<0.000000e+00> : vector<64x256xf32>
    %29 = tpu.matmul %25, %28, %cst_32 {dimension_numbers = #tpu.dot_dimension_numbers<[1], [0], [0], [1], [0, 0, 1, 1], [], []>} : vector<64x320xbf16>, vector<320x256xbf16>, vector<64x256xf32> -> vector<64x256xf32>
    %30 = arith.addf %26, %29 : vector<64x256xf32>
    %c0_33 = arith.constant 0 : index
    %c0_34 = arith.constant 0 : index
    %31 = vector.load %arg8[%c0_33, %c0_34] : memref<64x256xf32, #tpu.memory_space<vmem>>, vector<64x256xf32>
    tpu.vector_store %arg8[%c0_33, %c0_34], %30 {strides = array<i32>} : memref<64x256xf32, #tpu.memory_space<vmem>>, vector<64x256xf32>,
    %c0_35 = arith.constant 0 : index
    %c1_36 = arith.constant 1 : index
    %c0_37 = arith.constant 0 : index
    %c0_38 = arith.constant 0 : index
    %32 = vector.load %arg1[%c0_35, %c1_36, %c0_37, %c0_38] : memref<1x10x10x320xf32, #tpu.memory_space<vmem>>, vector<1x8x8x320xf32>
    %33 = vector.shape_cast %32 : vector<1x8x8x320xf32> to vector<8x8x320xf32>
    %34 = vector.shape_cast %33 : vector<8x8x320xf32> to vector<64x320xf32>
    %35 = arith.truncf %34 : vector<64x320xf32> to vector<64x320xbf16>
    %c0_39 = arith.constant 0 : index
    %c0_40 = arith.constant 0 : index
    %36 = vector.load %arg8[%c0_39, %c0_40] : memref<64x256xf32, #tpu.memory_space<vmem>>, vector<64x256xf32>
    %c3 = arith.constant 3 : index
    %c0_41 = arith.constant 0 : index
    %c0_42 = arith.constant 0 : index
    %37 = vector.load %arg2[%c3, %c0_41, %c0_42] : memref<9x320x256xbf16, #tpu.memory_space<vmem>>, vector<1x320x256xbf16>
    %38 = vector.shape_cast %37 : vector<1x320x256xbf16> to vector<320x256xbf16>
    %cst_43 = arith.constant dense<0.000000e+00> : vector<64x256xf32>
    %39 = tpu.matmul %35, %38, %cst_43 {dimension_numbers = #tpu.dot_dimension_numbers<[1], [0], [0], [1], [0, 0, 1, 1], [], []>} : vector<64x320xbf16>, vector<320x256xbf16>, vector<64x256xf32> -> vector<64x256xf32>
    %40 = arith.addf %36, %39 : vector<64x256xf32>
    %c0_44 = arith.constant 0 : index
    %c0_45 = arith.constant 0 : index
    %41 = vector.load %arg8[%c0_44, %c0_45] : memref<64x256xf32, #tpu.memory_space<vmem>>, vector<64x256xf32>
    tpu.vector_store %arg8[%c0_44, %c0_45], %40 {strides = array<i32>} : memref<64x256xf32, #tpu.memory_space<vmem>>, vector<64x256xf32>,
    %c0_46 = arith.constant 0 : index
    %c1_47 = arith.constant 1 : index
    %c1_48 = arith.constant 1 : index
    %c0_49 = arith.constant 0 : index
    %42 = vector.load %arg1[%c0_46, %c1_47, %c1_48, %c0_49] : memref<1x10x10x320xf32, #tpu.memory_space<vmem>>, vector<1x8x8x320xf32>
    %43 = vector.shape_cast %42 : vector<1x8x8x320xf32> to vector<8x8x320xf32>
    %44 = vector.shape_cast %43 : vector<8x8x320xf32> to vector<64x320xf32>
    %45 = arith.truncf %44 : vector<64x320xf32> to vector<64x320xbf16>
    %c0_50 = arith.constant 0 : index
    %c0_51 = arith.constant 0 : index
    %46 = vector.load %arg8[%c0_50, %c0_51] : memref<64x256xf32, #tpu.memory_space<vmem>>, vector<64x256xf32>
    %c4 = arith.constant 4 : index
    %c0_52 = arith.constant 0 : index
    %c0_53 = arith.constant 0 : index
    %47 = vector.load %arg2[%c4, %c0_52, %c0_53] : memref<9x320x256xbf16, #tpu.memory_space<vmem>>, vector<1x320x256xbf16>
    %48 = vector.shape_cast %47 : vector<1x320x256xbf16> to vector<320x256xbf16>
    %cst_54 = arith.constant dense<0.000000e+00> : vector<64x256xf32>
    %49 = tpu.matmul %45, %48, %cst_54 {dimension_numbers = #tpu.dot_dimension_numbers<[1], [0], [0], [1], [0, 0, 1, 1], [], []>} : vector<64x320xbf16>, vector<320x256xbf16>, vector<64x256xf32> -> vector<64x256xf32>
    %50 = arith.addf %46, %49 : vector<64x256xf32>
    %c0_55 = arith.constant 0 : index
    %c0_56 = arith.constant 0 : index
    %51 = vector.load %arg8[%c0_55, %c0_56] : memref<64x256xf32, #tpu.memory_space<vmem>>, vector<64x256xf32>
    tpu.vector_store %arg8[%c0_55, %c0_56], %50 {strides = array<i32>} : memref<64x256xf32, #tpu.memory_space<vmem>>, vector<64x256xf32>,
    %c0_57 = arith.constant 0 : index
    %c1_58 = arith.constant 1 : index
    %c2_59 = arith.constant 2 : index
    %c0_60 = arith.constant 0 : index
    %52 = vector.load %arg1[%c0_57, %c1_58, %c2_59, %c0_60] : memref<1x10x10x320xf32, #tpu.memory_space<vmem>>, vector<1x8x8x320xf32>
    %53 = vector.shape_cast %52 : vector<1x8x8x320xf32> to vector<8x8x320xf32>
    %54 = vector.shape_cast %53 : vector<8x8x320xf32> to vector<64x320xf32>
    %55 = arith.truncf %54 : vector<64x320xf32> to vector<64x320xbf16>
    %c0_61 = arith.constant 0 : index
    %c0_62 = arith.constant 0 : index
    %56 = vector.load %arg8[%c0_61, %c0_62] : memref<64x256xf32, #tpu.memory_space<vmem>>, vector<64x256xf32>
    %c5 = arith.constant 5 : index
    %c0_63 = arith.constant 0 : index
    %c0_64 = arith.constant 0 : index
    %57 = vector.load %arg2[%c5, %c0_63, %c0_64] : memref<9x320x256xbf16, #tpu.memory_space<vmem>>, vector<1x320x256xbf16>
    %58 = vector.shape_cast %57 : vector<1x320x256xbf16> to vector<320x256xbf16>
    %cst_65 = arith.constant dense<0.000000e+00> : vector<64x256xf32>
    %59 = tpu.matmul %55, %58, %cst_65 {dimension_numbers = #tpu.dot_dimension_numbers<[1], [0], [0], [1], [0, 0, 1, 1], [], []>} : vector<64x320xbf16>, vector<320x256xbf16>, vector<64x256xf32> -> vector<64x256xf32>
    %60 = arith.addf %56, %59 : vector<64x256xf32>
    %c0_66 = arith.constant 0 : index
    %c0_67 = arith.constant 0 : index
    %61 = vector.load %arg8[%c0_66, %c0_67] : memref<64x256xf32, #tpu.memory_space<vmem>>, vector<64x256xf32>
    tpu.vector_store %arg8[%c0_66, %c0_67], %60 {strides = array<i32>} : memref<64x256xf32, #tpu.memory_space<vmem>>, vector<64x256xf32>,
    %c0_68 = arith.constant 0 : index
    %c2_69 = arith.constant 2 : index
    %c0_70 = arith.constant 0 : index
    %c0_71 = arith.constant 0 : index
    %62 = vector.load %arg1[%c0_68, %c2_69, %c0_70, %c0_71] : memref<1x10x10x320xf32, #tpu.memory_space<vmem>>, vector<1x8x8x320xf32>
    %63 = vector.shape_cast %62 : vector<1x8x8x320xf32> to vector<8x8x320xf32>
    %64 = vector.shape_cast %63 : vector<8x8x320xf32> to vector<64x320xf32>
    %65 = arith.truncf %64 : vector<64x320xf32> to vector<64x320xbf16>
    %c0_72 = arith.constant 0 : index
    %c0_73 = arith.constant 0 : index
    %66 = vector.load %arg8[%c0_72, %c0_73] : memref<64x256xf32, #tpu.memory_space<vmem>>, vector<64x256xf32>
    %c6 = arith.constant 6 : index
    %c0_74 = arith.constant 0 : index
    %c0_75 = arith.constant 0 : index
    %67 = vector.load %arg2[%c6, %c0_74, %c0_75] : memref<9x320x256xbf16, #tpu.memory_space<vmem>>, vector<1x320x256xbf16>
    %68 = vector.shape_cast %67 : vector<1x320x256xbf16> to vector<320x256xbf16>
    %cst_76 = arith.constant dense<0.000000e+00> : vector<64x256xf32>
    %69 = tpu.matmul %65, %68, %cst_76 {dimension_numbers = #tpu.dot_dimension_numbers<[1], [0], [0], [1], [0, 0, 1, 1], [], []>} : vector<64x320xbf16>, vector<320x256xbf16>, vector<64x256xf32> -> vector<64x256xf32>
    %70 = arith.addf %66, %69 : vector<64x256xf32>
    %c0_77 = arith.constant 0 : index
    %c0_78 = arith.constant 0 : index
    %71 = vector.load %arg8[%c0_77, %c0_78] : memref<64x256xf32, #tpu.memory_space<vmem>>, vector<64x256xf32>
    tpu.vector_store %arg8[%c0_77, %c0_78], %70 {strides = array<i32>} : memref<64x256xf32, #tpu.memory_space<vmem>>, vector<64x256xf32>,
    %c0_79 = arith.constant 0 : index
    %c2_80 = arith.constant 2 : index
    %c1_81 = arith.constant 1 : index
    %c0_82 = arith.constant 0 : index
    %72 = vector.load %arg1[%c0_79, %c2_80, %c1_81, %c0_82] : memref<1x10x10x320xf32, #tpu.memory_space<vmem>>, vector<1x8x8x320xf32>
    %73 = vector.shape_cast %72 : vector<1x8x8x320xf32> to vector<8x8x320xf32>
    %74 = vector.shape_cast %73 : vector<8x8x320xf32> to vector<64x320xf32>
    %75 = arith.truncf %74 : vector<64x320xf32> to vector<64x320xbf16>
    %c0_83 = arith.constant 0 : index
    %c0_84 = arith.constant 0 : index
    %76 = vector.load %arg8[%c0_83, %c0_84] : memref<64x256xf32, #tpu.memory_space<vmem>>, vector<64x256xf32>
    %c7 = arith.constant 7 : index
    %c0_85 = arith.constant 0 : index
    %c0_86 = arith.constant 0 : index
    %77 = vector.load %arg2[%c7, %c0_85, %c0_86] : memref<9x320x256xbf16, #tpu.memory_space<vmem>>, vector<1x320x256xbf16>
    %78 = vector.shape_cast %77 : vector<1x320x256xbf16> to vector<320x256xbf16>
    %cst_87 = arith.constant dense<0.000000e+00> : vector<64x256xf32>
    %79 = tpu.matmul %75, %78, %cst_87 {dimension_numbers = #tpu.dot_dimension_numbers<[1], [0], [0], [1], [0, 0, 1, 1], [], []>} : vector<64x320xbf16>, vector<320x256xbf16>, vector<64x256xf32> -> vector<64x256xf32>
    %80 = arith.addf %76, %79 : vector<64x256xf32>
    %c0_88 = arith.constant 0 : index
    %c0_89 = arith.constant 0 : index
    %81 = vector.load %arg8[%c0_88, %c0_89] : memref<64x256xf32, #tpu.memory_space<vmem>>, vector<64x256xf32>
    tpu.vector_store %arg8[%c0_88, %c0_89], %80 {strides = array<i32>} : memref<64x256xf32, #tpu.memory_space<vmem>>, vector<64x256xf32>,
    %c0_90 = arith.constant 0 : index
    %c2_91 = arith.constant 2 : index
    %c2_92 = arith.constant 2 : index
    %c0_93 = arith.constant 0 : index
    %82 = vector.load %arg1[%c0_90, %c2_91, %c2_92, %c0_93] : memref<1x10x10x320xf32, #tpu.memory_space<vmem>>, vector<1x8x8x320xf32>
    %83 = vector.shape_cast %82 : vector<1x8x8x320xf32> to vector<8x8x320xf32>
    %84 = vector.shape_cast %83 : vector<8x8x320xf32> to vector<64x320xf32>
    %85 = arith.truncf %84 : vector<64x320xf32> to vector<64x320xbf16>
    %c0_94 = arith.constant 0 : index
    %c0_95 = arith.constant 0 : index
    %86 = vector.load %arg8[%c0_94, %c0_95] : memref<64x256xf32, #tpu.memory_space<vmem>>, vector<64x256xf32>
    %c8 = arith.constant 8 : index
    %c0_96 = arith.constant 0 : index
    %c0_97 = arith.constant 0 : index
    %87 = vector.load %arg2[%c8, %c0_96, %c0_97] : memref<9x320x256xbf16, #tpu.memory_space<vmem>>, vector<1x320x256xbf16>
    %88 = vector.shape_cast %87 : vector<1x320x256xbf16> to vector<320x256xbf16>
    %cst_98 = arith.constant dense<0.000000e+00> : vector<64x256xf32>
    %89 = tpu.matmul %85, %88, %cst_98 {dimension_numbers = #tpu.dot_dimension_numbers<[1], [0], [0], [1], [0, 0, 1, 1], [], []>} : vector<64x320xbf16>, vector<320x256xbf16>, vector<64x256xf32> -> vector<64x256xf32>
    %90 = arith.addf %86, %89 : vector<64x256xf32>
    %c0_99 = arith.constant 0 : index
    %c0_100 = arith.constant 0 : index
    %91 = vector.load %arg8[%c0_99, %c0_100] : memref<64x256xf32, #tpu.memory_space<vmem>>, vector<64x256xf32>
    tpu.vector_store %arg8[%c0_99, %c0_100], %90 {strides = array<i32>} : memref<64x256xf32, #tpu.memory_space<vmem>>, vector<64x256xf32>,
    %c0_101 = arith.constant 0 : index
    %c0_102 = arith.constant 0 : index
    %92 = vector.load %arg8[%c0_101, %c0_102] : memref<64x256xf32, #tpu.memory_space<vmem>>, vector<64x256xf32>
    %c0_103 = arith.constant 0 : index
    %c0_104 = arith.constant 0 : index
    %93 = vector.load %arg3[%c0_103, %c0_104] : memref<1x256xf32, #tpu.memory_space<vmem>>, vector<1x256xf32>
    %94 = vector.broadcast %93 : vector<1x256xf32> to vector<64x256xf32>
    %95 = arith.addf %92, %94 : vector<64x256xf32>
    %cst_105 = arith.constant 0.000000e+00 : f32
    %96 = vector.broadcast %cst_105 : f32 to vector<64x256xf32>
    %97 = arith.maximumf %95, %96 : vector<64x256xf32>
    %c0_106 = arith.constant 0 : index
    %c0_107 = arith.constant 0 : index
    %98 = vector.load %arg8[%c0_106, %c0_107] : memref<64x256xf32, #tpu.memory_space<vmem>>, vector<64x256xf32>
    tpu.vector_store %arg8[%c0_106, %c0_107], %97 {strides = array<i32>} : memref<64x256xf32, #tpu.memory_space<vmem>>, vector<64x256xf32>,
    %cst_108 = arith.constant dense<0.000000e+00> : vector<256xf32>
    %99 = vector.multi_reduction <add>, %97, %cst_108 [0] : vector<64x256xf32> to vector<256xf32>
    %100 = vector.shape_cast %99 : vector<256xf32> to vector<1x256xf32>
    %101 = arith.mulf %97, %97 : vector<64x256xf32>
    %cst_109 = arith.constant dense<0.000000e+00> : vector<256xf32>
    %102 = vector.multi_reduction <add>, %101, %cst_109 [0] : vector<64x256xf32> to vector<256xf32>
    %103 = vector.shape_cast %102 : vector<256xf32> to vector<1x256xf32>
    %104 = tpu.concatenate %100, %103 in 0 : vector<1x256xf32>, vector<1x256xf32> -> vector<2x256xf32>
    %c0_110 = arith.constant 0 : index
    %c0_111 = arith.constant 0 : index
    %105 = vector.load %arg6[%c0_110, %c0_111] : memref<256x256xf32, #tpu.memory_space<vmem>>, vector<256x256xf32>
    %cst_112 = arith.constant dense<0.000000e+00> : vector<2x256xf32>
    %106 = tpu.matmul %104, %105, %cst_112 {dimension_numbers = #tpu.dot_dimension_numbers<[1], [0], [0], [1], [0, 0, 1, 1], [], []>} : vector<2x256xf32>, vector<256x256xf32>, vector<2x256xf32> -> vector<2x256xf32>
    %107 = vector.extract_strided_slice %106 {offsets = [0, 0], sizes = [1, 256], strides = [1, 1]} : vector<2x256xf32> to vector<1x256xf32>
    %108 = vector.extract_strided_slice %106 {offsets = [1, 0], sizes = [1, 256], strides = [1, 1]} : vector<2x256xf32> to vector<1x256xf32>
    %109 = arith.mulf %107, %107 : vector<1x256xf32>
    %110 = arith.subf %108, %109 : vector<1x256xf32>
    %cst_113 = arith.constant 9.99999974E-6 : f32
    %111 = vector.broadcast %cst_113 : f32 to vector<1x256xf32>
    %112 = arith.addf %110, %111 : vector<1x256xf32>
    %113 = math.rsqrt %112 : vector<1x256xf32>
    %c0_114 = arith.constant 0 : index
    %c0_115 = arith.constant 0 : index
    %114 = vector.load %arg8[%c0_114, %c0_115] : memref<64x256xf32, #tpu.memory_space<vmem>>, vector<64x256xf32>
    %115 = vector.broadcast %107 : vector<1x256xf32> to vector<64x256xf32>
    %116 = arith.subf %114, %115 : vector<64x256xf32>
    %117 = vector.broadcast %113 : vector<1x256xf32> to vector<64x256xf32>
    %118 = arith.mulf %116, %117 : vector<64x256xf32>
    %c0_116 = arith.constant 0 : index
    %c0_117 = arith.constant 0 : index
    %119 = vector.load %arg4[%c0_116, %c0_117] : memref<1x256xf32, #tpu.memory_space<vmem>>, vector<1x256xf32>
    %120 = vector.broadcast %119 : vector<1x256xf32> to vector<64x256xf32>
    %121 = arith.mulf %118, %120 : vector<64x256xf32>
    %c0_118 = arith.constant 0 : index
    %c0_119 = arith.constant 0 : index
    %122 = vector.load %arg5[%c0_118, %c0_119] : memref<1x256xf32, #tpu.memory_space<vmem>>, vector<1x256xf32>
    %123 = vector.broadcast %122 : vector<1x256xf32> to vector<64x256xf32>
    %124 = arith.addf %121, %123 : vector<64x256xf32>
    %c0_120 = arith.constant 0 : index
    %c0_121 = arith.constant 0 : index
    %c0_122 = arith.constant 0 : index
    %125 = vector.load %arg7[%c0_120, %c0_121, %c0_122] : memref<1x64x256xf32, #tpu.memory_space<vmem>>, vector<1x64x256xf32>
    %126 = vector.shape_cast %125 : vector<1x64x256xf32> to vector<64x256xf32>
    %127 = vector.shape_cast %124 : vector<64x256xf32> to vector<1x64x256xf32>
    tpu.vector_store %arg7[%c0_120, %c0_121, %c0_122], %127 {strides = array<i32>} : memref<1x64x256xf32, #tpu.memory_space<vmem>>, vector<1x64x256xf32>,
    return
  }
  func.func @transform_0(%arg0: i32) -> (i32, i32, i32, i32) {
    %c0_i32 = arith.constant 0 : i32
    %c0_i32_0 = arith.constant 0 : i32
    %c0_i32_1 = arith.constant 0 : i32
    %c0_i32_2 = arith.constant 0 : i32
    return %arg0, %c0_i32, %c0_i32_0, %c0_i32_1 : i32, i32, i32, i32
  }
  func.func @transform_1(%arg0: i32) -> (i32, i32, i32) {
    %c0_i32 = arith.constant 0 : i32
    %c0_i32_0 = arith.constant 0 : i32
    %c0_i32_1 = arith.constant 0 : i32
    %c0_i32_2 = arith.constant 0 : i32
    return %c0_i32, %c0_i32_0, %c0_i32_1 : i32, i32, i32
  }
  func.func @transform_2(%arg0: i32) -> (i32, i32) {
    %c0_i32 = arith.constant 0 : i32
    %c0_i32_0 = arith.constant 0 : i32
    %c0_i32_1 = arith.constant 0 : i32
    return %c0_i32, %c0_i32_0 : i32, i32
  }
  func.func @transform_3(%arg0: i32) -> (i32, i32) {
    %c0_i32 = arith.constant 0 : i32
    %c0_i32_0 = arith.constant 0 : i32
    %c0_i32_1 = arith.constant 0 : i32
    return %c0_i32, %c0_i32_0 : i32, i32
  }
  func.func @transform_4(%arg0: i32) -> (i32, i32) {
    %c0_i32 = arith.constant 0 : i32
    %c0_i32_0 = arith.constant 0 : i32
    %c0_i32_1 = arith.constant 0 : i32
    return %c0_i32, %c0_i32_0 : i32, i32
  }
  func.func @transform_5(%arg0: i32) -> (i32, i32) {
    %c0_i32 = arith.constant 0 : i32
    %c0_i32_0 = arith.constant 0 : i32
    %c0_i32_1 = arith.constant 0 : i32
    return %c0_i32, %c0_i32_0 : i32, i32
  }
  func.func @transform_6(%arg0: i32) -> (i32, i32, i32) {
    %c0_i32 = arith.constant 0 : i32
    %c0_i32_0 = arith.constant 0 : i32
    %c0_i32_1 = arith.constant 0 : i32
    return %arg0, %c0_i32, %c0_i32_0 : i32, i32, i32
  }
}

</mosaic_0001>

<llo_original>
// kernel: upblock_forward.3
$region0: #{upblock_forward.3}
  #allocation0 [shape = 'u32[]', space=smem, size = 0x4, offset = 0x4, fixed_abs, tag = 'smem constant byte address 0x4 - core index']
  #allocation1 [shape = 'u32[144,128]{1,0:T(1,128)}', space=vmem, size = 0x12000, scoped, tag = 'internal scratch']
  #allocation2 [shape = 'f32[64,256]{1,0:T(8,128)}', space=vmem, size = 0x10000, scoped, tag = 'scratch operand']
  %s0 = inlined_call_operand.vmem [shape: bf16[4,64,256], index: 0, kind: input, shape index: {}]
  %s1 = inlined_call_operand.vmem [shape: f32[4,64,256], index: 1, kind: input, shape index: {}]
  %s2 = inlined_call_operand.vmem [shape: bf16[256,256], index: 2, kind: input, shape index: {}]
  %s3 = inlined_call_operand.vmem [shape: f32[1,256], index: 3, kind: input, shape index: {}]
  %s4 = inlined_call_operand.vmem [shape: f32[1,256], index: 4, kind: input, shape index: {}]
  %s5 = inlined_call_operand.vmem [shape: f32[1,256], index: 5, kind: input, shape index: {}]
  %s6 = inlined_call_operand.vmem [shape: f32[256,256], index: 6, kind: input, shape index: {}]
  %s7 = inlined_call_operand.vmem [shape: f32[4,64,256], index: 7, kind: output, shape index: {}]
  %s8 = sld [smem:[#allocation0]]
  $region61: #{upblock_forward.3} parent=0
    _
  %s10 = ssub.s32 1, %s8
  %s11 = scalar_select 0, %s10, %s8
  loop: start=0, step=1, limit=6
  $region2: #{upblock_forward.3} parent=0 // loop_pre_header
    _
  $region3: #{upblock_forward.3} parent=0 // loop_header
    %s13 = sphi 0, %s17
    %p14 = scmp.ge.s32.totalorder %s13, 6
    %s23 = sphi 0, %s25
    %s26 = sphi 0, %s23
    %s27 = sphi 0, %s26
    %s43 = sphi 0, %s27
    %s49 = sphi 0, %s51
    %s52 = sphi 0, %s49
    %s53 = sphi 0, %s52
    %s69 = sphi 0, %s53
    %s73 = sphi 0, %s73
    %s75 = sphi 0, %s73
    %s76 = sphi 0, %s75
    %s90 = sphi 0, %s76
    %s94 = sphi 0, %s94
    %s96 = sphi 0, %s94
    %s97 = sphi 0, %s96
    %s111 = sphi 0, %s97
    %s115 = sphi 0, %s115
    %s117 = sphi 0, %s115
    %s118 = sphi 0, %s117
    %s132 = sphi 0, %s118
    %s136 = sphi 0, %s136
    %s138 = sphi 0, %s136
    %s139 = sphi 0, %s138
    %s153 = sphi 0, %s139
    %s157 = sphi 0, %s157
    %s159 = sphi 0, %s157
    %s160 = sphi 0, %s159
    %s174 = sphi 0, %s160
    %s180 = sphi 0, %s182
    %s183 = sphi 0, %s180
    %s184 = sphi 0, %s183
    %s200 = sphi 0, %s184
  $region4: #{upblock_forward.3} parent=0 // loop_header_branch
    %16 = sbr.rel (%p14) target = $region8
  $region5: #{upblock_forward.3} parent=0 // loop_body
    %s18 = ssub.s32 %s13, 1
    %s19 = ssub.s32 %s13, 2
    %s20 = sadd.s32 %s13, 1
    %s21 = ssub.s32 %s13, %s20
    %p22 = scmp.eq.s32.totalorder %s21, 0
    %s24 = sadd.s32 %s23, 1
    %s25 = scalar_select %p22, %s23, %s24
    %p28 = pneg %p22
    %p29 = scmp.eq.s32.totalorder %s13, 3
    %p30 = por %p28, %p29
    %p31 = scmp.ne.s32.totalorder %s23, %s26
    %p32 = scmp.eq.s32.totalorder %s13, 0
    %p33 = por %p31, %p32
    %p34 = scmp.ne.s32.totalorder %s23, %s26
    %p35 = scmp.eq.s32.totalorder %s18, 3
    %p36 = por %p34, %p35
    %p37 = scmp.ne.s32.totalorder %s26, %s27
    %p38 = scmp.eq.s32.totalorder %s18, 0
    %p39 = por %p37, %p38
    %p40 = scmp.ne.s32.totalorder %s26, %s27
    %p41 = scmp.eq.s32.totalorder %s19, 3
    %p42 = por %p40, %p41
    %p44 = scmp.ne.s32.totalorder %s27, %s43
    %p45 = scmp.eq.s32.totalorder %s19, 0
    %p46 = por %p44, %p45
    %s47 = ssub.s32 %s13, %s20
    %p48 = scmp.eq.s32.totalorder %s47, 0
    %s50 = sadd.s32 %s49, 1
    %s51 = scalar_select %p48, %s49, %s50
    %p54 = pneg %p48
    %p55 = scmp.eq.s32.totalorder %s13, 3
    %p56 = por %p54, %p55
    %p57 = scmp.ne.s32.totalorder %s49, %s52
    %p58 = scmp.eq.s32.totalorder %s13, 0
    %p59 = por %p57, %p58
    %p60 = scmp.ne.s32.totalorder %s49, %s52
    %p61 = scmp.eq.s32.totalorder %s18, 3
    %p62 = por %p60, %p61
    %p63 = scmp.ne.s32.totalorder %s52, %s53
    %p64 = scmp.eq.s32.totalorder %s18, 0
    %p65 = por %p63, %p64
    %p66 = scmp.ne.s32.totalorder %s52, %s53
    %p67 = scmp.eq.s32.totalorder %s19, 3
    %p68 = por %p66, %p67
    %p70 = scmp.ne.s32.totalorder %s53, %s69
    %p71 = scmp.eq.s32.totalorder %s19, 0
    %p72 = por %p70, %p71
    %s74 = sadd.s32 %s73, 1
    %p77 = scmp.eq.s32.totalorder %s13, 3
    %p78 = scmp.ne.s32.totalorder %s73, %s75
    %p79 = scmp.eq.s32.totalorder %s13, 0
    %p80 = por %p78, %p79
    %p81 = scmp.ne.s32.totalorder %s73, %s75
    %p82 = scmp.eq.s32.totalorder %s18, 3
    %p83 = por %p81, %p82
    %p84 = scmp.ne.s32.totalorder %s75, %s76
    %p85 = scmp.eq.s32.totalorder %s18, 0
    %p86 = por %p84, %p85
    %p87 = scmp.ne.s32.totalorder %s75, %s76
    %p88 = scmp.eq.s32.totalorder %s19, 3
    %p89 = por %p87, %p88
    %p91 = scmp.ne.s32.totalorder %s76, %s90
    %p92 = scmp.eq.s32.totalorder %s19, 0
    %p93 = por %p91, %p92
    %s95 = sadd.s32 %s94, 1
    %p98 = scmp.eq.s32.totalorder %s13, 3
    %p99 = scmp.ne.s32.totalorder %s94, %s96
    %p100 = scmp.eq.s32.totalorder %s13, 0
    %p101 = por %p99, %p100
    %p102 = scmp.ne.s32.totalorder %s94, %s96
    %p103 = scmp.eq.s32.totalorder %s18, 3
    %p104 = por %p102, %p103
    %p105 = scmp.ne.s32.totalorder %s96, %s97
    %p106 = scmp.eq.s32.totalorder %s18, 0
    %p107 = por %p105, %p106
    %p108 = scmp.ne.s32.totalorder %s96, %s97
    %p109 = scmp.eq.s32.totalorder %s19, 3
    %p110 = por %p108, %p109
    %p112 = scmp.ne.s32.totalorder %s97, %s111
    %p113 = scmp.eq.s32.totalorder %s19, 0
    %p114 = por %p112, %p113
    %s116 = sadd.s32 %s115, 1
    %p119 = scmp.eq.s32.totalorder %s13, 3
    %p120 = scmp.ne.s32.totalorder %s115, %s117
    %p121 = scmp.eq.s32.totalorder %s13, 0
    %p122 = por %p120, %p121
    %p123 = scmp.ne.s32.totalorder %s115, %s117
    %p124 = scmp.eq.s32.totalorder %s18, 3
    %p125 = por %p123, %p124
    %p126 = scmp.ne.s32.totalorder %s117, %s118
    %p127 = scmp.eq.s32.totalorder %s18, 0
    %p128 = por %p126, %p127
    %p129 = scmp.ne.s32.totalorder %s117, %s118
    %p130 = scmp.eq.s32.totalorder %s19, 3
    %p131 = por %p129, %p130
    %p133 = scmp.ne.s32.totalorder %s118, %s132
    %p134 = scmp.eq.s32.totalorder %s19, 0
    %p135 = por %p133, %p134
    %s137 = sadd.s32 %s136, 1
    %p140 = scmp.eq.s32.totalorder %s13, 3
    %p141 = scmp.ne.s32.totalorder %s136, %s138
    %p142 = scmp.eq.s32.totalorder %s13, 0
    %p143 = por %p141, %p142
    %p144 = scmp.ne.s32.totalorder %s136, %s138
    %p145 = scmp.eq.s32.totalorder %s18, 3
    %p146 = por %p144, %p145
    %p147 = scmp.ne.s32.totalorder %s138, %s139
    %p148 = scmp.eq.s32.totalorder %s18, 0
    %p149 = por %p147, %p148
    %p150 = scmp.ne.s32.totalorder %s138, %s139
    %p151 = scmp.eq.s32.totalorder %s19, 3
    %p152 = por %p150, %p151
    %p154 = scmp.ne.s32.totalorder %s139, %s153
    %p155 = scmp.eq.s32.totalorder %s19, 0
    %p156 = por %p154, %p155
    %s158 = sadd.s32 %s157, 1
    %p161 = scmp.eq.s32.totalorder %s13, 3
    %p162 = scmp.ne.s32.totalorder %s157, %s159
    %p163 = scmp.eq.s32.totalorder %s13, 0
    %p164 = por %p162, %p163
    %p165 = scmp.ne.s32.totalorder %s157, %s159
    %p166 = scmp.eq.s32.totalorder %s18, 3
    %p167 = por %p165, %p166
    %p168 = scmp.ne.s32.totalorder %s159, %s160
    %p169 = scmp.eq.s32.totalorder %s18, 0
    %p170 = por %p168, %p169
    %p171 = scmp.ne.s32.totalorder %s159, %s160
    %p172 = scmp.eq.s32.totalorder %s19, 3
    %p173 = por %p171, %p172
    %p175 = scmp.ne.s32.totalorder %s160, %s174
    %p176 = scmp.eq.s32.totalorder %s19, 0
    %p177 = por %p175, %p176
    %s178 = ssub.s32 %s13, %s20
    %p179 = scmp.eq.s32.totalorder %s178, 0
    %s181 = sadd.s32 %s180, 1
    %s182 = scalar_select %p179, %s180, %s181
    %p185 = pneg %p179
    %p186 = scmp.eq.s32.totalorder %s13, 3
    %p187 = por %p185, %p186
    %p188 = scmp.ne.s32.totalorder %s180, %s183
    %p189 = scmp.eq.s32.totalorder %s13, 0
    %p190 = por %p188, %p189
    %p191 = scmp.ne.s32.totalorder %s180, %s183
    %p192 = scmp.eq.s32.totalorder %s18, 3
    %p193 = por %p191, %p192
    %p194 = scmp.ne.s32.totalorder %s183, %s184
    %p195 = scmp.eq.s32.totalorder %s18, 0
    %p196 = por %p194, %p195
    %p197 = scmp.ne.s32.totalorder %s183, %s184
    %p198 = scmp.eq.s32.totalorder %s19, 3
    %p199 = por %p197, %p198
    %p201 = scmp.ne.s32.totalorder %s184, %s200
    %p202 = scmp.eq.s32.totalorder %s19, 0
    %p203 = por %p201, %p202
    %p204 = scmp.le.s32.totalorder 1, %s13
    %p205 = scmp.lt.s32.totalorder %s13, 5
    %p206 = pnand %p204, %p205
    %p207 = pneg %p206
    // Predicated region
    $region9: #{upblock_forward.3} parent=5 // pred_check
      _
    $region10: #{upblock_forward.3} parent=5 // pred_check_branch
      %209 = sbr.rel (%p206) target = $region12
    $region11: #{upblock_forward.3} parent=5 // pred_region
      %s210 = ssub.s32 %s13, 1
      // Predicated region
      $region13: #{upblock_forward.3} parent=11 // pred_check
        %p211 = pneg %p86
      $region14: #{upblock_forward.3} parent=11 // pred_check_branch
        %213 = sbr.rel (%p211) target = $region16
      $region15: #{upblock_forward.3} parent=11 // pred_region
        _
      $region16: #{upblock_forward.3} parent=11 // pred_fallthru
        _
      // Predicated region
      $region17: #{upblock_forward.3} parent=11 // pred_check
        %p214 = pneg %p107
      $region18: #{upblock_forward.3} parent=11 // pred_check_branch
        %216 = sbr.rel (%p214) target = $region20
      $region19: #{upblock_forward.3} parent=11 // pred_region
        _
      $region20: #{upblock_forward.3} parent=11 // pred_fallthru
        _
      // Predicated region
      $region21: #{upblock_forward.3} parent=11 // pred_check
        %p217 = pneg %p128
      $region22: #{upblock_forward.3} parent=11 // pred_check_branch
        %219 = sbr.rel (%p217) target = $region24
      $region23: #{upblock_forward.3} parent=11 // pred_region
        _
      $region24: #{upblock_forward.3} parent=11 // pred_fallthru
        _
      // Predicated region
      $region25: #{upblock_forward.3} parent=11 // pred_check
        %p220 = pneg %p149
      $region26: #{upblock_forward.3} parent=11 // pred_check_branch
        %222 = sbr.rel (%p220) target = $region28
      $region27: #{upblock_forward.3} parent=11 // pred_region
        _
      $region28: #{upblock_forward.3} parent=11 // pred_fallthru
        _
      // Predicated region
      $region29: #{upblock_forward.3} parent=11 // pred_check
        %p223 = pneg %p170
      $region30: #{upblock_forward.3} parent=11 // pred_check_branch
        %225 = sbr.rel (%p223) target = $region32
      $region31: #{upblock_forward.3} parent=11 // pred_region
        _
      $region32: #{upblock_forward.3} parent=11 // pred_fallthru
        _
    $region12: #{upblock_forward.3} parent=5 // pred_fallthru
      _
    %p226 = scmp.lt.s32.totalorder %s13, 4
    // Predicated region
    $region33: #{upblock_forward.3} parent=5 // pred_check
      %p227 = pneg %p226
    $region34: #{upblock_forward.3} parent=5 // pred_check_branch
      %229 = sbr.rel (%p227) target = $region36
    $region35: #{upblock_forward.3} parent=5 // pred_region
      // Predicated region
      $region37: #{upblock_forward.3} parent=35 // pred_check
        %p230 = pneg %p33
      $region38: #{upblock_forward.3} parent=35 // pred_check_branch
        %232 = sbr.rel (%p230) target = $region40
      $region39: #{upblock_forward.3} parent=35 // pred_region
        %p233 = scmp.lt.s32.totalorder %s13, 3
        %s234 = scalar_select %p233, %s13, 3
        %s235 = smul.addr %s234, 16
        %s236 = smul.addr %s235, 4
        %s237 = scalar_lea.vmem %s0, %s236
      $region40: #{upblock_forward.3} parent=35 // pred_fallthru
        _
      // Predicated region
      $region41: #{upblock_forward.3} parent=35 // pred_check
        %p238 = pneg %p59
      $region42: #{upblock_forward.3} parent=35 // pred_check_branch
        %240 = sbr.rel (%p238) target = $region44
      $region43: #{upblock_forward.3} parent=35 // pred_region
        %p241 = scmp.lt.s32.totalorder %s13, 3
        %s242 = scalar_select %p241, %s13, 3
        %s243 = smul.addr %s242, 16
        %s244 = smul.addr %s243, 8
        %s245 = scalar_lea.vmem %s1, %s244
      $region44: #{upblock_forward.3} parent=35 // pred_fallthru
        _
    $region36: #{upblock_forward.3} parent=5 // pred_fallthru
      _
    %p246 = scmp.le.s32.totalorder 1, %s13
    %p247 = scmp.lt.s32.totalorder %s13, 5
    %p248 = pnand %p246, %p247
    %p249 = pneg %p248
    // Predicated region
    $region45: #{upblock_forward.3} parent=5 // pred_check
      _
    $region46: #{upblock_forward.3} parent=5 // pred_check_branch
      %251 = sbr.rel (%p248) target = $region48
    $region47: #{upblock_forward.3} parent=5 // pred_region
      %s252 = ssub.s32 %s13, 1
      %p253 = scmp.lt.s32.totalorder %s18, 3
      %s254 = scalar_select %p253, %s18, 3
      %s255 = smul.addr %s254, 16
      %s256 = smul.addr %s255, 4
      %s257 = scalar_lea.vmem %s0, %s256
      %p258 = pneg %p39
      %p259 = pneg %p36
      %p260 = scmp.lt.s32.totalorder %s18, 3
      %s261 = scalar_select %p260, %s18, 3
      %s262 = smul.addr %s261, 16
      %s263 = smul.addr %s262, 8
      %s264 = scalar_lea.vmem %s1, %s263
      %p265 = pneg %p65
      %p266 = pneg %p62
      %p267 = pneg %p86
      %p268 = pneg %p83
      %p269 = pneg %p107
      %p270 = pneg %p104
      %p271 = pneg %p128
      %p272 = pneg %p125
      %p273 = pneg %p149
      %p274 = pneg %p146
      %p275 = pneg %p170
      %p276 = pneg %p167
      %p277 = pneg %p196
      %p278 = pneg %p193
      %p279 = scmp.lt.s32.totalorder %s18, 3
      %s280 = scalar_select %p279, %s18, 3
      %s281 = smul.addr %s280, 16
      %s282 = smul.addr %s281, 8
      %s283 = scalar_lea.vmem %s7, %s282
      %p284 = scmp.lt.s32.totalorder %s18, 3
      %s285 = scalar_select %p284, %s18, 3
      %s286 = smul.addr %s285, 16
      %s287 = smul.addr %s286, 4
      %s288 = scalar_lea.vmem %s0, %s287
      %p289 = scmp.lt.s32.totalorder %s18, 3
      %s290 = scalar_select %p289, %s18, 3
      %s291 = smul.addr %s290, 16
      %s292 = smul.addr %s291, 8
      %s293 = scalar_lea.vmem %s1, %s292
      %p294 = scmp.lt.s32.totalorder %s18, 3
      %s295 = scalar_select %p294, %s18, 3
      %s296 = smul.addr %s295, 16
      %s297 = smul.addr %s296, 8
      %s298 = scalar_lea.vmem %s7, %s297
      %v299 = vld [vmem:[%s288] sm:$0xff]
      %v300 = vld [vmem:[%s288 + $0x8] sm:$0xff]
      %v301 = vld [vmem:[%s288 + $0x10] sm:$0xff]
      %v302 = vld [vmem:[%s288 + $0x18] sm:$0xff]
      %v303 = vld [vmem:[%s288 + $0x20] sm:$0xff]
      %v304 = vld [vmem:[%s288 + $0x28] sm:$0xff]
      %v305 = vld [vmem:[%s288 + $0x30] sm:$0xff]
      %v306 = vld [vmem:[%s288 + $0x38] sm:$0xff]
      %v307 = vld [vmem:[%s2] sm:$0xff]
      %v308 = vld [vmem:[%s2 + $0x8] sm:$0xff]
      %v309 = vld [vmem:[%s2 + $0x10] sm:$0xff]
      %v310 = vld [vmem:[%s2 + $0x18] sm:$0xff]
      %v311 = vld [vmem:[%s2 + $0x20] sm:$0xff]
      %v312 = vld [vmem:[%s2 + $0x28] sm:$0xff]
      %v313 = vld [vmem:[%s2 + $0x30] sm:$0xff]
      %v314 = vld [vmem:[%s2 + $0x38] sm:$0xff]
      %v315 = vld [vmem:[%s2 + $0x40] sm:$0xff]
      %v316 = vld [vmem:[%s2 + $0x48] sm:$0xff]
      %v317 = vld [vmem:[%s2 + $0x50] sm:$0xff]
      %v318 = vld [vmem:[%s2 + $0x58] sm:$0xff]
      %v319 = vld [vmem:[%s2 + $0x60] sm:$0xff]
      %v320 = vld [vmem:[%s2 + $0x68] sm:$0xff]
      %v321 = vld [vmem:[%s2 + $0x70] sm:$0xff]
      %v322 = vld [vmem:[%s2 + $0x78] sm:$0xff]
      %v323 = vld [vmem:[%s2 + $0x80] sm:$0xff]
      %v324 = vld [vmem:[%s2 + $0x88] sm:$0xff]
      %v325 = vld [vmem:[%s2 + $0x90] sm:$0xff]
      %v326 = vld [vmem:[%s2 + $0x98] sm:$0xff]
      %v327 = vld [vmem:[%s2 + $0xa0] sm:$0xff]
      %v328 = vld [vmem:[%s2 + $0xa8] sm:$0xff]
      %v329 = vld [vmem:[%s2 + $0xb0] sm:$0xff]
      %v330 = vld [vmem:[%s2 + $0xb8] sm:$0xff]
      %v331 = vld [vmem:[%s2 + $0xc0] sm:$0xff]
      %v332 = vld [vmem:[%s2 + $0xc8] sm:$0xff]
      %v333 = vld [vmem:[%s2 + $0xd0] sm:$0xff]
      %v334 = vld [vmem:[%s2 + $0xd8] sm:$0xff]
      %v335 = vld [vmem:[%s2 + $0xe0] sm:$0xff]
      %v336 = vld [vmem:[%s2 + $0xe8] sm:$0xff]
      %v337 = vld [vmem:[%s2 + $0xf0] sm:$0xff]
      %v338 = vld [vmem:[%s2 + $0xf8] sm:$0xff]
      %v339 = vld [vmem:[%s3] sm:$0x3]
      %v341 = vlaneseq
      %v342 = vshrl.u32 %v341, 7
      %v343 = vsub.s32 0, %v342
      %v344 = vrot.slane %v339, %v343
      %v345 = vlaneseq
      %v346 = vshrl.u32 %v345, 7
      %v347 = vsub.s32 1, %v346
      %v348 = vrot.slane %v339, %v347
      %v359 = vunpack.c.l.b16 %v299
      %v360 = vunpack.c.h.b16 %v299
      %v361 = vunpack.c.l.b16 %v300
      %v362 = vunpack.c.h.b16 %v300
      %v363 = vunpack.c.l.b16 %v301
      %v364 = vunpack.c.h.b16 %v301
      %v365 = vunpack.c.l.b16 %v302
      %v366 = vunpack.c.h.b16 %v302
      %v367 = vunpack.c.l.b16 %v303
      %v368 = vunpack.c.h.b16 %v303
      %v369 = vunpack.c.l.b16 %v304
      %v370 = vunpack.c.h.b16 %v304
      %v371 = vunpack.c.l.b16 %v305
      %v372 = vunpack.c.h.b16 %v305
      %v373 = vunpack.c.l.b16 %v306
      %v374 = vunpack.c.h.b16 %v306
      %v375 = vpack.c.b16 %v361, %v359
      %v376 = vpack.c.b16 %v362, %v360
      %v377 = vpack.c.b16 %v365, %v363
      %v378 = vpack.c.b16 %v366, %v364
      %v379 = vpack.c.b16 %v369, %v367
      %v380 = vpack.c.b16 %v370, %v368
      %v381 = vpack.c.b16 %v373, %v371
      %v382 = vpack.c.b16 %v374, %v372
      %v423 = vunpack.c.l.b16 %v307
      %v424 = vunpack.c.h.b16 %v307
      %v425 = vunpack.c.l.b16 %v308
      %v426 = vunpack.c.h.b16 %v308
      %v427 = vunpack.c.l.b16 %v309
      %v428 = vunpack.c.h.b16 %v309
      %v429 = vunpack.c.l.b16 %v310
      %v430 = vunpack.c.h.b16 %v310
      %v431 = vunpack.c.l.b16 %v311
      %v432 = vunpack.c.h.b16 %v311
      %v433 = vunpack.c.l.b16 %v312
      %v434 = vunpack.c.h.b16 %v312
      %v435 = vunpack.c.l.b16 %v313
      %v436 = vunpack.c.h.b16 %v313
      %v437 = vunpack.c.l.b16 %v314
      %v438 = vunpack.c.h.b16 %v314
      %v439 = vunpack.c.l.b16 %v315
      %v440 = vunpack.c.h.b16 %v315
      %v441 = vunpack.c.l.b16 %v316
      %v442 = vunpack.c.h.b16 %v316
      %v443 = vunpack.c.l.b16 %v317
      %v444 = vunpack.c.h.b16 %v317
      %v445 = vunpack.c.l.b16 %v318
      %v446 = vunpack.c.h.b16 %v318
      %v447 = vunpack.c.l.b16 %v319
      %v448 = vunpack.c.h.b16 %v319
      %v449 = vunpack.c.l.b16 %v320
      %v450 = vunpack.c.h.b16 %v320
      %v451 = vunpack.c.l.b16 %v321
      %v452 = vunpack.c.h.b16 %v321
      %v453 = vunpack.c.l.b16 %v322
      %v454 = vunpack.c.h.b16 %v322
      %v455 = vunpack.c.l.b16 %v323
      %v456 = vunpack.c.h.b16 %v323
      %v457 = vunpack.c.l.b16 %v324
      %v458 = vunpack.c.h.b16 %v324
      %v459 = vunpack.c.l.b16 %v325
      %v460 = vunpack.c.h.b16 %v325
      %v461 = vunpack.c.l.b16 %v326
      %v462 = vunpack.c.h.b16 %v326
      %v463 = vunpack.c.l.b16 %v327
      %v464 = vunpack.c.h.b16 %v327
      %v465 = vunpack.c.l.b16 %v328
      %v466 = vunpack.c.h.b16 %v328
      %v467 = vunpack.c.l.b16 %v329
      %v468 = vunpack.c.h.b16 %v329
      %v469 = vunpack.c.l.b16 %v330
      %v470 = vunpack.c.h.b16 %v330
      %v471 = vunpack.c.l.b16 %v331
      %v472 = vunpack.c.h.b16 %v331
      %v473 = vunpack.c.l.b16 %v332
      %v474 = vunpack.c.h.b16 %v332
      %v475 = vunpack.c.l.b16 %v333
      %v476 = vunpack.c.h.b16 %v333
      %v477 = vunpack.c.l.b16 %v334
      %v478 = vunpack.c.h.b16 %v334
      %v479 = vunpack.c.l.b16 %v335
      %v480 = vunpack.c.h.b16 %v335
      %v481 = vunpack.c.l.b16 %v336
      %v482 = vunpack.c.h.b16 %v336
      %v483 = vunpack.c.l.b16 %v337
      %v484 = vunpack.c.h.b16 %v337
      %v485 = vunpack.c.l.b16 %v338
      %v486 = vunpack.c.h.b16 %v338
      %v487 = vpack.c.b16 %v425, %v423
      %v488 = vpack.c.b16 %v426, %v424
      %v489 = vpack.c.b16 %v429, %v427
      %v490 = vpack.c.b16 %v430, %v428
      %v491 = vpack.c.b16 %v433, %v431
      %v492 = vpack.c.b16 %v434, %v432
      %v493 = vpack.c.b16 %v437, %v435
      %v494 = vpack.c.b16 %v438, %v436
      %v495 = vpack.c.b16 %v441, %v439
      %v496 = vpack.c.b16 %v442, %v440
      %v497 = vpack.c.b16 %v445, %v443
      %v498 = vpack.c.b16 %v446, %v444
      %v499 = vpack.c.b16 %v449, %v447
      %v500 = vpack.c.b16 %v450, %v448
      %v501 = vpack.c.b16 %v453, %v451
      %v502 = vpack.c.b16 %v454, %v452
      %v503 = vpack.c.b16 %v457, %v455
      %v504 = vpack.c.b16 %v458, %v456
      %v505 = vpack.c.b16 %v461, %v459
      %v506 = vpack.c.b16 %v462, %v460
      %v507 = vpack.c.b16 %v465, %v463
      %v508 = vpack.c.b16 %v466, %v464
      %v509 = vpack.c.b16 %v469, %v467
      %v510 = vpack.c.b16 %v470, %v468
      %v511 = vpack.c.b16 %v473, %v471
      %v512 = vpack.c.b16 %v474, %v472
      %v513 = vpack.c.b16 %v477, %v475
      %v514 = vpack.c.b16 %v478, %v476
      %v515 = vpack.c.b16 %v481, %v479
      %v516 = vpack.c.b16 %v482, %v480
      %v517 = vpack.c.b16 %v485, %v483
      %v518 = vpack.c.b16 %v486, %v484
      %551 = vmatprep.subr.bf16.mxu0 %v502
      %552 = vmatpush1.bf16.msra.mxu0 %v501
      %553 = vmatprep.subr.bf16.mxu0 %v500
      %554 = vmatpush1.bf16.msra.mxu0 %v499
      %555 = vmatprep.subr.bf16.mxu0 %v498
      %556 = vmatpush1.bf16.msra.mxu0 %v497
      %557 = vmatprep.subr.bf16.mxu0 %v496
      %558 = vmatpush1.bf16.msra.mxu0 %v495
      %559 = vmatprep.subr.bf16.mxu0 %v494
      %560 = vmatpush1.bf16.msra.mxu0 %v493
      %561 = vmatprep.subr.bf16.mxu0 %v492
      %562 = vmatpush1.bf16.msra.mxu0 %v491
      %563 = vmatprep.subr.bf16.mxu0 %v490
      %564 = vmatpush1.bf16.msra.mxu0 %v489
      %565 = vmatprep.subr.bf16.mxu0 %v488
      %566 = vmatpush1.bf16.msra.mxu0 %v487
      %567 = vmatprep.subr.bf16.mxu0 %v518
      %568 = vmatpush2.bf16.msra.mxu0 %v517
      %569 = vmatprep.subr.bf16.mxu0 %v516
      %570 = vmatpush2.bf16.msra.mxu0 %v515
      %571 = vmatprep.subr.bf16.mxu0 %v514
      %572 = vmatpush2.bf16.msra.mxu0 %v513
      %573 = vmatprep.subr.bf16.mxu0 %v512
      %574 = vmatpush2.bf16.msra.mxu0 %v511
      %575 = vmatprep.subr.bf16.mxu0 %v510
      %576 = vmatpush2.bf16.msra.mxu0 %v509
      %577 = vmatprep.subr.bf16.mxu0 %v508
      %578 = vmatpush2.bf16.msra.mxu0 %v507
      %579 = vmatprep.subr.bf16.mxu0 %v506
      %580 = vmatpush2.bf16.msra.mxu0 %v505
      %581 = vmatprep.subr.bf16.mxu0 %v504
      %582 = vmatpush2.bf16.msra.mxu0 %v503
      %583 = vmatprep.mubr.bf16.mxu0 %v376
      %584 = vmatmul.mubr.bf16.gmra.mxu0 %v375
      %v585 = vpop.f32.mrf.mxu0
      %v586 = vadd.f32 %v344, %v585
      %v587 = vpop.f32.mrf.mxu0
      %v588 = vadd.f32 %v348, %v587
      %v589 = vpop.f32.mrf.mxu0
      %v590 = vadd.f32 %v344, %v589
      %v591 = vpop.f32.mrf.mxu0
      %v592 = vadd.f32 %v348, %v591
      %593 = vmatprep.mubr.bf16.mxu0 %v378
      %594 = vmatmul.mubr.bf16.gmra.mxu0 %v377
      %v595 = vpop.f32.mrf.mxu0
      %v596 = vadd.f32 %v344, %v595
      %v597 = vpop.f32.mrf.mxu0
      %v598 = vadd.f32 %v348, %v597
      %v599 = vpop.f32.mrf.mxu0
      %v600 = vadd.f32 %v344, %v599
      %v601 = vpop.f32.mrf.mxu0
      %v602 = vadd.f32 %v348, %v601
      %603 = vmatprep.mubr.bf16.mxu0 %v380
      %604 = vmatmul.mubr.bf16.gmra.mxu0 %v379
      %v605 = vpop.f32.mrf.mxu0
      %v606 = vadd.f32 %v344, %v605
      %v607 = vpop.f32.mrf.mxu0
      %v608 = vadd.f32 %v348, %v607
      %v609 = vpop.f32.mrf.mxu0
      %v610 = vadd.f32 %v344, %v609
      %v611 = vpop.f32.mrf.mxu0
      %v612 = vadd.f32 %v348, %v611
      %613 = vmatprep.mubr.bf16.mxu0 %v382
      %614 = vmatmul.mubr.bf16.gmra.mxu0 %v381
      %v615 = vpop.f32.mrf.mxu0
      %v616 = vadd.f32 %v344, %v615
      %v617 = vpop.f32.mrf.mxu0
      %v618 = vadd.f32 %v348, %v617
      %v619 = vpop.f32.mrf.mxu0
      %v620 = vadd.f32 %v344, %v619
      %v621 = vpop.f32.mrf.mxu0
      %v622 = vadd.f32 %v348, %v621
      %623 = vdwg.mxu0
      %v624 = vmax.f32 %v586, 0.0
      %v625 = vmax.f32 %v588, 0.0
      %v626 = vmax.f32 %v590, 0.0
      %v627 = vmax.f32 %v592, 0.0
      %v628 = vmax.f32 %v596, 0.0
      %v629 = vmax.f32 %v598, 0.0
      %v630 = vmax.f32 %v600, 0.0
      %v631 = vmax.f32 %v602, 0.0
      %v632 = vmax.f32 %v606, 0.0
      %v633 = vmax.f32 %v608, 0.0
      %v634 = vmax.f32 %v610, 0.0
      %v635 = vmax.f32 %v612, 0.0
      %v636 = vmax.f32 %v616, 0.0
      %v637 = vmax.f32 %v618, 0.0
      %v638 = vmax.f32 %v620, 0.0
      %v639 = vmax.f32 %v622, 0.0
      %640 = vst [vmem:[#allocation2] sm:$0xff] %v624
      %641 = vst [vmem:[#allocation2 + $0x8] sm:$0xff] %v625
      %642 = vst [vmem:[#allocation2 + $0x10] sm:$0xff] %v626
      %643 = vst [vmem:[#allocation2 + $0x18] sm:$0xff] %v627
      %644 = vst [vmem:[#allocation2 + $0x20] sm:$0xff] %v628
      %645 = vst [vmem:[#allocation2 + $0x28] sm:$0xff] %v629
      %646 = vst [vmem:[#allocation2 + $0x30] sm:$0xff] %v630
      %647 = vst [vmem:[#allocation2 + $0x38] sm:$0xff] %v631
      %648 = vst [vmem:[#allocation2 + $0x40] sm:$0xff] %v632
      %649 = vst [vmem:[#allocation2 + $0x48] sm:$0xff] %v633
      %650 = vst [vmem:[#allocation2 + $0x50] sm:$0xff] %v634
      %651 = vst [vmem:[#allocation2 + $0x58] sm:$0xff] %v635
      %652 = vst [vmem:[#allocation2 + $0x60] sm:$0xff] %v636
      %653 = vst [vmem:[#allocation2 + $0x68] sm:$0xff] %v637
      %654 = vst [vmem:[#allocation2 + $0x70] sm:$0xff] %v638
      %655 = vst [vmem:[#allocation2 + $0x78] sm:$0xff] %v639
      %v656 = vadd.f32 %v624, %v626
      %v657 = vadd.f32 %v656, %v628
      %v658 = vadd.f32 %v657, %v630
      %v659 = vadd.f32 %v658, %v632
      %v660 = vadd.f32 %v659, %v634
      %v661 = vadd.f32 %v660, %v636
      %v662 = vadd.f32 %v661, %v638
      %v663 = vrot.slane %v662, 4
      %v664 = vadd.f32 %v662, %v663
      %v665 = vrot.slane %v664, 2
      %v666 = vadd.f32 %v664, %v665
      %v667 = vrot.slane %v666, 1
      %v668 = vadd.f32 %v666, %v667
      %v669 = vadd.f32 %v625, %v627
      %v670 = vadd.f32 %v669, %v629
      %v671 = vadd.f32 %v670, %v631
      %v672 = vadd.f32 %v671, %v633
      %v673 = vadd.f32 %v672, %v635
      %v674 = vadd.f32 %v673, %v637
      %v675 = vadd.f32 %v674, %v639
      %v676 = vrot.slane %v675, 4
      %v677 = vadd.f32 %v675, %v676
      %v678 = vrot.slane %v677, 2
      %v679 = vadd.f32 %v677, %v678
      %v680 = vrot.slane %v679, 1
      %v681 = vadd.f32 %v679, %v680
      %v682 = vmul.f32 %v624, %v624
      %v683 = vmul.f32 %v625, %v625
      %v684 = vmul.f32 %v626, %v626
      %v685 = vmul.f32 %v627, %v627
      %v686 = vmul.f32 %v628, %v628
      %v687 = vmul.f32 %v629, %v629
      %v688 = vmul.f32 %v630, %v630
      %v689 = vmul.f32 %v631, %v631
      %v690 = vmul.f32 %v632, %v632
      %v691 = vmul.f32 %v633, %v633
      %v692 = vmul.f32 %v634, %v634
      %v693 = vmul.f32 %v635, %v635
      %v694 = vmul.f32 %v636, %v636
      %v695 = vmul.f32 %v637, %v637
      %v696 = vmul.f32 %v638, %v638
      %v697 = vmul.f32 %v639, %v639
      %v698 = vadd.f32 %v682, %v684
      %v699 = vadd.f32 %v698, %v686
      %v700 = vadd.f32 %v699, %v688
      %v701 = vadd.f32 %v700, %v690
      %v702 = vadd.f32 %v701, %v692
      %v703 = vadd.f32 %v702, %v694
      %v704 = vadd.f32 %v703, %v696
      %v705 = vrot.slane %v704, 4
      %v706 = vadd.f32 %v704, %v705
      %v707 = vrot.slane %v706, 2
      %v708 = vadd.f32 %v706, %v707
      %v709 = vrot.slane %v708, 1
      %v710 = vadd.f32 %v708, %v709
      %v711 = vadd.f32 %v683, %v685
      %v712 = vadd.f32 %v711, %v687
      %v713 = vadd.f32 %v712, %v689
      %v714 = vadd.f32 %v713, %v691
      %v715 = vadd.f32 %v714, %v693
      %v716 = vadd.f32 %v715, %v695
      %v717 = vadd.f32 %v716, %v697
      %v718 = vrot.slane %v717, 4
      %v719 = vadd.f32 %v717, %v718
      %v720 = vrot.slane %v719, 2
      %v721 = vadd.f32 %v719, %v720
      %v722 = vrot.slane %v721, 1
      %v723 = vadd.f32 %v721, %v722
      %vm724 = vcmask 1040384
      %v725 = vsel %vm724, %v668, %v710
      %v726 = vsel %vm724, %v681, %v723
      %v727 = vld [vmem:[%s6] sm:$0xff]
      %v728 = vld [vmem:[%s6 + $0x8] sm:$0xff]
      %v729 = vld [vmem:[%s6 + $0x10] sm:$0xff]
      %v730 = vld [vmem:[%s6 + $0x18] sm:$0xff]
      %v731 = vld [vmem:[%s6 + $0x20] sm:$0xff]
      %v732 = vld [vmem:[%s6 + $0x28] sm:$0xff]
      %v733 = vld [vmem:[%s6 + $0x30] sm:$0xff]
      %v734 = vld [vmem:[%s6 + $0x38] sm:$0xff]
      %v735 = vld [vmem:[%s6 + $0x40] sm:$0xff]
      %v736 = vld [vmem:[%s6 + $0x48] sm:$0xff]
      %v737 = vld [vmem:[%s6 + $0x50] sm:$0xff]
      %v738 = vld [vmem:[%s6 + $0x58] sm:$0xff]
      %v739 = vld [vmem:[%s6 + $0x60] sm:$0xff]
      %v740 = vld [vmem:[%s6 + $0x68] sm:$0xff]
      %v741 = vld [vmem:[%s6 + $0x70] sm:$0xff]
      %v742 = vld [vmem:[%s6 + $0x78] sm:$0xff]
      %v743 = vld [vmem:[%s6 + $0x80] sm:$0xff]
      %v744 = vld [vmem:[%s6 + $0x88] sm:$0xff]
      %v745 = vld [vmem:[%s6 + $0x90] sm:$0xff]
      %v746 = vld [vmem:[%s6 + $0x98] sm:$0xff]
      %v747 = vld [vmem:[%s6 + $0xa0] sm:$0xff]
      %v748 = vld [vmem:[%s6 + $0xa8] sm:$0xff]
      %v749 = vld [vmem:[%s6 + $0xb0] sm:$0xff]
      %v750 = vld [vmem:[%s6 + $0xb8] sm:$0xff]
      %v751 = vld [vmem:[%s6 + $0xc0] sm:$0xff]
      %v752 = vld [vmem:[%s6 + $0xc8] sm:$0xff]
      %v753 = vld [vmem:[%s6 + $0xd0] sm:$0xff]
      %v754 = vld [vmem:[%s6 + $0xd8] sm:$0xff]
      %v755 = vld [vmem:[%s6 + $0xe0] sm:$0xff]
      %v756 = vld [vmem:[%s6 + $0xe8] sm:$0xff]
      %v757 = vld [vmem:[%s6 + $0xf0] sm:$0xff]
      %v758 = vld [vmem:[%s6 + $0xf8] sm:$0xff]
      %v759 = vld [vmem:[%s6 + $0x100] sm:$0xff]
      %v760 = vld [vmem:[%s6 + $0x108] sm:$0xff]
      %v761 = vld [vmem:[%s6 + $0x110] sm:$0xff]
      %v762 = vld [vmem:[%s6 + $0x118] sm:$0xff]
      %v763 = vld [vmem:[%s6 + $0x120] sm:$0xff]
      %v764 = vld [vmem:[%s6 + $0x128] sm:$0xff]
      %v765 = vld [vmem:[%s6 + $0x130] sm:$0xff]
      %v766 = vld [vmem:[%s6 + $0x138] sm:$0xff]
      %v767 = vld [vmem:[%s6 + $0x140] sm:$0xff]
      %v768 = vld [vmem:[%s6 + $0x148] sm:$0xff]
      %v769 = vld [vmem:[%s6 + $0x150] sm:$0xff]
      %v770 = vld [vmem:[%s6 + $0x158] sm:$0xff]
      %v771 = vld [vmem:[%s6 + $0x160] sm:$0xff]
      %v772 = vld [vmem:[%s6 + $0x168] sm:$0xff]
      %v773 = vld [vmem:[%s6 + $0x170] sm:$0xff]
      %v774 = vld [vmem:[%s6 + $0x178] sm:$0xff]
      %v775 = vld [vmem:[%s6 + $0x180] sm:$0xff]
      %v776 = vld [vmem:[%s6 + $0x188] sm:$0xff]
      %v777 = vld [vmem:[%s6 + $0x190] sm:$0xff]
      %v778 = vld [vmem:[%s6 + $0x198] sm:$0xff]
      %v779 = vld [vmem:[%s6 + $0x1a0] sm:$0xff]
      %v780 = vld [vmem:[%s6 + $0x1a8] sm:$0xff]
      %v781 = vld [vmem:[%s6 + $0x1b0] sm:$0xff]
      %v782 = vld [vmem:[%s6 + $0x1b8] sm:$0xff]
      %v783 = vld [vmem:[%s6 + $0x1c0] sm:$0xff]
      %v784 = vld [vmem:[%s6 + $0x1c8] sm:$0xff]
      %v785 = vld [vmem:[%s6 + $0x1d0] sm:$0xff]
      %v786 = vld [vmem:[%s6 + $0x1d8] sm:$0xff]
      %v787 = vld [vmem:[%s6 + $0x1e0] sm:$0xff]
      %v788 = vld [vmem:[%s6 + $0x1e8] sm:$0xff]
      %v789 = vld [vmem:[%s6 + $0x1f0] sm:$0xff]
      %v790 = vld [vmem:[%s6 + $0x1f8] sm:$0xff]
      %791 = vmatprep.subr.mxu0 %v758
      %792 = vmatpush1.msra.mxu0 %v757
      %793 = vmatprep.subr.mxu0 %v756
      %794 = vmatpush1.msra.mxu0 %v755
      %795 = vmatprep.subr.mxu0 %v754
      %796 = vmatpush1.msra.mxu0 %v753
      %797 = vmatprep.subr.mxu0 %v752
      %798 = vmatpush1.msra.mxu0 %v751
      %799 = vmatprep.subr.mxu0 %v750
      %800 = vmatpush1.msra.mxu0 %v749
      %801 = vmatprep.subr.mxu0 %v748
      %802 = vmatpush1.msra.mxu0 %v747
      %803 = vmatprep.subr.mxu0 %v746
      %804 = vmatpush1.msra.mxu0 %v745
      %805 = vmatprep.subr.mxu0 %v744
      %806 = vmatpush1.msra.mxu0 %v743
      %807 = vmatprep.subr.mxu0 %v742
      %808 = vmatpush1.msra.mxu0 %v741
      %809 = vmatprep.subr.mxu0 %v740
      %810 = vmatpush1.msra.mxu0 %v739
      %811 = vmatprep.subr.mxu0 %v738
      %812 = vmatpush1.msra.mxu0 %v737
      %813 = vmatprep.subr.mxu0 %v736
      %814 = vmatpush1.msra.mxu0 %v735
      %815 = vmatprep.subr.mxu0 %v734
      %816 = vmatpush1.msra.mxu0 %v733
      %817 = vmatprep.subr.mxu0 %v732
      %818 = vmatpush1.msra.mxu0 %v731
      %819 = vmatprep.subr.mxu0 %v730
      %820 = vmatpush1.msra.mxu0 %v729
      %821 = vmatprep.subr.mxu0 %v728
      %822 = vmatpush1.msra.mxu0 %v727
      %823 = vmatprep.subr.mxu0 %v790
      %824 = vmatpush2.msra.mxu0 %v789
      %825 = vmatprep.subr.mxu0 %v788
      %826 = vmatpush2.msra.mxu0 %v787
      %827 = vmatprep.subr.mxu0 %v786
      %828 = vmatpush2.msra.mxu0 %v785
      %829 = vmatprep.subr.mxu0 %v784
      %830 = vmatpush2.msra.mxu0 %v783
      %831 = vmatprep.subr.mxu0 %v782
      %832 = vmatpush2.msra.mxu0 %v781
      %833 = vmatprep.subr.mxu0 %v780
      %834 = vmatpush2.msra.mxu0 %v779
      %835 = vmatprep.subr.mxu0 %v778
      %836 = vmatpush2.msra.mxu0 %v777
      %837 = vmatprep.subr.mxu0 %v776
      %838 = vmatpush2.msra.mxu0 %v775
      %839 = vmatprep.subr.mxu0 %v774
      %840 = vmatpush2.msra.mxu0 %v773
      %841 = vmatprep.subr.mxu0 %v772
      %842 = vmatpush2.msra.mxu0 %v771
      %843 = vmatprep.subr.mxu0 %v770
      %844 = vmatpush2.msra.mxu0 %v769
      %845 = vmatprep.subr.mxu0 %v768
      %846 = vmatpush2.msra.mxu0 %v767
      %847 = vmatprep.subr.mxu0 %v766
      %848 = vmatpush2.msra.mxu0 %v765
      %849 = vmatprep.subr.mxu0 %v764
      %850 = vmatpush2.msra.mxu0 %v763
      %851 = vmatprep.subr.mxu0 %v762
      %852 = vmatpush2.msra.mxu0 %v761
      %853 = vmatprep.subr.mxu0 %v760
      %854 = vmatpush2.msra.mxu0 %v759
      %855 = vmatprep.mubr.f32.mxu0 %v726
      %856 = vmatmul.mubr.f32.gmra.mxu0 %v725
      %v857 = vpop.f32.mrf.mxu0
      %v858 = vadd.f32 0.0, %v857
      %v859 = vpop.f32.mrf.mxu0
      %v860 = vadd.f32 0.0, %v859
      %861 = vdwg.mxu0
      %v862 = vmul.f32 %v858, %v858
      %v863 = vmul.f32 %v860, %v860
      %v866 = vrot.slane %v862, 7
      %v867 = vrot.slane %v863, 7
      %v870 = vsub.f32 %v858, %v866
      %v871 = vsub.f32 %v860, %v867
      %v872 = vadd.f32 %v870, 1e-05
      %v873 = vadd.f32 %v871, 1e-05
      %v874 = vrsqrt.pop %v872
      %v875 = vrsqrt.pop %v873
      %v876 = vld [vmem:[#allocation2] sm:$0xff]
      %v877 = vld [vmem:[#allocation2 + $0x8] sm:$0xff]
      %v878 = vld [vmem:[#allocation2 + $0x10] sm:$0xff]
      %v879 = vld [vmem:[#allocation2 + $0x18] sm:$0xff]
      %v880 = vld [vmem:[#allocation2 + $0x20] sm:$0xff]
      %v881 = vld [vmem:[#allocation2 + $0x28] sm:$0xff]
      %v882 = vld [vmem:[#allocation2 + $0x30] sm:$0xff]
      %v883 = vld [vmem:[#allocation2 + $0x38] sm:$0xff]
      %v884 = vld [vmem:[#allocation2 + $0x40] sm:$0xff]
      %v885 = vld [vmem:[#allocation2 + $0x48] sm:$0xff]
      %v886 = vld [vmem:[#allocation2 + $0x50] sm:$0xff]
      %v887 = vld [vmem:[#allocation2 + $0x58] sm:$0xff]
      %v888 = vld [vmem:[#allocation2 + $0x60] sm:$0xff]
      %v889 = vld [vmem:[#allocation2 + $0x68] sm:$0xff]
      %v890 = vld [vmem:[#allocation2 + $0x70] sm:$0xff]
      %v891 = vld [vmem:[#allocation2 + $0x78] sm:$0xff]
      %v892 = vlaneseq
      %v893 = vshrl.u32 %v892, 7
      %v894 = vsub.s32 0, %v893
      %v895 = vrot.slane %v858, %v894
      %v896 = vlaneseq
      %v897 = vshrl.u32 %v896, 7
      %v898 = vsub.s32 0, %v897
      %v899 = vrot.slane %v860, %v898
      %v900 = vsub.f32 %v876, %v895
      %v901 = vsub.f32 %v877, %v899
      %v902 = vsub.f32 %v878, %v895
      %v903 = vsub.f32 %v879, %v899
      %v904 = vsub.f32 %v880, %v895
      %v905 = vsub.f32 %v881, %v899
      %v906 = vsub.f32 %v882, %v895
      %v907 = vsub.f32 %v883, %v899
      %v908 = vsub.f32 %v884, %v895
      %v909 = vsub.f32 %v885, %v899
      %v910 = vsub.f32 %v886, %v895
      %v911 = vsub.f32 %v887, %v899
      %v912 = vsub.f32 %v888, %v895
      %v913 = vsub.f32 %v889, %v899
      %v914 = vsub.f32 %v890, %v895
      %v915 = vsub.f32 %v891, %v899
      %v916 = vlaneseq
      %v917 = vshrl.u32 %v916, 7
      %v918 = vsub.s32 1, %v917
      %v919 = vrot.slane %v874, %v918
      %v920 = vlaneseq
      %v921 = vshrl.u32 %v920, 7
      %v922 = vsub.s32 1, %v921
      %v923 = vrot.slane %v875, %v922
      %v924 = vmul.f32 %v900, %v919
      %v925 = vmul.f32 %v901, %v923
      %v926 = vmul.f32 %v902, %v919
      %v927 = vmul.f32 %v903, %v923
      %v928 = vmul.f32 %v904, %v919
      %v929 = vmul.f32 %v905, %v923
      %v930 = vmul.f32 %v906, %v919
      %v931 = vmul.f32 %v907, %v923
      %v932 = vmul.f32 %v908, %v919
      %v933 = vmul.f32 %v909, %v923
      %v934 = vmul.f32 %v910, %v919
      %v935 = vmul.f32 %v911, %v923
      %v936 = vmul.f32 %v912, %v919
      %v937 = vmul.f32 %v913, %v923
      %v938 = vmul.f32 %v914, %v919
      %v939 = vmul.f32 %v915, %v923
      %v940 = vld [vmem:[%s4] sm:$0x3]
      %v942 = vlaneseq
      %v943 = vshrl.u32 %v942, 7
      %v944 = vsub.s32 0, %v943
      %v945 = vrot.slane %v940, %v944
      %v946 = vlaneseq
      %v947 = vshrl.u32 %v946, 7
      %v948 = vsub.s32 1, %v947
      %v949 = vrot.slane %v940, %v948
      %v952 = vmul.f32 %v924, %v945
      %v953 = vmul.f32 %v925, %v949
      %v954 = vmul.f32 %v926, %v945
      %v955 = vmul.f32 %v927, %v949
      %v956 = vmul.f32 %v928, %v945
      %v957 = vmul.f32 %v929, %v949
      %v958 = vmul.f32 %v930, %v945
      %v959 = vmul.f32 %v931, %v949
      %v960 = vmul.f32 %v932, %v945
      %v961 = vmul.f32 %v933, %v949
      %v962 = vmul.f32 %v934, %v945
      %v963 = vmul.f32 %v935, %v949
      %v964 = vmul.f32 %v936, %v945
      %v965 = vmul.f32 %v937, %v949
      %v966 = vmul.f32 %v938, %v945
      %v967 = vmul.f32 %v939, %v949
      %v968 = vld [vmem:[%s5] sm:$0x3]
      %v970 = vlaneseq
      %v971 = vshrl.u32 %v970, 7
      %v972 = vsub.s32 0, %v971
      %v973 = vrot.slane %v968, %v972
      %v974 = vlaneseq
      %v975 = vshrl.u32 %v974, 7
      %v976 = vsub.s32 1, %v975
      %v977 = vrot.slane %v968, %v976
      %v980 = vadd.f32 %v952, %v973
      %v981 = vadd.f32 %v953, %v977
      %v982 = vadd.f32 %v954, %v973
      %v983 = vadd.f32 %v955, %v977
      %v984 = vadd.f32 %v956, %v973
      %v985 = vadd.f32 %v957, %v977
      %v986 = vadd.f32 %v958, %v973
      %v987 = vadd.f32 %v959, %v977
      %v988 = vadd.f32 %v960, %v973
      %v989 = vadd.f32 %v961, %v977
      %v990 = vadd.f32 %v962, %v973
      %v991 = vadd.f32 %v963, %v977
      %v992 = vadd.f32 %v964, %v973
      %v993 = vadd.f32 %v965, %v977
      %v994 = vadd.f32 %v966, %v973
      %v995 = vadd.f32 %v967, %v977
      %v996 = vld [vmem:[%s293] sm:$0xff]
      %v997 = vld [vmem:[%s293 + $0x8] sm:$0xff]
      %v998 = vld [vmem:[%s293 + $0x10] sm:$0xff]
      %v999 = vld [vmem:[%s293 + $0x18] sm:$0xff]
      %v1000 = vld [vmem:[%s293 + $0x20] sm:$0xff]
      %v1001 = vld [vmem:[%s293 + $0x28] sm:$0xff]
      %v1002 = vld [vmem:[%s293 + $0x30] sm:$0xff]
      %v1003 = vld [vmem:[%s293 + $0x38] sm:$0xff]
      %v1004 = vld [vmem:[%s293 + $0x40] sm:$0xff]
      %v1005 = vld [vmem:[%s293 + $0x48] sm:$0xff]
      %v1006 = vld [vmem:[%s293 + $0x50] sm:$0xff]
      %v1007 = vld [vmem:[%s293 + $0x58] sm:$0xff]
      %v1008 = vld [vmem:[%s293 + $0x60] sm:$0xff]
      %v1009 = vld [vmem:[%s293 + $0x68] sm:$0xff]
      %v1010 = vld [vmem:[%s293 + $0x70] sm:$0xff]
      %v1011 = vld [vmem:[%s293 + $0x78] sm:$0xff]
      %v1012 = vadd.f32 %v980, %v996
      %v1013 = vadd.f32 %v981, %v997
      %v1014 = vadd.f32 %v982, %v998
      %v1015 = vadd.f32 %v983, %v999
      %v1016 = vadd.f32 %v984, %v1000
      %v1017 = vadd.f32 %v985, %v1001
      %v1018 = vadd.f32 %v986, %v1002
      %v1019 = vadd.f32 %v987, %v1003
      %v1020 = vadd.f32 %v988, %v1004
      %v1021 = vadd.f32 %v989, %v1005
      %v1022 = vadd.f32 %v990, %v1006
      %v1023 = vadd.f32 %v991, %v1007
      %v1024 = vadd.f32 %v992, %v1008
      %v1025 = vadd.f32 %v993, %v1009
      %v1026 = vadd.f32 %v994, %v1010
      %v1027 = vadd.f32 %v995, %v1011
      %1028 = vst [vmem:[%s298] sm:$0xff] %v1012
      %1029 = vst [vmem:[%s298 + $0x8] sm:$0xff] %v1013
      %1030 = vst [vmem:[%s298 + $0x10] sm:$0xff] %v1014
      %1031 = vst [vmem:[%s298 + $0x18] sm:$0xff] %v1015
      %1032 = vst [vmem:[%s298 + $0x20] sm:$0xff] %v1016
      %1033 = vst [vmem:[%s298 + $0x28] sm:$0xff] %v1017
      %1034 = vst [vmem:[%s298 + $0x30] sm:$0xff] %v1018
      %1035 = vst [vmem:[%s298 + $0x38] sm:$0xff] %v1019
      %1036 = vst [vmem:[%s298 + $0x40] sm:$0xff] %v1020
      %1037 = vst [vmem:[%s298 + $0x48] sm:$0xff] %v1021
      %1038 = vst [vmem:[%s298 + $0x50] sm:$0xff] %v1022
      %1039 = vst [vmem:[%s298 + $0x58] sm:$0xff] %v1023
      %1040 = vst [vmem:[%s298 + $0x60] sm:$0xff] %v1024
      %1041 = vst [vmem:[%s298 + $0x68] sm:$0xff] %v1025
      %1042 = vst [vmem:[%s298 + $0x70] sm:$0xff] %v1026
      %1043 = vst [vmem:[%s298 + $0x78] sm:$0xff] %v1027
      %p1044 = scmp.lt.s32.totalorder %s18, 3
      %s1045 = scalar_select %p1044, %s18, 3
      %s1046 = smul.addr %s1045, 16
      %s1047 = smul.addr %s1046, 8
      %s1048 = scalar_lea.vmem %s7, %s1047
      // Predicated region
      $region49: #{upblock_forward.3} parent=47 // pred_check
        %p1049 = pneg %p193
      $region50: #{upblock_forward.3} parent=47 // pred_check_branch
        %1051 = sbr.rel (%p1049) target = $region52
      $region51: #{upblock_forward.3} parent=47 // pred_region
        _
      $region52: #{upblock_forward.3} parent=47 // pred_fallthru
        _
    $region48: #{upblock_forward.3} parent=5 // pred_fallthru
      _
    %p1052 = scmp.le.s32.totalorder 2, %s13
    // Predicated region
    $region53: #{upblock_forward.3} parent=5 // pred_check
      %p1053 = pneg %p1052
    $region54: #{upblock_forward.3} parent=5 // pred_check_branch
      %1055 = sbr.rel (%p1053) target = $region56
    $region55: #{upblock_forward.3} parent=5 // pred_region
      %s1056 = ssub.s32 %s13, 2
      // Predicated region
      $region57: #{upblock_forward.3} parent=55 // pred_check
        %p1057 = pneg %p199
      $region58: #{upblock_forward.3} parent=55 // pred_check_branch
        %1059 = sbr.rel (%p1057) target = $region60
      $region59: #{upblock_forward.3} parent=55 // pred_region
        %p1060 = scmp.lt.s32.totalorder %s19, 3
        %s1061 = scalar_select %p1060, %s19, 3
        %s1062 = smul.addr %s1061, 16
        %s1063 = smul.addr %s1062, 8
        %s1064 = scalar_lea.vmem %s7, %s1063
      $region60: #{upblock_forward.3} parent=55 // pred_fallthru
        _
    $region56: #{upblock_forward.3} parent=5 // pred_fallthru
      _
  $region6: #{upblock_forward.3} parent=0 // loop_footer
    %s17 = sadd.s32 1, %s13
  $region7: #{upblock_forward.3} parent=0 // loop_footer_branch
    %12 = sbr.rel target = $region3
  $region8: #{upblock_forward.3} parent=0 // loop_exit
    _

// kernel: upblock_forward.4
$region0: #{upblock_forward.4}
  #allocation0 [shape = 'u32[]', space=smem, size = 0x4, offset = 0x4, fixed_abs, tag = 'smem constant byte address 0x4 - core index']
  #allocation1 [shape = 'u32[144,128]{1,0:T(1,128)}', space=vmem, size = 0x12000, scoped, tag = 'internal scratch']
  #allocation2 [shape = 'f32[64,256]{1,0:T(8,128)}', space=vmem, size = 0x10000, scoped, tag = 'scratch operand']
  %s0 = inlined_call_operand.vmem [shape: f32[4,10,10,320], index: 0, kind: input, shape index: {}]
  %s1 = inlined_call_operand.vmem [shape: bf16[9,320,256], index: 1, kind: input, shape index: {}]
  %s2 = inlined_call_operand.vmem [shape: f32[1,256], index: 2, kind: input, shape index: {}]
  %s3 = inlined_call_operand.vmem [shape: f32[1,256], index: 3, kind: input, shape index: {}]
  %s4 = inlined_call_operand.vmem [shape: f32[1,256], index: 4, kind: input, shape index: {}]
  %s5 = inlined_call_operand.vmem [shape: f32[256,256], index: 5, kind: input, shape index: {}]
  %s6 = inlined_call_operand.vmem [shape: f32[4,64,256], index: 6, kind: output, shape index: {}]
  %s7 = sld [smem:[#allocation0]]
  $region57: #{upblock_forward.4} parent=0
    _
  %s9 = ssub.s32 1, %s7
  %s10 = scalar_select 0, %s9, %s7
  loop: start=0, step=1, limit=6
  $region2: #{upblock_forward.4} parent=0 // loop_pre_header
    _
  $region3: #{upblock_forward.4} parent=0 // loop_header
    %s12 = sphi 0, %s16
    %p13 = scmp.ge.s32.totalorder %s12, 6
    %s22 = sphi 0, %s24
    %s25 = sphi 0, %s22
    %s26 = sphi 0, %s25
    %s42 = sphi 0, %s26
    %s46 = sphi 0, %s46
    %s48 = sphi 0, %s46
    %s49 = sphi 0, %s48
    %s63 = sphi 0, %s49
    %s67 = sphi 0, %s67
    %s69 = sphi 0, %s67
    %s70 = sphi 0, %s69
    %s84 = sphi 0, %s70
    %s88 = sphi 0, %s88
    %s90 = sphi 0, %s88
    %s91 = sphi 0, %s90
    %s105 = sphi 0, %s91
    %s109 = sphi 0, %s109
    %s111 = sphi 0, %s109
    %s112 = sphi 0, %s111
    %s126 = sphi 0, %s112
    %s130 = sphi 0, %s130
    %s132 = sphi 0, %s130
    %s133 = sphi 0, %s132
    %s147 = sphi 0, %s133
    %s153 = sphi 0, %s155
    %s156 = sphi 0, %s153
    %s157 = sphi 0, %s156
    %s173 = sphi 0, %s157
  $region4: #{upblock_forward.4} parent=0 // loop_header_branch
    %15 = sbr.rel (%p13) target = $region8
  $region5: #{upblock_forward.4} parent=0 // loop_body
    %s17 = ssub.s32 %s12, 1
    %s18 = ssub.s32 %s12, 2
    %s19 = sadd.s32 %s12, 1
    %s20 = ssub.s32 %s12, %s19
    %p21 = scmp.eq.s32.totalorder %s20, 0
    %s23 = sadd.s32 %s22, 1
    %s24 = scalar_select %p21, %s22, %s23
    %p27 = pneg %p21
    %p28 = scmp.eq.s32.totalorder %s12, 3
    %p29 = por %p27, %p28
    %p30 = scmp.ne.s32.totalorder %s22, %s25
    %p31 = scmp.eq.s32.totalorder %s12, 0
    %p32 = por %p30, %p31
    %p33 = scmp.ne.s32.totalorder %s22, %s25
    %p34 = scmp.eq.s32.totalorder %s17, 3
    %p35 = por %p33, %p34
    %p36 = scmp.ne.s32.totalorder %s25, %s26
    %p37 = scmp.eq.s32.totalorder %s17, 0
    %p38 = por %p36, %p37
    %p39 = scmp.ne.s32.totalorder %s25, %s26
    %p40 = scmp.eq.s32.totalorder %s18, 3
    %p41 = por %p39, %p40
    %p43 = scmp.ne.s32.totalorder %s26, %s42
    %p44 = scmp.eq.s32.totalorder %s18, 0
    %p45 = por %p43, %p44
    %s47 = sadd.s32 %s46, 1
    %p50 = scmp.eq.s32.totalorder %s12, 3
    %p51 = scmp.ne.s32.totalorder %s46, %s48
    %p52 = scmp.eq.s32.totalorder %s12, 0
    %p53 = por %p51, %p52
    %p54 = scmp.ne.s32.totalorder %s46, %s48
    %p55 = scmp.eq.s32.totalorder %s17, 3
    %p56 = por %p54, %p55
    %p57 = scmp.ne.s32.totalorder %s48, %s49
    %p58 = scmp.eq.s32.totalorder %s17, 0
    %p59 = por %p57, %p58
    %p60 = scmp.ne.s32.totalorder %s48, %s49
    %p61 = scmp.eq.s32.totalorder %s18, 3
    %p62 = por %p60, %p61
    %p64 = scmp.ne.s32.totalorder %s49, %s63
    %p65 = scmp.eq.s32.totalorder %s18, 0
    %p66 = por %p64, %p65
    %s68 = sadd.s32 %s67, 1
    %p71 = scmp.eq.s32.totalorder %s12, 3
    %p72 = scmp.ne.s32.totalorder %s67, %s69
    %p73 = scmp.eq.s32.totalorder %s12, 0
    %p74 = por %p72, %p73
    %p75 = scmp.ne.s32.totalorder %s67, %s69
    %p76 = scmp.eq.s32.totalorder %s17, 3
    %p77 = por %p75, %p76
    %p78 = scmp.ne.s32.totalorder %s69, %s70
    %p79 = scmp.eq.s32.totalorder %s17, 0
    %p80 = por %p78, %p79
    %p81 = scmp.ne.s32.totalorder %s69, %s70
    %p82 = scmp.eq.s32.totalorder %s18, 3
    %p83 = por %p81, %p82
    %p85 = scmp.ne.s32.totalorder %s70, %s84
    %p86 = scmp.eq.s32.totalorder %s18, 0
    %p87 = por %p85, %p86
    %s89 = sadd.s32 %s88, 1
    %p92 = scmp.eq.s32.totalorder %s12, 3
    %p93 = scmp.ne.s32.totalorder %s88, %s90
    %p94 = scmp.eq.s32.totalorder %s12, 0
    %p95 = por %p93, %p94
    %p96 = scmp.ne.s32.totalorder %s88, %s90
    %p97 = scmp.eq.s32.totalorder %s17, 3
    %p98 = por %p96, %p97
    %p99 = scmp.ne.s32.totalorder %s90, %s91
    %p100 = scmp.eq.s32.totalorder %s17, 0
    %p101 = por %p99, %p100
    %p102 = scmp.ne.s32.totalorder %s90, %s91
    %p103 = scmp.eq.s32.totalorder %s18, 3
    %p104 = por %p102, %p103
    %p106 = scmp.ne.s32.totalorder %s91, %s105
    %p107 = scmp.eq.s32.totalorder %s18, 0
    %p108 = por %p106, %p107
    %s110 = sadd.s32 %s109, 1
    %p113 = scmp.eq.s32.totalorder %s12, 3
    %p114 = scmp.ne.s32.totalorder %s109, %s111
    %p115 = scmp.eq.s32.totalorder %s12, 0
    %p116 = por %p114, %p115
    %p117 = scmp.ne.s32.totalorder %s109, %s111
    %p118 = scmp.eq.s32.totalorder %s17, 3
    %p119 = por %p117, %p118
    %p120 = scmp.ne.s32.totalorder %s111, %s112
    %p121 = scmp.eq.s32.totalorder %s17, 0
    %p122 = por %p120, %p121
    %p123 = scmp.ne.s32.totalorder %s111, %s112
    %p124 = scmp.eq.s32.totalorder %s18, 3
    %p125 = por %p123, %p124
    %p127 = scmp.ne.s32.totalorder %s112, %s126
    %p128 = scmp.eq.s32.totalorder %s18, 0
    %p129 = por %p127, %p128
    %s131 = sadd.s32 %s130, 1
    %p134 = scmp.eq.s32.totalorder %s12, 3
    %p135 = scmp.ne.s32.totalorder %s130, %s132
    %p136 = scmp.eq.s32.totalorder %s12, 0
    %p137 = por %p135, %p136
    %p138 = scmp.ne.s32.totalorder %s130, %s132
    %p139 = scmp.eq.s32.totalorder %s17, 3
    %p140 = por %p138, %p139
    %p141 = scmp.ne.s32.totalorder %s132, %s133
    %p142 = scmp.eq.s32.totalorder %s17, 0
    %p143 = por %p141, %p142
    %p144 = scmp.ne.s32.totalorder %s132, %s133
    %p145 = scmp.eq.s32.totalorder %s18, 3
    %p146 = por %p144, %p145
    %p148 = scmp.ne.s32.totalorder %s133, %s147
    %p149 = scmp.eq.s32.totalorder %s18, 0
    %p150 = por %p148, %p149
    %s151 = ssub.s32 %s12, %s19
    %p152 = scmp.eq.s32.totalorder %s151, 0
    %s154 = sadd.s32 %s153, 1
    %s155 = scalar_select %p152, %s153, %s154
    %p158 = pneg %p152
    %p159 = scmp.eq.s32.totalorder %s12, 3
    %p160 = por %p158, %p159
    %p161 = scmp.ne.s32.totalorder %s153, %s156
    %p162 = scmp.eq.s32.totalorder %s12, 0
    %p163 = por %p161, %p162
    %p164 = scmp.ne.s32.totalorder %s153, %s156
    %p165 = scmp.eq.s32.totalorder %s17, 3
    %p166 = por %p164, %p165
    %p167 = scmp.ne.s32.totalorder %s156, %s157
    %p168 = scmp.eq.s32.totalorder %s17, 0
    %p169 = por %p167, %p168
    %p170 = scmp.ne.s32.totalorder %s156, %s157
    %p171 = scmp.eq.s32.totalorder %s18, 3
    %p172 = por %p170, %p171
    %p174 = scmp.ne.s32.totalorder %s157, %s173
    %p175 = scmp.eq.s32.totalorder %s18, 0
    %p176 = por %p174, %p175
    %p177 = scmp.le.s32.totalorder 1, %s12
    %p178 = scmp.lt.s32.totalorder %s12, 5
    %p179 = pnand %p177, %p178
    %p180 = pneg %p179
    // Predicated region
    $region9: #{upblock_forward.4} parent=5 // pred_check
      _
    $region10: #{upblock_forward.4} parent=5 // pred_check_branch
      %182 = sbr.rel (%p179) target = $region12
    $region11: #{upblock_forward.4} parent=5 // pred_region
      %s183 = ssub.s32 %s12, 1
      // Predicated region
      $region13: #{upblock_forward.4} parent=11 // pred_check
        %p184 = pneg %p59
      $region14: #{upblock_forward.4} parent=11 // pred_check_branch
        %186 = sbr.rel (%p184) target = $region16
      $region15: #{upblock_forward.4} parent=11 // pred_region
        _
      $region16: #{upblock_forward.4} parent=11 // pred_fallthru
        _
      // Predicated region
      $region17: #{upblock_forward.4} parent=11 // pred_check
        %p187 = pneg %p80
      $region18: #{upblock_forward.4} parent=11 // pred_check_branch
        %189 = sbr.rel (%p187) target = $region20
      $region19: #{upblock_forward.4} parent=11 // pred_region
        _
      $region20: #{upblock_forward.4} parent=11 // pred_fallthru
        _
      // Predicated region
      $region21: #{upblock_forward.4} parent=11 // pred_check
        %p190 = pneg %p101
      $region22: #{upblock_forward.4} parent=11 // pred_check_branch
        %192 = sbr.rel (%p190) target = $region24
      $region23: #{upblock_forward.4} parent=11 // pred_region
        _
      $region24: #{upblock_forward.4} parent=11 // pred_fallthru
        _
      // Predicated region
      $region25: #{upblock_forward.4} parent=11 // pred_check
        %p193 = pneg %p122
      $region26: #{upblock_forward.4} parent=11 // pred_check_branch
        %195 = sbr.rel (%p193) target = $region28
      $region27: #{upblock_forward.4} parent=11 // pred_region
        _
      $region28: #{upblock_forward.4} parent=11 // pred_fallthru
        _
      // Predicated region
      $region29: #{upblock_forward.4} parent=11 // pred_check
        %p196 = pneg %p143
      $region30: #{upblock_forward.4} parent=11 // pred_check_branch
        %198 = sbr.rel (%p196) target = $region32
      $region31: #{upblock_forward.4} parent=11 // pred_region
        _
      $region32: #{upblock_forward.4} parent=11 // pred_fallthru
        _
    $region12: #{upblock_forward.4} parent=5 // pred_fallthru
      _
    %p199 = scmp.lt.s32.totalorder %s12, 4
    // Predicated region
    $region33: #{upblock_forward.4} parent=5 // pred_check
      %p200 = pneg %p199
    $region34: #{upblock_forward.4} parent=5 // pred_check_branch
      %202 = sbr.rel (%p200) target = $region36
    $region35: #{upblock_forward.4} parent=5 // pred_region
      // Predicated region
      $region37: #{upblock_forward.4} parent=35 // pred_check
        %p203 = pneg %p32
      $region38: #{upblock_forward.4} parent=35 // pred_check_branch
        %205 = sbr.rel (%p203) target = $region40
      $region39: #{upblock_forward.4} parent=35 // pred_region
        %p206 = scmp.lt.s32.totalorder %s12, 3
        %s207 = scalar_select %p206, %s12, 3
        %s208 = smul.addr %s207, 60
        %s209 = smul.addr %s208, 8
        %s210 = scalar_lea.vmem %s0, %s209
      $region40: #{upblock_forward.4} parent=35 // pred_fallthru
        _
    $region36: #{upblock_forward.4} parent=5 // pred_fallthru
      _
    %p211 = scmp.le.s32.totalorder 1, %s12
    %p212 = scmp.lt.s32.totalorder %s12, 5
    %p213 = pnand %p211, %p212
    %p214 = pneg %p213
    // Predicated region
    $region41: #{upblock_forward.4} parent=5 // pred_check
      _
    $region42: #{upblock_forward.4} parent=5 // pred_check_branch
      %216 = sbr.rel (%p213) target = $region44
    $region43: #{upblock_forward.4} parent=5 // pred_region
      %s217 = ssub.s32 %s12, 1
      %p218 = scmp.lt.s32.totalorder %s17, 3
      %s219 = scalar_select %p218, %s17, 3
      %s220 = smul.addr %s219, 60
      %s221 = smul.addr %s220, 8
      %s222 = scalar_lea.vmem %s0, %s221
      %p223 = pneg %p38
      %p224 = pneg %p35
      %p225 = pneg %p59
      %p226 = pneg %p56
      %p227 = pneg %p80
      %p228 = pneg %p77
      %p229 = pneg %p101
      %p230 = pneg %p98
      %p231 = pneg %p122
      %p232 = pneg %p119
      %p233 = pneg %p143
      %p234 = pneg %p140
      %p235 = pneg %p169
      %p236 = pneg %p166
      %p237 = scmp.lt.s32.totalorder %s17, 3
      %s238 = scalar_select %p237, %s17, 3
      %s239 = smul.addr %s238, 16
      %s240 = smul.addr %s239, 8
      %s241 = scalar_lea.vmem %s6, %s240
      %p242 = scmp.lt.s32.totalorder %s17, 3
      %s243 = scalar_select %p242, %s17, 3
      %s244 = smul.addr %s243, 60
      %s245 = smul.addr %s244, 8
      %s246 = scalar_lea.vmem %s0, %s245
      %p247 = scmp.lt.s32.totalorder %s17, 3
      %s248 = scalar_select %p247, %s17, 3
      %s249 = smul.addr %s248, 16
      %s250 = smul.addr %s249, 8
      %s251 = scalar_lea.vmem %s6, %s250
      %253 = vst [vmem:[#allocation2] sm:$0xff] 0.0
      %254 = vst [vmem:[#allocation2 + $0x8] sm:$0xff] 0.0
      %255 = vst [vmem:[#allocation2 + $0x10] sm:$0xff] 0.0
      %256 = vst [vmem:[#allocation2 + $0x18] sm:$0xff] 0.0
      %257 = vst [vmem:[#allocation2 + $0x20] sm:$0xff] 0.0
      %258 = vst [vmem:[#allocation2 + $0x28] sm:$0xff] 0.0
      %259 = vst [vmem:[#allocation2 + $0x30] sm:$0xff] 0.0
      %260 = vst [vmem:[#allocation2 + $0x38] sm:$0xff] 0.0
      %261 = vst [vmem:[#allocation2 + $0x40] sm:$0xff] 0.0
      %262 = vst [vmem:[#allocation2 + $0x48] sm:$0xff] 0.0
      %263 = vst [vmem:[#allocation2 + $0x50] sm:$0xff] 0.0
      %264 = vst [vmem:[#allocation2 + $0x58] sm:$0xff] 0.0
      %265 = vst [vmem:[#allocation2 + $0x60] sm:$0xff] 0.0
      %266 = vst [vmem:[#allocation2 + $0x68] sm:$0xff] 0.0
      %267 = vst [vmem:[#allocation2 + $0x70] sm:$0xff] 0.0
      %268 = vst [vmem:[#allocation2 + $0x78] sm:$0xff] 0.0
      %v269 = vld [vmem:[%s246] sm:$0xff]
      %v270 = vld [vmem:[%s246 + $0x8] sm:$0xff]
      %v271 = vld [vmem:[%s246 + $0x10] sm:$0xff]
      %v272 = vld [vmem:[%s246 + $0x30] sm:$0xff]
      %v273 = vld [vmem:[%s246 + $0x38] sm:$0xff]
      %v274 = vld [vmem:[%s246 + $0x40] sm:$0xff]
      %v275 = vld [vmem:[%s246 + $0x60] sm:$0xff]
      %v276 = vld [vmem:[%s246 + $0x68] sm:$0xff]
      %v277 = vld [vmem:[%s246 + $0x70] sm:$0xff]
      %v278 = vld [vmem:[%s246 + $0x90] sm:$0xff]
      %v279 = vld [vmem:[%s246 + $0x98] sm:$0xff]
      %v280 = vld [vmem:[%s246 + $0xa0] sm:$0xff]
      %v281 = vld [vmem:[%s246 + $0xc0] sm:$0xff]
      %v282 = vld [vmem:[%s246 + $0xc8] sm:$0xff]
      %v283 = vld [vmem:[%s246 + $0xd0] sm:$0xff]
      %v284 = vld [vmem:[%s246 + $0xf0] sm:$0xff]
      %v285 = vld [vmem:[%s246 + $0xf8] sm:$0xff]
      %v286 = vld [vmem:[%s246 + $0x100] sm:$0xff]
      %v287 = vld [vmem:[%s246 + $0x120] sm:$0xff]
      %v288 = vld [vmem:[%s246 + $0x128] sm:$0xff]
      %v289 = vld [vmem:[%s246 + $0x130] sm:$0xff]
      %v290 = vld [vmem:[%s246 + $0x150] sm:$0xff]
      %v291 = vld [vmem:[%s246 + $0x158] sm:$0xff]
      %v292 = vld [vmem:[%s246 + $0x160] sm:$0xff]
      %v293 = vpack.c.bf16 %v272, %v269
      %v294 = vpack.c.bf16 %v273, %v270
      %v295 = vpack.c.bf16 %v274, %v271
      %v296 = vpack.c.bf16 %v278, %v275
      %v297 = vpack.c.bf16 %v279, %v276
      %v298 = vpack.c.bf16 %v280, %v277
      %v299 = vpack.c.bf16 %v284, %v281
      %v300 = vpack.c.bf16 %v285, %v282
      %v301 = vpack.c.bf16 %v286, %v283
      %v302 = vpack.c.bf16 %v290, %v287
      %v303 = vpack.c.bf16 %v291, %v288
      %v304 = vpack.c.bf16 %v292, %v289
      %v305 = vld [vmem:[#allocation2] sm:$0xff]
      %v306 = vld [vmem:[#allocation2 + $0x8] sm:$0xff]
      %v307 = vld [vmem:[#allocation2 + $0x10] sm:$0xff]
      %v308 = vld [vmem:[#allocation2 + $0x18] sm:$0xff]
      %v309 = vld [vmem:[#allocation2 + $0x20] sm:$0xff]
      %v310 = vld [vmem:[#allocation2 + $0x28] sm:$0xff]
      %v311 = vld [vmem:[#allocation2 + $0x30] sm:$0xff]
      %v312 = vld [vmem:[#allocation2 + $0x38] sm:$0xff]
      %v313 = vld [vmem:[#allocation2 + $0x40] sm:$0xff]
      %v314 = vld [vmem:[#allocation2 + $0x48] sm:$0xff]
      %v315 = vld [vmem:[#allocation2 + $0x50] sm:$0xff]
      %v316 = vld [vmem:[#allocation2 + $0x58] sm:$0xff]
      %v317 = vld [vmem:[#allocation2 + $0x60] sm:$0xff]
      %v318 = vld [vmem:[#allocation2 + $0x68] sm:$0xff]
      %v319 = vld [vmem:[#allocation2 + $0x70] sm:$0xff]
      %v320 = vld [vmem:[#allocation2 + $0x78] sm:$0xff]
      %v321 = vld [vmem:[%s1] sm:$0xff]
      %v322 = vld [vmem:[%s1 + $0x8] sm:$0xff]
      %v323 = vld [vmem:[%s1 + $0x10] sm:$0xff]
      %v324 = vld [vmem:[%s1 + $0x18] sm:$0xff]
      %v325 = vld [vmem:[%s1 + $0x20] sm:$0xff]
      %v326 = vld [vmem:[%s1 + $0x28] sm:$0xff]
      %v327 = vld [vmem:[%s1 + $0x30] sm:$0xff]
      %v328 = vld [vmem:[%s1 + $0x38] sm:$0xff]
      %v329 = vld [vmem:[%s1 + $0x40] sm:$0xff]
      %v330 = vld [vmem:[%s1 + $0x48] sm:$0xff]
      %v331 = vld [vmem:[%s1 + $0x50] sm:$0xff]
      %v332 = vld [vmem:[%s1 + $0x58] sm:$0xff]
      %v333 = vld [vmem:[%s1 + $0x60] sm:$0xff]
      %v334 = vld [vmem:[%s1 + $0x68] sm:$0xff]
      %v335 = vld [vmem:[%s1 + $0x70] sm:$0xff]
      %v336 = vld [vmem:[%s1 + $0x78] sm:$0xff]
      %v337 = vld [vmem:[%s1 + $0x80] sm:$0xff]
      %v338 = vld [vmem:[%s1 + $0x88] sm:$0xff]
      %v339 = vld [vmem:[%s1 + $0x90] sm:$0xff]
      %v340 = vld [vmem:[%s1 + $0x98] sm:$0xff]
      %v341 = vld [vmem:[%s1 + $0xa0] sm:$0xff]
      %v342 = vld [vmem:[%s1 + $0xa8] sm:$0xff]
      %v343 = vld [vmem:[%s1 + $0xb0] sm:$0xff]
      %v344 = vld [vmem:[%s1 + $0xb8] sm:$0xff]
      %v345 = vld [vmem:[%s1 + $0xc0] sm:$0xff]
      %v346 = vld [vmem:[%s1 + $0xc8] sm:$0xff]
      %v347 = vld [vmem:[%s1 + $0xd0] sm:$0xff]
      %v348 = vld [vmem:[%s1 + $0xd8] sm:$0xff]
      %v349 = vld [vmem:[%s1 + $0xe0] sm:$0xff]
      %v350 = vld [vmem:[%s1 + $0xe8] sm:$0xff]
      %v351 = vld [vmem:[%s1 + $0xf0] sm:$0xff]
      %v352 = vld [vmem:[%s1 + $0xf8] sm:$0xff]
      %v353 = vld [vmem:[%s1 + $0x100] sm:$0xff]
      %v354 = vld [vmem:[%s1 + $0x108] sm:$0xff]
      %v355 = vld [vmem:[%s1 + $0x110] sm:$0xff]
      %v356 = vld [vmem:[%s1 + $0x118] sm:$0xff]
      %v357 = vld [vmem:[%s1 + $0x120] sm:$0xff]
      %v358 = vld [vmem:[%s1 + $0x128] sm:$0xff]
      %v359 = vld [vmem:[%s1 + $0x130] sm:$0xff]
      %v360 = vld [vmem:[%s1 + $0x138] sm:$0xff]
      %v401 = vunpack.c.l.b16 %v321
      %v402 = vunpack.c.h.b16 %v321
      %v403 = vunpack.c.l.b16 %v322
      %v404 = vunpack.c.h.b16 %v322
      %v405 = vunpack.c.l.b16 %v323
      %v406 = vunpack.c.h.b16 %v323
      %v407 = vunpack.c.l.b16 %v324
      %v408 = vunpack.c.h.b16 %v324
      %v409 = vunpack.c.l.b16 %v325
      %v410 = vunpack.c.h.b16 %v325
      %v411 = vunpack.c.l.b16 %v326
      %v412 = vunpack.c.h.b16 %v326
      %v413 = vunpack.c.l.b16 %v327
      %v414 = vunpack.c.h.b16 %v327
      %v415 = vunpack.c.l.b16 %v328
      %v416 = vunpack.c.h.b16 %v328
      %v417 = vunpack.c.l.b16 %v329
      %v418 = vunpack.c.h.b16 %v329
      %v419 = vunpack.c.l.b16 %v330
      %v420 = vunpack.c.h.b16 %v330
      %v421 = vunpack.c.l.b16 %v331
      %v422 = vunpack.c.h.b16 %v331
      %v423 = vunpack.c.l.b16 %v332
      %v424 = vunpack.c.h.b16 %v332
      %v425 = vunpack.c.l.b16 %v333
      %v426 = vunpack.c.h.b16 %v333
      %v427 = vunpack.c.l.b16 %v334
      %v428 = vunpack.c.h.b16 %v334
      %v429 = vunpack.c.l.b16 %v335
      %v430 = vunpack.c.h.b16 %v335
      %v431 = vunpack.c.l.b16 %v336
      %v432 = vunpack.c.h.b16 %v336
      %v433 = vunpack.c.l.b16 %v337
      %v434 = vunpack.c.h.b16 %v337
      %v435 = vunpack.c.l.b16 %v338
      %v436 = vunpack.c.h.b16 %v338
      %v437 = vunpack.c.l.b16 %v339
      %v438 = vunpack.c.h.b16 %v339
      %v439 = vunpack.c.l.b16 %v340
      %v440 = vunpack.c.h.b16 %v340
      %v441 = vunpack.c.l.b16 %v341
      %v442 = vunpack.c.h.b16 %v341
      %v443 = vunpack.c.l.b16 %v342
      %v444 = vunpack.c.h.b16 %v342
      %v445 = vunpack.c.l.b16 %v343
      %v446 = vunpack.c.h.b16 %v343
      %v447 = vunpack.c.l.b16 %v344
      %v448 = vunpack.c.h.b16 %v344
      %v449 = vunpack.c.l.b16 %v345
      %v450 = vunpack.c.h.b16 %v345
      %v451 = vunpack.c.l.b16 %v346
      %v452 = vunpack.c.h.b16 %v346
      %v453 = vunpack.c.l.b16 %v347
      %v454 = vunpack.c.h.b16 %v347
      %v455 = vunpack.c.l.b16 %v348
      %v456 = vunpack.c.h.b16 %v348
      %v457 = vunpack.c.l.b16 %v349
      %v458 = vunpack.c.h.b16 %v349
      %v459 = vunpack.c.l.b16 %v350
      %v460 = vunpack.c.h.b16 %v350
      %v461 = vunpack.c.l.b16 %v351
      %v462 = vunpack.c.h.b16 %v351
      %v463 = vunpack.c.l.b16 %v352
      %v464 = vunpack.c.h.b16 %v352
      %v465 = vunpack.c.l.b16 %v353
      %v466 = vunpack.c.h.b16 %v353
      %v467 = vunpack.c.l.b16 %v354
      %v468 = vunpack.c.h.b16 %v354
      %v469 = vunpack.c.l.b16 %v355
      %v470 = vunpack.c.h.b16 %v355
      %v471 = vunpack.c.l.b16 %v356
      %v472 = vunpack.c.h.b16 %v356
      %v473 = vunpack.c.l.b16 %v357
      %v474 = vunpack.c.h.b16 %v357
      %v475 = vunpack.c.l.b16 %v358
      %v476 = vunpack.c.h.b16 %v358
      %v477 = vunpack.c.l.b16 %v359
      %v478 = vunpack.c.h.b16 %v359
      %v479 = vunpack.c.l.b16 %v360
      %v480 = vunpack.c.h.b16 %v360
      %v481 = vpack.c.b16 %v403, %v401
      %v482 = vpack.c.b16 %v404, %v402
      %v483 = vpack.c.b16 %v407, %v405
      %v484 = vpack.c.b16 %v408, %v406
      %v485 = vpack.c.b16 %v411, %v409
      %v486 = vpack.c.b16 %v412, %v410
      %v487 = vpack.c.b16 %v415, %v413
      %v488 = vpack.c.b16 %v416, %v414
      %v489 = vpack.c.b16 %v419, %v417
      %v490 = vpack.c.b16 %v420, %v418
      %v491 = vpack.c.b16 %v423, %v421
      %v492 = vpack.c.b16 %v424, %v422
      %v493 = vpack.c.b16 %v427, %v425
      %v494 = vpack.c.b16 %v428, %v426
      %v495 = vpack.c.b16 %v431, %v429
      %v496 = vpack.c.b16 %v432, %v430
      %v497 = vpack.c.b16 %v435, %v433
      %v498 = vpack.c.b16 %v436, %v434
      %v499 = vpack.c.b16 %v439, %v437
      %v500 = vpack.c.b16 %v440, %v438
      %v501 = vpack.c.b16 %v443, %v441
      %v502 = vpack.c.b16 %v444, %v442
      %v503 = vpack.c.b16 %v447, %v445
      %v504 = vpack.c.b16 %v448, %v446
      %v505 = vpack.c.b16 %v451, %v449
      %v506 = vpack.c.b16 %v452, %v450
      %v507 = vpack.c.b16 %v455, %v453
      %v508 = vpack.c.b16 %v456, %v454
      %v509 = vpack.c.b16 %v459, %v457
      %v510 = vpack.c.b16 %v460, %v458
      %v511 = vpack.c.b16 %v463, %v461
      %v512 = vpack.c.b16 %v464, %v462
      %v513 = vpack.c.b16 %v467, %v465
      %v514 = vpack.c.b16 %v468, %v466
      %v515 = vpack.c.b16 %v471, %v469
      %v516 = vpack.c.b16 %v472, %v470
      %v517 = vpack.c.b16 %v475, %v473
      %v518 = vpack.c.b16 %v476, %v474
      %v519 = vpack.c.b16 %v479, %v477
      %v520 = vpack.c.b16 %v480, %v478
      %vm561 = vcmask 523264
      %v563 = vsel %vm561, %v295, 0
      %v566 = vsel %vm561, %v298, 0
      %v569 = vsel %vm561, %v301, 0
      %v572 = vsel %vm561, %v304, 0
      %574 = vmatprep.subr.bf16.mxu0 %v496
      %575 = vmatpush1.bf16.msra.mxu0 %v495
      %576 = vmatprep.subr.bf16.mxu0 %v494
      %577 = vmatpush1.bf16.msra.mxu0 %v493
      %578 = vmatprep.subr.bf16.mxu0 %v492
      %579 = vmatpush1.bf16.msra.mxu0 %v491
      %580 = vmatprep.subr.bf16.mxu0 %v490
      %581 = vmatpush1.bf16.msra.mxu0 %v489
      %582 = vmatprep.subr.bf16.mxu0 %v488
      %583 = vmatpush1.bf16.msra.mxu0 %v487
      %584 = vmatprep.subr.bf16.mxu0 %v486
      %585 = vmatpush1.bf16.msra.mxu0 %v485
      %586 = vmatprep.subr.bf16.mxu0 %v484
      %587 = vmatpush1.bf16.msra.mxu0 %v483
      %588 = vmatprep.subr.bf16.mxu0 %v482
      %589 = vmatpush1.bf16.msra.mxu0 %v481
      %590 = vmatprep.subr.bf16.mxu0 %v512
      %591 = vmatpush2.bf16.msra.mxu0 %v511
      %592 = vmatprep.subr.bf16.mxu0 %v510
      %593 = vmatpush2.bf16.msra.mxu0 %v509
      %594 = vmatprep.subr.bf16.mxu0 %v508
      %595 = vmatpush2.bf16.msra.mxu0 %v507
      %596 = vmatprep.subr.bf16.mxu0 %v506
      %597 = vmatpush2.bf16.msra.mxu0 %v505
      %598 = vmatprep.subr.bf16.mxu0 %v504
      %599 = vmatpush2.bf16.msra.mxu0 %v503
      %600 = vmatprep.subr.bf16.mxu0 %v502
      %601 = vmatpush2.bf16.msra.mxu0 %v501
      %602 = vmatprep.subr.bf16.mxu0 %v500
      %603 = vmatpush2.bf16.msra.mxu0 %v499
      %604 = vmatprep.subr.bf16.mxu0 %v498
      %605 = vmatpush2.bf16.msra.mxu0 %v497
      %606 = vmatprep.mubr.bf16.mxu0 %v294
      %607 = vmatmul.mubr.bf16.gmra.mxu0 %v293
      %v608 = vpop.f32.mrf.mxu0
      %v609 = vadd.f32 0.0, %v608
      %v610 = vpop.f32.mrf.mxu0
      %v611 = vadd.f32 0.0, %v610
      %v612 = vpop.f32.mrf.mxu0
      %v613 = vadd.f32 0.0, %v612
      %v614 = vpop.f32.mrf.mxu0
      %v615 = vadd.f32 0.0, %v614
      %616 = vmatprep.mubr.bf16.mxu0 %v297
      %617 = vmatmul.mubr.bf16.gmra.mxu0 %v296
      %v618 = vpop.f32.mrf.mxu0
      %v619 = vadd.f32 0.0, %v618
      %v620 = vpop.f32.mrf.mxu0
      %v621 = vadd.f32 0.0, %v620
      %v622 = vpop.f32.mrf.mxu0
      %v623 = vadd.f32 0.0, %v622
      %v624 = vpop.f32.mrf.mxu0
      %v625 = vadd.f32 0.0, %v624
      %626 = vmatprep.mubr.bf16.mxu0 %v300
      %627 = vmatmul.mubr.bf16.gmra.mxu0 %v299
      %v628 = vpop.f32.mrf.mxu0
      %v629 = vadd.f32 0.0, %v628
      %v630 = vpop.f32.mrf.mxu0
      %v631 = vadd.f32 0.0, %v630
      %v632 = vpop.f32.mrf.mxu0
      %v633 = vadd.f32 0.0, %v632
      %v634 = vpop.f32.mrf.mxu0
      %v635 = vadd.f32 0.0, %v634
      %636 = vmatprep.mubr.bf16.mxu0 %v303
      %637 = vmatmul.mubr.bf16.gmra.mxu0 %v302
      %v638 = vpop.f32.mrf.mxu0
      %v639 = vadd.f32 0.0, %v638
      %v640 = vpop.f32.mrf.mxu0
      %v641 = vadd.f32 0.0, %v640
      %v642 = vpop.f32.mrf.mxu0
      %v643 = vadd.f32 0.0, %v642
      %v644 = vpop.f32.mrf.mxu0
      %v645 = vadd.f32 0.0, %v644
      %646 = vdwg.mxu0
      %647 = vmatprep.subr.bf16.mxu0 0
      %648 = vmatpush1.bf16.msra.mxu0 0
      %649 = vmatprep.subr.bf16.mxu0 0
      %650 = vmatpush1.bf16.msra.mxu0 0
      %651 = vmatprep.subr.bf16.mxu0 0
      %652 = vmatpush1.bf16.msra.mxu0 0
      %653 = vmatprep.subr.bf16.mxu0 0
      %654 = vmatpush1.bf16.msra.mxu0 0
      %655 = vmatprep.subr.bf16.mxu0 %v520
      %656 = vmatpush1.bf16.msra.mxu0 %v519
      %657 = vmatprep.subr.bf16.mxu0 %v518
      %658 = vmatpush1.bf16.msra.mxu0 %v517
      %659 = vmatprep.subr.bf16.mxu0 %v516
      %660 = vmatpush1.bf16.msra.mxu0 %v515
      %661 = vmatprep.subr.bf16.mxu0 %v514
      %662 = vmatpush1.bf16.msra.mxu0 %v513
      %663 = vmatprep.subr.bf16.mxu0 0
      %664 = vmatpush2.bf16.msra.mxu0 0
      %665 = vmatprep.subr.bf16.mxu0 0
      %666 = vmatpush2.bf16.msra.mxu0 0
      %667 = vmatprep.subr.bf16.mxu0 0
      %668 = vmatpush2.bf16.msra.mxu0 0
      %669 = vmatprep.subr.bf16.mxu0 0
      %670 = vmatpush2.bf16.msra.mxu0 0
      %671 = vmatprep.subr.bf16.mxu0 0
      %672 = vmatpush2.bf16.msra.mxu0 0
      %673 = vmatprep.subr.bf16.mxu0 0
      %674 = vmatpush2.bf16.msra.mxu0 0
      %675 = vmatprep.subr.bf16.mxu0 0
      %676 = vmatpush2.bf16.msra.mxu0 0
      %677 = vmatprep.subr.bf16.mxu0 0
      %678 = vmatpush2.bf16.msra.mxu0 0
      %679 = vmatprep.mubr.bf16.mxu0 0
      %680 = vmatmul.mubr.bf16.gmra.mxu0 %v563
      %v681 = vpop.f32.mrf.mxu0
      %v682 = vadd.f32 %v609, %v681
      %v683 = vpop.f32.mrf.mxu0
      %v684 = vadd.f32 %v611, %v683
      %v685 = vpop.f32.mrf.mxu0
      %v686 = vadd.f32 %v613, %v685
      %v687 = vpop.f32.mrf.mxu0
      %v688 = vadd.f32 %v615, %v687
      %689 = vmatprep.mubr.bf16.mxu0 0
      %690 = vmatmul.mubr.bf16.gmra.mxu0 %v566
      %v691 = vpop.f32.mrf.mxu0
      %v692 = vadd.f32 %v619, %v691
      %v693 = vpop.f32.mrf.mxu0
      %v694 = vadd.f32 %v621, %v693
      %v695 = vpop.f32.mrf.mxu0
      %v696 = vadd.f32 %v623, %v695
      %v697 = vpop.f32.mrf.mxu0
      %v698 = vadd.f32 %v625, %v697
      %699 = vmatprep.mubr.bf16.mxu0 0
      %700 = vmatmul.mubr.bf16.gmra.mxu0 %v569
      %v701 = vpop.f32.mrf.mxu0
      %v702 = vadd.f32 %v629, %v701
      %v703 = vpop.f32.mrf.mxu0
      %v704 = vadd.f32 %v631, %v703
      %v705 = vpop.f32.mrf.mxu0
      %v706 = vadd.f32 %v633, %v705
      %v707 = vpop.f32.mrf.mxu0
      %v708 = vadd.f32 %v635, %v707
      %709 = vmatprep.mubr.bf16.mxu0 0
      %710 = vmatmul.mubr.bf16.gmra.mxu0 %v572
      %v711 = vpop.f32.mrf.mxu0
      %v712 = vadd.f32 %v639, %v711
      %v713 = vpop.f32.mrf.mxu0
      %v714 = vadd.f32 %v641, %v713
      %v715 = vpop.f32.mrf.mxu0
      %v716 = vadd.f32 %v643, %v715
      %v717 = vpop.f32.mrf.mxu0
      %v718 = vadd.f32 %v645, %v717
      %719 = vdwg.mxu0
      %v720 = vadd.f32 %v305, %v682
      %v721 = vadd.f32 %v306, %v684
      %v722 = vadd.f32 %v307, %v686
      %v723 = vadd.f32 %v308, %v688
      %v724 = vadd.f32 %v309, %v692
      %v725 = vadd.f32 %v310, %v694
      %v726 = vadd.f32 %v311, %v696
      %v727 = vadd.f32 %v312, %v698
      %v728 = vadd.f32 %v313, %v702
      %v729 = vadd.f32 %v314, %v704
      %v730 = vadd.f32 %v315, %v706
      %v731 = vadd.f32 %v316, %v708
      %v732 = vadd.f32 %v317, %v712
      %v733 = vadd.f32 %v318, %v714
      %v734 = vadd.f32 %v319, %v716
      %v735 = vadd.f32 %v320, %v718
      %736 = vst [vmem:[#allocation2] sm:$0xff] %v720
      %737 = vst [vmem:[#allocation2 + $0x8] sm:$0xff] %v721
      %738 = vst [vmem:[#allocation2 + $0x10] sm:$0xff] %v722
      %739 = vst [vmem:[#allocation2 + $0x18] sm:$0xff] %v723
      %740 = vst [vmem:[#allocation2 + $0x20] sm:$0xff] %v724
      %741 = vst [vmem:[#allocation2 + $0x28] sm:$0xff] %v725
      %742 = vst [vmem:[#allocation2 + $0x30] sm:$0xff] %v726
      %743 = vst [vmem:[#allocation2 + $0x38] sm:$0xff] %v727
      %744 = vst [vmem:[#allocation2 + $0x40] sm:$0xff] %v728
      %745 = vst [vmem:[#allocation2 + $0x48] sm:$0xff] %v729
      %746 = vst [vmem:[#allocation2 + $0x50] sm:$0xff] %v730
      %747 = vst [vmem:[#allocation2 + $0x58] sm:$0xff] %v731
      %748 = vst [vmem:[#allocation2 + $0x60] sm:$0xff] %v732
      %749 = vst [vmem:[#allocation2 + $0x68] sm:$0xff] %v733
      %750 = vst [vmem:[#allocation2 + $0x70] sm:$0xff] %v734
      %751 = vst [vmem:[#allocation2 + $0x78] sm:$0xff] %v735
      %v752 = vld [vmem:[%s246] sm:$0xfe]
      %v753 = vld [vmem:[%s246 + $0x8] sm:$0xfe]
      %v754 = vld [vmem:[%s246 + $0x10] sm:$0xfe]
      %v755 = vld [vmem:[%s246 + $0x18] sm:$0x1]
      %v756 = vld [vmem:[%s246 + $0x20] sm:$0x1]
      %v757 = vld [vmem:[%s246 + $0x28] sm:$0x1]
      %v758 = vld [vmem:[%s246 + $0x30] sm:$0xfe]
      %v759 = vld [vmem:[%s246 + $0x38] sm:$0xfe]
      %v760 = vld [vmem:[%s246 + $0x40] sm:$0xfe]
      %v761 = vld [vmem:[%s246 + $0x48] sm:$0x1]
      %v762 = vld [vmem:[%s246 + $0x50] sm:$0x1]
      %v763 = vld [vmem:[%s246 + $0x58] sm:$0x1]
      %v764 = vld [vmem:[%s246 + $0x60] sm:$0xfe]
      %v765 = vld [vmem:[%s246 + $0x68] sm:$0xfe]
      %v766 = vld [vmem:[%s246 + $0x70] sm:$0xfe]
      %v767 = vld [vmem:[%s246 + $0x78] sm:$0x1]
      %v768 = vld [vmem:[%s246 + $0x80] sm:$0x1]
      %v769 = vld [vmem:[%s246 + $0x88] sm:$0x1]
      %v770 = vld [vmem:[%s246 + $0x90] sm:$0xfe]
      %v771 = vld [vmem:[%s246 + $0x98] sm:$0xfe]
      %v772 = vld [vmem:[%s246 + $0xa0] sm:$0xfe]
      %v773 = vld [vmem:[%s246 + $0xa8] sm:$0x1]
      %v774 = vld [vmem:[%s246 + $0xb0] sm:$0x1]
      %v775 = vld [vmem:[%s246 + $0xb8] sm:$0x1]
      %v776 = vld [vmem:[%s246 + $0xc0] sm:$0xfe]
      %v777 = vld [vmem:[%s246 + $0xc8] sm:$0xfe]
      %v778 = vld [vmem:[%s246 + $0xd0] sm:$0xfe]
      %v779 = vld [vmem:[%s246 + $0xd8] sm:$0x1]
      %v780 = vld [vmem:[%s246 + $0xe0] sm:$0x1]
      %v781 = vld [vmem:[%s246 + $0xe8] sm:$0x1]
      %v782 = vld [vmem:[%s246 + $0xf0] sm:$0xfe]
      %v783 = vld [vmem:[%s246 + $0xf8] sm:$0xfe]
      %v784 = vld [vmem:[%s246 + $0x100] sm:$0xfe]
      %v785 = vld [vmem:[%s246 + $0x108] sm:$0x1]
      %v786 = vld [vmem:[%s246 + $0x110] sm:$0x1]
      %v787 = vld [vmem:[%s246 + $0x118] sm:$0x1]
      %v788 = vld [vmem:[%s246 + $0x120] sm:$0xfe]
      %v789 = vld [vmem:[%s246 + $0x128] sm:$0xfe]
      %v790 = vld [vmem:[%s246 + $0x130] sm:$0xfe]
      %v791 = vld [vmem:[%s246 + $0x138] sm:$0x1]
      %v792 = vld [vmem:[%s246 + $0x140] sm:$0x1]
      %v793 = vld [vmem:[%s246 + $0x148] sm:$0x1]
      %v794 = vld [vmem:[%s246 + $0x150] sm:$0xfe]
      %v795 = vld [vmem:[%s246 + $0x158] sm:$0xfe]
      %v796 = vld [vmem:[%s246 + $0x160] sm:$0xfe]
      %v797 = vld [vmem:[%s246 + $0x168] sm:$0x1]
      %v798 = vld [vmem:[%s246 + $0x170] sm:$0x1]
      %v799 = vld [vmem:[%s246 + $0x178] sm:$0x1]
      %vm848 = vcmask 1046528
      %v849 = vrot.slane %v752, 1
      %v850 = vrot.slane %v755, 1
      %v851 = vsel %vm848, %v849, %v850
      %v852 = vrot.slane %v753, 1
      %v853 = vrot.slane %v756, 1
      %v854 = vsel %vm848, %v852, %v853
      %v855 = vrot.slane %v754, 1
      %v856 = vrot.slane %v757, 1
      %v857 = vsel %vm848, %v855, %v856
      %v858 = vrot.slane %v758, 1
      %v859 = vrot.slane %v761, 1
      %v860 = vsel %vm848, %v858, %v859
      %v861 = vrot.slane %v759, 1
      %v862 = vrot.slane %v762, 1
      %v863 = vsel %vm848, %v861, %v862
      %v864 = vrot.slane %v760, 1
      %v865 = vrot.slane %v763, 1
      %v866 = vsel %vm848, %v864, %v865
      %v867 = vrot.slane %v764, 1
      %v868 = vrot.slane %v767, 1
      %v869 = vsel %vm848, %v867, %v868
      %v870 = vrot.slane %v765, 1
      %v871 = vrot.slane %v768, 1
      %v872 = vsel %vm848, %v870, %v871
      %v873 = vrot.slane %v766, 1
      %v874 = vrot.slane %v769, 1
      %v875 = vsel %vm848, %v873, %v874
      %v876 = vrot.slane %v770, 1
      %v877 = vrot.slane %v773, 1
      %v878 = vsel %vm848, %v876, %v877
      %v879 = vrot.slane %v771, 1
      %v880 = vrot.slane %v774, 1
      %v881 = vsel %vm848, %v879, %v880
      %v882 = vrot.slane %v772, 1
      %v883 = vrot.slane %v775, 1
      %v884 = vsel %vm848, %v882, %v883
      %v885 = vrot.slane %v776, 1
      %v886 = vrot.slane %v779, 1
      %v887 = vsel %vm848, %v885, %v886
      %v888 = vrot.slane %v777, 1
      %v889 = vrot.slane %v780, 1
      %v890 = vsel %vm848, %v888, %v889
      %v891 = vrot.slane %v778, 1
      %v892 = vrot.slane %v781, 1
      %v893 = vsel %vm848, %v891, %v892
      %v894 = vrot.slane %v782, 1
      %v895 = vrot.slane %v785, 1
      %v896 = vsel %vm848, %v894, %v895
      %v897 = vrot.slane %v783, 1
      %v898 = vrot.slane %v786, 1
      %v899 = vsel %vm848, %v897, %v898
      %v900 = vrot.slane %v784, 1
      %v901 = vrot.slane %v787, 1
      %v902 = vsel %vm848, %v900, %v901
      %v903 = vrot.slane %v788, 1
      %v904 = vrot.slane %v791, 1
      %v905 = vsel %vm848, %v903, %v904
      %v906 = vrot.slane %v789, 1
      %v907 = vrot.slane %v792, 1
      %v908 = vsel %vm848, %v906, %v907
      %v909 = vrot.slane %v790, 1
      %v910 = vrot.slane %v793, 1
      %v911 = vsel %vm848, %v909, %v910
      %v912 = vrot.slane %v794, 1
      %v913 = vrot.slane %v797, 1
      %v914 = vsel %vm848, %v912, %v913
      %v915 = vrot.slane %v795, 1
      %v916 = vrot.slane %v798, 1
      %v917 = vsel %vm848, %v915, %v916
      %v918 = vrot.slane %v796, 1
      %v919 = vrot.slane %v799, 1
      %v920 = vsel %vm848, %v918, %v919
      %v945 = vpack.c.bf16 %v860, %v851
      %v946 = vpack.c.bf16 %v863, %v854
      %v947 = vpack.c.bf16 %v866, %v857
      %v948 = vpack.c.bf16 %v878, %v869
      %v949 = vpack.c.bf16 %v881, %v872
      %v950 = vpack.c.bf16 %v884, %v875
      %v951 = vpack.c.bf16 %v896, %v887
      %v952 = vpack.c.bf16 %v899, %v890
      %v953 = vpack.c.bf16 %v902, %v893
      %v954 = vpack.c.bf16 %v914, %v905
      %v955 = vpack.c.bf16 %v917, %v908
      %v956 = vpack.c.bf16 %v920, %v911
      %v957 = vld [vmem:[#allocation2] sm:$0xff]
      %v958 = vld [vmem:[#allocation2 + $0x8] sm:$0xff]
      %v959 = vld [vmem:[#allocation2 + $0x10] sm:$0xff]
      %v960 = vld [vmem:[#allocation2 + $0x18] sm:$0xff]
      %v961 = vld [vmem:[#allocation2 + $0x20] sm:$0xff]
      %v962 = vld [vmem:[#allocation2 + $0x28] sm:$0xff]
      %v963 = vld [vmem:[#allocation2 + $0x30] sm:$0xff]
      %v964 = vld [vmem:[#allocation2 + $0x38] sm:$0xff]
      %v965 = vld [vmem:[#allocation2 + $0x40] sm:$0xff]
      %v966 = vld [vmem:[#allocation2 + $0x48] sm:$0xff]
      %v967 = vld [vmem:[#allocation2 + $0x50] sm:$0xff]
      %v968 = vld [vmem:[#allocation2 + $0x58] sm:$0xff]
      %v969 = vld [vmem:[#allocation2 + $0x60] sm:$0xff]
      %v970 = vld [vmem:[#allocation2 + $0x68] sm:$0xff]
      %v971 = vld [vmem:[#allocation2 + $0x70] sm:$0xff]
      %v972 = vld [vmem:[#allocation2 + $0x78] sm:$0xff]
      %s973 = scalar_lea.vmem %s1, 320
      %v974 = vld [vmem:[%s973] sm:$0xff]
      %v975 = vld [vmem:[%s973 + $0x8] sm:$0xff]
      %v976 = vld [vmem:[%s973 + $0x10] sm:$0xff]
      %v977 = vld [vmem:[%s973 + $0x18] sm:$0xff]
      %v978 = vld [vmem:[%s973 + $0x20] sm:$0xff]
      %v979 = vld [vmem:[%s973 + $0x28] sm:$0xff]
      %v980 = vld [vmem:[%s973 + $0x30] sm:$0xff]
      %v981 = vld [vmem:[%s973 + $0x38] sm:$0xff]
      %v982 = vld [vmem:[%s973 + $0x40] sm:$0xff]
      %v983 = vld [vmem:[%s973 + $0x48] sm:$0xff]
      %v984 = vld [vmem:[%s973 + $0x50] sm:$0xff]
      %v985 = vld [vmem:[%s973 + $0x58] sm:$0xff]
      %v986 = vld [vmem:[%s973 + $0x60] sm:$0xff]
      %v987 = vld [vmem:[%s973 + $0x68] sm:$0xff]
      %v988 = vld [vmem:[%s973 + $0x70] sm:$0xff]
      %v989 = vld [vmem:[%s973 + $0x78] sm:$0xff]
      %v990 = vld [vmem:[%s973 + $0x80] sm:$0xff]
      %v991 = vld [vmem:[%s973 + $0x88] sm:$0xff]
      %v992 = vld [vmem:[%s973 + $0x90] sm:$0xff]
      %v993 = vld [vmem:[%s973 + $0x98] sm:$0xff]
      %v994 = vld [vmem:[%s973 + $0xa0] sm:$0xff]
      %v995 = vld [vmem:[%s973 + $0xa8] sm:$0xff]
      %v996 = vld [vmem:[%s973 + $0xb0] sm:$0xff]
      %v997 = vld [vmem:[%s973 + $0xb8] sm:$0xff]
      %v998 = vld [vmem:[%s973 + $0xc0] sm:$0xff]
      %v999 = vld [vmem:[%s973 + $0xc8] sm:$0xff]
      %v1000 = vld [vmem:[%s973 + $0xd0] sm:$0xff]
      %v1001 = vld [vmem:[%s973 + $0xd8] sm:$0xff]
      %v1002 = vld [vmem:[%s973 + $0xe0] sm:$0xff]
      %v1003 = vld [vmem:[%s973 + $0xe8] sm:$0xff]
      %v1004 = vld [vmem:[%s973 + $0xf0] sm:$0xff]
      %v1005 = vld [vmem:[%s973 + $0xf8] sm:$0xff]
      %v1006 = vld [vmem:[%s973 + $0x100] sm:$0xff]
      %v1007 = vld [vmem:[%s973 + $0x108] sm:$0xff]
      %v1008 = vld [vmem:[%s973 + $0x110] sm:$0xff]
      %v1009 = vld [vmem:[%s973 + $0x118] sm:$0xff]
      %v1010 = vld [vmem:[%s973 + $0x120] sm:$0xff]
      %v1011 = vld [vmem:[%s973 + $0x128] sm:$0xff]
      %v1012 = vld [vmem:[%s973 + $0x130] sm:$0xff]
      %v1013 = vld [vmem:[%s973 + $0x138] sm:$0xff]
      %v1054 = vunpack.c.l.b16 %v974
      %v1055 = vunpack.c.h.b16 %v974
      %v1056 = vunpack.c.l.b16 %v975
      %v1057 = vunpack.c.h.b16 %v975
      %v1058 = vunpack.c.l.b16 %v976
      %v1059 = vunpack.c.h.b16 %v976
      %v1060 = vunpack.c.l.b16 %v977
      %v1061 = vunpack.c.h.b16 %v977
      %v1062 = vunpack.c.l.b16 %v978
      %v1063 = vunpack.c.h.b16 %v978
      %v1064 = vunpack.c.l.b16 %v979
      %v1065 = vunpack.c.h.b16 %v979
      %v1066 = vunpack.c.l.b16 %v980
      %v1067 = vunpack.c.h.b16 %v980
      %v1068 = vunpack.c.l.b16 %v981
      %v1069 = vunpack.c.h.b16 %v981
      %v1070 = vunpack.c.l.b16 %v982
      %v1071 = vunpack.c.h.b16 %v982
      %v1072 = vunpack.c.l.b16 %v983
      %v1073 = vunpack.c.h.b16 %v983
      %v1074 = vunpack.c.l.b16 %v984
      %v1075 = vunpack.c.h.b16 %v984
      %v1076 = vunpack.c.l.b16 %v985
      %v1077 = vunpack.c.h.b16 %v985
      %v1078 = vunpack.c.l.b16 %v986
      %v1079 = vunpack.c.h.b16 %v986
      %v1080 = vunpack.c.l.b16 %v987
      %v1081 = vunpack.c.h.b16 %v987
      %v1082 = vunpack.c.l.b16 %v988
      %v1083 = vunpack.c.h.b16 %v988
      %v1084 = vunpack.c.l.b16 %v989
      %v1085 = vunpack.c.h.b16 %v989
      %v1086 = vunpack.c.l.b16 %v990
      %v1087 = vunpack.c.h.b16 %v990
      %v1088 = vunpack.c.l.b16 %v991
      %v1089 = vunpack.c.h.b16 %v991
      %v1090 = vunpack.c.l.b16 %v992
      %v1091 = vunpack.c.h.b16 %v992
      %v1092 = vunpack.c.l.b16 %v993
      %v1093 = vunpack.c.h.b16 %v993
      %v1094 = vunpack.c.l.b16 %v994
      %v1095 = vunpack.c.h.b16 %v994
      %v1096 = vunpack.c.l.b16 %v995
      %v1097 = vunpack.c.h.b16 %v995
      %v1098 = vunpack.c.l.b16 %v996
      %v1099 = vunpack.c.h.b16 %v996
      %v1100 = vunpack.c.l.b16 %v997
      %v1101 = vunpack.c.h.b16 %v997
      %v1102 = vunpack.c.l.b16 %v998
      %v1103 = vunpack.c.h.b16 %v998
      %v1104 = vunpack.c.l.b16 %v999
      %v1105 = vunpack.c.h.b16 %v999
      %v1106 = vunpack.c.l.b16 %v1000
      %v1107 = vunpack.c.h.b16 %v1000
      %v1108 = vunpack.c.l.b16 %v1001
      %v1109 = vunpack.c.h.b16 %v1001
      %v1110 = vunpack.c.l.b16 %v1002
      %v1111 = vunpack.c.h.b16 %v1002
      %v1112 = vunpack.c.l.b16 %v1003
      %v1113 = vunpack.c.h.b16 %v1003
      %v1114 = vunpack.c.l.b16 %v1004
      %v1115 = vunpack.c.h.b16 %v1004
      %v1116 = vunpack.c.l.b16 %v1005
      %v1117 = vunpack.c.h.b16 %v1005
      %v1118 = vunpack.c.l.b16 %v1006
      %v1119 = vunpack.c.h.b16 %v1006
      %v1120 = vunpack.c.l.b16 %v1007
      %v1121 = vunpack.c.h.b16 %v1007
      %v1122 = vunpack.c.l.b16 %v1008
      %v1123 = vunpack.c.h.b16 %v1008
      %v1124 = vunpack.c.l.b16 %v1009
      %v1125 = vunpack.c.h.b16 %v1009
      %v1126 = vunpack.c.l.b16 %v1010
      %v1127 = vunpack.c.h.b16 %v1010
      %v1128 = vunpack.c.l.b16 %v1011
      %v1129 = vunpack.c.h.b16 %v1011
      %v1130 = vunpack.c.l.b16 %v1012
      %v1131 = vunpack.c.h.b16 %v1012
      %v1132 = vunpack.c.l.b16 %v1013
      %v1133 = vunpack.c.h.b16 %v1013
      %v1134 = vpack.c.b16 %v1056, %v1054
      %v1135 = vpack.c.b16 %v1057, %v1055
      %v1136 = vpack.c.b16 %v1060, %v1058
      %v1137 = vpack.c.b16 %v1061, %v1059
      %v1138 = vpack.c.b16 %v1064, %v1062
      %v1139 = vpack.c.b16 %v1065, %v1063
      %v1140 = vpack.c.b16 %v1068, %v1066
      %v1141 = vpack.c.b16 %v1069, %v1067
      %v1142 = vpack.c.b16 %v1072, %v1070
      %v1143 = vpack.c.b16 %v1073, %v1071
      %v1144 = vpack.c.b16 %v1076, %v1074
      %v1145 = vpack.c.b16 %v1077, %v1075
      %v1146 = vpack.c.b16 %v1080, %v1078
      %v1147 = vpack.c.b16 %v1081, %v1079
      %v1148 = vpack.c.b16 %v1084, %v1082
      %v1149 = vpack.c.b16 %v1085, %v1083
      %v1150 = vpack.c.b16 %v1088, %v1086
      %v1151 = vpack.c.b16 %v1089, %v1087
      %v1152 = vpack.c.b16 %v1092, %v1090
      %v1153 = vpack.c.b16 %v1093, %v1091
      %v1154 = vpack.c.b16 %v1096, %v1094
      %v1155 = vpack.c.b16 %v1097, %v1095
      %v1156 = vpack.c.b16 %v1100, %v1098
      %v1157 = vpack.c.b16 %v1101, %v1099
      %v1158 = vpack.c.b16 %v1104, %v1102
      %v1159 = vpack.c.b16 %v1105, %v1103
      %v1160 = vpack.c.b16 %v1108, %v1106
      %v1161 = vpack.c.b16 %v1109, %v1107
      %v1162 = vpack.c.b16 %v1112, %v1110
      %v1163 = vpack.c.b16 %v1113, %v1111
      %v1164 = vpack.c.b16 %v1116, %v1114
      %v1165 = vpack.c.b16 %v1117, %v1115
      %v1166 = vpack.c.b16 %v1120, %v1118
      %v1167 = vpack.c.b16 %v1121, %v1119
      %v1168 = vpack.c.b16 %v1124, %v1122
      %v1169 = vpack.c.b16 %v1125, %v1123
      %v1170 = vpack.c.b16 %v1128, %v1126
      %v1171 = vpack.c.b16 %v1129, %v1127
      %v1172 = vpack.c.b16 %v1132, %v1130
      %v1173 = vpack.c.b16 %v1133, %v1131
      %v1215 = vsel %vm561, %v947, 0
      %v1218 = vsel %vm561, %v950, 0
      %v1221 = vsel %vm561, %v953, 0
      %v1224 = vsel %vm561, %v956, 0
      %1226 = vmatprep.subr.bf16.mxu0 %v1149
      %1227 = vmatpush1.bf16.msra.mxu0 %v1148
      %1228 = vmatprep.subr.bf16.mxu0 %v1147
      %1229 = vmatpush1.bf16.msra.mxu0 %v1146
      %1230 = vmatprep.subr.bf16.mxu0 %v1145
      %1231 = vmatpush1.bf16.msra.mxu0 %v1144
      %1232 = vmatprep.subr.bf16.mxu0 %v1143
      %1233 = vmatpush1.bf16.msra.mxu0 %v1142
      %1234 = vmatprep.subr.bf16.mxu0 %v1141
      %1235 = vmatpush1.bf16.msra.mxu0 %v1140
      %1236 = vmatprep.subr.bf16.mxu0 %v1139
      %1237 = vmatpush1.bf16.msra.mxu0 %v1138
      %1238 = vmatprep.subr.bf16.mxu0 %v1137
      %1239 = vmatpush1.bf16.msra.mxu0 %v1136
      %1240 = vmatprep.subr.bf16.mxu0 %v1135
      %1241 = vmatpush1.bf16.msra.mxu0 %v1134
      %1242 = vmatprep.subr.bf16.mxu0 %v1165
      %1243 = vmatpush2.bf16.msra.mxu0 %v1164
      %1244 = vmatprep.subr.bf16.mxu0 %v1163
      %1245 = vmatpush2.bf16.msra.mxu0 %v1162
      %1246 = vmatprep.subr.bf16.mxu0 %v1161
      %1247 = vmatpush2.bf16.msra.mxu0 %v1160
      %1248 = vmatprep.subr.bf16.mxu0 %v1159
      %1249 = vmatpush2.bf16.msra.mxu0 %v1158
      %1250 = vmatprep.subr.bf16.mxu0 %v1157
      %1251 = vmatpush2.bf16.msra.mxu0 %v1156
      %1252 = vmatprep.subr.bf16.mxu0 %v1155
      %1253 = vmatpush2.bf16.msra.mxu0 %v1154
      %1254 = vmatprep.subr.bf16.mxu0 %v1153
      %1255 = vmatpush2.bf16.msra.mxu0 %v1152
      %1256 = vmatprep.subr.bf16.mxu0 %v1151
      %1257 = vmatpush2.bf16.msra.mxu0 %v1150
      %1258 = vmatprep.mubr.bf16.mxu0 %v946
      %1259 = vmatmul.mubr.bf16.gmra.mxu0 %v945
      %v1260 = vpop.f32.mrf.mxu0
      %v1261 = vadd.f32 0.0, %v1260
      %v1262 = vpop.f32.mrf.mxu0
      %v1263 = vadd.f32 0.0, %v1262
      %v1264 = vpop.f32.mrf.mxu0
      %v1265 = vadd.f32 0.0, %v1264
      %v1266 = vpop.f32.mrf.mxu0
      %v1267 = vadd.f32 0.0, %v1266
      %1268 = vmatprep.mubr.bf16.mxu0 %v949
      %1269 = vmatmul.mubr.bf16.gmra.mxu0 %v948
      %v1270 = vpop.f32.mrf.mxu0
      %v1271 = vadd.f32 0.0, %v1270
      %v1272 = vpop.f32.mrf.mxu0
      %v1273 = vadd.f32 0.0, %v1272
      %v1274 = vpop.f32.mrf.mxu0
      %v1275 = vadd.f32 0.0, %v1274
      %v1276 = vpop.f32.mrf.mxu0
      %v1277 = vadd.f32 0.0, %v1276
      %1278 = vmatprep.mubr.bf16.mxu0 %v952
      %1279 = vmatmul.mubr.bf16.gmra.mxu0 %v951
      %v1280 = vpop.f32.mrf.mxu0
      %v1281 = vadd.f32 0.0, %v1280
      %v1282 = vpop.f32.mrf.mxu0
      %v1283 = vadd.f32 0.0, %v1282
      %v1284 = vpop.f32.mrf.mxu0
      %v1285 = vadd.f32 0.0, %v1284
      %v1286 = vpop.f32.mrf.mxu0
      %v1287 = vadd.f32 0.0, %v1286
      %1288 = vmatprep.mubr.bf16.mxu0 %v955
      %1289 = vmatmul.mubr.bf16.gmra.mxu0 %v954
      %v1290 = vpop.f32.mrf.mxu0
      %v1291 = vadd.f32 0.0, %v1290
      %v1292 = vpop.f32.mrf.mxu0
      %v1293 = vadd.f32 0.0, %v1292
      %v1294 = vpop.f32.mrf.mxu0
      %v1295 = vadd.f32 0.0, %v1294
      %v1296 = vpop.f32.mrf.mxu0
      %v1297 = vadd.f32 0.0, %v1296
      %1298 = vdwg.mxu0
      %1299 = vmatprep.subr.bf16.mxu0 0
      %1300 = vmatpush1.bf16.msra.mxu0 0
      %1301 = vmatprep.subr.bf16.mxu0 0
      %1302 = vmatpush1.bf16.msra.mxu0 0
      %1303 = vmatprep.subr.bf16.mxu0 0
      %1304 = vmatpush1.bf16.msra.mxu0 0
      %1305 = vmatprep.subr.bf16.mxu0 0
      %1306 = vmatpush1.bf16.msra.mxu0 0
      %1307 = vmatprep.subr.bf16.mxu0 %v1173
      %1308 = vmatpush1.bf16.msra.mxu0 %v1172
      %1309 = vmatprep.subr.bf16.mxu0 %v1171
      %1310 = vmatpush1.bf16.msra.mxu0 %v1170
      %1311 = vmatprep.subr.bf16.mxu0 %v1169
      %1312 = vmatpush1.bf16.msra.mxu0 %v1168
      %1313 = vmatprep.subr.bf16.mxu0 %v1167
      %1314 = vmatpush1.bf16.msra.mxu0 %v1166
      %1315 = vmatprep.subr.bf16.mxu0 0
      %1316 = vmatpush2.bf16.msra.mxu0 0
      %1317 = vmatprep.subr.bf16.mxu0 0
      %1318 = vmatpush2.bf16.msra.mxu0 0
      %1319 = vmatprep.subr.bf16.mxu0 0
      %1320 = vmatpush2.bf16.msra.mxu0 0
      %1321 = vmatprep.subr.bf16.mxu0 0
      %1322 = vmatpush2.bf16.msra.mxu0 0
      %1323 = vmatprep.subr.bf16.mxu0 0
      %1324 = vmatpush2.bf16.msra.mxu0 0
      %1325 = vmatprep.subr.bf16.mxu0 0
      %1326 = vmatpush2.bf16.msra.mxu0 0
      %1327 = vmatprep.subr.bf16.mxu0 0
      %1328 = vmatpush2.bf16.msra.mxu0 0
      %1329 = vmatprep.subr.bf16.mxu0 0
      %1330 = vmatpush2.bf16.msra.mxu0 0
      %1331 = vmatprep.mubr.bf16.mxu0 0
      %1332 = vmatmul.mubr.bf16.gmra.mxu0 %v1215
      %v1333 = vpop.f32.mrf.mxu0
      %v1334 = vadd.f32 %v1261, %v1333
      %v1335 = vpop.f32.mrf.mxu0
      %v1336 = vadd.f32 %v1263, %v1335
      %v1337 = vpop.f32.mrf.mxu0
      %v1338 = vadd.f32 %v1265, %v1337
      %v1339 = vpop.f32.mrf.mxu0
      %v1340 = vadd.f32 %v1267, %v1339
      %1341 = vmatprep.mubr.bf16.mxu0 0
      %1342 = vmatmul.mubr.bf16.gmra.mxu0 %v1218
      %v1343 = vpop.f32.mrf.mxu0
      %v1344 = vadd.f32 %v1271, %v1343
      %v1345 = vpop.f32.mrf.mxu0
      %v1346 = vadd.f32 %v1273, %v1345
      %v1347 = vpop.f32.mrf.mxu0
      %v1348 = vadd.f32 %v1275, %v1347
      %v1349 = vpop.f32.mrf.mxu0
      %v1350 = vadd.f32 %v1277, %v1349
      %1351 = vmatprep.mubr.bf16.mxu0 0
      %1352 = vmatmul.mubr.bf16.gmra.mxu0 %v1221
      %v1353 = vpop.f32.mrf.mxu0
      %v1354 = vadd.f32 %v1281, %v1353
      %v1355 = vpop.f32.mrf.mxu0
      %v1356 = vadd.f32 %v1283, %v1355
      %v1357 = vpop.f32.mrf.mxu0
      %v1358 = vadd.f32 %v1285, %v1357
      %v1359 = vpop.f32.mrf.mxu0
      %v1360 = vadd.f32 %v1287, %v1359
      %1361 = vmatprep.mubr.bf16.mxu0 0
      %1362 = vmatmul.mubr.bf16.gmra.mxu0 %v1224
      %v1363 = vpop.f32.mrf.mxu0
      %v1364 = vadd.f32 %v1291, %v1363
      %v1365 = vpop.f32.mrf.mxu0
      %v1366 = vadd.f32 %v1293, %v1365
      %v1367 = vpop.f32.mrf.mxu0
      %v1368 = vadd.f32 %v1295, %v1367
      %v1369 = vpop.f32.mrf.mxu0
      %v1370 = vadd.f32 %v1297, %v1369
      %1371 = vdwg.mxu0
      %v1372 = vadd.f32 %v957, %v1334
      %v1373 = vadd.f32 %v958, %v1336
      %v1374 = vadd.f32 %v959, %v1338
      %v1375 = vadd.f32 %v960, %v1340
      %v1376 = vadd.f32 %v961, %v1344
      %v1377 = vadd.f32 %v962, %v1346
      %v1378 = vadd.f32 %v963, %v1348
      %v1379 = vadd.f32 %v964, %v1350
      %v1380 = vadd.f32 %v965, %v1354
      %v1381 = vadd.f32 %v966, %v1356
      %v1382 = vadd.f32 %v967, %v1358
      %v1383 = vadd.f32 %v968, %v1360
      %v1384 = vadd.f32 %v969, %v1364
      %v1385 = vadd.f32 %v970, %v1366
      %v1386 = vadd.f32 %v971, %v1368
      %v1387 = vadd.f32 %v972, %v1370
      %1388 = vst [vmem:[#allocation2] sm:$0xff] %v1372
      %1389 = vst [vmem:[#allocation2 + $0x8] sm:$0xff] %v1373
      %1390 = vst [vmem:[#allocation2 + $0x10] sm:$0xff] %v1374
      %1391 = vst [vmem:[#allocation2 + $0x18] sm:$0xff] %v1375
      %1392 = vst [vmem:[#allocation2 + $0x20] sm:$0xff] %v1376
      %1393 = vst [vmem:[#allocation2 + $0x28] sm:$0xff] %v1377
      %1394 = vst [vmem:[#allocation2 + $0x30] sm:$0xff] %v1378
      %1395 = vst [vmem:[#allocation2 + $0x38] sm:$0xff] %v1379
      %1396 = vst [vmem:[#allocation2 + $0x40] sm:$0xff] %v1380
      %1397 = vst [vmem:[#allocation2 + $0x48] sm:$0xff] %v1381
      %1398 = vst [vmem:[#allocation2 + $0x50] sm:$0xff] %v1382
      %1399 = vst [vmem:[#allocation2 + $0x58] sm:$0xff] %v1383
      %1400 = vst [vmem:[#allocation2 + $0x60] sm:$0xff] %v1384
      %1401 = vst [vmem:[#allocation2 + $0x68] sm:$0xff] %v1385
      %1402 = vst [vmem:[#allocation2 + $0x70] sm:$0xff] %v1386
      %1403 = vst [vmem:[#allocation2 + $0x78] sm:$0xff] %v1387
      %v1404 = vld [vmem:[%s246] sm:$0xfc]
      %v1405 = vld [vmem:[%s246 + $0x8] sm:$0xfc]
      %v1406 = vld [vmem:[%s246 + $0x10] sm:$0xfc]
      %v1407 = vld [vmem:[%s246 + $0x18] sm:$0x3]
      %v1408 = vld [vmem:[%s246 + $0x20] sm:$0x3]
      %v1409 = vld [vmem:[%s246 + $0x28] sm:$0x3]
      %v1410 = vld [vmem:[%s246 + $0x30] sm:$0xfc]
      %v1411 = vld [vmem:[%s246 + $0x38] sm:$0xfc]
      %v1412 = vld [vmem:[%s246 + $0x40] sm:$0xfc]
      %v1413 = vld [vmem:[%s246 + $0x48] sm:$0x3]
      %v1414 = vld [vmem:[%s246 + $0x50] sm:$0x3]
      %v1415 = vld [vmem:[%s246 + $0x58] sm:$0x3]
      %v1416 = vld [vmem:[%s246 + $0x60] sm:$0xfc]
      %v1417 = vld [vmem:[%s246 + $0x68] sm:$0xfc]
      %v1418 = vld [vmem:[%s246 + $0x70] sm:$0xfc]
      %v1419 = vld [vmem:[%s246 + $0x78] sm:$0x3]
      %v1420 = vld [vmem:[%s246 + $0x80] sm:$0x3]
      %v1421 = vld [vmem:[%s246 + $0x88] sm:$0x3]
      %v1422 = vld [vmem:[%s246 + $0x90] sm:$0xfc]
      %v1423 = vld [vmem:[%s246 + $0x98] sm:$0xfc]
      %v1424 = vld [vmem:[%s246 + $0xa0] sm:$0xfc]
      %v1425 = vld [vmem:[%s246 + $0xa8] sm:$0x3]
      %v1426 = vld [vmem:[%s246 + $0xb0] sm:$0x3]
      %v1427 = vld [vmem:[%s246 + $0xb8] sm:$0x3]
      %v1428 = vld [vmem:[%s246 + $0xc0] sm:$0xfc]
      %v1429 = vld [vmem:[%s246 + $0xc8] sm:$0xfc]
      %v1430 = vld [vmem:[%s246 + $0xd0] sm:$0xfc]
      %v1431 = vld [vmem:[%s246 + $0xd8] sm:$0x3]
      %v1432 = vld [vmem:[%s246 + $0xe0] sm:$0x3]
      %v1433 = vld [vmem:[%s246 + $0xe8] sm:$0x3]
      %v1434 = vld [vmem:[%s246 + $0xf0] sm:$0xfc]
      %v1435 = vld [vmem:[%s246 + $0xf8] sm:$0xfc]
      %v1436 = vld [vmem:[%s246 + $0x100] sm:$0xfc]
      %v1437 = vld [vmem:[%s246 + $0x108] sm:$0x3]
      %v1438 = vld [vmem:[%s246 + $0x110] sm:$0x3]
      %v1439 = vld [vmem:[%s246 + $0x118] sm:$0x3]
      %v1440 = vld [vmem:[%s246 + $0x120] sm:$0xfc]
      %v1441 = vld [vmem:[%s246 + $0x128] sm:$0xfc]
      %v1442 = vld [vmem:[%s246 + $0x130] sm:$0xfc]
      %v1443 = vld [vmem:[%s246 + $0x138] sm:$0x3]
      %v1444 = vld [vmem:[%s246 + $0x140] sm:$0x3]
      %v1445 = vld [vmem:[%s246 + $0x148] sm:$0x3]
      %v1446 = vld [vmem:[%s246 + $0x150] sm:$0xfc]
      %v1447 = vld [vmem:[%s246 + $0x158] sm:$0xfc]
      %v1448 = vld [vmem:[%s246 + $0x160] sm:$0xfc]
      %v1449 = vld [vmem:[%s246 + $0x168] sm:$0x3]
      %v1450 = vld [vmem:[%s246 + $0x170] sm:$0x3]
      %v1451 = vld [vmem:[%s246 + $0x178] sm:$0x3]
      %vm1500 = vcmask 1045504
      %v1501 = vrot.slane %v1404, 2
      %v1502 = vrot.slane %v1407, 2
      %v1503 = vsel %vm1500, %v1501, %v1502
      %v1504 = vrot.slane %v1405, 2
      %v1505 = vrot.slane %v1408, 2
      %v1506 = vsel %vm1500, %v1504, %v1505
      %v1507 = vrot.slane %v1406, 2
      %v1508 = vrot.slane %v1409, 2
      %v1509 = vsel %vm1500, %v1507, %v1508
      %v1510 = vrot.slane %v1410, 2
      %v1511 = vrot.slane %v1413, 2
      %v1512 = vsel %vm1500, %v1510, %v1511
      %v1513 = vrot.slane %v1411, 2
      %v1514 = vrot.slane %v1414, 2
      %v1515 = vsel %vm1500, %v1513, %v1514
      %v1516 = vrot.slane %v1412, 2
      %v1517 = vrot.slane %v1415, 2
      %v1518 = vsel %vm1500, %v1516, %v1517
      %v1519 = vrot.slane %v1416, 2
      %v1520 = vrot.slane %v1419, 2
      %v1521 = vsel %vm1500, %v1519, %v1520
      %v1522 = vrot.slane %v1417, 2
      %v1523 = vrot.slane %v1420, 2
      %v1524 = vsel %vm1500, %v1522, %v1523
      %v1525 = vrot.slane %v1418, 2
      %v1526 = vrot.slane %v1421, 2
      %v1527 = vsel %vm1500, %v1525, %v1526
      %v1528 = vrot.slane %v1422, 2
      %v1529 = vrot.slane %v1425, 2
      %v1530 = vsel %vm1500, %v1528, %v1529
      %v1531 = vrot.slane %v1423, 2
      %v1532 = vrot.slane %v1426, 2
      %v1533 = vsel %vm1500, %v1531, %v1532
      %v1534 = vrot.slane %v1424, 2
      %v1535 = vrot.slane %v1427, 2
      %v1536 = vsel %vm1500, %v1534, %v1535
      %v1537 = vrot.slane %v1428, 2
      %v1538 = vrot.slane %v1431, 2
      %v1539 = vsel %vm1500, %v1537, %v1538
      %v1540 = vrot.slane %v1429, 2
      %v1541 = vrot.slane %v1432, 2
      %v1542 = vsel %vm1500, %v1540, %v1541
      %v1543 = vrot.slane %v1430, 2
      %v1544 = vrot.slane %v1433, 2
      %v1545 = vsel %vm1500, %v1543, %v1544
      %v1546 = vrot.slane %v1434, 2
      %v1547 = vrot.slane %v1437, 2
      %v1548 = vsel %vm1500, %v1546, %v1547
      %v1549 = vrot.slane %v1435, 2
      %v1550 = vrot.slane %v1438, 2
      %v1551 = vsel %vm1500, %v1549, %v1550
      %v1552 = vrot.slane %v1436, 2
      %v1553 = vrot.slane %v1439, 2
      %v1554 = vsel %vm1500, %v1552, %v1553
      %v1555 = vrot.slane %v1440, 2
      %v1556 = vrot.slane %v1443, 2
      %v1557 = vsel %vm1500, %v1555, %v1556
      %v1558 = vrot.slane %v1441, 2
      %v1559 = vrot.slane %v1444, 2
      %v1560 = vsel %vm1500, %v1558, %v1559
      %v1561 = vrot.slane %v1442, 2
      %v1562 = vrot.slane %v1445, 2
      %v1563 = vsel %vm1500, %v1561, %v1562
      %v1564 = vrot.slane %v1446, 2
      %v1565 = vrot.slane %v1449, 2
      %v1566 = vsel %vm1500, %v1564, %v1565
      %v1567 = vrot.slane %v1447, 2
      %v1568 = vrot.slane %v1450, 2
      %v1569 = vsel %vm1500, %v1567, %v1568
      %v1570 = vrot.slane %v1448, 2
      %v1571 = vrot.slane %v1451, 2
      %v1572 = vsel %vm1500, %v1570, %v1571
      %v1597 = vpack.c.bf16 %v1512, %v1503
      %v1598 = vpack.c.bf16 %v1515, %v1506
      %v1599 = vpack.c.bf16 %v1518, %v1509
      %v1600 = vpack.c.bf16 %v1530, %v1521
      %v1601 = vpack.c.bf16 %v1533, %v1524
      %v1602 = vpack.c.bf16 %v1536, %v1527
      %v1603 = vpack.c.bf16 %v1548, %v1539
      %v1604 = vpack.c.bf16 %v1551, %v1542
      %v1605 = vpack.c.bf16 %v1554, %v1545
      %v1606 = vpack.c.bf16 %v1566, %v1557
      %v1607 = vpack.c.bf16 %v1569, %v1560
      %v1608 = vpack.c.bf16 %v1572, %v1563
      %v1609 = vld [vmem:[#allocation2] sm:$0xff]
      %v1610 = vld [vmem:[#allocation2 + $0x8] sm:$0xff]
      %v1611 = vld [vmem:[#allocation2 + $0x10] sm:$0xff]
      %v1612 = vld [vmem:[#allocation2 + $0x18] sm:$0xff]
      %v1613 = vld [vmem:[#allocation2 + $0x20] sm:$0xff]
      %v1614 = vld [vmem:[#allocation2 + $0x28] sm:$0xff]
      %v1615 = vld [vmem:[#allocation2 + $0x30] sm:$0xff]
      %v1616 = vld [vmem:[#allocation2 + $0x38] sm:$0xff]
      %v1617 = vld [vmem:[#allocation2 + $0x40] sm:$0xff]
      %v1618 = vld [vmem:[#allocation2 + $0x48] sm:$0xff]
      %v1619 = vld [vmem:[#allocation2 + $0x50] sm:$0xff]
      %v1620 = vld [vmem:[#allocation2 + $0x58] sm:$0xff]
      %v1621 = vld [vmem:[#allocation2 + $0x60] sm:$0xff]
      %v1622 = vld [vmem:[#allocation2 + $0x68] sm:$0xff]
      %v1623 = vld [vmem:[#allocation2 + $0x70] sm:$0xff]
      %v1624 = vld [vmem:[#allocation2 + $0x78] sm:$0xff]
      %s1625 = scalar_lea.vmem %s1, 640
      %v1626 = vld [vmem:[%s1625] sm:$0xff]
      %v1627 = vld [vmem:[%s1625 + $0x8] sm:$0xff]
      %v1628 = vld [vmem:[%s1625 + $0x10] sm:$0xff]
      %v1629 = vld [vmem:[%s1625 + $0x18] sm:$0xff]
      %v1630 = vld [vmem:[%s1625 + $0x20] sm:$0xff]
      %v1631 = vld [vmem:[%s1625 + $0x28] sm:$0xff]
      %v1632 = vld [vmem:[%s1625 + $0x30] sm:$0xff]
      %v1633 = vld [vmem:[%s1625 + $0x38] sm:$0xff]
      %v1634 = vld [vmem:[%s1625 + $0x40] sm:$0xff]
      %v1635 = vld [vmem:[%s1625 + $0x48] sm:$0xff]
      %v1636 = vld [vmem:[%s1625 + $0x50] sm:$0xff]
      %v1637 = vld [vmem:[%s1625 + $0x58] sm:$0xff]
      %v1638 = vld [vmem:[%s1625 + $0x60] sm:$0xff]
      %v1639 = vld [vmem:[%s1625 + $0x68] sm:$0xff]
      %v1640 = vld [vmem:[%s1625 + $0x70] sm:$0xff]
      %v1641 = vld [vmem:[%s1625 + $0x78] sm:$0xff]
      %v1642 = vld [vmem:[%s1625 + $0x80] sm:$0xff]
      %v1643 = vld [vmem:[%s1625 + $0x88] sm:$0xff]
      %v1644 = vld [vmem:[%s1625 + $0x90] sm:$0xff]
      %v1645 = vld [vmem:[%s1625 + $0x98] sm:$0xff]
      %v1646 = vld [vmem:[%s1625 + $0xa0] sm:$0xff]
      %v1647 = vld [vmem:[%s1625 + $0xa8] sm:$0xff]
      %v1648 = vld [vmem:[%s1625 + $0xb0] sm:$0xff]
      %v1649 = vld [vmem:[%s1625 + $0xb8] sm:$0xff]
      %v1650 = vld [vmem:[%s1625 + $0xc0] sm:$0xff]
      %v1651 = vld [vmem:[%s1625 + $0xc8] sm:$0xff]
      %v1652 = vld [vmem:[%s1625 + $0xd0] sm:$0xff]
      %v1653 = vld [vmem:[%s1625 + $0xd8] sm:$0xff]
      %v1654 = vld [vmem:[%s1625 + $0xe0] sm:$0xff]
      %v1655 = vld [vmem:[%s1625 + $0xe8] sm:$0xff]
      %v1656 = vld [vmem:[%s1625 + $0xf0] sm:$0xff]
      %v1657 = vld [vmem:[%s1625 + $0xf8] sm:$0xff]
      %v1658 = vld [vmem:[%s1625 + $0x100] sm:$0xff]
      %v1659 = vld [vmem:[%s1625 + $0x108] sm:$0xff]
      %v1660 = vld [vmem:[%s1625 + $0x110] sm:$0xff]
      %v1661 = vld [vmem:[%s1625 + $0x118] sm:$0xff]
      %v1662 = vld [vmem:[%s1625 + $0x120] sm:$0xff]
      %v1663 = vld [vmem:[%s1625 + $0x128] sm:$0xff]
      %v1664 = vld [vmem:[%s1625 + $0x130] sm:$0xff]
      %v1665 = vld [vmem:[%s1625 + $0x138] sm:$0xff]
      %v1706 = vunpack.c.l.b16 %v1626
      %v1707 = vunpack.c.h.b16 %v1626
      %v1708 = vunpack.c.l.b16 %v1627
      %v1709 = vunpack.c.h.b16 %v1627
      %v1710 = vunpack.c.l.b16 %v1628
      %v1711 = vunpack.c.h.b16 %v1628
      %v1712 = vunpack.c.l.b16 %v1629
      %v1713 = vunpack.c.h.b16 %v1629
      %v1714 = vunpack.c.l.b16 %v1630
      %v1715 = vunpack.c.h.b16 %v1630
      %v1716 = vunpack.c.l.b16 %v1631
      %v1717 = vunpack.c.h.b16 %v1631
      %v1718 = vunpack.c.l.b16 %v1632
      %v1719 = vunpack.c.h.b16 %v1632
      %v1720 = vunpack.c.l.b16 %v1633
      %v1721 = vunpack.c.h.b16 %v1633
      %v1722 = vunpack.c.l.b16 %v1634
      %v1723 = vunpack.c.h.b16 %v1634
      %v1724 = vunpack.c.l.b16 %v1635
      %v1725 = vunpack.c.h.b16 %v1635
      %v1726 = vunpack.c.l.b16 %v1636
      %v1727 = vunpack.c.h.b16 %v1636
      %v1728 = vunpack.c.l.b16 %v1637
      %v1729 = vunpack.c.h.b16 %v1637
      %v1730 = vunpack.c.l.b16 %v1638
      %v1731 = vunpack.c.h.b16 %v1638
      %v1732 = vunpack.c.l.b16 %v1639
      %v1733 = vunpack.c.h.b16 %v1639
      %v1734 = vunpack.c.l.b16 %v1640
      %v1735 = vunpack.c.h.b16 %v1640
      %v1736 = vunpack.c.l.b16 %v1641
      %v1737 = vunpack.c.h.b16 %v1641
      %v1738 = vunpack.c.l.b16 %v1642
      %v1739 = vunpack.c.h.b16 %v1642
      %v1740 = vunpack.c.l.b16 %v1643
      %v1741 = vunpack.c.h.b16 %v1643
      %v1742 = vunpack.c.l.b16 %v1644
      %v1743 = vunpack.c.h.b16 %v1644
      %v1744 = vunpack.c.l.b16 %v1645
      %v1745 = vunpack.c.h.b16 %v1645
      %v1746 = vunpack.c.l.b16 %v1646
      %v1747 = vunpack.c.h.b16 %v1646
      %v1748 = vunpack.c.l.b16 %v1647
      %v1749 = vunpack.c.h.b16 %v1647
      %v1750 = vunpack.c.l.b16 %v1648
      %v1751 = vunpack.c.h.b16 %v1648
      %v1752 = vunpack.c.l.b16 %v1649
      %v1753 = vunpack.c.h.b16 %v1649
      %v1754 = vunpack.c.l.b16 %v1650
      %v1755 = vunpack.c.h.b16 %v1650
      %v1756 = vunpack.c.l.b16 %v1651
      %v1757 = vunpack.c.h.b16 %v1651
      %v1758 = vunpack.c.l.b16 %v1652
      %v1759 = vunpack.c.h.b16 %v1652
      %v1760 = vunpack.c.l.b16 %v1653
      %v1761 = vunpack.c.h.b16 %v1653
      %v1762 = vunpack.c.l.b16 %v1654
      %v1763 = vunpack.c.h.b16 %v1654
      %v1764 = vunpack.c.l.b16 %v1655
      %v1765 = vunpack.c.h.b16 %v1655
      %v1766 = vunpack.c.l.b16 %v1656
      %v1767 = vunpack.c.h.b16 %v1656
      %v1768 = vunpack.c.l.b16 %v1657
      %v1769 = vunpack.c.h.b16 %v1657
      %v1770 = vunpack.c.l.b16 %v1658
      %v1771 = vunpack.c.h.b16 %v1658
      %v1772 = vunpack.c.l.b16 %v1659
      %v1773 = vunpack.c.h.b16 %v1659
      %v1774 = vunpack.c.l.b16 %v1660
      %v1775 = vunpack.c.h.b16 %v1660
      %v1776 = vunpack.c.l.b16 %v1661
      %v1777 = vunpack.c.h.b16 %v1661
      %v1778 = vunpack.c.l.b16 %v1662
      %v1779 = vunpack.c.h.b16 %v1662
      %v1780 = vunpack.c.l.b16 %v1663
      %v1781 = vunpack.c.h.b16 %v1663
      %v1782 = vunpack.c.l.b16 %v1664
      %v1783 = vunpack.c.h.b16 %v1664
      %v1784 = vunpack.c.l.b16 %v1665
      %v1785 = vunpack.c.h.b16 %v1665
      %v1786 = vpack.c.b16 %v1708, %v1706
      %v1787 = vpack.c.b16 %v1709, %v1707
      %v1788 = vpack.c.b16 %v1712, %v1710
      %v1789 = vpack.c.b16 %v1713, %v1711
      %v1790 = vpack.c.b16 %v1716, %v1714
      %v1791 = vpack.c.b16 %v1717, %v1715
      %v1792 = vpack.c.b16 %v1720, %v1718
      %v1793 = vpack.c.b16 %v1721, %v1719
      %v1794 = vpack.c.b16 %v1724, %v1722
      %v1795 = vpack.c.b16 %v1725, %v1723
      %v1796 = vpack.c.b16 %v1728, %v1726
      %v1797 = vpack.c.b16 %v1729, %v1727
      %v1798 = vpack.c.b16 %v1732, %v1730
      %v1799 = vpack.c.b16 %v1733, %v1731
      %v1800 = vpack.c.b16 %v1736, %v1734
      %v1801 = vpack.c.b16 %v1737, %v1735
      %v1802 = vpack.c.b16 %v1740, %v1738
      %v1803 = vpack.c.b16 %v1741, %v1739
      %v1804 = vpack.c.b16 %v1744, %v1742
      %v1805 = vpack.c.b16 %v1745, %v1743
      %v1806 = vpack.c.b16 %v1748, %v1746
      %v1807 = vpack.c.b16 %v1749, %v1747
      %v1808 = vpack.c.b16 %v1752, %v1750
      %v1809 = vpack.c.b16 %v1753, %v1751
      %v1810 = vpack.c.b16 %v1756, %v1754
      %v1811 = vpack.c.b16 %v1757, %v1755
      %v1812 = vpack.c.b16 %v1760, %v1758
      %v1813 = vpack.c.b16 %v1761, %v1759
      %v1814 = vpack.c.b16 %v1764, %v1762
      %v1815 = vpack.c.b16 %v1765, %v1763
      %v1816 = vpack.c.b16 %v1768, %v1766
      %v1817 = vpack.c.b16 %v1769, %v1767
      %v1818 = vpack.c.b16 %v1772, %v1770
      %v1819 = vpack.c.b16 %v1773, %v1771
      %v1820 = vpack.c.b16 %v1776, %v1774
      %v1821 = vpack.c.b16 %v1777, %v1775
      %v1822 = vpack.c.b16 %v1780, %v1778
      %v1823 = vpack.c.b16 %v1781, %v1779
      %v1824 = vpack.c.b16 %v1784, %v1782
      %v1825 = vpack.c.b16 %v1785, %v1783
      %v1867 = vsel %vm561, %v1599, 0
      %v1870 = vsel %vm561, %v1602, 0
      %v1873 = vsel %vm561, %v1605, 0
      %v1876 = vsel %vm561, %v1608, 0
      %1878 = vmatprep.subr.bf16.mxu0 %v1801
      %1879 = vmatpush1.bf16.msra.mxu0 %v1800
      %1880 = vmatprep.subr.bf16.mxu0 %v1799
      %1881 = vmatpush1.bf16.msra.mxu0 %v1798
      %1882 = vmatprep.subr.bf16.mxu0 %v1797
      %1883 = vmatpush1.bf16.msra.mxu0 %v1796
      %1884 = vmatprep.subr.bf16.mxu0 %v1795
      %1885 = vmatpush1.bf16.msra.mxu0 %v1794
      %1886 = vmatprep.subr.bf16.mxu0 %v1793
      %1887 = vmatpush1.bf16.msra.mxu0 %v1792
      %1888 = vmatprep.subr.bf16.mxu0 %v1791
      %1889 = vmatpush1.bf16.msra.mxu0 %v1790
      %1890 = vmatprep.subr.bf16.mxu0 %v1789
      %1891 = vmatpush1.bf16.msra.mxu0 %v1788
      %1892 = vmatprep.subr.bf16.mxu0 %v1787
      %1893 = vmatpush1.bf16.msra.mxu0 %v1786
      %1894 = vmatprep.subr.bf16.mxu0 %v1817
      %1895 = vmatpush2.bf16.msra.mxu0 %v1816
      %1896 = vmatprep.subr.bf16.mxu0 %v1815
      %1897 = vmatpush2.bf16.msra.mxu0 %v1814
      %1898 = vmatprep.subr.bf16.mxu0 %v1813
      %1899 = vmatpush2.bf16.msra.mxu0 %v1812
      %1900 = vmatprep.subr.bf16.mxu0 %v1811
      %1901 = vmatpush2.bf16.msra.mxu0 %v1810
      %1902 = vmatprep.subr.bf16.mxu0 %v1809
      %1903 = vmatpush2.bf16.msra.mxu0 %v1808
      %1904 = vmatprep.subr.bf16.mxu0 %v1807
      %1905 = vmatpush2.bf16.msra.mxu0 %v1806
      %1906 = vmatprep.subr.bf16.mxu0 %v1805
      %1907 = vmatpush2.bf16.msra.mxu0 %v1804
      %1908 = vmatprep.subr.bf16.mxu0 %v1803
      %1909 = vmatpush2.bf16.msra.mxu0 %v1802
      %1910 = vmatprep.mubr.bf16.mxu0 %v1598
      %1911 = vmatmul.mubr.bf16.gmra.mxu0 %v1597
      %v1912 = vpop.f32.mrf.mxu0
      %v1913 = vadd.f32 0.0, %v1912
      %v1914 = vpop.f32.mrf.mxu0
      %v1915 = vadd.f32 0.0, %v1914
      %v1916 = vpop.f32.mrf.mxu0
      %v1917 = vadd.f32 0.0, %v1916
      %v1918 = vpop.f32.mrf.mxu0
      %v1919 = vadd.f32 0.0, %v1918
      %1920 = vmatprep.mubr.bf16.mxu0 %v1601
      %1921 = vmatmul.mubr.bf16.gmra.mxu0 %v1600
      %v1922 = vpop.f32.mrf.mxu0
      %v1923 = vadd.f32 0.0, %v1922
      %v1924 = vpop.f32.mrf.mxu0
      %v1925 = vadd.f32 0.0, %v1924
      %v1926 = vpop.f32.mrf.mxu0
      %v1927 = vadd.f32 0.0, %v1926
      %v1928 = vpop.f32.mrf.mxu0
      %v1929 = vadd.f32 0.0, %v1928
      %1930 = vmatprep.mubr.bf16.mxu0 %v1604
      %1931 = vmatmul.mubr.bf16.gmra.mxu0 %v1603
      %v1932 = vpop.f32.mrf.mxu0
      %v1933 = vadd.f32 0.0, %v1932
      %v1934 = vpop.f32.mrf.mxu0
      %v1935 = vadd.f32 0.0, %v1934
      %v1936 = vpop.f32.mrf.mxu0
      %v1937 = vadd.f32 0.0, %v1936
      %v1938 = vpop.f32.mrf.mxu0
      %v1939 = vadd.f32 0.0, %v1938
      %1940 = vmatprep.mubr.bf16.mxu0 %v1607
      %1941 = vmatmul.mubr.bf16.gmra.mxu0 %v1606
      %v1942 = vpop.f32.mrf.mxu0
      %v1943 = vadd.f32 0.0, %v1942
      %v1944 = vpop.f32.mrf.mxu0
      %v1945 = vadd.f32 0.0, %v1944
      %v1946 = vpop.f32.mrf.mxu0
      %v1947 = vadd.f32 0.0, %v1946
      %v1948 = vpop.f32.mrf.mxu0
      %v1949 = vadd.f32 0.0, %v1948
      %1950 = vdwg.mxu0
      %1951 = vmatprep.subr.bf16.mxu0 0
      %1952 = vmatpush1.bf16.msra.mxu0 0
      %1953 = vmatprep.subr.bf16.mxu0 0
      %1954 = vmatpush1.bf16.msra.mxu0 0
      %1955 = vmatprep.subr.bf16.mxu0 0
      %1956 = vmatpush1.bf16.msra.mxu0 0
      %1957 = vmatprep.subr.bf16.mxu0 0
      %1958 = vmatpush1.bf16.msra.mxu0 0
      %1959 = vmatprep.subr.bf16.mxu0 %v1825
      %1960 = vmatpush1.bf16.msra.mxu0 %v1824
      %1961 = vmatprep.subr.bf16.mxu0 %v1823
      %1962 = vmatpush1.bf16.msra.mxu0 %v1822
      %1963 = vmatprep.subr.bf16.mxu0 %v1821
      %1964 = vmatpush1.bf16.msra.mxu0 %v1820
      %1965 = vmatprep.subr.bf16.mxu0 %v1819
      %1966 = vmatpush1.bf16.msra.mxu0 %v1818
      %1967 = vmatprep.subr.bf16.mxu0 0
      %1968 = vmatpush2.bf16.msra.mxu0 0
      %1969 = vmatprep.subr.bf16.mxu0 0
      %1970 = vmatpush2.bf16.msra.mxu0 0
      %1971 = vmatprep.subr.bf16.mxu0 0
      %1972 = vmatpush2.bf16.msra.mxu0 0
      %1973 = vmatprep.subr.bf16.mxu0 0
      %1974 = vmatpush2.bf16.msra.mxu0 0
      %1975 = vmatprep.subr.bf16.mxu0 0
      %1976 = vmatpush2.bf16.msra.mxu0 0
      %1977 = vmatprep.subr.bf16.mxu0 0
      %1978 = vmatpush2.bf16.msra.mxu0 0
      %1979 = vmatprep.subr.bf16.mxu0 0
      %1980 = vmatpush2.bf16.msra.mxu0 0
      %1981 = vmatprep.subr.bf16.mxu0 0
      %1982 = vmatpush2.bf16.msra.mxu0 0
      %1983 = vmatprep.mubr.bf16.mxu0 0
      %1984 = vmatmul.mubr.bf16.gmra.mxu0 %v1867
      %v1985 = vpop.f32.mrf.mxu0
      %v1986 = vadd.f32 %v1913, %v1985
      %v1987 = vpop.f32.mrf.mxu0
      %v1988 = vadd.f32 %v1915, %v1987
      %v1989 = vpop.f32.mrf.mxu0
      %v1990 = vadd.f32 %v1917, %v1989
      %v1991 = vpop.f32.mrf.mxu0
      %v1992 = vadd.f32 %v1919, %v1991
      %1993 = vmatprep.mubr.bf16.mxu0 0
      %1994 = vmatmul.mubr.bf16.gmra.mxu0 %v1870
      %v1995 = vpop.f32.mrf.mxu0
      %v1996 = vadd.f32 %v1923, %v1995
      %v1997 = vpop.f32.mrf.mxu0
      %v1998 = vadd.f32 %v1925, %v1997
      %v1999 = vpop.f32.mrf.mxu0
      %v2000 = vadd.f32 %v1927, %v1999
      %v2001 = vpop.f32.mrf.mxu0
      %v2002 = vadd.f32 %v1929, %v2001
      %2003 = vmatprep.mubr.bf16.mxu0 0
      %2004 = vmatmul.mubr.bf16.gmra.mxu0 %v1873
      %v2005 = vpop.f32.mrf.mxu0
      %v2006 = vadd.f32 %v1933, %v2005
      %v2007 = vpop.f32.mrf.mxu0
      %v2008 = vadd.f32 %v1935, %v2007
      %v2009 = vpop.f32.mrf.mxu0
      %v2010 = vadd.f32 %v1937, %v2009
      %v2011 = vpop.f32.mrf.mxu0
      %v2012 = vadd.f32 %v1939, %v2011
      %2013 = vmatprep.mubr.bf16.mxu0 0
      %2014 = vmatmul.mubr.bf16.gmra.mxu0 %v1876
      %v2015 = vpop.f32.mrf.mxu0
      %v2016 = vadd.f32 %v1943, %v2015
      %v2017 = vpop.f32.mrf.mxu0
      %v2018 = vadd.f32 %v1945, %v2017
      %v2019 = vpop.f32.mrf.mxu0
      %v2020 = vadd.f32 %v1947, %v2019
      %v2021 = vpop.f32.mrf.mxu0
      %v2022 = vadd.f32 %v1949, %v2021
      %2023 = vdwg.mxu0
      %v2024 = vadd.f32 %v1609, %v1986
      %v2025 = vadd.f32 %v1610, %v1988
      %v2026 = vadd.f32 %v1611, %v1990
      %v2027 = vadd.f32 %v1612, %v1992
      %v2028 = vadd.f32 %v1613, %v1996
      %v2029 = vadd.f32 %v1614, %v1998
      %v2030 = vadd.f32 %v1615, %v2000
      %v2031 = vadd.f32 %v1616, %v2002
      %v2032 = vadd.f32 %v1617, %v2006
      %v2033 = vadd.f32 %v1618, %v2008
      %v2034 = vadd.f32 %v1619, %v2010
      %v2035 = vadd.f32 %v1620, %v2012
      %v2036 = vadd.f32 %v1621, %v2016
      %v2037 = vadd.f32 %v1622, %v2018
      %v2038 = vadd.f32 %v1623, %v2020
      %v2039 = vadd.f32 %v1624, %v2022
      %2040 = vst [vmem:[#allocation2] sm:$0xff] %v2024
      %2041 = vst [vmem:[#allocation2 + $0x8] sm:$0xff] %v2025
      %2042 = vst [vmem:[#allocation2 + $0x10] sm:$0xff] %v2026
      %2043 = vst [vmem:[#allocation2 + $0x18] sm:$0xff] %v2027
      %2044 = vst [vmem:[#allocation2 + $0x20] sm:$0xff] %v2028
      %2045 = vst [vmem:[#allocation2 + $0x28] sm:$0xff] %v2029
      %2046 = vst [vmem:[#allocation2 + $0x30] sm:$0xff] %v2030
      %2047 = vst [vmem:[#allocation2 + $0x38] sm:$0xff] %v2031
      %2048 = vst [vmem:[#allocation2 + $0x40] sm:$0xff] %v2032
      %2049 = vst [vmem:[#allocation2 + $0x48] sm:$0xff] %v2033
      %2050 = vst [vmem:[#allocation2 + $0x50] sm:$0xff] %v2034
      %2051 = vst [vmem:[#allocation2 + $0x58] sm:$0xff] %v2035
      %2052 = vst [vmem:[#allocation2 + $0x60] sm:$0xff] %v2036
      %2053 = vst [vmem:[#allocation2 + $0x68] sm:$0xff] %v2037
      %2054 = vst [vmem:[#allocation2 + $0x70] sm:$0xff] %v2038
      %2055 = vst [vmem:[#allocation2 + $0x78] sm:$0xff] %v2039
      %s2056 = scalar_lea.vmem %s246, 48
      %v2057 = vld [vmem:[%s2056] sm:$0xff]
      %v2058 = vld [vmem:[%s2056 + $0x8] sm:$0xff]
      %v2059 = vld [vmem:[%s2056 + $0x10] sm:$0xff]
      %v2060 = vld [vmem:[%s2056 + $0x30] sm:$0xff]
      %v2061 = vld [vmem:[%s2056 + $0x38] sm:$0xff]
      %v2062 = vld [vmem:[%s2056 + $0x40] sm:$0xff]
      %v2063 = vld [vmem:[%s2056 + $0x60] sm:$0xff]
      %v2064 = vld [vmem:[%s2056 + $0x68] sm:$0xff]
      %v2065 = vld [vmem:[%s2056 + $0x70] sm:$0xff]
      %v2066 = vld [vmem:[%s2056 + $0x90] sm:$0xff]
      %v2067 = vld [vmem:[%s2056 + $0x98] sm:$0xff]
      %v2068 = vld [vmem:[%s2056 + $0xa0] sm:$0xff]
      %v2069 = vld [vmem:[%s2056 + $0xc0] sm:$0xff]
      %v2070 = vld [vmem:[%s2056 + $0xc8] sm:$0xff]
      %v2071 = vld [vmem:[%s2056 + $0xd0] sm:$0xff]
      %v2072 = vld [vmem:[%s2056 + $0xf0] sm:$0xff]
      %v2073 = vld [vmem:[%s2056 + $0xf8] sm:$0xff]
      %v2074 = vld [vmem:[%s2056 + $0x100] sm:$0xff]
      %v2075 = vld [vmem:[%s2056 + $0x120] sm:$0xff]
      %v2076 = vld [vmem:[%s2056 + $0x128] sm:$0xff]
      %v2077 = vld [vmem:[%s2056 + $0x130] sm:$0xff]
      %v2078 = vld [vmem:[%s2056 + $0x150] sm:$0xff]
      %v2079 = vld [vmem:[%s2056 + $0x158] sm:$0xff]
      %v2080 = vld [vmem:[%s2056 + $0x160] sm:$0xff]
      %v2081 = vpack.c.bf16 %v2060, %v2057
      %v2082 = vpack.c.bf16 %v2061, %v2058
      %v2083 = vpack.c.bf16 %v2062, %v2059
      %v2084 = vpack.c.bf16 %v2066, %v2063
      %v2085 = vpack.c.bf16 %v2067, %v2064
      %v2086 = vpack.c.bf16 %v2068, %v2065
      %v2087 = vpack.c.bf16 %v2072, %v2069
      %v2088 = vpack.c.bf16 %v2073, %v2070
      %v2089 = vpack.c.bf16 %v2074, %v2071
      %v2090 = vpack.c.bf16 %v2078, %v2075
      %v2091 = vpack.c.bf16 %v2079, %v2076
      %v2092 = vpack.c.bf16 %v2080, %v2077
      %v2093 = vld [vmem:[#allocation2] sm:$0xff]
      %v2094 = vld [vmem:[#allocation2 + $0x8] sm:$0xff]
      %v2095 = vld [vmem:[#allocation2 + $0x10] sm:$0xff]
      %v2096 = vld [vmem:[#allocation2 + $0x18] sm:$0xff]
      %v2097 = vld [vmem:[#allocation2 + $0x20] sm:$0xff]
      %v2098 = vld [vmem:[#allocation2 + $0x28] sm:$0xff]
      %v2099 = vld [vmem:[#allocation2 + $0x30] sm:$0xff]
      %v2100 = vld [vmem:[#allocation2 + $0x38] sm:$0xff]
      %v2101 = vld [vmem:[#allocation2 + $0x40] sm:$0xff]
      %v2102 = vld [vmem:[#allocation2 + $0x48] sm:$0xff]
      %v2103 = vld [vmem:[#allocation2 + $0x50] sm:$0xff]
      %v2104 = vld [vmem:[#allocation2 + $0x58] sm:$0xff]
      %v2105 = vld [vmem:[#allocation2 + $0x60] sm:$0xff]
      %v2106 = vld [vmem:[#allocation2 + $0x68] sm:$0xff]
      %v2107 = vld [vmem:[#allocation2 + $0x70] sm:$0xff]
      %v2108 = vld [vmem:[#allocation2 + $0x78] sm:$0xff]
      %s2109 = scalar_lea.vmem %s1, 960
      %v2110 = vld [vmem:[%s2109] sm:$0xff]
      %v2111 = vld [vmem:[%s2109 + $0x8] sm:$0xff]
      %v2112 = vld [vmem:[%s2109 + $0x10] sm:$0xff]
      %v2113 = vld [vmem:[%s2109 + $0x18] sm:$0xff]
      %v2114 = vld [vmem:[%s2109 + $0x20] sm:$0xff]
      %v2115 = vld [vmem:[%s2109 + $0x28] sm:$0xff]
      %v2116 = vld [vmem:[%s2109 + $0x30] sm:$0xff]
      %v2117 = vld [vmem:[%s2109 + $0x38] sm:$0xff]
      %v2118 = vld [vmem:[%s2109 + $0x40] sm:$0xff]
      %v2119 = vld [vmem:[%s2109 + $0x48] sm:$0xff]
      %v2120 = vld [vmem:[%s2109 + $0x50] sm:$0xff]
      %v2121 = vld [vmem:[%s2109 + $0x58] sm:$0xff]
      %v2122 = vld [vmem:[%s2109 + $0x60] sm:$0xff]
      %v2123 = vld [vmem:[%s2109 + $0x68] sm:$0xff]
      %v2124 = vld [vmem:[%s2109 + $0x70] sm:$0xff]
      %v2125 = vld [vmem:[%s2109 + $0x78] sm:$0xff]
      %v2126 = vld [vmem:[%s2109 + $0x80] sm:$0xff]
      %v2127 = vld [vmem:[%s2109 + $0x88] sm:$0xff]
      %v2128 = vld [vmem:[%s2109 + $0x90] sm:$0xff]
      %v2129 = vld [vmem:[%s2109 + $0x98] sm:$0xff]
      %v2130 = vld [vmem:[%s2109 + $0xa0] sm:$0xff]
      %v2131 = vld [vmem:[%s2109 + $0xa8] sm:$0xff]
      %v2132 = vld [vmem:[%s2109 + $0xb0] sm:$0xff]
      %v2133 = vld [vmem:[%s2109 + $0xb8] sm:$0xff]
      %v2134 = vld [vmem:[%s2109 + $0xc0] sm:$0xff]
      %v2135 = vld [vmem:[%s2109 + $0xc8] sm:$0xff]
      %v2136 = vld [vmem:[%s2109 + $0xd0] sm:$0xff]
      %v2137 = vld [vmem:[%s2109 + $0xd8] sm:$0xff]
      %v2138 = vld [vmem:[%s2109 + $0xe0] sm:$0xff]
      %v2139 = vld [vmem:[%s2109 + $0xe8] sm:$0xff]
      %v2140 = vld [vmem:[%s2109 + $0xf0] sm:$0xff]
      %v2141 = vld [vmem:[%s2109 + $0xf8] sm:$0xff]
      %v2142 = vld [vmem:[%s2109 + $0x100] sm:$0xff]
      %v2143 = vld [vmem:[%s2109 + $0x108] sm:$0xff]
      %v2144 = vld [vmem:[%s2109 + $0x110] sm:$0xff]
      %v2145 = vld [vmem:[%s2109 + $0x118] sm:$0xff]
      %v2146 = vld [vmem:[%s2109 + $0x120] sm:$0xff]
      %v2147 = vld [vmem:[%s2109 + $0x128] sm:$0xff]
      %v2148 = vld [vmem:[%s2109 + $0x130] sm:$0xff]
      %v2149 = vld [vmem:[%s2109 + $0x138] sm:$0xff]
      %v2190 = vunpack.c.l.b16 %v2110
      %v2191 = vunpack.c.h.b16 %v2110
      %v2192 = vunpack.c.l.b16 %v2111
      %v2193 = vunpack.c.h.b16 %v2111
      %v2194 = vunpack.c.l.b16 %v2112
      %v2195 = vunpack.c.h.b16 %v2112
      %v2196 = vunpack.c.l.b16 %v2113
      %v2197 = vunpack.c.h.b16 %v2113
      %v2198 = vunpack.c.l.b16 %v2114
      %v2199 = vunpack.c.h.b16 %v2114
      %v2200 = vunpack.c.l.b16 %v2115
      %v2201 = vunpack.c.h.b16 %v2115
      %v2202 = vunpack.c.l.b16 %v2116
      %v2203 = vunpack.c.h.b16 %v2116
      %v2204 = vunpack.c.l.b16 %v2117
      %v2205 = vunpack.c.h.b16 %v2117
      %v2206 = vunpack.c.l.b16 %v2118
      %v2207 = vunpack.c.h.b16 %v2118
      %v2208 = vunpack.c.l.b16 %v2119
      %v2209 = vunpack.c.h.b16 %v2119
      %v2210 = vunpack.c.l.b16 %v2120
      %v2211 = vunpack.c.h.b16 %v2120
      %v2212 = vunpack.c.l.b16 %v2121
      %v2213 = vunpack.c.h.b16 %v2121
      %v2214 = vunpack.c.l.b16 %v2122
      %v2215 = vunpack.c.h.b16 %v2122
      %v2216 = vunpack.c.l.b16 %v2123
      %v2217 = vunpack.c.h.b16 %v2123
      %v2218 = vunpack.c.l.b16 %v2124
      %v2219 = vunpack.c.h.b16 %v2124
      %v2220 = vunpack.c.l.b16 %v2125
      %v2221 = vunpack.c.h.b16 %v2125
      %v2222 = vunpack.c.l.b16 %v2126
      %v2223 = vunpack.c.h.b16 %v2126
      %v2224 = vunpack.c.l.b16 %v2127
      %v2225 = vunpack.c.h.b16 %v2127
      %v2226 = vunpack.c.l.b16 %v2128
      %v2227 = vunpack.c.h.b16 %v2128
      %v2228 = vunpack.c.l.b16 %v2129
      %v2229 = vunpack.c.h.b16 %v2129
      %v2230 = vunpack.c.l.b16 %v2130
      %v2231 = vunpack.c.h.b16 %v2130
      %v2232 = vunpack.c.l.b16 %v2131
      %v2233 = vunpack.c.h.b16 %v2131
      %v2234 = vunpack.c.l.b16 %v2132
      %v2235 = vunpack.c.h.b16 %v2132
      %v2236 = vunpack.c.l.b16 %v2133
      %v2237 = vunpack.c.h.b16 %v2133
      %v2238 = vunpack.c.l.b16 %v2134
      %v2239 = vunpack.c.h.b16 %v2134
      %v2240 = vunpack.c.l.b16 %v2135
      %v2241 = vunpack.c.h.b16 %v2135
      %v2242 = vunpack.c.l.b16 %v2136
      %v2243 = vunpack.c.h.b16 %v2136
      %v2244 = vunpack.c.l.b16 %v2137
      %v2245 = vunpack.c.h.b16 %v2137
      %v2246 = vunpack.c.l.b16 %v2138
      %v2247 = vunpack.c.h.b16 %v2138
      %v2248 = vunpack.c.l.b16 %v2139
      %v2249 = vunpack.c.h.b16 %v2139
      %v2250 = vunpack.c.l.b16 %v2140
      %v2251 = vunpack.c.h.b16 %v2140
      %v2252 = vunpack.c.l.b16 %v2141
      %v2253 = vunpack.c.h.b16 %v2141
      %v2254 = vunpack.c.l.b16 %v2142
      %v2255 = vunpack.c.h.b16 %v2142
      %v2256 = vunpack.c.l.b16 %v2143
      %v2257 = vunpack.c.h.b16 %v2143
      %v2258 = vunpack.c.l.b16 %v2144
      %v2259 = vunpack.c.h.b16 %v2144
      %v2260 = vunpack.c.l.b16 %v2145
      %v2261 = vunpack.c.h.b16 %v2145
      %v2262 = vunpack.c.l.b16 %v2146
      %v2263 = vunpack.c.h.b16 %v2146
      %v2264 = vunpack.c.l.b16 %v2147
      %v2265 = vunpack.c.h.b16 %v2147
      %v2266 = vunpack.c.l.b16 %v2148
      %v2267 = vunpack.c.h.b16 %v2148
      %v2268 = vunpack.c.l.b16 %v2149
      %v2269 = vunpack.c.h.b16 %v2149
      %v2270 = vpack.c.b16 %v2192, %v2190
      %v2271 = vpack.c.b16 %v2193, %v2191
      %v2272 = vpack.c.b16 %v2196, %v2194
      %v2273 = vpack.c.b16 %v2197, %v2195
      %v2274 = vpack.c.b16 %v2200, %v2198
      %v2275 = vpack.c.b16 %v2201, %v2199
      %v2276 = vpack.c.b16 %v2204, %v2202
      %v2277 = vpack.c.b16 %v2205, %v2203
      %v2278 = vpack.c.b16 %v2208, %v2206
      %v2279 = vpack.c.b16 %v2209, %v2207
      %v2280 = vpack.c.b16 %v2212, %v2210
      %v2281 = vpack.c.b16 %v2213, %v2211
      %v2282 = vpack.c.b16 %v2216, %v2214
      %v2283 = vpack.c.b16 %v2217, %v2215
      %v2284 = vpack.c.b16 %v2220, %v2218
      %v2285 = vpack.c.b16 %v2221, %v2219
      %v2286 = vpack.c.b16 %v2224, %v2222
      %v2287 = vpack.c.b16 %v2225, %v2223
      %v2288 = vpack.c.b16 %v2228, %v2226
      %v2289 = vpack.c.b16 %v2229, %v2227
      %v2290 = vpack.c.b16 %v2232, %v2230
      %v2291 = vpack.c.b16 %v2233, %v2231
      %v2292 = vpack.c.b16 %v2236, %v2234
      %v2293 = vpack.c.b16 %v2237, %v2235
      %v2294 = vpack.c.b16 %v2240, %v2238
      %v2295 = vpack.c.b16 %v2241, %v2239
      %v2296 = vpack.c.b16 %v2244, %v2242
      %v2297 = vpack.c.b16 %v2245, %v2243
      %v2298 = vpack.c.b16 %v2248, %v2246
      %v2299 = vpack.c.b16 %v2249, %v2247
      %v2300 = vpack.c.b16 %v2252, %v2250
      %v2301 = vpack.c.b16 %v2253, %v2251
      %v2302 = vpack.c.b16 %v2256, %v2254
      %v2303 = vpack.c.b16 %v2257, %v2255
      %v2304 = vpack.c.b16 %v2260, %v2258
      %v2305 = vpack.c.b16 %v2261, %v2259
      %v2306 = vpack.c.b16 %v2264, %v2262
      %v2307 = vpack.c.b16 %v2265, %v2263
      %v2308 = vpack.c.b16 %v2268, %v2266
      %v2309 = vpack.c.b16 %v2269, %v2267
      %v2351 = vsel %vm561, %v2083, 0
      %v2354 = vsel %vm561, %v2086, 0
      %v2357 = vsel %vm561, %v2089, 0
      %v2360 = vsel %vm561, %v2092, 0
      %2362 = vmatprep.subr.bf16.mxu0 %v2285
      %2363 = vmatpush1.bf16.msra.mxu0 %v2284
      %2364 = vmatprep.subr.bf16.mxu0 %v2283
      %2365 = vmatpush1.bf16.msra.mxu0 %v2282
      %2366 = vmatprep.subr.bf16.mxu0 %v2281
      %2367 = vmatpush1.bf16.msra.mxu0 %v2280
      %2368 = vmatprep.subr.bf16.mxu0 %v2279
      %2369 = vmatpush1.bf16.msra.mxu0 %v2278
      %2370 = vmatprep.subr.bf16.mxu0 %v2277
      %2371 = vmatpush1.bf16.msra.mxu0 %v2276
      %2372 = vmatprep.subr.bf16.mxu0 %v2275
      %2373 = vmatpush1.bf16.msra.mxu0 %v2274
      %2374 = vmatprep.subr.bf16.mxu0 %v2273
      %2375 = vmatpush1.bf16.msra.mxu0 %v2272
      %2376 = vmatprep.subr.bf16.mxu0 %v2271
      %2377 = vmatpush1.bf16.msra.mxu0 %v2270
      %2378 = vmatprep.subr.bf16.mxu0 %v2301
      %2379 = vmatpush2.bf16.msra.mxu0 %v2300
      %2380 = vmatprep.subr.bf16.mxu0 %v2299
      %2381 = vmatpush2.bf16.msra.mxu0 %v2298
      %2382 = vmatprep.subr.bf16.mxu0 %v2297
      %2383 = vmatpush2.bf16.msra.mxu0 %v2296
      %2384 = vmatprep.subr.bf16.mxu0 %v2295
      %2385 = vmatpush2.bf16.msra.mxu0 %v2294
      %2386 = vmatprep.subr.bf16.mxu0 %v2293
      %2387 = vmatpush2.bf16.msra.mxu0 %v2292
      %2388 = vmatprep.subr.bf16.mxu0 %v2291
      %2389 = vmatpush2.bf16.msra.mxu0 %v2290
      %2390 = vmatprep.subr.bf16.mxu0 %v2289
      %2391 = vmatpush2.bf16.msra.mxu0 %v2288
      %2392 = vmatprep.subr.bf16.mxu0 %v2287
      %2393 = vmatpush2.bf16.msra.mxu0 %v2286
      %2394 = vmatprep.mubr.bf16.mxu0 %v2082
      %2395 = vmatmul.mubr.bf16.gmra.mxu0 %v2081
      %v2396 = vpop.f32.mrf.mxu0
      %v2397 = vadd.f32 0.0, %v2396
      %v2398 = vpop.f32.mrf.mxu0
      %v2399 = vadd.f32 0.0, %v2398
      %v2400 = vpop.f32.mrf.mxu0
      %v2401 = vadd.f32 0.0, %v2400
      %v2402 = vpop.f32.mrf.mxu0
      %v2403 = vadd.f32 0.0, %v2402
      %2404 = vmatprep.mubr.bf16.mxu0 %v2085
      %2405 = vmatmul.mubr.bf16.gmra.mxu0 %v2084
      %v2406 = vpop.f32.mrf.mxu0
      %v2407 = vadd.f32 0.0, %v2406
      %v2408 = vpop.f32.mrf.mxu0
      %v2409 = vadd.f32 0.0, %v2408
      %v2410 = vpop.f32.mrf.mxu0
      %v2411 = vadd.f32 0.0, %v2410
      %v2412 = vpop.f32.mrf.mxu0
      %v2413 = vadd.f32 0.0, %v2412
      %2414 = vmatprep.mubr.bf16.mxu0 %v2088
      %2415 = vmatmul.mubr.bf16.gmra.mxu0 %v2087
      %v2416 = vpop.f32.mrf.mxu0
      %v2417 = vadd.f32 0.0, %v2416
      %v2418 = vpop.f32.mrf.mxu0
      %v2419 = vadd.f32 0.0, %v2418
      %v2420 = vpop.f32.mrf.mxu0
      %v2421 = vadd.f32 0.0, %v2420
      %v2422 = vpop.f32.mrf.mxu0
      %v2423 = vadd.f32 0.0, %v2422
      %2424 = vmatprep.mubr.bf16.mxu0 %v2091
      %2425 = vmatmul.mubr.bf16.gmra.mxu0 %v2090
      %v2426 = vpop.f32.mrf.mxu0
      %v2427 = vadd.f32 0.0, %v2426
      %v2428 = vpop.f32.mrf.mxu0
      %v2429 = vadd.f32 0.0, %v2428
      %v2430 = vpop.f32.mrf.mxu0
      %v2431 = vadd.f32 0.0, %v2430
      %v2432 = vpop.f32.mrf.mxu0
      %v2433 = vadd.f32 0.0, %v2432
      %2434 = vdwg.mxu0
      %2435 = vmatprep.subr.bf16.mxu0 0
      %2436 = vmatpush1.bf16.msra.mxu0 0
      %2437 = vmatprep.subr.bf16.mxu0 0
      %2438 = vmatpush1.bf16.msra.mxu0 0
      %2439 = vmatprep.subr.bf16.mxu0 0
      %2440 = vmatpush1.bf16.msra.mxu0 0
      %2441 = vmatprep.subr.bf16.mxu0 0
      %2442 = vmatpush1.bf16.msra.mxu0 0
      %2443 = vmatprep.subr.bf16.mxu0 %v2309
      %2444 = vmatpush1.bf16.msra.mxu0 %v2308
      %2445 = vmatprep.subr.bf16.mxu0 %v2307
      %2446 = vmatpush1.bf16.msra.mxu0 %v2306
      %2447 = vmatprep.subr.bf16.mxu0 %v2305
      %2448 = vmatpush1.bf16.msra.mxu0 %v2304
      %2449 = vmatprep.subr.bf16.mxu0 %v2303
      %2450 = vmatpush1.bf16.msra.mxu0 %v2302
      %2451 = vmatprep.subr.bf16.mxu0 0
      %2452 = vmatpush2.bf16.msra.mxu0 0
      %2453 = vmatprep.subr.bf16.mxu0 0
      %2454 = vmatpush2.bf16.msra.mxu0 0
      %2455 = vmatprep.subr.bf16.mxu0 0
      %2456 = vmatpush2.bf16.msra.mxu0 0
      %2457 = vmatprep.subr.bf16.mxu0 0
      %2458 = vmatpush2.bf16.msra.mxu0 0
      %2459 = vmatprep.subr.bf16.mxu0 0
      %2460 = vmatpush2.bf16.msra.mxu0 0
      %2461 = vmatprep.subr.bf16.mxu0 0
      %2462 = vmatpush2.bf16.msra.mxu0 0
      %2463 = vmatprep.subr.bf16.mxu0 0
      %2464 = vmatpush2.bf16.msra.mxu0 0
      %2465 = vmatprep.subr.bf16.mxu0 0
      %2466 = vmatpush2.bf16.msra.mxu0 0
      %2467 = vmatprep.mubr.bf16.mxu0 0
      %2468 = vmatmul.mubr.bf16.gmra.mxu0 %v2351
      %v2469 = vpop.f32.mrf.mxu0
      %v2470 = vadd.f32 %v2397, %v2469
      %v2471 = vpop.f32.mrf.mxu0
      %v2472 = vadd.f32 %v2399, %v2471
      %v2473 = vpop.f32.mrf.mxu0
      %v2474 = vadd.f32 %v2401, %v2473
      %v2475 = vpop.f32.mrf.mxu0
      %v2476 = vadd.f32 %v2403, %v2475
      %2477 = vmatprep.mubr.bf16.mxu0 0
      %2478 = vmatmul.mubr.bf16.gmra.mxu0 %v2354
      %v2479 = vpop.f32.mrf.mxu0
      %v2480 = vadd.f32 %v2407, %v2479
      %v2481 = vpop.f32.mrf.mxu0
      %v2482 = vadd.f32 %v2409, %v2481
      %v2483 = vpop.f32.mrf.mxu0
      %v2484 = vadd.f32 %v2411, %v2483
      %v2485 = vpop.f32.mrf.mxu0
      %v2486 = vadd.f32 %v2413, %v2485
      %2487 = vmatprep.mubr.bf16.mxu0 0
      %2488 = vmatmul.mubr.bf16.gmra.mxu0 %v2357
      %v2489 = vpop.f32.mrf.mxu0
      %v2490 = vadd.f32 %v2417, %v2489
      %v2491 = vpop.f32.mrf.mxu0
      %v2492 = vadd.f32 %v2419, %v2491
      %v2493 = vpop.f32.mrf.mxu0
      %v2494 = vadd.f32 %v2421, %v2493
      %v2495 = vpop.f32.mrf.mxu0
      %v2496 = vadd.f32 %v2423, %v2495
      %2497 = vmatprep.mubr.bf16.mxu0 0
      %2498 = vmatmul.mubr.bf16.gmra.mxu0 %v2360
      %v2499 = vpop.f32.mrf.mxu0
      %v2500 = vadd.f32 %v2427, %v2499
      %v2501 = vpop.f32.mrf.mxu0
      %v2502 = vadd.f32 %v2429, %v2501
      %v2503 = vpop.f32.mrf.mxu0
      %v2504 = vadd.f32 %v2431, %v2503
      %v2505 = vpop.f32.mrf.mxu0
      %v2506 = vadd.f32 %v2433, %v2505
      %2507 = vdwg.mxu0
      %v2508 = vadd.f32 %v2093, %v2470
      %v2509 = vadd.f32 %v2094, %v2472
      %v2510 = vadd.f32 %v2095, %v2474
      %v2511 = vadd.f32 %v2096, %v2476
      %v2512 = vadd.f32 %v2097, %v2480
      %v2513 = vadd.f32 %v2098, %v2482
      %v2514 = vadd.f32 %v2099, %v2484
      %v2515 = vadd.f32 %v2100, %v2486
      %v2516 = vadd.f32 %v2101, %v2490
      %v2517 = vadd.f32 %v2102, %v2492
      %v2518 = vadd.f32 %v2103, %v2494
      %v2519 = vadd.f32 %v2104, %v2496
      %v2520 = vadd.f32 %v2105, %v2500
      %v2521 = vadd.f32 %v2106, %v2502
      %v2522 = vadd.f32 %v2107, %v2504
      %v2523 = vadd.f32 %v2108, %v2506
      %2524 = vst [vmem:[#allocation2] sm:$0xff] %v2508
      %2525 = vst [vmem:[#allocation2 + $0x8] sm:$0xff] %v2509
      %2526 = vst [vmem:[#allocation2 + $0x10] sm:$0xff] %v2510
      %2527 = vst [vmem:[#allocation2 + $0x18] sm:$0xff] %v2511
      %2528 = vst [vmem:[#allocation2 + $0x20] sm:$0xff] %v2512
      %2529 = vst [vmem:[#allocation2 + $0x28] sm:$0xff] %v2513
      %2530 = vst [vmem:[#allocation2 + $0x30] sm:$0xff] %v2514
      %2531 = vst [vmem:[#allocation2 + $0x38] sm:$0xff] %v2515
      %2532 = vst [vmem:[#allocation2 + $0x40] sm:$0xff] %v2516
      %2533 = vst [vmem:[#allocation2 + $0x48] sm:$0xff] %v2517
      %2534 = vst [vmem:[#allocation2 + $0x50] sm:$0xff] %v2518
      %2535 = vst [vmem:[#allocation2 + $0x58] sm:$0xff] %v2519
      %2536 = vst [vmem:[#allocation2 + $0x60] sm:$0xff] %v2520
      %2537 = vst [vmem:[#allocation2 + $0x68] sm:$0xff] %v2521
      %2538 = vst [vmem:[#allocation2 + $0x70] sm:$0xff] %v2522
      %2539 = vst [vmem:[#allocation2 + $0x78] sm:$0xff] %v2523
      %v2540 = vld [vmem:[%s2056] sm:$0xfe]
      %v2541 = vld [vmem:[%s2056 + $0x8] sm:$0xfe]
      %v2542 = vld [vmem:[%s2056 + $0x10] sm:$0xfe]
      %v2543 = vld [vmem:[%s2056 + $0x18] sm:$0x1]
      %v2544 = vld [vmem:[%s2056 + $0x20] sm:$0x1]
      %v2545 = vld [vmem:[%s2056 + $0x28] sm:$0x1]
      %v2546 = vld [vmem:[%s2056 + $0x30] sm:$0xfe]
      %v2547 = vld [vmem:[%s2056 + $0x38] sm:$0xfe]
      %v2548 = vld [vmem:[%s2056 + $0x40] sm:$0xfe]
      %v2549 = vld [vmem:[%s2056 + $0x48] sm:$0x1]
      %v2550 = vld [vmem:[%s2056 + $0x50] sm:$0x1]
      %v2551 = vld [vmem:[%s2056 + $0x58] sm:$0x1]
      %v2552 = vld [vmem:[%s2056 + $0x60] sm:$0xfe]
      %v2553 = vld [vmem:[%s2056 + $0x68] sm:$0xfe]
      %v2554 = vld [vmem:[%s2056 + $0x70] sm:$0xfe]
      %v2555 = vld [vmem:[%s2056 + $0x78] sm:$0x1]
      %v2556 = vld [vmem:[%s2056 + $0x80] sm:$0x1]
      %v2557 = vld [vmem:[%s2056 + $0x88] sm:$0x1]
      %v2558 = vld [vmem:[%s2056 + $0x90] sm:$0xfe]
      %v2559 = vld [vmem:[%s2056 + $0x98] sm:$0xfe]
      %v2560 = vld [vmem:[%s2056 + $0xa0] sm:$0xfe]
      %v2561 = vld [vmem:[%s2056 + $0xa8] sm:$0x1]
      %v2562 = vld [vmem:[%s2056 + $0xb0] sm:$0x1]
      %v2563 = vld [vmem:[%s2056 + $0xb8] sm:$0x1]
      %v2564 = vld [vmem:[%s2056 + $0xc0] sm:$0xfe]
      %v2565 = vld [vmem:[%s2056 + $0xc8] sm:$0xfe]
      %v2566 = vld [vmem:[%s2056 + $0xd0] sm:$0xfe]
      %v2567 = vld [vmem:[%s2056 + $0xd8] sm:$0x1]
      %v2568 = vld [vmem:[%s2056 + $0xe0] sm:$0x1]
      %v2569 = vld [vmem:[%s2056 + $0xe8] sm:$0x1]
      %v2570 = vld [vmem:[%s2056 + $0xf0] sm:$0xfe]
      %v2571 = vld [vmem:[%s2056 + $0xf8] sm:$0xfe]
      %v2572 = vld [vmem:[%s2056 + $0x100] sm:$0xfe]
      %v2573 = vld [vmem:[%s2056 + $0x108] sm:$0x1]
      %v2574 = vld [vmem:[%s2056 + $0x110] sm:$0x1]
      %v2575 = vld [vmem:[%s2056 + $0x118] sm:$0x1]
      %v2576 = vld [vmem:[%s2056 + $0x120] sm:$0xfe]
      %v2577 = vld [vmem:[%s2056 + $0x128] sm:$0xfe]
      %v2578 = vld [vmem:[%s2056 + $0x130] sm:$0xfe]
      %v2579 = vld [vmem:[%s2056 + $0x138] sm:$0x1]
      %v2580 = vld [vmem:[%s2056 + $0x140] sm:$0x1]
      %v2581 = vld [vmem:[%s2056 + $0x148] sm:$0x1]
      %v2582 = vld [vmem:[%s2056 + $0x150] sm:$0xfe]
      %v2583 = vld [vmem:[%s2056 + $0x158] sm:$0xfe]
      %v2584 = vld [vmem:[%s2056 + $0x160] sm:$0xfe]
      %v2585 = vld [vmem:[%s2056 + $0x168] sm:$0x1]
      %v2586 = vld [vmem:[%s2056 + $0x170] sm:$0x1]
      %v2587 = vld [vmem:[%s2056 + $0x178] sm:$0x1]
      %v2636 = vrot.slane %v2540, 1
      %v2637 = vrot.slane %v2543, 1
      %v2638 = vsel %vm848, %v2636, %v2637
      %v2639 = vrot.slane %v2541, 1
      %v2640 = vrot.slane %v2544, 1
      %v2641 = vsel %vm848, %v2639, %v2640
      %v2642 = vrot.slane %v2542, 1
      %v2643 = vrot.slane %v2545, 1
      %v2644 = vsel %vm848, %v2642, %v2643
      %v2645 = vrot.slane %v2546, 1
      %v2646 = vrot.slane %v2549, 1
      %v2647 = vsel %vm848, %v2645, %v2646
      %v2648 = vrot.slane %v2547, 1
      %v2649 = vrot.slane %v2550, 1
      %v2650 = vsel %vm848, %v2648, %v2649
      %v2651 = vrot.slane %v2548, 1
      %v2652 = vrot.slane %v2551, 1
      %v2653 = vsel %vm848, %v2651, %v2652
      %v2654 = vrot.slane %v2552, 1
      %v2655 = vrot.slane %v2555, 1
      %v2656 = vsel %vm848, %v2654, %v2655
      %v2657 = vrot.slane %v2553, 1
      %v2658 = vrot.slane %v2556, 1
      %v2659 = vsel %vm848, %v2657, %v2658
      %v2660 = vrot.slane %v2554, 1
      %v2661 = vrot.slane %v2557, 1
      %v2662 = vsel %vm848, %v2660, %v2661
      %v2663 = vrot.slane %v2558, 1
      %v2664 = vrot.slane %v2561, 1
      %v2665 = vsel %vm848, %v2663, %v2664
      %v2666 = vrot.slane %v2559, 1
      %v2667 = vrot.slane %v2562, 1
      %v2668 = vsel %vm848, %v2666, %v2667
      %v2669 = vrot.slane %v2560, 1
      %v2670 = vrot.slane %v2563, 1
      %v2671 = vsel %vm848, %v2669, %v2670
      %v2672 = vrot.slane %v2564, 1
      %v2673 = vrot.slane %v2567, 1
      %v2674 = vsel %vm848, %v2672, %v2673
      %v2675 = vrot.slane %v2565, 1
      %v2676 = vrot.slane %v2568, 1
      %v2677 = vsel %vm848, %v2675, %v2676
      %v2678 = vrot.slane %v2566, 1
      %v2679 = vrot.slane %v2569, 1
      %v2680 = vsel %vm848, %v2678, %v2679
      %v2681 = vrot.slane %v2570, 1
      %v2682 = vrot.slane %v2573, 1
      %v2683 = vsel %vm848, %v2681, %v2682
      %v2684 = vrot.slane %v2571, 1
      %v2685 = vrot.slane %v2574, 1
      %v2686 = vsel %vm848, %v2684, %v2685
      %v2687 = vrot.slane %v2572, 1
      %v2688 = vrot.slane %v2575, 1
      %v2689 = vsel %vm848, %v2687, %v2688
      %v2690 = vrot.slane %v2576, 1
      %v2691 = vrot.slane %v2579, 1
      %v2692 = vsel %vm848, %v2690, %v2691
      %v2693 = vrot.slane %v2577, 1
      %v2694 = vrot.slane %v2580, 1
      %v2695 = vsel %vm848, %v2693, %v2694
      %v2696 = vrot.slane %v2578, 1
      %v2697 = vrot.slane %v2581, 1
      %v2698 = vsel %vm848, %v2696, %v2697
      %v2699 = vrot.slane %v2582, 1
      %v2700 = vrot.slane %v2585, 1
      %v2701 = vsel %vm848, %v2699, %v2700
      %v2702 = vrot.slane %v2583, 1
      %v2703 = vrot.slane %v2586, 1
      %v2704 = vsel %vm848, %v2702, %v2703
      %v2705 = vrot.slane %v2584, 1
      %v2706 = vrot.slane %v2587, 1
      %v2707 = vsel %vm848, %v2705, %v2706
      %v2732 = vpack.c.bf16 %v2647, %v2638
      %v2733 = vpack.c.bf16 %v2650, %v2641
      %v2734 = vpack.c.bf16 %v2653, %v2644
      %v2735 = vpack.c.bf16 %v2665, %v2656
      %v2736 = vpack.c.bf16 %v2668, %v2659
      %v2737 = vpack.c.bf16 %v2671, %v2662
      %v2738 = vpack.c.bf16 %v2683, %v2674
      %v2739 = vpack.c.bf16 %v2686, %v2677
      %v2740 = vpack.c.bf16 %v2689, %v2680
      %v2741 = vpack.c.bf16 %v2701, %v2692
      %v2742 = vpack.c.bf16 %v2704, %v2695
      %v2743 = vpack.c.bf16 %v2707, %v2698
      %v2744 = vld [vmem:[#allocation2] sm:$0xff]
      %v2745 = vld [vmem:[#allocation2 + $0x8] sm:$0xff]
      %v2746 = vld [vmem:[#allocation2 + $0x10] sm:$0xff]
      %v2747 = vld [vmem:[#allocation2 + $0x18] sm:$0xff]
      %v2748 = vld [vmem:[#allocation2 + $0x20] sm:$0xff]
      %v2749 = vld [vmem:[#allocation2 + $0x28] sm:$0xff]
      %v2750 = vld [vmem:[#allocation2 + $0x30] sm:$0xff]
      %v2751 = vld [vmem:[#allocation2 + $0x38] sm:$0xff]
      %v2752 = vld [vmem:[#allocation2 + $0x40] sm:$0xff]
      %v2753 = vld [vmem:[#allocation2 + $0x48] sm:$0xff]
      %v2754 = vld [vmem:[#allocation2 + $0x50] sm:$0xff]
      %v2755 = vld [vmem:[#allocation2 + $0x58] sm:$0xff]
      %v2756 = vld [vmem:[#allocation2 + $0x60] sm:$0xff]
      %v2757 = vld [vmem:[#allocation2 + $0x68] sm:$0xff]
      %v2758 = vld [vmem:[#allocation2 + $0x70] sm:$0xff]
      %v2759 = vld [vmem:[#allocation2 + $0x78] sm:$0xff]
      %s2760 = scalar_lea.vmem %s1, 1280
      %v2761 = vld [vmem:[%s2760] sm:$0xff]
      %v2762 = vld [vmem:[%s2760 + $0x8] sm:$0xff]
      %v2763 = vld [vmem:[%s2760 + $0x10] sm:$0xff]
      %v2764 = vld [vmem:[%s2760 + $0x18] sm:$0xff]
      %v2765 = vld [vmem:[%s2760 + $0x20] sm:$0xff]
      %v2766 = vld [vmem:[%s2760 + $0x28] sm:$0xff]
      %v2767 = vld [vmem:[%s2760 + $0x30] sm:$0xff]
      %v2768 = vld [vmem:[%s2760 + $0x38] sm:$0xff]
      %v2769 = vld [vmem:[%s2760 + $0x40] sm:$0xff]
      %v2770 = vld [vmem:[%s2760 + $0x48] sm:$0xff]
      %v2771 = vld [vmem:[%s2760 + $0x50] sm:$0xff]
      %v2772 = vld [vmem:[%s2760 + $0x58] sm:$0xff]
      %v2773 = vld [vmem:[%s2760 + $0x60] sm:$0xff]
      %v2774 = vld [vmem:[%s2760 + $0x68] sm:$0xff]
      %v2775 = vld [vmem:[%s2760 + $0x70] sm:$0xff]
      %v2776 = vld [vmem:[%s2760 + $0x78] sm:$0xff]
      %v2777 = vld [vmem:[%s2760 + $0x80] sm:$0xff]
      %v2778 = vld [vmem:[%s2760 + $0x88] sm:$0xff]
      %v2779 = vld [vmem:[%s2760 + $0x90] sm:$0xff]
      %v2780 = vld [vmem:[%s2760 + $0x98] sm:$0xff]
      %v2781 = vld [vmem:[%s2760 + $0xa0] sm:$0xff]
      %v2782 = vld [vmem:[%s2760 + $0xa8] sm:$0xff]
      %v2783 = vld [vmem:[%s2760 + $0xb0] sm:$0xff]
      %v2784 = vld [vmem:[%s2760 + $0xb8] sm:$0xff]
      %v2785 = vld [vmem:[%s2760 + $0xc0] sm:$0xff]
      %v2786 = vld [vmem:[%s2760 + $0xc8] sm:$0xff]
      %v2787 = vld [vmem:[%s2760 + $0xd0] sm:$0xff]
      %v2788 = vld [vmem:[%s2760 + $0xd8] sm:$0xff]
      %v2789 = vld [vmem:[%s2760 + $0xe0] sm:$0xff]
      %v2790 = vld [vmem:[%s2760 + $0xe8] sm:$0xff]
      %v2791 = vld [vmem:[%s2760 + $0xf0] sm:$0xff]
      %v2792 = vld [vmem:[%s2760 + $0xf8] sm:$0xff]
      %v2793 = vld [vmem:[%s2760 + $0x100] sm:$0xff]
      %v2794 = vld [vmem:[%s2760 + $0x108] sm:$0xff]
      %v2795 = vld [vmem:[%s2760 + $0x110] sm:$0xff]
      %v2796 = vld [vmem:[%s2760 + $0x118] sm:$0xff]
      %v2797 = vld [vmem:[%s2760 + $0x120] sm:$0xff]
      %v2798 = vld [vmem:[%s2760 + $0x128] sm:$0xff]
      %v2799 = vld [vmem:[%s2760 + $0x130] sm:$0xff]
      %v2800 = vld [vmem:[%s2760 + $0x138] sm:$0xff]
      %v2841 = vunpack.c.l.b16 %v2761
      %v2842 = vunpack.c.h.b16 %v2761
      %v2843 = vunpack.c.l.b16 %v2762
      %v2844 = vunpack.c.h.b16 %v2762
      %v2845 = vunpack.c.l.b16 %v2763
      %v2846 = vunpack.c.h.b16 %v2763
      %v2847 = vunpack.c.l.b16 %v2764
      %v2848 = vunpack.c.h.b16 %v2764
      %v2849 = vunpack.c.l.b16 %v2765
      %v2850 = vunpack.c.h.b16 %v2765
      %v2851 = vunpack.c.l.b16 %v2766
      %v2852 = vunpack.c.h.b16 %v2766
      %v2853 = vunpack.c.l.b16 %v2767
      %v2854 = vunpack.c.h.b16 %v2767
      %v2855 = vunpack.c.l.b16 %v2768
      %v2856 = vunpack.c.h.b16 %v2768
      %v2857 = vunpack.c.l.b16 %v2769
      %v2858 = vunpack.c.h.b16 %v2769
      %v2859 = vunpack.c.l.b16 %v2770
      %v2860 = vunpack.c.h.b16 %v2770
      %v2861 = vunpack.c.l.b16 %v2771
      %v2862 = vunpack.c.h.b16 %v2771
      %v2863 = vunpack.c.l.b16 %v2772
      %v2864 = vunpack.c.h.b16 %v2772
      %v2865 = vunpack.c.l.b16 %v2773
      %v2866 = vunpack.c.h.b16 %v2773
      %v2867 = vunpack.c.l.b16 %v2774
      %v2868 = vunpack.c.h.b16 %v2774
      %v2869 = vunpack.c.l.b16 %v2775
      %v2870 = vunpack.c.h.b16 %v2775
      %v2871 = vunpack.c.l.b16 %v2776
      %v2872 = vunpack.c.h.b16 %v2776
      %v2873 = vunpack.c.l.b16 %v2777
      %v2874 = vunpack.c.h.b16 %v2777
      %v2875 = vunpack.c.l.b16 %v2778
      %v2876 = vunpack.c.h.b16 %v2778
      %v2877 = vunpack.c.l.b16 %v2779
      %v2878 = vunpack.c.h.b16 %v2779
      %v2879 = vunpack.c.l.b16 %v2780
      %v2880 = vunpack.c.h.b16 %v2780
      %v2881 = vunpack.c.l.b16 %v2781
      %v2882 = vunpack.c.h.b16 %v2781
      %v2883 = vunpack.c.l.b16 %v2782
      %v2884 = vunpack.c.h.b16 %v2782
      %v2885 = vunpack.c.l.b16 %v2783
      %v2886 = vunpack.c.h.b16 %v2783
      %v2887 = vunpack.c.l.b16 %v2784
      %v2888 = vunpack.c.h.b16 %v2784
      %v2889 = vunpack.c.l.b16 %v2785
      %v2890 = vunpack.c.h.b16 %v2785
      %v2891 = vunpack.c.l.b16 %v2786
      %v2892 = vunpack.c.h.b16 %v2786
      %v2893 = vunpack.c.l.b16 %v2787
      %v2894 = vunpack.c.h.b16 %v2787
      %v2895 = vunpack.c.l.b16 %v2788
      %v2896 = vunpack.c.h.b16 %v2788
      %v2897 = vunpack.c.l.b16 %v2789
      %v2898 = vunpack.c.h.b16 %v2789
      %v2899 = vunpack.c.l.b16 %v2790
      %v2900 = vunpack.c.h.b16 %v2790
      %v2901 = vunpack.c.l.b16 %v2791
      %v2902 = vunpack.c.h.b16 %v2791
      %v2903 = vunpack.c.l.b16 %v2792
      %v2904 = vunpack.c.h.b16 %v2792
      %v2905 = vunpack.c.l.b16 %v2793
      %v2906 = vunpack.c.h.b16 %v2793
      %v2907 = vunpack.c.l.b16 %v2794
      %v2908 = vunpack.c.h.b16 %v2794
      %v2909 = vunpack.c.l.b16 %v2795
      %v2910 = vunpack.c.h.b16 %v2795
      %v2911 = vunpack.c.l.b16 %v2796
      %v2912 = vunpack.c.h.b16 %v2796
      %v2913 = vunpack.c.l.b16 %v2797
      %v2914 = vunpack.c.h.b16 %v2797
      %v2915 = vunpack.c.l.b16 %v2798
      %v2916 = vunpack.c.h.b16 %v2798
      %v2917 = vunpack.c.l.b16 %v2799
      %v2918 = vunpack.c.h.b16 %v2799
      %v2919 = vunpack.c.l.b16 %v2800
      %v2920 = vunpack.c.h.b16 %v2800
      %v2921 = vpack.c.b16 %v2843, %v2841
      %v2922 = vpack.c.b16 %v2844, %v2842
      %v2923 = vpack.c.b16 %v2847, %v2845
      %v2924 = vpack.c.b16 %v2848, %v2846
      %v2925 = vpack.c.b16 %v2851, %v2849
      %v2926 = vpack.c.b16 %v2852, %v2850
      %v2927 = vpack.c.b16 %v2855, %v2853
      %v2928 = vpack.c.b16 %v2856, %v2854
      %v2929 = vpack.c.b16 %v2859, %v2857
      %v2930 = vpack.c.b16 %v2860, %v2858
      %v2931 = vpack.c.b16 %v2863, %v2861
      %v2932 = vpack.c.b16 %v2864, %v2862
      %v2933 = vpack.c.b16 %v2867, %v2865
      %v2934 = vpack.c.b16 %v2868, %v2866
      %v2935 = vpack.c.b16 %v2871, %v2869
      %v2936 = vpack.c.b16 %v2872, %v2870
      %v2937 = vpack.c.b16 %v2875, %v2873
      %v2938 = vpack.c.b16 %v2876, %v2874
      %v2939 = vpack.c.b16 %v2879, %v2877
      %v2940 = vpack.c.b16 %v2880, %v2878
      %v2941 = vpack.c.b16 %v2883, %v2881
      %v2942 = vpack.c.b16 %v2884, %v2882
      %v2943 = vpack.c.b16 %v2887, %v2885
      %v2944 = vpack.c.b16 %v2888, %v2886
      %v2945 = vpack.c.b16 %v2891, %v2889
      %v2946 = vpack.c.b16 %v2892, %v2890
      %v2947 = vpack.c.b16 %v2895, %v2893
      %v2948 = vpack.c.b16 %v2896, %v2894
      %v2949 = vpack.c.b16 %v2899, %v2897
      %v2950 = vpack.c.b16 %v2900, %v2898
      %v2951 = vpack.c.b16 %v2903, %v2901
      %v2952 = vpack.c.b16 %v2904, %v2902
      %v2953 = vpack.c.b16 %v2907, %v2905
      %v2954 = vpack.c.b16 %v2908, %v2906
      %v2955 = vpack.c.b16 %v2911, %v2909
      %v2956 = vpack.c.b16 %v2912, %v2910
      %v2957 = vpack.c.b16 %v2915, %v2913
      %v2958 = vpack.c.b16 %v2916, %v2914
      %v2959 = vpack.c.b16 %v2919, %v2917
      %v2960 = vpack.c.b16 %v2920, %v2918
      %v3002 = vsel %vm561, %v2734, 0
      %v3005 = vsel %vm561, %v2737, 0
      %v3008 = vsel %vm561, %v2740, 0
      %v3011 = vsel %vm561, %v2743, 0
      %3013 = vmatprep.subr.bf16.mxu0 %v2936
      %3014 = vmatpush1.bf16.msra.mxu0 %v2935
      %3015 = vmatprep.subr.bf16.mxu0 %v2934
      %3016 = vmatpush1.bf16.msra.mxu0 %v2933
      %3017 = vmatprep.subr.bf16.mxu0 %v2932
      %3018 = vmatpush1.bf16.msra.mxu0 %v2931
      %3019 = vmatprep.subr.bf16.mxu0 %v2930
      %3020 = vmatpush1.bf16.msra.mxu0 %v2929
      %3021 = vmatprep.subr.bf16.mxu0 %v2928
      %3022 = vmatpush1.bf16.msra.mxu0 %v2927
      %3023 = vmatprep.subr.bf16.mxu0 %v2926
      %3024 = vmatpush1.bf16.msra.mxu0 %v2925
      %3025 = vmatprep.subr.bf16.mxu0 %v2924
      %3026 = vmatpush1.bf16.msra.mxu0 %v2923
      %3027 = vmatprep.subr.bf16.mxu0 %v2922
      %3028 = vmatpush1.bf16.msra.mxu0 %v2921
      %3029 = vmatprep.subr.bf16.mxu0 %v2952
      %3030 = vmatpush2.bf16.msra.mxu0 %v2951
      %3031 = vmatprep.subr.bf16.mxu0 %v2950
      %3032 = vmatpush2.bf16.msra.mxu0 %v2949
      %3033 = vmatprep.subr.bf16.mxu0 %v2948
      %3034 = vmatpush2.bf16.msra.mxu0 %v2947
      %3035 = vmatprep.subr.bf16.mxu0 %v2946
      %3036 = vmatpush2.bf16.msra.mxu0 %v2945
      %3037 = vmatprep.subr.bf16.mxu0 %v2944
      %3038 = vmatpush2.bf16.msra.mxu0 %v2943
      %3039 = vmatprep.subr.bf16.mxu0 %v2942
      %3040 = vmatpush2.bf16.msra.mxu0 %v2941
      %3041 = vmatprep.subr.bf16.mxu0 %v2940
      %3042 = vmatpush2.bf16.msra.mxu0 %v2939
      %3043 = vmatprep.subr.bf16.mxu0 %v2938
      %3044 = vmatpush2.bf16.msra.mxu0 %v2937
      %3045 = vmatprep.mubr.bf16.mxu0 %v2733
      %3046 = vmatmul.mubr.bf16.gmra.mxu0 %v2732
      %v3047 = vpop.f32.mrf.mxu0
      %v3048 = vadd.f32 0.0, %v3047
      %v3049 = vpop.f32.mrf.mxu0
      %v3050 = vadd.f32 0.0, %v3049
      %v3051 = vpop.f32.mrf.mxu0
      %v3052 = vadd.f32 0.0, %v3051
      %v3053 = vpop.f32.mrf.mxu0
      %v3054 = vadd.f32 0.0, %v3053
      %3055 = vmatprep.mubr.bf16.mxu0 %v2736
      %3056 = vmatmul.mubr.bf16.gmra.mxu0 %v2735
      %v3057 = vpop.f32.mrf.mxu0
      %v3058 = vadd.f32 0.0, %v3057
      %v3059 = vpop.f32.mrf.mxu0
      %v3060 = vadd.f32 0.0, %v3059
      %v3061 = vpop.f32.mrf.mxu0
      %v3062 = vadd.f32 0.0, %v3061
      %v3063 = vpop.f32.mrf.mxu0
      %v3064 = vadd.f32 0.0, %v3063
      %3065 = vmatprep.mubr.bf16.mxu0 %v2739
      %3066 = vmatmul.mubr.bf16.gmra.mxu0 %v2738
      %v3067 = vpop.f32.mrf.mxu0
      %v3068 = vadd.f32 0.0, %v3067
      %v3069 = vpop.f32.mrf.mxu0
      %v3070 = vadd.f32 0.0, %v3069
      %v3071 = vpop.f32.mrf.mxu0
      %v3072 = vadd.f32 0.0, %v3071
      %v3073 = vpop.f32.mrf.mxu0
      %v3074 = vadd.f32 0.0, %v3073
      %3075 = vmatprep.mubr.bf16.mxu0 %v2742
      %3076 = vmatmul.mubr.bf16.gmra.mxu0 %v2741
      %v3077 = vpop.f32.mrf.mxu0
      %v3078 = vadd.f32 0.0, %v3077
      %v3079 = vpop.f32.mrf.mxu0
      %v3080 = vadd.f32 0.0, %v3079
      %v3081 = vpop.f32.mrf.mxu0
      %v3082 = vadd.f32 0.0, %v3081
      %v3083 = vpop.f32.mrf.mxu0
      %v3084 = vadd.f32 0.0, %v3083
      %3085 = vdwg.mxu0
      %3086 = vmatprep.subr.bf16.mxu0 0
      %3087 = vmatpush1.bf16.msra.mxu0 0
      %3088 = vmatprep.subr.bf16.mxu0 0
      %3089 = vmatpush1.bf16.msra.mxu0 0
      %3090 = vmatprep.subr.bf16.mxu0 0
      %3091 = vmatpush1.bf16.msra.mxu0 0
      %3092 = vmatprep.subr.bf16.mxu0 0
      %3093 = vmatpush1.bf16.msra.mxu0 0
      %3094 = vmatprep.subr.bf16.mxu0 %v2960
      %3095 = vmatpush1.bf16.msra.mxu0 %v2959
      %3096 = vmatprep.subr.bf16.mxu0 %v2958
      %3097 = vmatpush1.bf16.msra.mxu0 %v2957
      %3098 = vmatprep.subr.bf16.mxu0 %v2956
      %3099 = vmatpush1.bf16.msra.mxu0 %v2955
      %3100 = vmatprep.subr.bf16.mxu0 %v2954
      %3101 = vmatpush1.bf16.msra.mxu0 %v2953
      %3102 = vmatprep.subr.bf16.mxu0 0
      %3103 = vmatpush2.bf16.msra.mxu0 0
      %3104 = vmatprep.subr.bf16.mxu0 0
      %3105 = vmatpush2.bf16.msra.mxu0 0
      %3106 = vmatprep.subr.bf16.mxu0 0
      %3107 = vmatpush2.bf16.msra.mxu0 0
      %3108 = vmatprep.subr.bf16.mxu0 0
      %3109 = vmatpush2.bf16.msra.mxu0 0
      %3110 = vmatprep.subr.bf16.mxu0 0
      %3111 = vmatpush2.bf16.msra.mxu0 0
      %3112 = vmatprep.subr.bf16.mxu0 0
      %3113 = vmatpush2.bf16.msra.mxu0 0
      %3114 = vmatprep.subr.bf16.mxu0 0
      %3115 = vmatpush2.bf16.msra.mxu0 0
      %3116 = vmatprep.subr.bf16.mxu0 0
      %3117 = vmatpush2.bf16.msra.mxu0 0
      %3118 = vmatprep.mubr.bf16.mxu0 0
      %3119 = vmatmul.mubr.bf16.gmra.mxu0 %v3002
      %v3120 = vpop.f32.mrf.mxu0
      %v3121 = vadd.f32 %v3048, %v3120
      %v3122 = vpop.f32.mrf.mxu0
      %v3123 = vadd.f32 %v3050, %v3122
      %v3124 = vpop.f32.mrf.mxu0
      %v3125 = vadd.f32 %v3052, %v3124
      %v3126 = vpop.f32.mrf.mxu0
      %v3127 = vadd.f32 %v3054, %v3126
      %3128 = vmatprep.mubr.bf16.mxu0 0
      %3129 = vmatmul.mubr.bf16.gmra.mxu0 %v3005
      %v3130 = vpop.f32.mrf.mxu0
      %v3131 = vadd.f32 %v3058, %v3130
      %v3132 = vpop.f32.mrf.mxu0
      %v3133 = vadd.f32 %v3060, %v3132
      %v3134 = vpop.f32.mrf.mxu0
      %v3135 = vadd.f32 %v3062, %v3134
      %v3136 = vpop.f32.mrf.mxu0
      %v3137 = vadd.f32 %v3064, %v3136
      %3138 = vmatprep.mubr.bf16.mxu0 0
      %3139 = vmatmul.mubr.bf16.gmra.mxu0 %v3008
      %v3140 = vpop.f32.mrf.mxu0
      %v3141 = vadd.f32 %v3068, %v3140
      %v3142 = vpop.f32.mrf.mxu0
      %v3143 = vadd.f32 %v3070, %v3142
      %v3144 = vpop.f32.mrf.mxu0
      %v3145 = vadd.f32 %v3072, %v3144
      %v3146 = vpop.f32.mrf.mxu0
      %v3147 = vadd.f32 %v3074, %v3146
      %3148 = vmatprep.mubr.bf16.mxu0 0
      %3149 = vmatmul.mubr.bf16.gmra.mxu0 %v3011
      %v3150 = vpop.f32.mrf.mxu0
      %v3151 = vadd.f32 %v3078, %v3150
      %v3152 = vpop.f32.mrf.mxu0
      %v3153 = vadd.f32 %v3080, %v3152
      %v3154 = vpop.f32.mrf.mxu0
      %v3155 = vadd.f32 %v3082, %v3154
      %v3156 = vpop.f32.mrf.mxu0
      %v3157 = vadd.f32 %v3084, %v3156
      %3158 = vdwg.mxu0
      %v3159 = vadd.f32 %v2744, %v3121
      %v3160 = vadd.f32 %v2745, %v3123
      %v3161 = vadd.f32 %v2746, %v3125
      %v3162 = vadd.f32 %v2747, %v3127
      %v3163 = vadd.f32 %v2748, %v3131
      %v3164 = vadd.f32 %v2749, %v3133
      %v3165 = vadd.f32 %v2750, %v3135
      %v3166 = vadd.f32 %v2751, %v3137
      %v3167 = vadd.f32 %v2752, %v3141
      %v3168 = vadd.f32 %v2753, %v3143
      %v3169 = vadd.f32 %v2754, %v3145
      %v3170 = vadd.f32 %v2755, %v3147
      %v3171 = vadd.f32 %v2756, %v3151
      %v3172 = vadd.f32 %v2757, %v3153
      %v3173 = vadd.f32 %v2758, %v3155
      %v3174 = vadd.f32 %v2759, %v3157
      %3175 = vst [vmem:[#allocation2] sm:$0xff] %v3159
      %3176 = vst [vmem:[#allocation2 + $0x8] sm:$0xff] %v3160
      %3177 = vst [vmem:[#allocation2 + $0x10] sm:$0xff] %v3161
      %3178 = vst [vmem:[#allocation2 + $0x18] sm:$0xff] %v3162
      %3179 = vst [vmem:[#allocation2 + $0x20] sm:$0xff] %v3163
      %3180 = vst [vmem:[#allocation2 + $0x28] sm:$0xff] %v3164
      %3181 = vst [vmem:[#allocation2 + $0x30] sm:$0xff] %v3165
      %3182 = vst [vmem:[#allocation2 + $0x38] sm:$0xff] %v3166
      %3183 = vst [vmem:[#allocation2 + $0x40] sm:$0xff] %v3167
      %3184 = vst [vmem:[#allocation2 + $0x48] sm:$0xff] %v3168
      %3185 = vst [vmem:[#allocation2 + $0x50] sm:$0xff] %v3169
      %3186 = vst [vmem:[#allocation2 + $0x58] sm:$0xff] %v3170
      %3187 = vst [vmem:[#allocation2 + $0x60] sm:$0xff] %v3171
      %3188 = vst [vmem:[#allocation2 + $0x68] sm:$0xff] %v3172
      %3189 = vst [vmem:[#allocation2 + $0x70] sm:$0xff] %v3173
      %3190 = vst [vmem:[#allocation2 + $0x78] sm:$0xff] %v3174
      %v3191 = vld [vmem:[%s2056] sm:$0xfc]
      %v3192 = vld [vmem:[%s2056 + $0x8] sm:$0xfc]
      %v3193 = vld [vmem:[%s2056 + $0x10] sm:$0xfc]
      %v3194 = vld [vmem:[%s2056 + $0x18] sm:$0x3]
      %v3195 = vld [vmem:[%s2056 + $0x20] sm:$0x3]
      %v3196 = vld [vmem:[%s2056 + $0x28] sm:$0x3]
      %v3197 = vld [vmem:[%s2056 + $0x30] sm:$0xfc]
      %v3198 = vld [vmem:[%s2056 + $0x38] sm:$0xfc]
      %v3199 = vld [vmem:[%s2056 + $0x40] sm:$0xfc]
      %v3200 = vld [vmem:[%s2056 + $0x48] sm:$0x3]
      %v3201 = vld [vmem:[%s2056 + $0x50] sm:$0x3]
      %v3202 = vld [vmem:[%s2056 + $0x58] sm:$0x3]
      %v3203 = vld [vmem:[%s2056 + $0x60] sm:$0xfc]
      %v3204 = vld [vmem:[%s2056 + $0x68] sm:$0xfc]
      %v3205 = vld [vmem:[%s2056 + $0x70] sm:$0xfc]
      %v3206 = vld [vmem:[%s2056 + $0x78] sm:$0x3]
      %v3207 = vld [vmem:[%s2056 + $0x80] sm:$0x3]
      %v3208 = vld [vmem:[%s2056 + $0x88] sm:$0x3]
      %v3209 = vld [vmem:[%s2056 + $0x90] sm:$0xfc]
      %v3210 = vld [vmem:[%s2056 + $0x98] sm:$0xfc]
      %v3211 = vld [vmem:[%s2056 + $0xa0] sm:$0xfc]
      %v3212 = vld [vmem:[%s2056 + $0xa8] sm:$0x3]
      %v3213 = vld [vmem:[%s2056 + $0xb0] sm:$0x3]
      %v3214 = vld [vmem:[%s2056 + $0xb8] sm:$0x3]
      %v3215 = vld [vmem:[%s2056 + $0xc0] sm:$0xfc]
      %v3216 = vld [vmem:[%s2056 + $0xc8] sm:$0xfc]
      %v3217 = vld [vmem:[%s2056 + $0xd0] sm:$0xfc]
      %v3218 = vld [vmem:[%s2056 + $0xd8] sm:$0x3]
      %v3219 = vld [vmem:[%s2056 + $0xe0] sm:$0x3]
      %v3220 = vld [vmem:[%s2056 + $0xe8] sm:$0x3]
      %v3221 = vld [vmem:[%s2056 + $0xf0] sm:$0xfc]
      %v3222 = vld [vmem:[%s2056 + $0xf8] sm:$0xfc]
      %v3223 = vld [vmem:[%s2056 + $0x100] sm:$0xfc]
      %v3224 = vld [vmem:[%s2056 + $0x108] sm:$0x3]
      %v3225 = vld [vmem:[%s2056 + $0x110] sm:$0x3]
      %v3226 = vld [vmem:[%s2056 + $0x118] sm:$0x3]
      %v3227 = vld [vmem:[%s2056 + $0x120] sm:$0xfc]
      %v3228 = vld [vmem:[%s2056 + $0x128] sm:$0xfc]
      %v3229 = vld [vmem:[%s2056 + $0x130] sm:$0xfc]
      %v3230 = vld [vmem:[%s2056 + $0x138] sm:$0x3]
      %v3231 = vld [vmem:[%s2056 + $0x140] sm:$0x3]
      %v3232 = vld [vmem:[%s2056 + $0x148] sm:$0x3]
      %v3233 = vld [vmem:[%s2056 + $0x150] sm:$0xfc]
      %v3234 = vld [vmem:[%s2056 + $0x158] sm:$0xfc]
      %v3235 = vld [vmem:[%s2056 + $0x160] sm:$0xfc]
      %v3236 = vld [vmem:[%s2056 + $0x168] sm:$0x3]
      %v3237 = vld [vmem:[%s2056 + $0x170] sm:$0x3]
      %v3238 = vld [vmem:[%s2056 + $0x178] sm:$0x3]
      %v3287 = vrot.slane %v3191, 2
      %v3288 = vrot.slane %v3194, 2
      %v3289 = vsel %vm1500, %v3287, %v3288
      %v3290 = vrot.slane %v3192, 2
      %v3291 = vrot.slane %v3195, 2
      %v3292 = vsel %vm1500, %v3290, %v3291
      %v3293 = vrot.slane %v3193, 2
      %v3294 = vrot.slane %v3196, 2
      %v3295 = vsel %vm1500, %v3293, %v3294
      %v3296 = vrot.slane %v3197, 2
      %v3297 = vrot.slane %v3200, 2
      %v3298 = vsel %vm1500, %v3296, %v3297
      %v3299 = vrot.slane %v3198, 2
      %v3300 = vrot.slane %v3201, 2
      %v3301 = vsel %vm1500, %v3299, %v3300
      %v3302 = vrot.slane %v3199, 2
      %v3303 = vrot.slane %v3202, 2
      %v3304 = vsel %vm1500, %v3302, %v3303
      %v3305 = vrot.slane %v3203, 2
      %v3306 = vrot.slane %v3206, 2
      %v3307 = vsel %vm1500, %v3305, %v3306
      %v3308 = vrot.slane %v3204, 2
      %v3309 = vrot.slane %v3207, 2
      %v3310 = vsel %vm1500, %v3308, %v3309
      %v3311 = vrot.slane %v3205, 2
      %v3312 = vrot.slane %v3208, 2
      %v3313 = vsel %vm1500, %v3311, %v3312
      %v3314 = vrot.slane %v3209, 2
      %v3315 = vrot.slane %v3212, 2
      %v3316 = vsel %vm1500, %v3314, %v3315
      %v3317 = vrot.slane %v3210, 2
      %v3318 = vrot.slane %v3213, 2
      %v3319 = vsel %vm1500, %v3317, %v3318
      %v3320 = vrot.slane %v3211, 2
      %v3321 = vrot.slane %v3214, 2
      %v3322 = vsel %vm1500, %v3320, %v3321
      %v3323 = vrot.slane %v3215, 2
      %v3324 = vrot.slane %v3218, 2
      %v3325 = vsel %vm1500, %v3323, %v3324
      %v3326 = vrot.slane %v3216, 2
      %v3327 = vrot.slane %v3219, 2
      %v3328 = vsel %vm1500, %v3326, %v3327
      %v3329 = vrot.slane %v3217, 2
      %v3330 = vrot.slane %v3220, 2
      %v3331 = vsel %vm1500, %v3329, %v3330
      %v3332 = vrot.slane %v3221, 2
      %v3333 = vrot.slane %v3224, 2
      %v3334 = vsel %vm1500, %v3332, %v3333
      %v3335 = vrot.slane %v3222, 2
      %v3336 = vrot.slane %v3225, 2
      %v3337 = vsel %vm1500, %v3335, %v3336
      %v3338 = vrot.slane %v3223, 2
      %v3339 = vrot.slane %v3226, 2
      %v3340 = vsel %vm1500, %v3338, %v3339
      %v3341 = vrot.slane %v3227, 2
      %v3342 = vrot.slane %v3230, 2
      %v3343 = vsel %vm1500, %v3341, %v3342
      %v3344 = vrot.slane %v3228, 2
      %v3345 = vrot.slane %v3231, 2
      %v3346 = vsel %vm1500, %v3344, %v3345
      %v3347 = vrot.slane %v3229, 2
      %v3348 = vrot.slane %v3232, 2
      %v3349 = vsel %vm1500, %v3347, %v3348
      %v3350 = vrot.slane %v3233, 2
      %v3351 = vrot.slane %v3236, 2
      %v3352 = vsel %vm1500, %v3350, %v3351
      %v3353 = vrot.slane %v3234, 2
      %v3354 = vrot.slane %v3237, 2
      %v3355 = vsel %vm1500, %v3353, %v3354
      %v3356 = vrot.slane %v3235, 2
      %v3357 = vrot.slane %v3238, 2
      %v3358 = vsel %vm1500, %v3356, %v3357
      %v3383 = vpack.c.bf16 %v3298, %v3289
      %v3384 = vpack.c.bf16 %v3301, %v3292
      %v3385 = vpack.c.bf16 %v3304, %v3295
      %v3386 = vpack.c.bf16 %v3316, %v3307
      %v3387 = vpack.c.bf16 %v3319, %v3310
      %v3388 = vpack.c.bf16 %v3322, %v3313
      %v3389 = vpack.c.bf16 %v3334, %v3325
      %v3390 = vpack.c.bf16 %v3337, %v3328
      %v3391 = vpack.c.bf16 %v3340, %v3331
      %v3392 = vpack.c.bf16 %v3352, %v3343
      %v3393 = vpack.c.bf16 %v3355, %v3346
      %v3394 = vpack.c.bf16 %v3358, %v3349
      %v3395 = vld [vmem:[#allocation2] sm:$0xff]
      %v3396 = vld [vmem:[#allocation2 + $0x8] sm:$0xff]
      %v3397 = vld [vmem:[#allocation2 + $0x10] sm:$0xff]
      %v3398 = vld [vmem:[#allocation2 + $0x18] sm:$0xff]
      %v3399 = vld [vmem:[#allocation2 + $0x20] sm:$0xff]
      %v3400 = vld [vmem:[#allocation2 + $0x28] sm:$0xff]
      %v3401 = vld [vmem:[#allocation2 + $0x30] sm:$0xff]
      %v3402 = vld [vmem:[#allocation2 + $0x38] sm:$0xff]
      %v3403 = vld [vmem:[#allocation2 + $0x40] sm:$0xff]
      %v3404 = vld [vmem:[#allocation2 + $0x48] sm:$0xff]
      %v3405 = vld [vmem:[#allocation2 + $0x50] sm:$0xff]
      %v3406 = vld [vmem:[#allocation2 + $0x58] sm:$0xff]
      %v3407 = vld [vmem:[#allocation2 + $0x60] sm:$0xff]
      %v3408 = vld [vmem:[#allocation2 + $0x68] sm:$0xff]
      %v3409 = vld [vmem:[#allocation2 + $0x70] sm:$0xff]
      %v3410 = vld [vmem:[#allocation2 + $0x78] sm:$0xff]
      %s3411 = scalar_lea.vmem %s1, 1600
      %v3412 = vld [vmem:[%s3411] sm:$0xff]
      %v3413 = vld [vmem:[%s3411 + $0x8] sm:$0xff]
      %v3414 = vld [vmem:[%s3411 + $0x10] sm:$0xff]
      %v3415 = vld [vmem:[%s3411 + $0x18] sm:$0xff]
      %v3416 = vld [vmem:[%s3411 + $0x20] sm:$0xff]
      %v3417 = vld [vmem:[%s3411 + $0x28] sm:$0xff]
      %v3418 = vld [vmem:[%s3411 + $0x30] sm:$0xff]
      %v3419 = vld [vmem:[%s3411 + $0x38] sm:$0xff]
      %v3420 = vld [vmem:[%s3411 + $0x40] sm:$0xff]
      %v3421 = vld [vmem:[%s3411 + $0x48] sm:$0xff]
      %v3422 = vld [vmem:[%s3411 + $0x50] sm:$0xff]
      %v3423 = vld [vmem:[%s3411 + $0x58] sm:$0xff]
      %v3424 = vld [vmem:[%s3411 + $0x60] sm:$0xff]
      %v3425 = vld [vmem:[%s3411 + $0x68] sm:$0xff]
      %v3426 = vld [vmem:[%s3411 + $0x70] sm:$0xff]
      %v3427 = vld [vmem:[%s3411 + $0x78] sm:$0xff]
      %v3428 = vld [vmem:[%s3411 + $0x80] sm:$0xff]
      %v3429 = vld [vmem:[%s3411 + $0x88] sm:$0xff]
      %v3430 = vld [vmem:[%s3411 + $0x90] sm:$0xff]
      %v3431 = vld [vmem:[%s3411 + $0x98] sm:$0xff]
      %v3432 = vld [vmem:[%s3411 + $0xa0] sm:$0xff]
      %v3433 = vld [vmem:[%s3411 + $0xa8] sm:$0xff]
      %v3434 = vld [vmem:[%s3411 + $0xb0] sm:$0xff]
      %v3435 = vld [vmem:[%s3411 + $0xb8] sm:$0xff]
      %v3436 = vld [vmem:[%s3411 + $0xc0] sm:$0xff]
      %v3437 = vld [vmem:[%s3411 + $0xc8] sm:$0xff]
      %v3438 = vld [vmem:[%s3411 + $0xd0] sm:$0xff]
      %v3439 = vld [vmem:[%s3411 + $0xd8] sm:$0xff]
      %v3440 = vld [vmem:[%s3411 + $0xe0] sm:$0xff]
      %v3441 = vld [vmem:[%s3411 + $0xe8] sm:$0xff]
      %v3442 = vld [vmem:[%s3411 + $0xf0] sm:$0xff]
      %v3443 = vld [vmem:[%s3411 + $0xf8] sm:$0xff]
      %v3444 = vld [vmem:[%s3411 + $0x100] sm:$0xff]
      %v3445 = vld [vmem:[%s3411 + $0x108] sm:$0xff]
      %v3446 = vld [vmem:[%s3411 + $0x110] sm:$0xff]
      %v3447 = vld [vmem:[%s3411 + $0x118] sm:$0xff]
      %v3448 = vld [vmem:[%s3411 + $0x120] sm:$0xff]
      %v3449 = vld [vmem:[%s3411 + $0x128] sm:$0xff]
      %v3450 = vld [vmem:[%s3411 + $0x130] sm:$0xff]
      %v3451 = vld [vmem:[%s3411 + $0x138] sm:$0xff]
      %v3492 = vunpack.c.l.b16 %v3412
      %v3493 = vunpack.c.h.b16 %v3412
      %v3494 = vunpack.c.l.b16 %v3413
      %v3495 = vunpack.c.h.b16 %v3413
      %v3496 = vunpack.c.l.b16 %v3414
      %v3497 = vunpack.c.h.b16 %v3414
      %v3498 = vunpack.c.l.b16 %v3415
      %v3499 = vunpack.c.h.b16 %v3415
      %v3500 = vunpack.c.l.b16 %v3416
      %v3501 = vunpack.c.h.b16 %v3416
      %v3502 = vunpack.c.l.b16 %v3417
      %v3503 = vunpack.c.h.b16 %v3417
      %v3504 = vunpack.c.l.b16 %v3418
      %v3505 = vunpack.c.h.b16 %v3418
      %v3506 = vunpack.c.l.b16 %v3419
      %v3507 = vunpack.c.h.b16 %v3419
      %v3508 = vunpack.c.l.b16 %v3420
      %v3509 = vunpack.c.h.b16 %v3420
      %v3510 = vunpack.c.l.b16 %v3421
      %v3511 = vunpack.c.h.b16 %v3421
      %v3512 = vunpack.c.l.b16 %v3422
      %v3513 = vunpack.c.h.b16 %v3422
      %v3514 = vunpack.c.l.b16 %v3423
      %v3515 = vunpack.c.h.b16 %v3423
      %v3516 = vunpack.c.l.b16 %v3424
      %v3517 = vunpack.c.h.b16 %v3424
      %v3518 = vunpack.c.l.b16 %v3425
      %v3519 = vunpack.c.h.b16 %v3425
      %v3520 = vunpack.c.l.b16 %v3426
      %v3521 = vunpack.c.h.b16 %v3426
      %v3522 = vunpack.c.l.b16 %v3427
      %v3523 = vunpack.c.h.b16 %v3427
      %v3524 = vunpack.c.l.b16 %v3428
      %v3525 = vunpack.c.h.b16 %v3428
      %v3526 = vunpack.c.l.b16 %v3429
      %v3527 = vunpack.c.h.b16 %v3429
      %v3528 = vunpack.c.l.b16 %v3430
      %v3529 = vunpack.c.h.b16 %v3430
      %v3530 = vunpack.c.l.b16 %v3431
      %v3531 = vunpack.c.h.b16 %v3431
      %v3532 = vunpack.c.l.b16 %v3432
      %v3533 = vunpack.c.h.b16 %v3432
      %v3534 = vunpack.c.l.b16 %v3433
      %v3535 = vunpack.c.h.b16 %v3433
      %v3536 = vunpack.c.l.b16 %v3434
      %v3537 = vunpack.c.h.b16 %v3434
      %v3538 = vunpack.c.l.b16 %v3435
      %v3539 = vunpack.c.h.b16 %v3435
      %v3540 = vunpack.c.l.b16 %v3436
      %v3541 = vunpack.c.h.b16 %v3436
      %v3542 = vunpack.c.l.b16 %v3437
      %v3543 = vunpack.c.h.b16 %v3437
      %v3544 = vunpack.c.l.b16 %v3438
      %v3545 = vunpack.c.h.b16 %v3438
      %v3546 = vunpack.c.l.b16 %v3439
      %v3547 = vunpack.c.h.b16 %v3439
      %v3548 = vunpack.c.l.b16 %v3440
      %v3549 = vunpack.c.h.b16 %v3440
      %v3550 = vunpack.c.l.b16 %v3441
      %v3551 = vunpack.c.h.b16 %v3441
      %v3552 = vunpack.c.l.b16 %v3442
      %v3553 = vunpack.c.h.b16 %v3442
      %v3554 = vunpack.c.l.b16 %v3443
      %v3555 = vunpack.c.h.b16 %v3443
      %v3556 = vunpack.c.l.b16 %v3444
      %v3557 = vunpack.c.h.b16 %v3444
      %v3558 = vunpack.c.l.b16 %v3445
      %v3559 = vunpack.c.h.b16 %v3445
      %v3560 = vunpack.c.l.b16 %v3446
      %v3561 = vunpack.c.h.b16 %v3446
      %v3562 = vunpack.c.l.b16 %v3447
      %v3563 = vunpack.c.h.b16 %v3447
      %v3564 = vunpack.c.l.b16 %v3448
      %v3565 = vunpack.c.h.b16 %v3448
      %v3566 = vunpack.c.l.b16 %v3449
      %v3567 = vunpack.c.h.b16 %v3449
      %v3568 = vunpack.c.l.b16 %v3450
      %v3569 = vunpack.c.h.b16 %v3450
      %v3570 = vunpack.c.l.b16 %v3451
      %v3571 = vunpack.c.h.b16 %v3451
      %v3572 = vpack.c.b16 %v3494, %v3492
      %v3573 = vpack.c.b16 %v3495, %v3493
      %v3574 = vpack.c.b16 %v3498, %v3496
      %v3575 = vpack.c.b16 %v3499, %v3497
      %v3576 = vpack.c.b16 %v3502, %v3500
      %v3577 = vpack.c.b16 %v3503, %v3501
      %v3578 = vpack.c.b16 %v3506, %v3504
      %v3579 = vpack.c.b16 %v3507, %v3505
      %v3580 = vpack.c.b16 %v3510, %v3508
      %v3581 = vpack.c.b16 %v3511, %v3509
      %v3582 = vpack.c.b16 %v3514, %v3512
      %v3583 = vpack.c.b16 %v3515, %v3513
      %v3584 = vpack.c.b16 %v3518, %v3516
      %v3585 = vpack.c.b16 %v3519, %v3517
      %v3586 = vpack.c.b16 %v3522, %v3520
      %v3587 = vpack.c.b16 %v3523, %v3521
      %v3588 = vpack.c.b16 %v3526, %v3524
      %v3589 = vpack.c.b16 %v3527, %v3525
      %v3590 = vpack.c.b16 %v3530, %v3528
      %v3591 = vpack.c.b16 %v3531, %v3529
      %v3592 = vpack.c.b16 %v3534, %v3532
      %v3593 = vpack.c.b16 %v3535, %v3533
      %v3594 = vpack.c.b16 %v3538, %v3536
      %v3595 = vpack.c.b16 %v3539, %v3537
      %v3596 = vpack.c.b16 %v3542, %v3540
      %v3597 = vpack.c.b16 %v3543, %v3541
      %v3598 = vpack.c.b16 %v3546, %v3544
      %v3599 = vpack.c.b16 %v3547, %v3545
      %v3600 = vpack.c.b16 %v3550, %v3548
      %v3601 = vpack.c.b16 %v3551, %v3549
      %v3602 = vpack.c.b16 %v3554, %v3552
      %v3603 = vpack.c.b16 %v3555, %v3553
      %v3604 = vpack.c.b16 %v3558, %v3556
      %v3605 = vpack.c.b16 %v3559, %v3557
      %v3606 = vpack.c.b16 %v3562, %v3560
      %v3607 = vpack.c.b16 %v3563, %v3561
      %v3608 = vpack.c.b16 %v3566, %v3564
      %v3609 = vpack.c.b16 %v3567, %v3565
      %v3610 = vpack.c.b16 %v3570, %v3568
      %v3611 = vpack.c.b16 %v3571, %v3569
      %v3653 = vsel %vm561, %v3385, 0
      %v3656 = vsel %vm561, %v3388, 0
      %v3659 = vsel %vm561, %v3391, 0
      %v3662 = vsel %vm561, %v3394, 0
      %3664 = vmatprep.subr.bf16.mxu0 %v3587
      %3665 = vmatpush1.bf16.msra.mxu0 %v3586
      %3666 = vmatprep.subr.bf16.mxu0 %v3585
      %3667 = vmatpush1.bf16.msra.mxu0 %v3584
      %3668 = vmatprep.subr.bf16.mxu0 %v3583
      %3669 = vmatpush1.bf16.msra.mxu0 %v3582
      %3670 = vmatprep.subr.bf16.mxu0 %v3581
      %3671 = vmatpush1.bf16.msra.mxu0 %v3580
      %3672 = vmatprep.subr.bf16.mxu0 %v3579
      %3673 = vmatpush1.bf16.msra.mxu0 %v3578
      %3674 = vmatprep.subr.bf16.mxu0 %v3577
      %3675 = vmatpush1.bf16.msra.mxu0 %v3576
      %3676 = vmatprep.subr.bf16.mxu0 %v3575
      %3677 = vmatpush1.bf16.msra.mxu0 %v3574
      %3678 = vmatprep.subr.bf16.mxu0 %v3573
      %3679 = vmatpush1.bf16.msra.mxu0 %v3572
      %3680 = vmatprep.subr.bf16.mxu0 %v3603
      %3681 = vmatpush2.bf16.msra.mxu0 %v3602
      %3682 = vmatprep.subr.bf16.mxu0 %v3601
      %3683 = vmatpush2.bf16.msra.mxu0 %v3600
      %3684 = vmatprep.subr.bf16.mxu0 %v3599
      %3685 = vmatpush2.bf16.msra.mxu0 %v3598
      %3686 = vmatprep.subr.bf16.mxu0 %v3597
      %3687 = vmatpush2.bf16.msra.mxu0 %v3596
      %3688 = vmatprep.subr.bf16.mxu0 %v3595
      %3689 = vmatpush2.bf16.msra.mxu0 %v3594
      %3690 = vmatprep.subr.bf16.mxu0 %v3593
      %3691 = vmatpush2.bf16.msra.mxu0 %v3592
      %3692 = vmatprep.subr.bf16.mxu0 %v3591
      %3693 = vmatpush2.bf16.msra.mxu0 %v3590
      %3694 = vmatprep.subr.bf16.mxu0 %v3589
      %3695 = vmatpush2.bf16.msra.mxu0 %v3588
      %3696 = vmatprep.mubr.bf16.mxu0 %v3384
      %3697 = vmatmul.mubr.bf16.gmra.mxu0 %v3383
      %v3698 = vpop.f32.mrf.mxu0
      %v3699 = vadd.f32 0.0, %v3698
      %v3700 = vpop.f32.mrf.mxu0
      %v3701 = vadd.f32 0.0, %v3700
      %v3702 = vpop.f32.mrf.mxu0
      %v3703 = vadd.f32 0.0, %v3702
      %v3704 = vpop.f32.mrf.mxu0
      %v3705 = vadd.f32 0.0, %v3704
      %3706 = vmatprep.mubr.bf16.mxu0 %v3387
      %3707 = vmatmul.mubr.bf16.gmra.mxu0 %v3386
      %v3708 = vpop.f32.mrf.mxu0
      %v3709 = vadd.f32 0.0, %v3708
      %v3710 = vpop.f32.mrf.mxu0
      %v3711 = vadd.f32 0.0, %v3710
      %v3712 = vpop.f32.mrf.mxu0
      %v3713 = vadd.f32 0.0, %v3712
      %v3714 = vpop.f32.mrf.mxu0
      %v3715 = vadd.f32 0.0, %v3714
      %3716 = vmatprep.mubr.bf16.mxu0 %v3390
      %3717 = vmatmul.mubr.bf16.gmra.mxu0 %v3389
      %v3718 = vpop.f32.mrf.mxu0
      %v3719 = vadd.f32 0.0, %v3718
      %v3720 = vpop.f32.mrf.mxu0
      %v3721 = vadd.f32 0.0, %v3720
      %v3722 = vpop.f32.mrf.mxu0
      %v3723 = vadd.f32 0.0, %v3722
      %v3724 = vpop.f32.mrf.mxu0
      %v3725 = vadd.f32 0.0, %v3724
      %3726 = vmatprep.mubr.bf16.mxu0 %v3393
      %3727 = vmatmul.mubr.bf16.gmra.mxu0 %v3392
      %v3728 = vpop.f32.mrf.mxu0
      %v3729 = vadd.f32 0.0, %v3728
      %v3730 = vpop.f32.mrf.mxu0
      %v3731 = vadd.f32 0.0, %v3730
      %v3732 = vpop.f32.mrf.mxu0
      %v3733 = vadd.f32 0.0, %v3732
      %v3734 = vpop.f32.mrf.mxu0
      %v3735 = vadd.f32 0.0, %v3734
      %3736 = vdwg.mxu0
      %3737 = vmatprep.subr.bf16.mxu0 0
      %3738 = vmatpush1.bf16.msra.mxu0 0
      %3739 = vmatprep.subr.bf16.mxu0 0
      %3740 = vmatpush1.bf16.msra.mxu0 0
      %3741 = vmatprep.subr.bf16.mxu0 0
      %3742 = vmatpush1.bf16.msra.mxu0 0
      %3743 = vmatprep.subr.bf16.mxu0 0
      %3744 = vmatpush1.bf16.msra.mxu0 0
      %3745 = vmatprep.subr.bf16.mxu0 %v3611
      %3746 = vmatpush1.bf16.msra.mxu0 %v3610
      %3747 = vmatprep.subr.bf16.mxu0 %v3609
      %3748 = vmatpush1.bf16.msra.mxu0 %v3608
      %3749 = vmatprep.subr.bf16.mxu0 %v3607
      %3750 = vmatpush1.bf16.msra.mxu0 %v3606
      %3751 = vmatprep.subr.bf16.mxu0 %v3605
      %3752 = vmatpush1.bf16.msra.mxu0 %v3604
      %3753 = vmatprep.subr.bf16.mxu0 0
      %3754 = vmatpush2.bf16.msra.mxu0 0
      %3755 = vmatprep.subr.bf16.mxu0 0
      %3756 = vmatpush2.bf16.msra.mxu0 0
      %3757 = vmatprep.subr.bf16.mxu0 0
      %3758 = vmatpush2.bf16.msra.mxu0 0
      %3759 = vmatprep.subr.bf16.mxu0 0
      %3760 = vmatpush2.bf16.msra.mxu0 0
      %3761 = vmatprep.subr.bf16.mxu0 0
      %3762 = vmatpush2.bf16.msra.mxu0 0
      %3763 = vmatprep.subr.bf16.mxu0 0
      %3764 = vmatpush2.bf16.msra.mxu0 0
      %3765 = vmatprep.subr.bf16.mxu0 0
      %3766 = vmatpush2.bf16.msra.mxu0 0
      %3767 = vmatprep.subr.bf16.mxu0 0
      %3768 = vmatpush2.bf16.msra.mxu0 0
      %3769 = vmatprep.mubr.bf16.mxu0 0
      %3770 = vmatmul.mubr.bf16.gmra.mxu0 %v3653
      %v3771 = vpop.f32.mrf.mxu0
      %v3772 = vadd.f32 %v3699, %v3771
      %v3773 = vpop.f32.mrf.mxu0
      %v3774 = vadd.f32 %v3701, %v3773
      %v3775 = vpop.f32.mrf.mxu0
      %v3776 = vadd.f32 %v3703, %v3775
      %v3777 = vpop.f32.mrf.mxu0
      %v3778 = vadd.f32 %v3705, %v3777
      %3779 = vmatprep.mubr.bf16.mxu0 0
      %3780 = vmatmul.mubr.bf16.gmra.mxu0 %v3656
      %v3781 = vpop.f32.mrf.mxu0
      %v3782 = vadd.f32 %v3709, %v3781
      %v3783 = vpop.f32.mrf.mxu0
      %v3784 = vadd.f32 %v3711, %v3783
      %v3785 = vpop.f32.mrf.mxu0
      %v3786 = vadd.f32 %v3713, %v3785
      %v3787 = vpop.f32.mrf.mxu0
      %v3788 = vadd.f32 %v3715, %v3787
      %3789 = vmatprep.mubr.bf16.mxu0 0
      %3790 = vmatmul.mubr.bf16.gmra.mxu0 %v3659
      %v3791 = vpop.f32.mrf.mxu0
      %v3792 = vadd.f32 %v3719, %v3791
      %v3793 = vpop.f32.mrf.mxu0
      %v3794 = vadd.f32 %v3721, %v3793
      %v3795 = vpop.f32.mrf.mxu0
      %v3796 = vadd.f32 %v3723, %v3795
      %v3797 = vpop.f32.mrf.mxu0
      %v3798 = vadd.f32 %v3725, %v3797
      %3799 = vmatprep.mubr.bf16.mxu0 0
      %3800 = vmatmul.mubr.bf16.gmra.mxu0 %v3662
      %v3801 = vpop.f32.mrf.mxu0
      %v3802 = vadd.f32 %v3729, %v3801
      %v3803 = vpop.f32.mrf.mxu0
      %v3804 = vadd.f32 %v3731, %v3803
      %v3805 = vpop.f32.mrf.mxu0
      %v3806 = vadd.f32 %v3733, %v3805
      %v3807 = vpop.f32.mrf.mxu0
      %v3808 = vadd.f32 %v3735, %v3807
      %3809 = vdwg.mxu0
      %v3810 = vadd.f32 %v3395, %v3772
      %v3811 = vadd.f32 %v3396, %v3774
      %v3812 = vadd.f32 %v3397, %v3776
      %v3813 = vadd.f32 %v3398, %v3778
      %v3814 = vadd.f32 %v3399, %v3782
      %v3815 = vadd.f32 %v3400, %v3784
      %v3816 = vadd.f32 %v3401, %v3786
      %v3817 = vadd.f32 %v3402, %v3788
      %v3818 = vadd.f32 %v3403, %v3792
      %v3819 = vadd.f32 %v3404, %v3794
      %v3820 = vadd.f32 %v3405, %v3796
      %v3821 = vadd.f32 %v3406, %v3798
      %v3822 = vadd.f32 %v3407, %v3802
      %v3823 = vadd.f32 %v3408, %v3804
      %v3824 = vadd.f32 %v3409, %v3806
      %v3825 = vadd.f32 %v3410, %v3808
      %3826 = vst [vmem:[#allocation2] sm:$0xff] %v3810
      %3827 = vst [vmem:[#allocation2 + $0x8] sm:$0xff] %v3811
      %3828 = vst [vmem:[#allocation2 + $0x10] sm:$0xff] %v3812
      %3829 = vst [vmem:[#allocation2 + $0x18] sm:$0xff] %v3813
      %3830 = vst [vmem:[#allocation2 + $0x20] sm:$0xff] %v3814
      %3831 = vst [vmem:[#allocation2 + $0x28] sm:$0xff] %v3815
      %3832 = vst [vmem:[#allocation2 + $0x30] sm:$0xff] %v3816
      %3833 = vst [vmem:[#allocation2 + $0x38] sm:$0xff] %v3817
      %3834 = vst [vmem:[#allocation2 + $0x40] sm:$0xff] %v3818
      %3835 = vst [vmem:[#allocation2 + $0x48] sm:$0xff] %v3819
      %3836 = vst [vmem:[#allocation2 + $0x50] sm:$0xff] %v3820
      %3837 = vst [vmem:[#allocation2 + $0x58] sm:$0xff] %v3821
      %3838 = vst [vmem:[#allocation2 + $0x60] sm:$0xff] %v3822
      %3839 = vst [vmem:[#allocation2 + $0x68] sm:$0xff] %v3823
      %3840 = vst [vmem:[#allocation2 + $0x70] sm:$0xff] %v3824
      %3841 = vst [vmem:[#allocation2 + $0x78] sm:$0xff] %v3825
      %s3842 = scalar_lea.vmem %s246, 96
      %v3843 = vld [vmem:[%s3842] sm:$0xff]
      %v3844 = vld [vmem:[%s3842 + $0x8] sm:$0xff]
      %v3845 = vld [vmem:[%s3842 + $0x10] sm:$0xff]
      %v3846 = vld [vmem:[%s3842 + $0x30] sm:$0xff]
      %v3847 = vld [vmem:[%s3842 + $0x38] sm:$0xff]
      %v3848 = vld [vmem:[%s3842 + $0x40] sm:$0xff]
      %v3849 = vld [vmem:[%s3842 + $0x60] sm:$0xff]
      %v3850 = vld [vmem:[%s3842 + $0x68] sm:$0xff]
      %v3851 = vld [vmem:[%s3842 + $0x70] sm:$0xff]
      %v3852 = vld [vmem:[%s3842 + $0x90] sm:$0xff]
      %v3853 = vld [vmem:[%s3842 + $0x98] sm:$0xff]
      %v3854 = vld [vmem:[%s3842 + $0xa0] sm:$0xff]
      %v3855 = vld [vmem:[%s3842 + $0xc0] sm:$0xff]
      %v3856 = vld [vmem:[%s3842 + $0xc8] sm:$0xff]
      %v3857 = vld [vmem:[%s3842 + $0xd0] sm:$0xff]
      %v3858 = vld [vmem:[%s3842 + $0xf0] sm:$0xff]
      %v3859 = vld [vmem:[%s3842 + $0xf8] sm:$0xff]
      %v3860 = vld [vmem:[%s3842 + $0x100] sm:$0xff]
      %v3861 = vld [vmem:[%s3842 + $0x120] sm:$0xff]
      %v3862 = vld [vmem:[%s3842 + $0x128] sm:$0xff]
      %v3863 = vld [vmem:[%s3842 + $0x130] sm:$0xff]
      %v3864 = vld [vmem:[%s3842 + $0x150] sm:$0xff]
      %v3865 = vld [vmem:[%s3842 + $0x158] sm:$0xff]
      %v3866 = vld [vmem:[%s3842 + $0x160] sm:$0xff]
      %v3867 = vpack.c.bf16 %v3846, %v3843
      %v3868 = vpack.c.bf16 %v3847, %v3844
      %v3869 = vpack.c.bf16 %v3848, %v3845
      %v3870 = vpack.c.bf16 %v3852, %v3849
      %v3871 = vpack.c.bf16 %v3853, %v3850
      %v3872 = vpack.c.bf16 %v3854, %v3851
      %v3873 = vpack.c.bf16 %v3858, %v3855
      %v3874 = vpack.c.bf16 %v3859, %v3856
      %v3875 = vpack.c.bf16 %v3860, %v3857
      %v3876 = vpack.c.bf16 %v3864, %v3861
      %v3877 = vpack.c.bf16 %v3865, %v3862
      %v3878 = vpack.c.bf16 %v3866, %v3863
      %v3879 = vld [vmem:[#allocation2] sm:$0xff]
      %v3880 = vld [vmem:[#allocation2 + $0x8] sm:$0xff]
      %v3881 = vld [vmem:[#allocation2 + $0x10] sm:$0xff]
      %v3882 = vld [vmem:[#allocation2 + $0x18] sm:$0xff]
      %v3883 = vld [vmem:[#allocation2 + $0x20] sm:$0xff]
      %v3884 = vld [vmem:[#allocation2 + $0x28] sm:$0xff]
      %v3885 = vld [vmem:[#allocation2 + $0x30] sm:$0xff]
      %v3886 = vld [vmem:[#allocation2 + $0x38] sm:$0xff]
      %v3887 = vld [vmem:[#allocation2 + $0x40] sm:$0xff]
      %v3888 = vld [vmem:[#allocation2 + $0x48] sm:$0xff]
      %v3889 = vld [vmem:[#allocation2 + $0x50] sm:$0xff]
      %v3890 = vld [vmem:[#allocation2 + $0x58] sm:$0xff]
      %v3891 = vld [vmem:[#allocation2 + $0x60] sm:$0xff]
      %v3892 = vld [vmem:[#allocation2 + $0x68] sm:$0xff]
      %v3893 = vld [vmem:[#allocation2 + $0x70] sm:$0xff]
      %v3894 = vld [vmem:[#allocation2 + $0x78] sm:$0xff]
      %s3895 = scalar_lea.vmem %s1, 1920
      %v3896 = vld [vmem:[%s3895] sm:$0xff]
      %v3897 = vld [vmem:[%s3895 + $0x8] sm:$0xff]
      %v3898 = vld [vmem:[%s3895 + $0x10] sm:$0xff]
      %v3899 = vld [vmem:[%s3895 + $0x18] sm:$0xff]
      %v3900 = vld [vmem:[%s3895 + $0x20] sm:$0xff]
      %v3901 = vld [vmem:[%s3895 + $0x28] sm:$0xff]
      %v3902 = vld [vmem:[%s3895 + $0x30] sm:$0xff]
      %v3903 = vld [vmem:[%s3895 + $0x38] sm:$0xff]
      %v3904 = vld [vmem:[%s3895 + $0x40] sm:$0xff]
      %v3905 = vld [vmem:[%s3895 + $0x48] sm:$0xff]
      %v3906 = vld [vmem:[%s3895 + $0x50] sm:$0xff]
      %v3907 = vld [vmem:[%s3895 + $0x58] sm:$0xff]
      %v3908 = vld [vmem:[%s3895 + $0x60] sm:$0xff]
      %v3909 = vld [vmem:[%s3895 + $0x68] sm:$0xff]
      %v3910 = vld [vmem:[%s3895 + $0x70] sm:$0xff]
      %v3911 = vld [vmem:[%s3895 + $0x78] sm:$0xff]
      %v3912 = vld [vmem:[%s3895 + $0x80] sm:$0xff]
      %v3913 = vld [vmem:[%s3895 + $0x88] sm:$0xff]
      %v3914 = vld [vmem:[%s3895 + $0x90] sm:$0xff]
      %v3915 = vld [vmem:[%s3895 + $0x98] sm:$0xff]
      %v3916 = vld [vmem:[%s3895 + $0xa0] sm:$0xff]
      %v3917 = vld [vmem:[%s3895 + $0xa8] sm:$0xff]
      %v3918 = vld [vmem:[%s3895 + $0xb0] sm:$0xff]
      %v3919 = vld [vmem:[%s3895 + $0xb8] sm:$0xff]
      %v3920 = vld [vmem:[%s3895 + $0xc0] sm:$0xff]
      %v3921 = vld [vmem:[%s3895 + $0xc8] sm:$0xff]
      %v3922 = vld [vmem:[%s3895 + $0xd0] sm:$0xff]
      %v3923 = vld [vmem:[%s3895 + $0xd8] sm:$0xff]
      %v3924 = vld [vmem:[%s3895 + $0xe0] sm:$0xff]
      %v3925 = vld [vmem:[%s3895 + $0xe8] sm:$0xff]
      %v3926 = vld [vmem:[%s3895 + $0xf0] sm:$0xff]
      %v3927 = vld [vmem:[%s3895 + $0xf8] sm:$0xff]
      %v3928 = vld [vmem:[%s3895 + $0x100] sm:$0xff]
      %v3929 = vld [vmem:[%s3895 + $0x108] sm:$0xff]
      %v3930 = vld [vmem:[%s3895 + $0x110] sm:$0xff]
      %v3931 = vld [vmem:[%s3895 + $0x118] sm:$0xff]
      %v3932 = vld [vmem:[%s3895 + $0x120] sm:$0xff]
      %v3933 = vld [vmem:[%s3895 + $0x128] sm:$0xff]
      %v3934 = vld [vmem:[%s3895 + $0x130] sm:$0xff]
      %v3935 = vld [vmem:[%s3895 + $0x138] sm:$0xff]
      %v3976 = vunpack.c.l.b16 %v3896
      %v3977 = vunpack.c.h.b16 %v3896
      %v3978 = vunpack.c.l.b16 %v3897
      %v3979 = vunpack.c.h.b16 %v3897
      %v3980 = vunpack.c.l.b16 %v3898
      %v3981 = vunpack.c.h.b16 %v3898
      %v3982 = vunpack.c.l.b16 %v3899
      %v3983 = vunpack.c.h.b16 %v3899
      %v3984 = vunpack.c.l.b16 %v3900
      %v3985 = vunpack.c.h.b16 %v3900
      %v3986 = vunpack.c.l.b16 %v3901
      %v3987 = vunpack.c.h.b16 %v3901
      %v3988 = vunpack.c.l.b16 %v3902
      %v3989 = vunpack.c.h.b16 %v3902
      %v3990 = vunpack.c.l.b16 %v3903
      %v3991 = vunpack.c.h.b16 %v3903
      %v3992 = vunpack.c.l.b16 %v3904
      %v3993 = vunpack.c.h.b16 %v3904
      %v3994 = vunpack.c.l.b16 %v3905
      %v3995 = vunpack.c.h.b16 %v3905
      %v3996 = vunpack.c.l.b16 %v3906
      %v3997 = vunpack.c.h.b16 %v3906
      %v3998 = vunpack.c.l.b16 %v3907
      %v3999 = vunpack.c.h.b16 %v3907
      %v4000 = vunpack.c.l.b16 %v3908
      %v4001 = vunpack.c.h.b16 %v3908
      %v4002 = vunpack.c.l.b16 %v3909
      %v4003 = vunpack.c.h.b16 %v3909
      %v4004 = vunpack.c.l.b16 %v3910
      %v4005 = vunpack.c.h.b16 %v3910
      %v4006 = vunpack.c.l.b16 %v3911
      %v4007 = vunpack.c.h.b16 %v3911
      %v4008 = vunpack.c.l.b16 %v3912
      %v4009 = vunpack.c.h.b16 %v3912
      %v4010 = vunpack.c.l.b16 %v3913
      %v4011 = vunpack.c.h.b16 %v3913
      %v4012 = vunpack.c.l.b16 %v3914
      %v4013 = vunpack.c.h.b16 %v3914
      %v4014 = vunpack.c.l.b16 %v3915
      %v4015 = vunpack.c.h.b16 %v3915
      %v4016 = vunpack.c.l.b16 %v3916
      %v4017 = vunpack.c.h.b16 %v3916
      %v4018 = vunpack.c.l.b16 %v3917
      %v4019 = vunpack.c.h.b16 %v3917
      %v4020 = vunpack.c.l.b16 %v3918
      %v4021 = vunpack.c.h.b16 %v3918
      %v4022 = vunpack.c.l.b16 %v3919
      %v4023 = vunpack.c.h.b16 %v3919
      %v4024 = vunpack.c.l.b16 %v3920
      %v4025 = vunpack.c.h.b16 %v3920
      %v4026 = vunpack.c.l.b16 %v3921
      %v4027 = vunpack.c.h.b16 %v3921
      %v4028 = vunpack.c.l.b16 %v3922
      %v4029 = vunpack.c.h.b16 %v3922
      %v4030 = vunpack.c.l.b16 %v3923
      %v4031 = vunpack.c.h.b16 %v3923
      %v4032 = vunpack.c.l.b16 %v3924
      %v4033 = vunpack.c.h.b16 %v3924
      %v4034 = vunpack.c.l.b16 %v3925
      %v4035 = vunpack.c.h.b16 %v3925
      %v4036 = vunpack.c.l.b16 %v3926
      %v4037 = vunpack.c.h.b16 %v3926
      %v4038 = vunpack.c.l.b16 %v3927
      %v4039 = vunpack.c.h.b16 %v3927
      %v4040 = vunpack.c.l.b16 %v3928
      %v4041 = vunpack.c.h.b16 %v3928
      %v4042 = vunpack.c.l.b16 %v3929
      %v4043 = vunpack.c.h.b16 %v3929
      %v4044 = vunpack.c.l.b16 %v3930
      %v4045 = vunpack.c.h.b16 %v3930
      %v4046 = vunpack.c.l.b16 %v3931
      %v4047 = vunpack.c.h.b16 %v3931
      %v4048 = vunpack.c.l.b16 %v3932
      %v4049 = vunpack.c.h.b16 %v3932
      %v4050 = vunpack.c.l.b16 %v3933
      %v4051 = vunpack.c.h.b16 %v3933
      %v4052 = vunpack.c.l.b16 %v3934
      %v4053 = vunpack.c.h.b16 %v3934
      %v4054 = vunpack.c.l.b16 %v3935
      %v4055 = vunpack.c.h.b16 %v3935
      %v4056 = vpack.c.b16 %v3978, %v3976
      %v4057 = vpack.c.b16 %v3979, %v3977
      %v4058 = vpack.c.b16 %v3982, %v3980
      %v4059 = vpack.c.b16 %v3983, %v3981
      %v4060 = vpack.c.b16 %v3986, %v3984
      %v4061 = vpack.c.b16 %v3987, %v3985
      %v4062 = vpack.c.b16 %v3990, %v3988
      %v4063 = vpack.c.b16 %v3991, %v3989
      %v4064 = vpack.c.b16 %v3994, %v3992
      %v4065 = vpack.c.b16 %v3995, %v3993
      %v4066 = vpack.c.b16 %v3998, %v3996
      %v4067 = vpack.c.b16 %v3999, %v3997
      %v4068 = vpack.c.b16 %v4002, %v4000
      %v4069 = vpack.c.b16 %v4003, %v4001
      %v4070 = vpack.c.b16 %v4006, %v4004
      %v4071 = vpack.c.b16 %v4007, %v4005
      %v4072 = vpack.c.b16 %v4010, %v4008
      %v4073 = vpack.c.b16 %v4011, %v4009
      %v4074 = vpack.c.b16 %v4014, %v4012
      %v4075 = vpack.c.b16 %v4015, %v4013
      %v4076 = vpack.c.b16 %v4018, %v4016
      %v4077 = vpack.c.b16 %v4019, %v4017
      %v4078 = vpack.c.b16 %v4022, %v4020
      %v4079 = vpack.c.b16 %v4023, %v4021
      %v4080 = vpack.c.b16 %v4026, %v4024
      %v4081 = vpack.c.b16 %v4027, %v4025
      %v4082 = vpack.c.b16 %v4030, %v4028
      %v4083 = vpack.c.b16 %v4031, %v4029
      %v4084 = vpack.c.b16 %v4034, %v4032
      %v4085 = vpack.c.b16 %v4035, %v4033
      %v4086 = vpack.c.b16 %v4038, %v4036
      %v4087 = vpack.c.b16 %v4039, %v4037
      %v4088 = vpack.c.b16 %v4042, %v4040
      %v4089 = vpack.c.b16 %v4043, %v4041
      %v4090 = vpack.c.b16 %v4046, %v4044
      %v4091 = vpack.c.b16 %v4047, %v4045
      %v4092 = vpack.c.b16 %v4050, %v4048
      %v4093 = vpack.c.b16 %v4051, %v4049
      %v4094 = vpack.c.b16 %v4054, %v4052
      %v4095 = vpack.c.b16 %v4055, %v4053
      %v4137 = vsel %vm561, %v3869, 0
      %v4140 = vsel %vm561, %v3872, 0
      %v4143 = vsel %vm561, %v3875, 0
      %v4146 = vsel %vm561, %v3878, 0
      %4148 = vmatprep.subr.bf16.mxu0 %v4071
      %4149 = vmatpush1.bf16.msra.mxu0 %v4070
      %4150 = vmatprep.subr.bf16.mxu0 %v4069
      %4151 = vmatpush1.bf16.msra.mxu0 %v4068
      %4152 = vmatprep.subr.bf16.mxu0 %v4067
      %4153 = vmatpush1.bf16.msra.mxu0 %v4066
      %4154 = vmatprep.subr.bf16.mxu0 %v4065
      %4155 = vmatpush1.bf16.msra.mxu0 %v4064
      %4156 = vmatprep.subr.bf16.mxu0 %v4063
      %4157 = vmatpush1.bf16.msra.mxu0 %v4062
      %4158 = vmatprep.subr.bf16.mxu0 %v4061
      %4159 = vmatpush1.bf16.msra.mxu0 %v4060
      %4160 = vmatprep.subr.bf16.mxu0 %v4059
      %4161 = vmatpush1.bf16.msra.mxu0 %v4058
      %4162 = vmatprep.subr.bf16.mxu0 %v4057
      %4163 = vmatpush1.bf16.msra.mxu0 %v4056
      %4164 = vmatprep.subr.bf16.mxu0 %v4087
      %4165 = vmatpush2.bf16.msra.mxu0 %v4086
      %4166 = vmatprep.subr.bf16.mxu0 %v4085
      %4167 = vmatpush2.bf16.msra.mxu0 %v4084
      %4168 = vmatprep.subr.bf16.mxu0 %v4083
      %4169 = vmatpush2.bf16.msra.mxu0 %v4082
      %4170 = vmatprep.subr.bf16.mxu0 %v4081
      %4171 = vmatpush2.bf16.msra.mxu0 %v4080
      %4172 = vmatprep.subr.bf16.mxu0 %v4079
      %4173 = vmatpush2.bf16.msra.mxu0 %v4078
      %4174 = vmatprep.subr.bf16.mxu0 %v4077
      %4175 = vmatpush2.bf16.msra.mxu0 %v4076
      %4176 = vmatprep.subr.bf16.mxu0 %v4075
      %4177 = vmatpush2.bf16.msra.mxu0 %v4074
      %4178 = vmatprep.subr.bf16.mxu0 %v4073
      %4179 = vmatpush2.bf16.msra.mxu0 %v4072
      %4180 = vmatprep.mubr.bf16.mxu0 %v3868
      %4181 = vmatmul.mubr.bf16.gmra.mxu0 %v3867
      %v4182 = vpop.f32.mrf.mxu0
      %v4183 = vadd.f32 0.0, %v4182
      %v4184 = vpop.f32.mrf.mxu0
      %v4185 = vadd.f32 0.0, %v4184
      %v4186 = vpop.f32.mrf.mxu0
      %v4187 = vadd.f32 0.0, %v4186
      %v4188 = vpop.f32.mrf.mxu0
      %v4189 = vadd.f32 0.0, %v4188
      %4190 = vmatprep.mubr.bf16.mxu0 %v3871
      %4191 = vmatmul.mubr.bf16.gmra.mxu0 %v3870
      %v4192 = vpop.f32.mrf.mxu0
      %v4193 = vadd.f32 0.0, %v4192
      %v4194 = vpop.f32.mrf.mxu0
      %v4195 = vadd.f32 0.0, %v4194
      %v4196 = vpop.f32.mrf.mxu0
      %v4197 = vadd.f32 0.0, %v4196
      %v4198 = vpop.f32.mrf.mxu0
      %v4199 = vadd.f32 0.0, %v4198
      %4200 = vmatprep.mubr.bf16.mxu0 %v3874
      %4201 = vmatmul.mubr.bf16.gmra.mxu0 %v3873
      %v4202 = vpop.f32.mrf.mxu0
      %v4203 = vadd.f32 0.0, %v4202
      %v4204 = vpop.f32.mrf.mxu0
      %v4205 = vadd.f32 0.0, %v4204
      %v4206 = vpop.f32.mrf.mxu0
      %v4207 = vadd.f32 0.0, %v4206
      %v4208 = vpop.f32.mrf.mxu0
      %v4209 = vadd.f32 0.0, %v4208
      %4210 = vmatprep.mubr.bf16.mxu0 %v3877
      %4211 = vmatmul.mubr.bf16.gmra.mxu0 %v3876
      %v4212 = vpop.f32.mrf.mxu0
      %v4213 = vadd.f32 0.0, %v4212
      %v4214 = vpop.f32.mrf.mxu0
      %v4215 = vadd.f32 0.0, %v4214
      %v4216 = vpop.f32.mrf.mxu0
      %v4217 = vadd.f32 0.0, %v4216
      %v4218 = vpop.f32.mrf.mxu0
      %v4219 = vadd.f32 0.0, %v4218
      %4220 = vdwg.mxu0
      %4221 = vmatprep.subr.bf16.mxu0 0
      %4222 = vmatpush1.bf16.msra.mxu0 0
      %4223 = vmatprep.subr.bf16.mxu0 0
      %4224 = vmatpush1.bf16.msra.mxu0 0
      %4225 = vmatprep.subr.bf16.mxu0 0
      %4226 = vmatpush1.bf16.msra.mxu0 0
      %4227 = vmatprep.subr.bf16.mxu0 0
      %4228 = vmatpush1.bf16.msra.mxu0 0
      %4229 = vmatprep.subr.bf16.mxu0 %v4095
      %4230 = vmatpush1.bf16.msra.mxu0 %v4094
      %4231 = vmatprep.subr.bf16.mxu0 %v4093
      %4232 = vmatpush1.bf16.msra.mxu0 %v4092
      %4233 = vmatprep.subr.bf16.mxu0 %v4091
      %4234 = vmatpush1.bf16.msra.mxu0 %v4090
      %4235 = vmatprep.subr.bf16.mxu0 %v4089
      %4236 = vmatpush1.bf16.msra.mxu0 %v4088
      %4237 = vmatprep.subr.bf16.mxu0 0
      %4238 = vmatpush2.bf16.msra.mxu0 0
      %4239 = vmatprep.subr.bf16.mxu0 0
      %4240 = vmatpush2.bf16.msra.mxu0 0
      %4241 = vmatprep.subr.bf16.mxu0 0
      %4242 = vmatpush2.bf16.msra.mxu0 0
      %4243 = vmatprep.subr.bf16.mxu0 0
      %4244 = vmatpush2.bf16.msra.mxu0 0
      %4245 = vmatprep.subr.bf16.mxu0 0
      %4246 = vmatpush2.bf16.msra.mxu0 0
      %4247 = vmatprep.subr.bf16.mxu0 0
      %4248 = vmatpush2.bf16.msra.mxu0 0
      %4249 = vmatprep.subr.bf16.mxu0 0
      %4250 = vmatpush2.bf16.msra.mxu0 0
      %4251 = vmatprep.subr.bf16.mxu0 0
      %4252 = vmatpush2.bf16.msra.mxu0 0
      %4253 = vmatprep.mubr.bf16.mxu0 0
      %4254 = vmatmul.mubr.bf16.gmra.mxu0 %v4137
      %v4255 = vpop.f32.mrf.mxu0
      %v4256 = vadd.f32 %v4183, %v4255
      %v4257 = vpop.f32.mrf.mxu0
      %v4258 = vadd.f32 %v4185, %v4257
      %v4259 = vpop.f32.mrf.mxu0
      %v4260 = vadd.f32 %v4187, %v4259
      %v4261 = vpop.f32.mrf.mxu0
      %v4262 = vadd.f32 %v4189, %v4261
      %4263 = vmatprep.mubr.bf16.mxu0 0
      %4264 = vmatmul.mubr.bf16.gmra.mxu0 %v4140
      %v4265 = vpop.f32.mrf.mxu0
      %v4266 = vadd.f32 %v4193, %v4265
      %v4267 = vpop.f32.mrf.mxu0
      %v4268 = vadd.f32 %v4195, %v4267
      %v4269 = vpop.f32.mrf.mxu0
      %v4270 = vadd.f32 %v4197, %v4269
      %v4271 = vpop.f32.mrf.mxu0
      %v4272 = vadd.f32 %v4199, %v4271
      %4273 = vmatprep.mubr.bf16.mxu0 0
      %4274 = vmatmul.mubr.bf16.gmra.mxu0 %v4143
      %v4275 = vpop.f32.mrf.mxu0
      %v4276 = vadd.f32 %v4203, %v4275
      %v4277 = vpop.f32.mrf.mxu0
      %v4278 = vadd.f32 %v4205, %v4277
      %v4279 = vpop.f32.mrf.mxu0
      %v4280 = vadd.f32 %v4207, %v4279
      %v4281 = vpop.f32.mrf.mxu0
      %v4282 = vadd.f32 %v4209, %v4281
      %4283 = vmatprep.mubr.bf16.mxu0 0
      %4284 = vmatmul.mubr.bf16.gmra.mxu0 %v4146
      %v4285 = vpop.f32.mrf.mxu0
      %v4286 = vadd.f32 %v4213, %v4285
      %v4287 = vpop.f32.mrf.mxu0
      %v4288 = vadd.f32 %v4215, %v4287
      %v4289 = vpop.f32.mrf.mxu0
      %v4290 = vadd.f32 %v4217, %v4289
      %v4291 = vpop.f32.mrf.mxu0
      %v4292 = vadd.f32 %v4219, %v4291
      %4293 = vdwg.mxu0
      %v4294 = vadd.f32 %v3879, %v4256
      %v4295 = vadd.f32 %v3880, %v4258
      %v4296 = vadd.f32 %v3881, %v4260
      %v4297 = vadd.f32 %v3882, %v4262
      %v4298 = vadd.f32 %v3883, %v4266
      %v4299 = vadd.f32 %v3884, %v4268
      %v4300 = vadd.f32 %v3885, %v4270
      %v4301 = vadd.f32 %v3886, %v4272
      %v4302 = vadd.f32 %v3887, %v4276
      %v4303 = vadd.f32 %v3888, %v4278
      %v4304 = vadd.f32 %v3889, %v4280
      %v4305 = vadd.f32 %v3890, %v4282
      %v4306 = vadd.f32 %v3891, %v4286
      %v4307 = vadd.f32 %v3892, %v4288
      %v4308 = vadd.f32 %v3893, %v4290
      %v4309 = vadd.f32 %v3894, %v4292
      %4310 = vst [vmem:[#allocation2] sm:$0xff] %v4294
      %4311 = vst [vmem:[#allocation2 + $0x8] sm:$0xff] %v4295
      %4312 = vst [vmem:[#allocation2 + $0x10] sm:$0xff] %v4296
      %4313 = vst [vmem:[#allocation2 + $0x18] sm:$0xff] %v4297
      %4314 = vst [vmem:[#allocation2 + $0x20] sm:$0xff] %v4298
      %4315 = vst [vmem:[#allocation2 + $0x28] sm:$0xff] %v4299
      %4316 = vst [vmem:[#allocation2 + $0x30] sm:$0xff] %v4300
      %4317 = vst [vmem:[#allocation2 + $0x38] sm:$0xff] %v4301
      %4318 = vst [vmem:[#allocation2 + $0x40] sm:$0xff] %v4302
      %4319 = vst [vmem:[#allocation2 + $0x48] sm:$0xff] %v4303
      %4320 = vst [vmem:[#allocation2 + $0x50] sm:$0xff] %v4304
      %4321 = vst [vmem:[#allocation2 + $0x58] sm:$0xff] %v4305
      %4322 = vst [vmem:[#allocation2 + $0x60] sm:$0xff] %v4306
      %4323 = vst [vmem:[#allocation2 + $0x68] sm:$0xff] %v4307
      %4324 = vst [vmem:[#allocation2 + $0x70] sm:$0xff] %v4308
      %4325 = vst [vmem:[#allocation2 + $0x78] sm:$0xff] %v4309
      %v4326 = vld [vmem:[%s3842] sm:$0xfe]
      %v4327 = vld [vmem:[%s3842 + $0x8] sm:$0xfe]
      %v4328 = vld [vmem:[%s3842 + $0x10] sm:$0xfe]
      %v4329 = vld [vmem:[%s3842 + $0x18] sm:$0x1]
      %v4330 = vld [vmem:[%s3842 + $0x20] sm:$0x1]
      %v4331 = vld [vmem:[%s3842 + $0x28] sm:$0x1]
      %v4332 = vld [vmem:[%s3842 + $0x30] sm:$0xfe]
      %v4333 = vld [vmem:[%s3842 + $0x38] sm:$0xfe]
      %v4334 = vld [vmem:[%s3842 + $0x40] sm:$0xfe]
      %v4335 = vld [vmem:[%s3842 + $0x48] sm:$0x1]
      %v4336 = vld [vmem:[%s3842 + $0x50] sm:$0x1]
      %v4337 = vld [vmem:[%s3842 + $0x58] sm:$0x1]
      %v4338 = vld [vmem:[%s3842 + $0x60] sm:$0xfe]
      %v4339 = vld [vmem:[%s3842 + $0x68] sm:$0xfe]
      %v4340 = vld [vmem:[%s3842 + $0x70] sm:$0xfe]
      %v4341 = vld [vmem:[%s3842 + $0x78] sm:$0x1]
      %v4342 = vld [vmem:[%s3842 + $0x80] sm:$0x1]
      %v4343 = vld [vmem:[%s3842 + $0x88] sm:$0x1]
      %v4344 = vld [vmem:[%s3842 + $0x90] sm:$0xfe]
      %v4345 = vld [vmem:[%s3842 + $0x98] sm:$0xfe]
      %v4346 = vld [vmem:[%s3842 + $0xa0] sm:$0xfe]
      %v4347 = vld [vmem:[%s3842 + $0xa8] sm:$0x1]
      %v4348 = vld [vmem:[%s3842 + $0xb0] sm:$0x1]
      %v4349 = vld [vmem:[%s3842 + $0xb8] sm:$0x1]
      %v4350 = vld [vmem:[%s3842 + $0xc0] sm:$0xfe]
      %v4351 = vld [vmem:[%s3842 + $0xc8] sm:$0xfe]
      %v4352 = vld [vmem:[%s3842 + $0xd0] sm:$0xfe]
      %v4353 = vld [vmem:[%s3842 + $0xd8] sm:$0x1]
      %v4354 = vld [vmem:[%s3842 + $0xe0] sm:$0x1]
      %v4355 = vld [vmem:[%s3842 + $0xe8] sm:$0x1]
      %v4356 = vld [vmem:[%s3842 + $0xf0] sm:$0xfe]
      %v4357 = vld [vmem:[%s3842 + $0xf8] sm:$0xfe]
      %v4358 = vld [vmem:[%s3842 + $0x100] sm:$0xfe]
      %v4359 = vld [vmem:[%s3842 + $0x108] sm:$0x1]
      %v4360 = vld [vmem:[%s3842 + $0x110] sm:$0x1]
      %v4361 = vld [vmem:[%s3842 + $0x118] sm:$0x1]
      %v4362 = vld [vmem:[%s3842 + $0x120] sm:$0xfe]
      %v4363 = vld [vmem:[%s3842 + $0x128] sm:$0xfe]
      %v4364 = vld [vmem:[%s3842 + $0x130] sm:$0xfe]
      %v4365 = vld [vmem:[%s3842 + $0x138] sm:$0x1]
      %v4366 = vld [vmem:[%s3842 + $0x140] sm:$0x1]
      %v4367 = vld [vmem:[%s3842 + $0x148] sm:$0x1]
      %v4368 = vld [vmem:[%s3842 + $0x150] sm:$0xfe]
      %v4369 = vld [vmem:[%s3842 + $0x158] sm:$0xfe]
      %v4370 = vld [vmem:[%s3842 + $0x160] sm:$0xfe]
      %v4371 = vld [vmem:[%s3842 + $0x168] sm:$0x1]
      %v4372 = vld [vmem:[%s3842 + $0x170] sm:$0x1]
      %v4373 = vld [vmem:[%s3842 + $0x178] sm:$0x1]
      %v4422 = vrot.slane %v4326, 1
      %v4423 = vrot.slane %v4329, 1
      %v4424 = vsel %vm848, %v4422, %v4423
      %v4425 = vrot.slane %v4327, 1
      %v4426 = vrot.slane %v4330, 1
      %v4427 = vsel %vm848, %v4425, %v4426
      %v4428 = vrot.slane %v4328, 1
      %v4429 = vrot.slane %v4331, 1
      %v4430 = vsel %vm848, %v4428, %v4429
      %v4431 = vrot.slane %v4332, 1
      %v4432 = vrot.slane %v4335, 1
      %v4433 = vsel %vm848, %v4431, %v4432
      %v4434 = vrot.slane %v4333, 1
      %v4435 = vrot.slane %v4336, 1
      %v4436 = vsel %vm848, %v4434, %v4435
      %v4437 = vrot.slane %v4334, 1
      %v4438 = vrot.slane %v4337, 1
      %v4439 = vsel %vm848, %v4437, %v4438
      %v4440 = vrot.slane %v4338, 1
      %v4441 = vrot.slane %v4341, 1
      %v4442 = vsel %vm848, %v4440, %v4441
      %v4443 = vrot.slane %v4339, 1
      %v4444 = vrot.slane %v4342, 1
      %v4445 = vsel %vm848, %v4443, %v4444
      %v4446 = vrot.slane %v4340, 1
      %v4447 = vrot.slane %v4343, 1
      %v4448 = vsel %vm848, %v4446, %v4447
      %v4449 = vrot.slane %v4344, 1
      %v4450 = vrot.slane %v4347, 1
      %v4451 = vsel %vm848, %v4449, %v4450
      %v4452 = vrot.slane %v4345, 1
      %v4453 = vrot.slane %v4348, 1
      %v4454 = vsel %vm848, %v4452, %v4453
      %v4455 = vrot.slane %v4346, 1
      %v4456 = vrot.slane %v4349, 1
      %v4457 = vsel %vm848, %v4455, %v4456
      %v4458 = vrot.slane %v4350, 1
      %v4459 = vrot.slane %v4353, 1
      %v4460 = vsel %vm848, %v4458, %v4459
      %v4461 = vrot.slane %v4351, 1
      %v4462 = vrot.slane %v4354, 1
      %v4463 = vsel %vm848, %v4461, %v4462
      %v4464 = vrot.slane %v4352, 1
      %v4465 = vrot.slane %v4355, 1
      %v4466 = vsel %vm848, %v4464, %v4465
      %v4467 = vrot.slane %v4356, 1
      %v4468 = vrot.slane %v4359, 1
      %v4469 = vsel %vm848, %v4467, %v4468
      %v4470 = vrot.slane %v4357, 1
      %v4471 = vrot.slane %v4360, 1
      %v4472 = vsel %vm848, %v4470, %v4471
      %v4473 = vrot.slane %v4358, 1
      %v4474 = vrot.slane %v4361, 1
      %v4475 = vsel %vm848, %v4473, %v4474
      %v4476 = vrot.slane %v4362, 1
      %v4477 = vrot.slane %v4365, 1
      %v4478 = vsel %vm848, %v4476, %v4477
      %v4479 = vrot.slane %v4363, 1
      %v4480 = vrot.slane %v4366, 1
      %v4481 = vsel %vm848, %v4479, %v4480
      %v4482 = vrot.slane %v4364, 1
      %v4483 = vrot.slane %v4367, 1
      %v4484 = vsel %vm848, %v4482, %v4483
      %v4485 = vrot.slane %v4368, 1
      %v4486 = vrot.slane %v4371, 1
      %v4487 = vsel %vm848, %v4485, %v4486
      %v4488 = vrot.slane %v4369, 1
      %v4489 = vrot.slane %v4372, 1
      %v4490 = vsel %vm848, %v4488, %v4489
      %v4491 = vrot.slane %v4370, 1
      %v4492 = vrot.slane %v4373, 1
      %v4493 = vsel %vm848, %v4491, %v4492
      %v4518 = vpack.c.bf16 %v4433, %v4424
      %v4519 = vpack.c.bf16 %v4436, %v4427
      %v4520 = vpack.c.bf16 %v4439, %v4430
      %v4521 = vpack.c.bf16 %v4451, %v4442
      %v4522 = vpack.c.bf16 %v4454, %v4445
      %v4523 = vpack.c.bf16 %v4457, %v4448
      %v4524 = vpack.c.bf16 %v4469, %v4460
      %v4525 = vpack.c.bf16 %v4472, %v4463
      %v4526 = vpack.c.bf16 %v4475, %v4466
      %v4527 = vpack.c.bf16 %v4487, %v4478
      %v4528 = vpack.c.bf16 %v4490, %v4481
      %v4529 = vpack.c.bf16 %v4493, %v4484
      %v4530 = vld [vmem:[#allocation2] sm:$0xff]
      %v4531 = vld [vmem:[#allocation2 + $0x8] sm:$0xff]
      %v4532 = vld [vmem:[#allocation2 + $0x10] sm:$0xff]
      %v4533 = vld [vmem:[#allocation2 + $0x18] sm:$0xff]
      %v4534 = vld [vmem:[#allocation2 + $0x20] sm:$0xff]
      %v4535 = vld [vmem:[#allocation2 + $0x28] sm:$0xff]
      %v4536 = vld [vmem:[#allocation2 + $0x30] sm:$0xff]
      %v4537 = vld [vmem:[#allocation2 + $0x38] sm:$0xff]
      %v4538 = vld [vmem:[#allocation2 + $0x40] sm:$0xff]
      %v4539 = vld [vmem:[#allocation2 + $0x48] sm:$0xff]
      %v4540 = vld [vmem:[#allocation2 + $0x50] sm:$0xff]
      %v4541 = vld [vmem:[#allocation2 + $0x58] sm:$0xff]
      %v4542 = vld [vmem:[#allocation2 + $0x60] sm:$0xff]
      %v4543 = vld [vmem:[#allocation2 + $0x68] sm:$0xff]
      %v4544 = vld [vmem:[#allocation2 + $0x70] sm:$0xff]
      %v4545 = vld [vmem:[#allocation2 + $0x78] sm:$0xff]
      %s4546 = scalar_lea.vmem %s1, 2240
      %v4547 = vld [vmem:[%s4546] sm:$0xff]
      %v4548 = vld [vmem:[%s4546 + $0x8] sm:$0xff]
      %v4549 = vld [vmem:[%s4546 + $0x10] sm:$0xff]
      %v4550 = vld [vmem:[%s4546 + $0x18] sm:$0xff]
      %v4551 = vld [vmem:[%s4546 + $0x20] sm:$0xff]
      %v4552 = vld [vmem:[%s4546 + $0x28] sm:$0xff]
      %v4553 = vld [vmem:[%s4546 + $0x30] sm:$0xff]
      %v4554 = vld [vmem:[%s4546 + $0x38] sm:$0xff]
      %v4555 = vld [vmem:[%s4546 + $0x40] sm:$0xff]
      %v4556 = vld [vmem:[%s4546 + $0x48] sm:$0xff]
      %v4557 = vld [vmem:[%s4546 + $0x50] sm:$0xff]
      %v4558 = vld [vmem:[%s4546 + $0x58] sm:$0xff]
      %v4559 = vld [vmem:[%s4546 + $0x60] sm:$0xff]
      %v4560 = vld [vmem:[%s4546 + $0x68] sm:$0xff]
      %v4561 = vld [vmem:[%s4546 + $0x70] sm:$0xff]
      %v4562 = vld [vmem:[%s4546 + $0x78] sm:$0xff]
      %v4563 = vld [vmem:[%s4546 + $0x80] sm:$0xff]
      %v4564 = vld [vmem:[%s4546 + $0x88] sm:$0xff]
      %v4565 = vld [vmem:[%s4546 + $0x90] sm:$0xff]
      %v4566 = vld [vmem:[%s4546 + $0x98] sm:$0xff]
      %v4567 = vld [vmem:[%s4546 + $0xa0] sm:$0xff]
      %v4568 = vld [vmem:[%s4546 + $0xa8] sm:$0xff]
      %v4569 = vld [vmem:[%s4546 + $0xb0] sm:$0xff]
      %v4570 = vld [vmem:[%s4546 + $0xb8] sm:$0xff]
      %v4571 = vld [vmem:[%s4546 + $0xc0] sm:$0xff]
      %v4572 = vld [vmem:[%s4546 + $0xc8] sm:$0xff]
      %v4573 = vld [vmem:[%s4546 + $0xd0] sm:$0xff]
      %v4574 = vld [vmem:[%s4546 + $0xd8] sm:$0xff]
      %v4575 = vld [vmem:[%s4546 + $0xe0] sm:$0xff]
      %v4576 = vld [vmem:[%s4546 + $0xe8] sm:$0xff]
      %v4577 = vld [vmem:[%s4546 + $0xf0] sm:$0xff]
      %v4578 = vld [vmem:[%s4546 + $0xf8] sm:$0xff]
      %v4579 = vld [vmem:[%s4546 + $0x100] sm:$0xff]
      %v4580 = vld [vmem:[%s4546 + $0x108] sm:$0xff]
      %v4581 = vld [vmem:[%s4546 + $0x110] sm:$0xff]
      %v4582 = vld [vmem:[%s4546 + $0x118] sm:$0xff]
      %v4583 = vld [vmem:[%s4546 + $0x120] sm:$0xff]
      %v4584 = vld [vmem:[%s4546 + $0x128] sm:$0xff]
      %v4585 = vld [vmem:[%s4546 + $0x130] sm:$0xff]
      %v4586 = vld [vmem:[%s4546 + $0x138] sm:$0xff]
      %v4627 = vunpack.c.l.b16 %v4547
      %v4628 = vunpack.c.h.b16 %v4547
      %v4629 = vunpack.c.l.b16 %v4548
      %v4630 = vunpack.c.h.b16 %v4548
      %v4631 = vunpack.c.l.b16 %v4549
      %v4632 = vunpack.c.h.b16 %v4549
      %v4633 = vunpack.c.l.b16 %v4550
      %v4634 = vunpack.c.h.b16 %v4550
      %v4635 = vunpack.c.l.b16 %v4551
      %v4636 = vunpack.c.h.b16 %v4551
      %v4637 = vunpack.c.l.b16 %v4552
      %v4638 = vunpack.c.h.b16 %v4552
      %v4639 = vunpack.c.l.b16 %v4553
      %v4640 = vunpack.c.h.b16 %v4553
      %v4641 = vunpack.c.l.b16 %v4554
      %v4642 = vunpack.c.h.b16 %v4554
      %v4643 = vunpack.c.l.b16 %v4555
      %v4644 = vunpack.c.h.b16 %v4555
      %v4645 = vunpack.c.l.b16 %v4556
      %v4646 = vunpack.c.h.b16 %v4556
      %v4647 = vunpack.c.l.b16 %v4557
      %v4648 = vunpack.c.h.b16 %v4557
      %v4649 = vunpack.c.l.b16 %v4558
      %v4650 = vunpack.c.h.b16 %v4558
      %v4651 = vunpack.c.l.b16 %v4559
      %v4652 = vunpack.c.h.b16 %v4559
      %v4653 = vunpack.c.l.b16 %v4560
      %v4654 = vunpack.c.h.b16 %v4560
      %v4655 = vunpack.c.l.b16 %v4561
      %v4656 = vunpack.c.h.b16 %v4561
      %v4657 = vunpack.c.l.b16 %v4562
      %v4658 = vunpack.c.h.b16 %v4562
      %v4659 = vunpack.c.l.b16 %v4563
      %v4660 = vunpack.c.h.b16 %v4563
      %v4661 = vunpack.c.l.b16 %v4564
      %v4662 = vunpack.c.h.b16 %v4564
      %v4663 = vunpack.c.l.b16 %v4565
      %v4664 = vunpack.c.h.b16 %v4565
      %v4665 = vunpack.c.l.b16 %v4566
      %v4666 = vunpack.c.h.b16 %v4566
      %v4667 = vunpack.c.l.b16 %v4567
      %v4668 = vunpack.c.h.b16 %v4567
      %v4669 = vunpack.c.l.b16 %v4568
      %v4670 = vunpack.c.h.b16 %v4568
      %v4671 = vunpack.c.l.b16 %v4569
      %v4672 = vunpack.c.h.b16 %v4569
      %v4673 = vunpack.c.l.b16 %v4570
      %v4674 = vunpack.c.h.b16 %v4570
      %v4675 = vunpack.c.l.b16 %v4571
      %v4676 = vunpack.c.h.b16 %v4571
      %v4677 = vunpack.c.l.b16 %v4572
      %v4678 = vunpack.c.h.b16 %v4572
      %v4679 = vunpack.c.l.b16 %v4573
      %v4680 = vunpack.c.h.b16 %v4573
      %v4681 = vunpack.c.l.b16 %v4574
      %v4682 = vunpack.c.h.b16 %v4574
      %v4683 = vunpack.c.l.b16 %v4575
      %v4684 = vunpack.c.h.b16 %v4575
      %v4685 = vunpack.c.l.b16 %v4576
      %v4686 = vunpack.c.h.b16 %v4576
      %v4687 = vunpack.c.l.b16 %v4577
      %v4688 = vunpack.c.h.b16 %v4577
      %v4689 = vunpack.c.l.b16 %v4578
      %v4690 = vunpack.c.h.b16 %v4578
      %v4691 = vunpack.c.l.b16 %v4579
      %v4692 = vunpack.c.h.b16 %v4579
      %v4693 = vunpack.c.l.b16 %v4580
      %v4694 = vunpack.c.h.b16 %v4580
      %v4695 = vunpack.c.l.b16 %v4581
      %v4696 = vunpack.c.h.b16 %v4581
      %v4697 = vunpack.c.l.b16 %v4582
      %v4698 = vunpack.c.h.b16 %v4582
      %v4699 = vunpack.c.l.b16 %v4583
      %v4700 = vunpack.c.h.b16 %v4583
      %v4701 = vunpack.c.l.b16 %v4584
      %v4702 = vunpack.c.h.b16 %v4584
      %v4703 = vunpack.c.l.b16 %v4585
      %v4704 = vunpack.c.h.b16 %v4585
      %v4705 = vunpack.c.l.b16 %v4586
      %v4706 = vunpack.c.h.b16 %v4586
      %v4707 = vpack.c.b16 %v4629, %v4627
      %v4708 = vpack.c.b16 %v4630, %v4628
      %v4709 = vpack.c.b16 %v4633, %v4631
      %v4710 = vpack.c.b16 %v4634, %v4632
      %v4711 = vpack.c.b16 %v4637, %v4635
      %v4712 = vpack.c.b16 %v4638, %v4636
      %v4713 = vpack.c.b16 %v4641, %v4639
      %v4714 = vpack.c.b16 %v4642, %v4640
      %v4715 = vpack.c.b16 %v4645, %v4643
      %v4716 = vpack.c.b16 %v4646, %v4644
      %v4717 = vpack.c.b16 %v4649, %v4647
      %v4718 = vpack.c.b16 %v4650, %v4648
      %v4719 = vpack.c.b16 %v4653, %v4651
      %v4720 = vpack.c.b16 %v4654, %v4652
      %v4721 = vpack.c.b16 %v4657, %v4655
      %v4722 = vpack.c.b16 %v4658, %v4656
      %v4723 = vpack.c.b16 %v4661, %v4659
      %v4724 = vpack.c.b16 %v4662, %v4660
      %v4725 = vpack.c.b16 %v4665, %v4663
      %v4726 = vpack.c.b16 %v4666, %v4664
      %v4727 = vpack.c.b16 %v4669, %v4667
      %v4728 = vpack.c.b16 %v4670, %v4668
      %v4729 = vpack.c.b16 %v4673, %v4671
      %v4730 = vpack.c.b16 %v4674, %v4672
      %v4731 = vpack.c.b16 %v4677, %v4675
      %v4732 = vpack.c.b16 %v4678, %v4676
      %v4733 = vpack.c.b16 %v4681, %v4679
      %v4734 = vpack.c.b16 %v4682, %v4680
      %v4735 = vpack.c.b16 %v4685, %v4683
      %v4736 = vpack.c.b16 %v4686, %v4684
      %v4737 = vpack.c.b16 %v4689, %v4687
      %v4738 = vpack.c.b16 %v4690, %v4688
      %v4739 = vpack.c.b16 %v4693, %v4691
      %v4740 = vpack.c.b16 %v4694, %v4692
      %v4741 = vpack.c.b16 %v4697, %v4695
      %v4742 = vpack.c.b16 %v4698, %v4696
      %v4743 = vpack.c.b16 %v4701, %v4699
      %v4744 = vpack.c.b16 %v4702, %v4700
      %v4745 = vpack.c.b16 %v4705, %v4703
      %v4746 = vpack.c.b16 %v4706, %v4704
      %v4788 = vsel %vm561, %v4520, 0
      %v4791 = vsel %vm561, %v4523, 0
      %v4794 = vsel %vm561, %v4526, 0
      %v4797 = vsel %vm561, %v4529, 0
      %4799 = vmatprep.subr.bf16.mxu0 %v4722
      %4800 = vmatpush1.bf16.msra.mxu0 %v4721
      %4801 = vmatprep.subr.bf16.mxu0 %v4720
      %4802 = vmatpush1.bf16.msra.mxu0 %v4719
      %4803 = vmatprep.subr.bf16.mxu0 %v4718
      %4804 = vmatpush1.bf16.msra.mxu0 %v4717
      %4805 = vmatprep.subr.bf16.mxu0 %v4716
      %4806 = vmatpush1.bf16.msra.mxu0 %v4715
      %4807 = vmatprep.subr.bf16.mxu0 %v4714
      %4808 = vmatpush1.bf16.msra.mxu0 %v4713
      %4809 = vmatprep.subr.bf16.mxu0 %v4712
      %4810 = vmatpush1.bf16.msra.mxu0 %v4711
      %4811 = vmatprep.subr.bf16.mxu0 %v4710
      %4812 = vmatpush1.bf16.msra.mxu0 %v4709
      %4813 = vmatprep.subr.bf16.mxu0 %v4708
      %4814 = vmatpush1.bf16.msra.mxu0 %v4707
      %4815 = vmatprep.subr.bf16.mxu0 %v4738
      %4816 = vmatpush2.bf16.msra.mxu0 %v4737
      %4817 = vmatprep.subr.bf16.mxu0 %v4736
      %4818 = vmatpush2.bf16.msra.mxu0 %v4735
      %4819 = vmatprep.subr.bf16.mxu0 %v4734
      %4820 = vmatpush2.bf16.msra.mxu0 %v4733
      %4821 = vmatprep.subr.bf16.mxu0 %v4732
      %4822 = vmatpush2.bf16.msra.mxu0 %v4731
      %4823 = vmatprep.subr.bf16.mxu0 %v4730
      %4824 = vmatpush2.bf16.msra.mxu0 %v4729
      %4825 = vmatprep.subr.bf16.mxu0 %v4728
      %4826 = vmatpush2.bf16.msra.mxu0 %v4727
      %4827 = vmatprep.subr.bf16.mxu0 %v4726
      %4828 = vmatpush2.bf16.msra.mxu0 %v4725
      %4829 = vmatprep.subr.bf16.mxu0 %v4724
      %4830 = vmatpush2.bf16.msra.mxu0 %v4723
      %4831 = vmatprep.mubr.bf16.mxu0 %v4519
      %4832 = vmatmul.mubr.bf16.gmra.mxu0 %v4518
      %v4833 = vpop.f32.mrf.mxu0
      %v4834 = vadd.f32 0.0, %v4833
      %v4835 = vpop.f32.mrf.mxu0
      %v4836 = vadd.f32 0.0, %v4835
      %v4837 = vpop.f32.mrf.mxu0
      %v4838 = vadd.f32 0.0, %v4837
      %v4839 = vpop.f32.mrf.mxu0
      %v4840 = vadd.f32 0.0, %v4839
      %4841 = vmatprep.mubr.bf16.mxu0 %v4522
      %4842 = vmatmul.mubr.bf16.gmra.mxu0 %v4521
      %v4843 = vpop.f32.mrf.mxu0
      %v4844 = vadd.f32 0.0, %v4843
      %v4845 = vpop.f32.mrf.mxu0
      %v4846 = vadd.f32 0.0, %v4845
      %v4847 = vpop.f32.mrf.mxu0
      %v4848 = vadd.f32 0.0, %v4847
      %v4849 = vpop.f32.mrf.mxu0
      %v4850 = vadd.f32 0.0, %v4849
      %4851 = vmatprep.mubr.bf16.mxu0 %v4525
      %4852 = vmatmul.mubr.bf16.gmra.mxu0 %v4524
      %v4853 = vpop.f32.mrf.mxu0
      %v4854 = vadd.f32 0.0, %v4853
      %v4855 = vpop.f32.mrf.mxu0
      %v4856 = vadd.f32 0.0, %v4855
      %v4857 = vpop.f32.mrf.mxu0
      %v4858 = vadd.f32 0.0, %v4857
      %v4859 = vpop.f32.mrf.mxu0
      %v4860 = vadd.f32 0.0, %v4859
      %4861 = vmatprep.mubr.bf16.mxu0 %v4528
      %4862 = vmatmul.mubr.bf16.gmra.mxu0 %v4527
      %v4863 = vpop.f32.mrf.mxu0
      %v4864 = vadd.f32 0.0, %v4863
      %v4865 = vpop.f32.mrf.mxu0
      %v4866 = vadd.f32 0.0, %v4865
      %v4867 = vpop.f32.mrf.mxu0
      %v4868 = vadd.f32 0.0, %v4867
      %v4869 = vpop.f32.mrf.mxu0
      %v4870 = vadd.f32 0.0, %v4869
      %4871 = vdwg.mxu0
      %4872 = vmatprep.subr.bf16.mxu0 0
      %4873 = vmatpush1.bf16.msra.mxu0 0
      %4874 = vmatprep.subr.bf16.mxu0 0
      %4875 = vmatpush1.bf16.msra.mxu0 0
      %4876 = vmatprep.subr.bf16.mxu0 0
      %4877 = vmatpush1.bf16.msra.mxu0 0
      %4878 = vmatprep.subr.bf16.mxu0 0
      %4879 = vmatpush1.bf16.msra.mxu0 0
      %4880 = vmatprep.subr.bf16.mxu0 %v4746
      %4881 = vmatpush1.bf16.msra.mxu0 %v4745
      %4882 = vmatprep.subr.bf16.mxu0 %v4744
      %4883 = vmatpush1.bf16.msra.mxu0 %v4743
      %4884 = vmatprep.subr.bf16.mxu0 %v4742
      %4885 = vmatpush1.bf16.msra.mxu0 %v4741
      %4886 = vmatprep.subr.bf16.mxu0 %v4740
      %4887 = vmatpush1.bf16.msra.mxu0 %v4739
      %4888 = vmatprep.subr.bf16.mxu0 0
      %4889 = vmatpush2.bf16.msra.mxu0 0
      %4890 = vmatprep.subr.bf16.mxu0 0
      %4891 = vmatpush2.bf16.msra.mxu0 0
      %4892 = vmatprep.subr.bf16.mxu0 0
      %4893 = vmatpush2.bf16.msra.mxu0 0
      %4894 = vmatprep.subr.bf16.mxu0 0
      %4895 = vmatpush2.bf16.msra.mxu0 0
      %4896 = vmatprep.subr.bf16.mxu0 0
      %4897 = vmatpush2.bf16.msra.mxu0 0
      %4898 = vmatprep.subr.bf16.mxu0 0
      %4899 = vmatpush2.bf16.msra.mxu0 0
      %4900 = vmatprep.subr.bf16.mxu0 0
      %4901 = vmatpush2.bf16.msra.mxu0 0
      %4902 = vmatprep.subr.bf16.mxu0 0
      %4903 = vmatpush2.bf16.msra.mxu0 0
      %4904 = vmatprep.mubr.bf16.mxu0 0
      %4905 = vmatmul.mubr.bf16.gmra.mxu0 %v4788
      %v4906 = vpop.f32.mrf.mxu0
      %v4907 = vadd.f32 %v4834, %v4906
      %v4908 = vpop.f32.mrf.mxu0
      %v4909 = vadd.f32 %v4836, %v4908
      %v4910 = vpop.f32.mrf.mxu0
      %v4911 = vadd.f32 %v4838, %v4910
      %v4912 = vpop.f32.mrf.mxu0
      %v4913 = vadd.f32 %v4840, %v4912
      %4914 = vmatprep.mubr.bf16.mxu0 0
      %4915 = vmatmul.mubr.bf16.gmra.mxu0 %v4791
      %v4916 = vpop.f32.mrf.mxu0
      %v4917 = vadd.f32 %v4844, %v4916
      %v4918 = vpop.f32.mrf.mxu0
      %v4919 = vadd.f32 %v4846, %v4918
      %v4920 = vpop.f32.mrf.mxu0
      %v4921 = vadd.f32 %v4848, %v4920
      %v4922 = vpop.f32.mrf.mxu0
      %v4923 = vadd.f32 %v4850, %v4922
      %4924 = vmatprep.mubr.bf16.mxu0 0
      %4925 = vmatmul.mubr.bf16.gmra.mxu0 %v4794
      %v4926 = vpop.f32.mrf.mxu0
      %v4927 = vadd.f32 %v4854, %v4926
      %v4928 = vpop.f32.mrf.mxu0
      %v4929 = vadd.f32 %v4856, %v4928
      %v4930 = vpop.f32.mrf.mxu0
      %v4931 = vadd.f32 %v4858, %v4930
      %v4932 = vpop.f32.mrf.mxu0
      %v4933 = vadd.f32 %v4860, %v4932
      %4934 = vmatprep.mubr.bf16.mxu0 0
      %4935 = vmatmul.mubr.bf16.gmra.mxu0 %v4797
      %v4936 = vpop.f32.mrf.mxu0
      %v4937 = vadd.f32 %v4864, %v4936
      %v4938 = vpop.f32.mrf.mxu0
      %v4939 = vadd.f32 %v4866, %v4938
      %v4940 = vpop.f32.mrf.mxu0
      %v4941 = vadd.f32 %v4868, %v4940
      %v4942 = vpop.f32.mrf.mxu0
      %v4943 = vadd.f32 %v4870, %v4942
      %4944 = vdwg.mxu0
      %v4945 = vadd.f32 %v4530, %v4907
      %v4946 = vadd.f32 %v4531, %v4909
      %v4947 = vadd.f32 %v4532, %v4911
      %v4948 = vadd.f32 %v4533, %v4913
      %v4949 = vadd.f32 %v4534, %v4917
      %v4950 = vadd.f32 %v4535, %v4919
      %v4951 = vadd.f32 %v4536, %v4921
      %v4952 = vadd.f32 %v4537, %v4923
      %v4953 = vadd.f32 %v4538, %v4927
      %v4954 = vadd.f32 %v4539, %v4929
      %v4955 = vadd.f32 %v4540, %v4931
      %v4956 = vadd.f32 %v4541, %v4933
      %v4957 = vadd.f32 %v4542, %v4937
      %v4958 = vadd.f32 %v4543, %v4939
      %v4959 = vadd.f32 %v4544, %v4941
      %v4960 = vadd.f32 %v4545, %v4943
      %4961 = vst [vmem:[#allocation2] sm:$0xff] %v4945
      %4962 = vst [vmem:[#allocation2 + $0x8] sm:$0xff] %v4946
      %4963 = vst [vmem:[#allocation2 + $0x10] sm:$0xff] %v4947
      %4964 = vst [vmem:[#allocation2 + $0x18] sm:$0xff] %v4948
      %4965 = vst [vmem:[#allocation2 + $0x20] sm:$0xff] %v4949
      %4966 = vst [vmem:[#allocation2 + $0x28] sm:$0xff] %v4950
      %4967 = vst [vmem:[#allocation2 + $0x30] sm:$0xff] %v4951
      %4968 = vst [vmem:[#allocation2 + $0x38] sm:$0xff] %v4952
      %4969 = vst [vmem:[#allocation2 + $0x40] sm:$0xff] %v4953
      %4970 = vst [vmem:[#allocation2 + $0x48] sm:$0xff] %v4954
      %4971 = vst [vmem:[#allocation2 + $0x50] sm:$0xff] %v4955
      %4972 = vst [vmem:[#allocation2 + $0x58] sm:$0xff] %v4956
      %4973 = vst [vmem:[#allocation2 + $0x60] sm:$0xff] %v4957
      %4974 = vst [vmem:[#allocation2 + $0x68] sm:$0xff] %v4958
      %4975 = vst [vmem:[#allocation2 + $0x70] sm:$0xff] %v4959
      %4976 = vst [vmem:[#allocation2 + $0x78] sm:$0xff] %v4960
      %v4977 = vld [vmem:[%s3842] sm:$0xfc]
      %v4978 = vld [vmem:[%s3842 + $0x8] sm:$0xfc]
      %v4979 = vld [vmem:[%s3842 + $0x10] sm:$0xfc]
      %v4980 = vld [vmem:[%s3842 + $0x18] sm:$0x3]
      %v4981 = vld [vmem:[%s3842 + $0x20] sm:$0x3]
      %v4982 = vld [vmem:[%s3842 + $0x28] sm:$0x3]
      %v4983 = vld [vmem:[%s3842 + $0x30] sm:$0xfc]
      %v4984 = vld [vmem:[%s3842 + $0x38] sm:$0xfc]
      %v4985 = vld [vmem:[%s3842 + $0x40] sm:$0xfc]
      %v4986 = vld [vmem:[%s3842 + $0x48] sm:$0x3]
      %v4987 = vld [vmem:[%s3842 + $0x50] sm:$0x3]
      %v4988 = vld [vmem:[%s3842 + $0x58] sm:$0x3]
      %v4989 = vld [vmem:[%s3842 + $0x60] sm:$0xfc]
      %v4990 = vld [vmem:[%s3842 + $0x68] sm:$0xfc]
      %v4991 = vld [vmem:[%s3842 + $0x70] sm:$0xfc]
      %v4992 = vld [vmem:[%s3842 + $0x78] sm:$0x3]
      %v4993 = vld [vmem:[%s3842 + $0x80] sm:$0x3]
      %v4994 = vld [vmem:[%s3842 + $0x88] sm:$0x3]
      %v4995 = vld [vmem:[%s3842 + $0x90] sm:$0xfc]
      %v4996 = vld [vmem:[%s3842 + $0x98] sm:$0xfc]
      %v4997 = vld [vmem:[%s3842 + $0xa0] sm:$0xfc]
      %v4998 = vld [vmem:[%s3842 + $0xa8] sm:$0x3]
      %v4999 = vld [vmem:[%s3842 + $0xb0] sm:$0x3]
      %v5000 = vld [vmem:[%s3842 + $0xb8] sm:$0x3]
      %v5001 = vld [vmem:[%s3842 + $0xc0] sm:$0xfc]
      %v5002 = vld [vmem:[%s3842 + $0xc8] sm:$0xfc]
      %v5003 = vld [vmem:[%s3842 + $0xd0] sm:$0xfc]
      %v5004 = vld [vmem:[%s3842 + $0xd8] sm:$0x3]
      %v5005 = vld [vmem:[%s3842 + $0xe0] sm:$0x3]
      %v5006 = vld [vmem:[%s3842 + $0xe8] sm:$0x3]
      %v5007 = vld [vmem:[%s3842 + $0xf0] sm:$0xfc]
      %v5008 = vld [vmem:[%s3842 + $0xf8] sm:$0xfc]
      %v5009 = vld [vmem:[%s3842 + $0x100] sm:$0xfc]
      %v5010 = vld [vmem:[%s3842 + $0x108] sm:$0x3]
      %v5011 = vld [vmem:[%s3842 + $0x110] sm:$0x3]
      %v5012 = vld [vmem:[%s3842 + $0x118] sm:$0x3]
      %v5013 = vld [vmem:[%s3842 + $0x120] sm:$0xfc]
      %v5014 = vld [vmem:[%s3842 + $0x128] sm:$0xfc]
      %v5015 = vld [vmem:[%s3842 + $0x130] sm:$0xfc]
      %v5016 = vld [vmem:[%s3842 + $0x138] sm:$0x3]
      %v5017 = vld [vmem:[%s3842 + $0x140] sm:$0x3]
      %v5018 = vld [vmem:[%s3842 + $0x148] sm:$0x3]
      %v5019 = vld [vmem:[%s3842 + $0x150] sm:$0xfc]
      %v5020 = vld [vmem:[%s3842 + $0x158] sm:$0xfc]
      %v5021 = vld [vmem:[%s3842 + $0x160] sm:$0xfc]
      %v5022 = vld [vmem:[%s3842 + $0x168] sm:$0x3]
      %v5023 = vld [vmem:[%s3842 + $0x170] sm:$0x3]
      %v5024 = vld [vmem:[%s3842 + $0x178] sm:$0x3]
      %v5073 = vrot.slane %v4977, 2
      %v5074 = vrot.slane %v4980, 2
      %v5075 = vsel %vm1500, %v5073, %v5074
      %v5076 = vrot.slane %v4978, 2
      %v5077 = vrot.slane %v4981, 2
      %v5078 = vsel %vm1500, %v5076, %v5077
      %v5079 = vrot.slane %v4979, 2
      %v5080 = vrot.slane %v4982, 2
      %v5081 = vsel %vm1500, %v5079, %v5080
      %v5082 = vrot.slane %v4983, 2
      %v5083 = vrot.slane %v4986, 2
      %v5084 = vsel %vm1500, %v5082, %v5083
      %v5085 = vrot.slane %v4984, 2
      %v5086 = vrot.slane %v4987, 2
      %v5087 = vsel %vm1500, %v5085, %v5086
      %v5088 = vrot.slane %v4985, 2
      %v5089 = vrot.slane %v4988, 2
      %v5090 = vsel %vm1500, %v5088, %v5089
      %v5091 = vrot.slane %v4989, 2
      %v5092 = vrot.slane %v4992, 2
      %v5093 = vsel %vm1500, %v5091, %v5092
      %v5094 = vrot.slane %v4990, 2
      %v5095 = vrot.slane %v4993, 2
      %v5096 = vsel %vm1500, %v5094, %v5095
      %v5097 = vrot.slane %v4991, 2
      %v5098 = vrot.slane %v4994, 2
      %v5099 = vsel %vm1500, %v5097, %v5098
      %v5100 = vrot.slane %v4995, 2
      %v5101 = vrot.slane %v4998, 2
      %v5102 = vsel %vm1500, %v5100, %v5101
      %v5103 = vrot.slane %v4996, 2
      %v5104 = vrot.slane %v4999, 2
      %v5105 = vsel %vm1500, %v5103, %v5104
      %v5106 = vrot.slane %v4997, 2
      %v5107 = vrot.slane %v5000, 2
      %v5108 = vsel %vm1500, %v5106, %v5107
      %v5109 = vrot.slane %v5001, 2
      %v5110 = vrot.slane %v5004, 2
      %v5111 = vsel %vm1500, %v5109, %v5110
      %v5112 = vrot.slane %v5002, 2
      %v5113 = vrot.slane %v5005, 2
      %v5114 = vsel %vm1500, %v5112, %v5113
      %v5115 = vrot.slane %v5003, 2
      %v5116 = vrot.slane %v5006, 2
      %v5117 = vsel %vm1500, %v5115, %v5116
      %v5118 = vrot.slane %v5007, 2
      %v5119 = vrot.slane %v5010, 2
      %v5120 = vsel %vm1500, %v5118, %v5119
      %v5121 = vrot.slane %v5008, 2
      %v5122 = vrot.slane %v5011, 2
      %v5123 = vsel %vm1500, %v5121, %v5122
      %v5124 = vrot.slane %v5009, 2
      %v5125 = vrot.slane %v5012, 2
      %v5126 = vsel %vm1500, %v5124, %v5125
      %v5127 = vrot.slane %v5013, 2
      %v5128 = vrot.slane %v5016, 2
      %v5129 = vsel %vm1500, %v5127, %v5128
      %v5130 = vrot.slane %v5014, 2
      %v5131 = vrot.slane %v5017, 2
      %v5132 = vsel %vm1500, %v5130, %v5131
      %v5133 = vrot.slane %v5015, 2
      %v5134 = vrot.slane %v5018, 2
      %v5135 = vsel %vm1500, %v5133, %v5134
      %v5136 = vrot.slane %v5019, 2
      %v5137 = vrot.slane %v5022, 2
      %v5138 = vsel %vm1500, %v5136, %v5137
      %v5139 = vrot.slane %v5020, 2
      %v5140 = vrot.slane %v5023, 2
      %v5141 = vsel %vm1500, %v5139, %v5140
      %v5142 = vrot.slane %v5021, 2
      %v5143 = vrot.slane %v5024, 2
      %v5144 = vsel %vm1500, %v5142, %v5143
      %v5169 = vpack.c.bf16 %v5084, %v5075
      %v5170 = vpack.c.bf16 %v5087, %v5078
      %v5171 = vpack.c.bf16 %v5090, %v5081
      %v5172 = vpack.c.bf16 %v5102, %v5093
      %v5173 = vpack.c.bf16 %v5105, %v5096
      %v5174 = vpack.c.bf16 %v5108, %v5099
      %v5175 = vpack.c.bf16 %v5120, %v5111
      %v5176 = vpack.c.bf16 %v5123, %v5114
      %v5177 = vpack.c.bf16 %v5126, %v5117
      %v5178 = vpack.c.bf16 %v5138, %v5129
      %v5179 = vpack.c.bf16 %v5141, %v5132
      %v5180 = vpack.c.bf16 %v5144, %v5135
      %v5181 = vld [vmem:[#allocation2] sm:$0xff]
      %v5182 = vld [vmem:[#allocation2 + $0x8] sm:$0xff]
      %v5183 = vld [vmem:[#allocation2 + $0x10] sm:$0xff]
      %v5184 = vld [vmem:[#allocation2 + $0x18] sm:$0xff]
      %v5185 = vld [vmem:[#allocation2 + $0x20] sm:$0xff]
      %v5186 = vld [vmem:[#allocation2 + $0x28] sm:$0xff]
      %v5187 = vld [vmem:[#allocation2 + $0x30] sm:$0xff]
      %v5188 = vld [vmem:[#allocation2 + $0x38] sm:$0xff]
      %v5189 = vld [vmem:[#allocation2 + $0x40] sm:$0xff]
      %v5190 = vld [vmem:[#allocation2 + $0x48] sm:$0xff]
      %v5191 = vld [vmem:[#allocation2 + $0x50] sm:$0xff]
      %v5192 = vld [vmem:[#allocation2 + $0x58] sm:$0xff]
      %v5193 = vld [vmem:[#allocation2 + $0x60] sm:$0xff]
      %v5194 = vld [vmem:[#allocation2 + $0x68] sm:$0xff]
      %v5195 = vld [vmem:[#allocation2 + $0x70] sm:$0xff]
      %v5196 = vld [vmem:[#allocation2 + $0x78] sm:$0xff]
      %s5197 = scalar_lea.vmem %s1, 2560
      %v5198 = vld [vmem:[%s5197] sm:$0xff]
      %v5199 = vld [vmem:[%s5197 + $0x8] sm:$0xff]
      %v5200 = vld [vmem:[%s5197 + $0x10] sm:$0xff]
      %v5201 = vld [vmem:[%s5197 + $0x18] sm:$0xff]
      %v5202 = vld [vmem:[%s5197 + $0x20] sm:$0xff]
      %v5203 = vld [vmem:[%s5197 + $0x28] sm:$0xff]
      %v5204 = vld [vmem:[%s5197 + $0x30] sm:$0xff]
      %v5205 = vld [vmem:[%s5197 + $0x38] sm:$0xff]
      %v5206 = vld [vmem:[%s5197 + $0x40] sm:$0xff]
      %v5207 = vld [vmem:[%s5197 + $0x48] sm:$0xff]
      %v5208 = vld [vmem:[%s5197 + $0x50] sm:$0xff]
      %v5209 = vld [vmem:[%s5197 + $0x58] sm:$0xff]
      %v5210 = vld [vmem:[%s5197 + $0x60] sm:$0xff]
      %v5211 = vld [vmem:[%s5197 + $0x68] sm:$0xff]
      %v5212 = vld [vmem:[%s5197 + $0x70] sm:$0xff]
      %v5213 = vld [vmem:[%s5197 + $0x78] sm:$0xff]
      %v5214 = vld [vmem:[%s5197 + $0x80] sm:$0xff]
      %v5215 = vld [vmem:[%s5197 + $0x88] sm:$0xff]
      %v5216 = vld [vmem:[%s5197 + $0x90] sm:$0xff]
      %v5217 = vld [vmem:[%s5197 + $0x98] sm:$0xff]
      %v5218 = vld [vmem:[%s5197 + $0xa0] sm:$0xff]
      %v5219 = vld [vmem:[%s5197 + $0xa8] sm:$0xff]
      %v5220 = vld [vmem:[%s5197 + $0xb0] sm:$0xff]
      %v5221 = vld [vmem:[%s5197 + $0xb8] sm:$0xff]
      %v5222 = vld [vmem:[%s5197 + $0xc0] sm:$0xff]
      %v5223 = vld [vmem:[%s5197 + $0xc8] sm:$0xff]
      %v5224 = vld [vmem:[%s5197 + $0xd0] sm:$0xff]
      %v5225 = vld [vmem:[%s5197 + $0xd8] sm:$0xff]
      %v5226 = vld [vmem:[%s5197 + $0xe0] sm:$0xff]
      %v5227 = vld [vmem:[%s5197 + $0xe8] sm:$0xff]
      %v5228 = vld [vmem:[%s5197 + $0xf0] sm:$0xff]
      %v5229 = vld [vmem:[%s5197 + $0xf8] sm:$0xff]
      %v5230 = vld [vmem:[%s5197 + $0x100] sm:$0xff]
      %v5231 = vld [vmem:[%s5197 + $0x108] sm:$0xff]
      %v5232 = vld [vmem:[%s5197 + $0x110] sm:$0xff]
      %v5233 = vld [vmem:[%s5197 + $0x118] sm:$0xff]
      %v5234 = vld [vmem:[%s5197 + $0x120] sm:$0xff]
      %v5235 = vld [vmem:[%s5197 + $0x128] sm:$0xff]
      %v5236 = vld [vmem:[%s5197 + $0x130] sm:$0xff]
      %v5237 = vld [vmem:[%s5197 + $0x138] sm:$0xff]
      %v5278 = vunpack.c.l.b16 %v5198
      %v5279 = vunpack.c.h.b16 %v5198
      %v5280 = vunpack.c.l.b16 %v5199
      %v5281 = vunpack.c.h.b16 %v5199
      %v5282 = vunpack.c.l.b16 %v5200
      %v5283 = vunpack.c.h.b16 %v5200
      %v5284 = vunpack.c.l.b16 %v5201
      %v5285 = vunpack.c.h.b16 %v5201
      %v5286 = vunpack.c.l.b16 %v5202
      %v5287 = vunpack.c.h.b16 %v5202
      %v5288 = vunpack.c.l.b16 %v5203
      %v5289 = vunpack.c.h.b16 %v5203
      %v5290 = vunpack.c.l.b16 %v5204
      %v5291 = vunpack.c.h.b16 %v5204
      %v5292 = vunpack.c.l.b16 %v5205
      %v5293 = vunpack.c.h.b16 %v5205
      %v5294 = vunpack.c.l.b16 %v5206
      %v5295 = vunpack.c.h.b16 %v5206
      %v5296 = vunpack.c.l.b16 %v5207
      %v5297 = vunpack.c.h.b16 %v5207
      %v5298 = vunpack.c.l.b16 %v5208
      %v5299 = vunpack.c.h.b16 %v5208
      %v5300 = vunpack.c.l.b16 %v5209
      %v5301 = vunpack.c.h.b16 %v5209
      %v5302 = vunpack.c.l.b16 %v5210
      %v5303 = vunpack.c.h.b16 %v5210
      %v5304 = vunpack.c.l.b16 %v5211
      %v5305 = vunpack.c.h.b16 %v5211
      %v5306 = vunpack.c.l.b16 %v5212
      %v5307 = vunpack.c.h.b16 %v5212
      %v5308 = vunpack.c.l.b16 %v5213
      %v5309 = vunpack.c.h.b16 %v5213
      %v5310 = vunpack.c.l.b16 %v5214
      %v5311 = vunpack.c.h.b16 %v5214
      %v5312 = vunpack.c.l.b16 %v5215
      %v5313 = vunpack.c.h.b16 %v5215
      %v5314 = vunpack.c.l.b16 %v5216
      %v5315 = vunpack.c.h.b16 %v5216
      %v5316 = vunpack.c.l.b16 %v5217
      %v5317 = vunpack.c.h.b16 %v5217
      %v5318 = vunpack.c.l.b16 %v5218
      %v5319 = vunpack.c.h.b16 %v5218
      %v5320 = vunpack.c.l.b16 %v5219
      %v5321 = vunpack.c.h.b16 %v5219
      %v5322 = vunpack.c.l.b16 %v5220
      %v5323 = vunpack.c.h.b16 %v5220
      %v5324 = vunpack.c.l.b16 %v5221
      %v5325 = vunpack.c.h.b16 %v5221
      %v5326 = vunpack.c.l.b16 %v5222
      %v5327 = vunpack.c.h.b16 %v5222
      %v5328 = vunpack.c.l.b16 %v5223
      %v5329 = vunpack.c.h.b16 %v5223
      %v5330 = vunpack.c.l.b16 %v5224
      %v5331 = vunpack.c.h.b16 %v5224
      %v5332 = vunpack.c.l.b16 %v5225
      %v5333 = vunpack.c.h.b16 %v5225
      %v5334 = vunpack.c.l.b16 %v5226
      %v5335 = vunpack.c.h.b16 %v5226
      %v5336 = vunpack.c.l.b16 %v5227
      %v5337 = vunpack.c.h.b16 %v5227
      %v5338 = vunpack.c.l.b16 %v5228
      %v5339 = vunpack.c.h.b16 %v5228
      %v5340 = vunpack.c.l.b16 %v5229
      %v5341 = vunpack.c.h.b16 %v5229
      %v5342 = vunpack.c.l.b16 %v5230
      %v5343 = vunpack.c.h.b16 %v5230
      %v5344 = vunpack.c.l.b16 %v5231
      %v5345 = vunpack.c.h.b16 %v5231
      %v5346 = vunpack.c.l.b16 %v5232
      %v5347 = vunpack.c.h.b16 %v5232
      %v5348 = vunpack.c.l.b16 %v5233
      %v5349 = vunpack.c.h.b16 %v5233
      %v5350 = vunpack.c.l.b16 %v5234
      %v5351 = vunpack.c.h.b16 %v5234
      %v5352 = vunpack.c.l.b16 %v5235
      %v5353 = vunpack.c.h.b16 %v5235
      %v5354 = vunpack.c.l.b16 %v5236
      %v5355 = vunpack.c.h.b16 %v5236
      %v5356 = vunpack.c.l.b16 %v5237
      %v5357 = vunpack.c.h.b16 %v5237
      %v5358 = vpack.c.b16 %v5280, %v5278
      %v5359 = vpack.c.b16 %v5281, %v5279
      %v5360 = vpack.c.b16 %v5284, %v5282
      %v5361 = vpack.c.b16 %v5285, %v5283
      %v5362 = vpack.c.b16 %v5288, %v5286
      %v5363 = vpack.c.b16 %v5289, %v5287
      %v5364 = vpack.c.b16 %v5292, %v5290
      %v5365 = vpack.c.b16 %v5293, %v5291
      %v5366 = vpack.c.b16 %v5296, %v5294
      %v5367 = vpack.c.b16 %v5297, %v5295
      %v5368 = vpack.c.b16 %v5300, %v5298
      %v5369 = vpack.c.b16 %v5301, %v5299
      %v5370 = vpack.c.b16 %v5304, %v5302
      %v5371 = vpack.c.b16 %v5305, %v5303
      %v5372 = vpack.c.b16 %v5308, %v5306
      %v5373 = vpack.c.b16 %v5309, %v5307
      %v5374 = vpack.c.b16 %v5312, %v5310
      %v5375 = vpack.c.b16 %v5313, %v5311
      %v5376 = vpack.c.b16 %v5316, %v5314
      %v5377 = vpack.c.b16 %v5317, %v5315
      %v5378 = vpack.c.b16 %v5320, %v5318
      %v5379 = vpack.c.b16 %v5321, %v5319
      %v5380 = vpack.c.b16 %v5324, %v5322
      %v5381 = vpack.c.b16 %v5325, %v5323
      %v5382 = vpack.c.b16 %v5328, %v5326
      %v5383 = vpack.c.b16 %v5329, %v5327
      %v5384 = vpack.c.b16 %v5332, %v5330
      %v5385 = vpack.c.b16 %v5333, %v5331
      %v5386 = vpack.c.b16 %v5336, %v5334
      %v5387 = vpack.c.b16 %v5337, %v5335
      %v5388 = vpack.c.b16 %v5340, %v5338
      %v5389 = vpack.c.b16 %v5341, %v5339
      %v5390 = vpack.c.b16 %v5344, %v5342
      %v5391 = vpack.c.b16 %v5345, %v5343
      %v5392 = vpack.c.b16 %v5348, %v5346
      %v5393 = vpack.c.b16 %v5349, %v5347
      %v5394 = vpack.c.b16 %v5352, %v5350
      %v5395 = vpack.c.b16 %v5353, %v5351
      %v5396 = vpack.c.b16 %v5356, %v5354
      %v5397 = vpack.c.b16 %v5357, %v5355
      %v5439 = vsel %vm561, %v5171, 0
      %v5442 = vsel %vm561, %v5174, 0
      %v5445 = vsel %vm561, %v5177, 0
      %v5448 = vsel %vm561, %v5180, 0
      %5450 = vmatprep.subr.bf16.mxu0 %v5373
      %5451 = vmatpush1.bf16.msra.mxu0 %v5372
      %5452 = vmatprep.subr.bf16.mxu0 %v5371
      %5453 = vmatpush1.bf16.msra.mxu0 %v5370
      %5454 = vmatprep.subr.bf16.mxu0 %v5369
      %5455 = vmatpush1.bf16.msra.mxu0 %v5368
      %5456 = vmatprep.subr.bf16.mxu0 %v5367
      %5457 = vmatpush1.bf16.msra.mxu0 %v5366
      %5458 = vmatprep.subr.bf16.mxu0 %v5365
      %5459 = vmatpush1.bf16.msra.mxu0 %v5364
      %5460 = vmatprep.subr.bf16.mxu0 %v5363
      %5461 = vmatpush1.bf16.msra.mxu0 %v5362
      %5462 = vmatprep.subr.bf16.mxu0 %v5361
      %5463 = vmatpush1.bf16.msra.mxu0 %v5360
      %5464 = vmatprep.subr.bf16.mxu0 %v5359
      %5465 = vmatpush1.bf16.msra.mxu0 %v5358
      %5466 = vmatprep.subr.bf16.mxu0 %v5389
      %5467 = vmatpush2.bf16.msra.mxu0 %v5388
      %5468 = vmatprep.subr.bf16.mxu0 %v5387
      %5469 = vmatpush2.bf16.msra.mxu0 %v5386
      %5470 = vmatprep.subr.bf16.mxu0 %v5385
      %5471 = vmatpush2.bf16.msra.mxu0 %v5384
      %5472 = vmatprep.subr.bf16.mxu0 %v5383
      %5473 = vmatpush2.bf16.msra.mxu0 %v5382
      %5474 = vmatprep.subr.bf16.mxu0 %v5381
      %5475 = vmatpush2.bf16.msra.mxu0 %v5380
      %5476 = vmatprep.subr.bf16.mxu0 %v5379
      %5477 = vmatpush2.bf16.msra.mxu0 %v5378
      %5478 = vmatprep.subr.bf16.mxu0 %v5377
      %5479 = vmatpush2.bf16.msra.mxu0 %v5376
      %5480 = vmatprep.subr.bf16.mxu0 %v5375
      %5481 = vmatpush2.bf16.msra.mxu0 %v5374
      %5482 = vmatprep.mubr.bf16.mxu0 %v5170
      %5483 = vmatmul.mubr.bf16.gmra.mxu0 %v5169
      %v5484 = vpop.f32.mrf.mxu0
      %v5485 = vadd.f32 0.0, %v5484
      %v5486 = vpop.f32.mrf.mxu0
      %v5487 = vadd.f32 0.0, %v5486
      %v5488 = vpop.f32.mrf.mxu0
      %v5489 = vadd.f32 0.0, %v5488
      %v5490 = vpop.f32.mrf.mxu0
      %v5491 = vadd.f32 0.0, %v5490
      %5492 = vmatprep.mubr.bf16.mxu0 %v5173
      %5493 = vmatmul.mubr.bf16.gmra.mxu0 %v5172
      %v5494 = vpop.f32.mrf.mxu0
      %v5495 = vadd.f32 0.0, %v5494
      %v5496 = vpop.f32.mrf.mxu0
      %v5497 = vadd.f32 0.0, %v5496
      %v5498 = vpop.f32.mrf.mxu0
      %v5499 = vadd.f32 0.0, %v5498
      %v5500 = vpop.f32.mrf.mxu0
      %v5501 = vadd.f32 0.0, %v5500
      %5502 = vmatprep.mubr.bf16.mxu0 %v5176
      %5503 = vmatmul.mubr.bf16.gmra.mxu0 %v5175
      %v5504 = vpop.f32.mrf.mxu0
      %v5505 = vadd.f32 0.0, %v5504
      %v5506 = vpop.f32.mrf.mxu0
      %v5507 = vadd.f32 0.0, %v5506
      %v5508 = vpop.f32.mrf.mxu0
      %v5509 = vadd.f32 0.0, %v5508
      %v5510 = vpop.f32.mrf.mxu0
      %v5511 = vadd.f32 0.0, %v5510
      %5512 = vmatprep.mubr.bf16.mxu0 %v5179
      %5513 = vmatmul.mubr.bf16.gmra.mxu0 %v5178
      %v5514 = vpop.f32.mrf.mxu0
      %v5515 = vadd.f32 0.0, %v5514
      %v5516 = vpop.f32.mrf.mxu0
      %v5517 = vadd.f32 0.0, %v5516
      %v5518 = vpop.f32.mrf.mxu0
      %v5519 = vadd.f32 0.0, %v5518
      %v5520 = vpop.f32.mrf.mxu0
      %v5521 = vadd.f32 0.0, %v5520
      %5522 = vdwg.mxu0
      %5523 = vmatprep.subr.bf16.mxu0 0
      %5524 = vmatpush1.bf16.msra.mxu0 0
      %5525 = vmatprep.subr.bf16.mxu0 0
      %5526 = vmatpush1.bf16.msra.mxu0 0
      %5527 = vmatprep.subr.bf16.mxu0 0
      %5528 = vmatpush1.bf16.msra.mxu0 0
      %5529 = vmatprep.subr.bf16.mxu0 0
      %5530 = vmatpush1.bf16.msra.mxu0 0
      %5531 = vmatprep.subr.bf16.mxu0 %v5397
      %5532 = vmatpush1.bf16.msra.mxu0 %v5396
      %5533 = vmatprep.subr.bf16.mxu0 %v5395
      %5534 = vmatpush1.bf16.msra.mxu0 %v5394
      %5535 = vmatprep.subr.bf16.mxu0 %v5393
      %5536 = vmatpush1.bf16.msra.mxu0 %v5392
      %5537 = vmatprep.subr.bf16.mxu0 %v5391
      %5538 = vmatpush1.bf16.msra.mxu0 %v5390
      %5539 = vmatprep.subr.bf16.mxu0 0
      %5540 = vmatpush2.bf16.msra.mxu0 0
      %5541 = vmatprep.subr.bf16.mxu0 0
      %5542 = vmatpush2.bf16.msra.mxu0 0
      %5543 = vmatprep.subr.bf16.mxu0 0
      %5544 = vmatpush2.bf16.msra.mxu0 0
      %5545 = vmatprep.subr.bf16.mxu0 0
      %5546 = vmatpush2.bf16.msra.mxu0 0
      %5547 = vmatprep.subr.bf16.mxu0 0
      %5548 = vmatpush2.bf16.msra.mxu0 0
      %5549 = vmatprep.subr.bf16.mxu0 0
      %5550 = vmatpush2.bf16.msra.mxu0 0
      %5551 = vmatprep.subr.bf16.mxu0 0
      %5552 = vmatpush2.bf16.msra.mxu0 0
      %5553 = vmatprep.subr.bf16.mxu0 0
      %5554 = vmatpush2.bf16.msra.mxu0 0
      %5555 = vmatprep.mubr.bf16.mxu0 0
      %5556 = vmatmul.mubr.bf16.gmra.mxu0 %v5439
      %v5557 = vpop.f32.mrf.mxu0
      %v5558 = vadd.f32 %v5485, %v5557
      %v5559 = vpop.f32.mrf.mxu0
      %v5560 = vadd.f32 %v5487, %v5559
      %v5561 = vpop.f32.mrf.mxu0
      %v5562 = vadd.f32 %v5489, %v5561
      %v5563 = vpop.f32.mrf.mxu0
      %v5564 = vadd.f32 %v5491, %v5563
      %5565 = vmatprep.mubr.bf16.mxu0 0
      %5566 = vmatmul.mubr.bf16.gmra.mxu0 %v5442
      %v5567 = vpop.f32.mrf.mxu0
      %v5568 = vadd.f32 %v5495, %v5567
      %v5569 = vpop.f32.mrf.mxu0
      %v5570 = vadd.f32 %v5497, %v5569
      %v5571 = vpop.f32.mrf.mxu0
      %v5572 = vadd.f32 %v5499, %v5571
      %v5573 = vpop.f32.mrf.mxu0
      %v5574 = vadd.f32 %v5501, %v5573
      %5575 = vmatprep.mubr.bf16.mxu0 0
      %5576 = vmatmul.mubr.bf16.gmra.mxu0 %v5445
      %v5577 = vpop.f32.mrf.mxu0
      %v5578 = vadd.f32 %v5505, %v5577
      %v5579 = vpop.f32.mrf.mxu0
      %v5580 = vadd.f32 %v5507, %v5579
      %v5581 = vpop.f32.mrf.mxu0
      %v5582 = vadd.f32 %v5509, %v5581
      %v5583 = vpop.f32.mrf.mxu0
      %v5584 = vadd.f32 %v5511, %v5583
      %5585 = vmatprep.mubr.bf16.mxu0 0
      %5586 = vmatmul.mubr.bf16.gmra.mxu0 %v5448
      %v5587 = vpop.f32.mrf.mxu0
      %v5588 = vadd.f32 %v5515, %v5587
      %v5589 = vpop.f32.mrf.mxu0
      %v5590 = vadd.f32 %v5517, %v5589
      %v5591 = vpop.f32.mrf.mxu0
      %v5592 = vadd.f32 %v5519, %v5591
      %v5593 = vpop.f32.mrf.mxu0
      %v5594 = vadd.f32 %v5521, %v5593
      %5595 = vdwg.mxu0
      %v5596 = vadd.f32 %v5181, %v5558
      %v5597 = vadd.f32 %v5182, %v5560
      %v5598 = vadd.f32 %v5183, %v5562
      %v5599 = vadd.f32 %v5184, %v5564
      %v5600 = vadd.f32 %v5185, %v5568
      %v5601 = vadd.f32 %v5186, %v5570
      %v5602 = vadd.f32 %v5187, %v5572
      %v5603 = vadd.f32 %v5188, %v5574
      %v5604 = vadd.f32 %v5189, %v5578
      %v5605 = vadd.f32 %v5190, %v5580
      %v5606 = vadd.f32 %v5191, %v5582
      %v5607 = vadd.f32 %v5192, %v5584
      %v5608 = vadd.f32 %v5193, %v5588
      %v5609 = vadd.f32 %v5194, %v5590
      %v5610 = vadd.f32 %v5195, %v5592
      %v5611 = vadd.f32 %v5196, %v5594
      %5612 = vst [vmem:[#allocation2] sm:$0xff] %v5596
      %5613 = vst [vmem:[#allocation2 + $0x8] sm:$0xff] %v5597
      %5614 = vst [vmem:[#allocation2 + $0x10] sm:$0xff] %v5598
      %5615 = vst [vmem:[#allocation2 + $0x18] sm:$0xff] %v5599
      %5616 = vst [vmem:[#allocation2 + $0x20] sm:$0xff] %v5600
      %5617 = vst [vmem:[#allocation2 + $0x28] sm:$0xff] %v5601
      %5618 = vst [vmem:[#allocation2 + $0x30] sm:$0xff] %v5602
      %5619 = vst [vmem:[#allocation2 + $0x38] sm:$0xff] %v5603
      %5620 = vst [vmem:[#allocation2 + $0x40] sm:$0xff] %v5604
      %5621 = vst [vmem:[#allocation2 + $0x48] sm:$0xff] %v5605
      %5622 = vst [vmem:[#allocation2 + $0x50] sm:$0xff] %v5606
      %5623 = vst [vmem:[#allocation2 + $0x58] sm:$0xff] %v5607
      %5624 = vst [vmem:[#allocation2 + $0x60] sm:$0xff] %v5608
      %5625 = vst [vmem:[#allocation2 + $0x68] sm:$0xff] %v5609
      %5626 = vst [vmem:[#allocation2 + $0x70] sm:$0xff] %v5610
      %5627 = vst [vmem:[#allocation2 + $0x78] sm:$0xff] %v5611
      %v5628 = vld [vmem:[#allocation2] sm:$0xff]
      %v5629 = vld [vmem:[#allocation2 + $0x8] sm:$0xff]
      %v5630 = vld [vmem:[#allocation2 + $0x10] sm:$0xff]
      %v5631 = vld [vmem:[#allocation2 + $0x18] sm:$0xff]
      %v5632 = vld [vmem:[#allocation2 + $0x20] sm:$0xff]
      %v5633 = vld [vmem:[#allocation2 + $0x28] sm:$0xff]
      %v5634 = vld [vmem:[#allocation2 + $0x30] sm:$0xff]
      %v5635 = vld [vmem:[#allocation2 + $0x38] sm:$0xff]
      %v5636 = vld [vmem:[#allocation2 + $0x40] sm:$0xff]
      %v5637 = vld [vmem:[#allocation2 + $0x48] sm:$0xff]
      %v5638 = vld [vmem:[#allocation2 + $0x50] sm:$0xff]
      %v5639 = vld [vmem:[#allocation2 + $0x58] sm:$0xff]
      %v5640 = vld [vmem:[#allocation2 + $0x60] sm:$0xff]
      %v5641 = vld [vmem:[#allocation2 + $0x68] sm:$0xff]
      %v5642 = vld [vmem:[#allocation2 + $0x70] sm:$0xff]
      %v5643 = vld [vmem:[#allocation2 + $0x78] sm:$0xff]
      %v5644 = vld [vmem:[%s2] sm:$0x3]
      %v5646 = vlaneseq
      %v5647 = vshrl.u32 %v5646, 7
      %v5648 = vsub.s32 0, %v5647
      %v5649 = vrot.slane %v5644, %v5648
      %v5650 = vlaneseq
      %v5651 = vshrl.u32 %v5650, 7
      %v5652 = vsub.s32 1, %v5651
      %v5653 = vrot.slane %v5644, %v5652
      %v5656 = vadd.f32 %v5628, %v5649
      %v5657 = vadd.f32 %v5629, %v5653
      %v5658 = vadd.f32 %v5630, %v5649
      %v5659 = vadd.f32 %v5631, %v5653
      %v5660 = vadd.f32 %v5632, %v5649
      %v5661 = vadd.f32 %v5633, %v5653
      %v5662 = vadd.f32 %v5634, %v5649
      %v5663 = vadd.f32 %v5635, %v5653
      %v5664 = vadd.f32 %v5636, %v5649
      %v5665 = vadd.f32 %v5637, %v5653
      %v5666 = vadd.f32 %v5638, %v5649
      %v5667 = vadd.f32 %v5639, %v5653
      %v5668 = vadd.f32 %v5640, %v5649
      %v5669 = vadd.f32 %v5641, %v5653
      %v5670 = vadd.f32 %v5642, %v5649
      %v5671 = vadd.f32 %v5643, %v5653
      %v5672 = vmax.f32 %v5656, 0.0
      %v5673 = vmax.f32 %v5657, 0.0
      %v5674 = vmax.f32 %v5658, 0.0
      %v5675 = vmax.f32 %v5659, 0.0
      %v5676 = vmax.f32 %v5660, 0.0
      %v5677 = vmax.f32 %v5661, 0.0
      %v5678 = vmax.f32 %v5662, 0.0
      %v5679 = vmax.f32 %v5663, 0.0
      %v5680 = vmax.f32 %v5664, 0.0
      %v5681 = vmax.f32 %v5665, 0.0
      %v5682 = vmax.f32 %v5666, 0.0
      %v5683 = vmax.f32 %v5667, 0.0
      %v5684 = vmax.f32 %v5668, 0.0
      %v5685 = vmax.f32 %v5669, 0.0
      %v5686 = vmax.f32 %v5670, 0.0
      %v5687 = vmax.f32 %v5671, 0.0
      %5688 = vst [vmem:[#allocation2] sm:$0xff] %v5672
      %5689 = vst [vmem:[#allocation2 + $0x8] sm:$0xff] %v5673
      %5690 = vst [vmem:[#allocation2 + $0x10] sm:$0xff] %v5674
      %5691 = vst [vmem:[#allocation2 + $0x18] sm:$0xff] %v5675
      %5692 = vst [vmem:[#allocation2 + $0x20] sm:$0xff] %v5676
      %5693 = vst [vmem:[#allocation2 + $0x28] sm:$0xff] %v5677
      %5694 = vst [vmem:[#allocation2 + $0x30] sm:$0xff] %v5678
      %5695 = vst [vmem:[#allocation2 + $0x38] sm:$0xff] %v5679
      %5696 = vst [vmem:[#allocation2 + $0x40] sm:$0xff] %v5680
      %5697 = vst [vmem:[#allocation2 + $0x48] sm:$0xff] %v5681
      %5698 = vst [vmem:[#allocation2 + $0x50] sm:$0xff] %v5682
      %5699 = vst [vmem:[#allocation2 + $0x58] sm:$0xff] %v5683
      %5700 = vst [vmem:[#allocation2 + $0x60] sm:$0xff] %v5684
      %5701 = vst [vmem:[#allocation2 + $0x68] sm:$0xff] %v5685
      %5702 = vst [vmem:[#allocation2 + $0x70] sm:$0xff] %v5686
      %5703 = vst [vmem:[#allocation2 + $0x78] sm:$0xff] %v5687
      %v5704 = vadd.f32 %v5672, %v5674
      %v5705 = vadd.f32 %v5704, %v5676
      %v5706 = vadd.f32 %v5705, %v5678
      %v5707 = vadd.f32 %v5706, %v5680
      %v5708 = vadd.f32 %v5707, %v5682
      %v5709 = vadd.f32 %v5708, %v5684
      %v5710 = vadd.f32 %v5709, %v5686
      %v5711 = vrot.slane %v5710, 4
      %v5712 = vadd.f32 %v5710, %v5711
      %v5713 = vrot.slane %v5712, 2
      %v5714 = vadd.f32 %v5712, %v5713
      %v5715 = vrot.slane %v5714, 1
      %v5716 = vadd.f32 %v5714, %v5715
      %v5717 = vadd.f32 %v5673, %v5675
      %v5718 = vadd.f32 %v5717, %v5677
      %v5719 = vadd.f32 %v5718, %v5679
      %v5720 = vadd.f32 %v5719, %v5681
      %v5721 = vadd.f32 %v5720, %v5683
      %v5722 = vadd.f32 %v5721, %v5685
      %v5723 = vadd.f32 %v5722, %v5687
      %v5724 = vrot.slane %v5723, 4
      %v5725 = vadd.f32 %v5723, %v5724
      %v5726 = vrot.slane %v5725, 2
      %v5727 = vadd.f32 %v5725, %v5726
      %v5728 = vrot.slane %v5727, 1
      %v5729 = vadd.f32 %v5727, %v5728
      %v5730 = vmul.f32 %v5672, %v5672
      %v5731 = vmul.f32 %v5673, %v5673
      %v5732 = vmul.f32 %v5674, %v5674
      %v5733 = vmul.f32 %v5675, %v5675
      %v5734 = vmul.f32 %v5676, %v5676
      %v5735 = vmul.f32 %v5677, %v5677
      %v5736 = vmul.f32 %v5678, %v5678
      %v5737 = vmul.f32 %v5679, %v5679
      %v5738 = vmul.f32 %v5680, %v5680
      %v5739 = vmul.f32 %v5681, %v5681
      %v5740 = vmul.f32 %v5682, %v5682
      %v5741 = vmul.f32 %v5683, %v5683
      %v5742 = vmul.f32 %v5684, %v5684
      %v5743 = vmul.f32 %v5685, %v5685
      %v5744 = vmul.f32 %v5686, %v5686
      %v5745 = vmul.f32 %v5687, %v5687
      %v5746 = vadd.f32 %v5730, %v5732
      %v5747 = vadd.f32 %v5746, %v5734
      %v5748 = vadd.f32 %v5747, %v5736
      %v5749 = vadd.f32 %v5748, %v5738
      %v5750 = vadd.f32 %v5749, %v5740
      %v5751 = vadd.f32 %v5750, %v5742
      %v5752 = vadd.f32 %v5751, %v5744
      %v5753 = vrot.slane %v5752, 4
      %v5754 = vadd.f32 %v5752, %v5753
      %v5755 = vrot.slane %v5754, 2
      %v5756 = vadd.f32 %v5754, %v5755
      %v5757 = vrot.slane %v5756, 1
      %v5758 = vadd.f32 %v5756, %v5757
      %v5759 = vadd.f32 %v5731, %v5733
      %v5760 = vadd.f32 %v5759, %v5735
      %v5761 = vadd.f32 %v5760, %v5737
      %v5762 = vadd.f32 %v5761, %v5739
      %v5763 = vadd.f32 %v5762, %v5741
      %v5764 = vadd.f32 %v5763, %v5743
      %v5765 = vadd.f32 %v5764, %v5745
      %v5766 = vrot.slane %v5765, 4
      %v5767 = vadd.f32 %v5765, %v5766
      %v5768 = vrot.slane %v5767, 2
      %v5769 = vadd.f32 %v5767, %v5768
      %v5770 = vrot.slane %v5769, 1
      %v5771 = vadd.f32 %v5769, %v5770
      %vm5772 = vcmask 1040384
      %v5773 = vsel %vm5772, %v5716, %v5758
      %v5774 = vsel %vm5772, %v5729, %v5771
      %v5775 = vld [vmem:[%s5] sm:$0xff]
      %v5776 = vld [vmem:[%s5 + $0x8] sm:$0xff]
      %v5777 = vld [vmem:[%s5 + $0x10] sm:$0xff]
      %v5778 = vld [vmem:[%s5 + $0x18] sm:$0xff]
      %v5779 = vld [vmem:[%s5 + $0x20] sm:$0xff]
      %v5780 = vld [vmem:[%s5 + $0x28] sm:$0xff]
      %v5781 = vld [vmem:[%s5 + $0x30] sm:$0xff]
      %v5782 = vld [vmem:[%s5 + $0x38] sm:$0xff]
      %v5783 = vld [vmem:[%s5 + $0x40] sm:$0xff]
      %v5784 = vld [vmem:[%s5 + $0x48] sm:$0xff]
      %v5785 = vld [vmem:[%s5 + $0x50] sm:$0xff]
      %v5786 = vld [vmem:[%s5 + $0x58] sm:$0xff]
      %v5787 = vld [vmem:[%s5 + $0x60] sm:$0xff]
      %v5788 = vld [vmem:[%s5 + $0x68] sm:$0xff]
      %v5789 = vld [vmem:[%s5 + $0x70] sm:$0xff]
      %v5790 = vld [vmem:[%s5 + $0x78] sm:$0xff]
      %v5791 = vld [vmem:[%s5 + $0x80] sm:$0xff]
      %v5792 = vld [vmem:[%s5 + $0x88] sm:$0xff]
      %v5793 = vld [vmem:[%s5 + $0x90] sm:$0xff]
      %v5794 = vld [vmem:[%s5 + $0x98] sm:$0xff]
      %v5795 = vld [vmem:[%s5 + $0xa0] sm:$0xff]
      %v5796 = vld [vmem:[%s5 + $0xa8] sm:$0xff]
      %v5797 = vld [vmem:[%s5 + $0xb0] sm:$0xff]
      %v5798 = vld [vmem:[%s5 + $0xb8] sm:$0xff]
      %v5799 = vld [vmem:[%s5 + $0xc0] sm:$0xff]
      %v5800 = vld [vmem:[%s5 + $0xc8] sm:$0xff]
      %v5801 = vld [vmem:[%s5 + $0xd0] sm:$0xff]
      %v5802 = vld [vmem:[%s5 + $0xd8] sm:$0xff]
      %v5803 = vld [vmem:[%s5 + $0xe0] sm:$0xff]
      %v5804 = vld [vmem:[%s5 + $0xe8] sm:$0xff]
      %v5805 = vld [vmem:[%s5 + $0xf0] sm:$0xff]
      %v5806 = vld [vmem:[%s5 + $0xf8] sm:$0xff]
      %v5807 = vld [vmem:[%s5 + $0x100] sm:$0xff]
      %v5808 = vld [vmem:[%s5 + $0x108] sm:$0xff]
      %v5809 = vld [vmem:[%s5 + $0x110] sm:$0xff]
      %v5810 = vld [vmem:[%s5 + $0x118] sm:$0xff]
      %v5811 = vld [vmem:[%s5 + $0x120] sm:$0xff]
      %v5812 = vld [vmem:[%s5 + $0x128] sm:$0xff]
      %v5813 = vld [vmem:[%s5 + $0x130] sm:$0xff]
      %v5814 = vld [vmem:[%s5 + $0x138] sm:$0xff]
      %v5815 = vld [vmem:[%s5 + $0x140] sm:$0xff]
      %v5816 = vld [vmem:[%s5 + $0x148] sm:$0xff]
      %v5817 = vld [vmem:[%s5 + $0x150] sm:$0xff]
      %v5818 = vld [vmem:[%s5 + $0x158] sm:$0xff]
      %v5819 = vld [vmem:[%s5 + $0x160] sm:$0xff]
      %v5820 = vld [vmem:[%s5 + $0x168] sm:$0xff]
      %v5821 = vld [vmem:[%s5 + $0x170] sm:$0xff]
      %v5822 = vld [vmem:[%s5 + $0x178] sm:$0xff]
      %v5823 = vld [vmem:[%s5 + $0x180] sm:$0xff]
      %v5824 = vld [vmem:[%s5 + $0x188] sm:$0xff]
      %v5825 = vld [vmem:[%s5 + $0x190] sm:$0xff]
      %v5826 = vld [vmem:[%s5 + $0x198] sm:$0xff]
      %v5827 = vld [vmem:[%s5 + $0x1a0] sm:$0xff]
      %v5828 = vld [vmem:[%s5 + $0x1a8] sm:$0xff]
      %v5829 = vld [vmem:[%s5 + $0x1b0] sm:$0xff]
      %v5830 = vld [vmem:[%s5 + $0x1b8] sm:$0xff]
      %v5831 = vld [vmem:[%s5 + $0x1c0] sm:$0xff]
      %v5832 = vld [vmem:[%s5 + $0x1c8] sm:$0xff]
      %v5833 = vld [vmem:[%s5 + $0x1d0] sm:$0xff]
      %v5834 = vld [vmem:[%s5 + $0x1d8] sm:$0xff]
      %v5835 = vld [vmem:[%s5 + $0x1e0] sm:$0xff]
      %v5836 = vld [vmem:[%s5 + $0x1e8] sm:$0xff]
      %v5837 = vld [vmem:[%s5 + $0x1f0] sm:$0xff]
      %v5838 = vld [vmem:[%s5 + $0x1f8] sm:$0xff]
      %5839 = vmatprep.subr.mxu0 %v5806
      %5840 = vmatpush1.msra.mxu0 %v5805
      %5841 = vmatprep.subr.mxu0 %v5804
      %5842 = vmatpush1.msra.mxu0 %v5803
      %5843 = vmatprep.subr.mxu0 %v5802
      %5844 = vmatpush1.msra.mxu0 %v5801
      %5845 = vmatprep.subr.mxu0 %v5800
      %5846 = vmatpush1.msra.mxu0 %v5799
      %5847 = vmatprep.subr.mxu0 %v5798
      %5848 = vmatpush1.msra.mxu0 %v5797
      %5849 = vmatprep.subr.mxu0 %v5796
      %5850 = vmatpush1.msra.mxu0 %v5795
      %5851 = vmatprep.subr.mxu0 %v5794
      %5852 = vmatpush1.msra.mxu0 %v5793
      %5853 = vmatprep.subr.mxu0 %v5792
      %5854 = vmatpush1.msra.mxu0 %v5791
      %5855 = vmatprep.subr.mxu0 %v5790
      %5856 = vmatpush1.msra.mxu0 %v5789
      %5857 = vmatprep.subr.mxu0 %v5788
      %5858 = vmatpush1.msra.mxu0 %v5787
      %5859 = vmatprep.subr.mxu0 %v5786
      %5860 = vmatpush1.msra.mxu0 %v5785
      %5861 = vmatprep.subr.mxu0 %v5784
      %5862 = vmatpush1.msra.mxu0 %v5783
      %5863 = vmatprep.subr.mxu0 %v5782
      %5864 = vmatpush1.msra.mxu0 %v5781
      %5865 = vmatprep.subr.mxu0 %v5780
      %5866 = vmatpush1.msra.mxu0 %v5779
      %5867 = vmatprep.subr.mxu0 %v5778
      %5868 = vmatpush1.msra.mxu0 %v5777
      %5869 = vmatprep.subr.mxu0 %v5776
      %5870 = vmatpush1.msra.mxu0 %v5775
      %5871 = vmatprep.subr.mxu0 %v5838
      %5872 = vmatpush2.msra.mxu0 %v5837
      %5873 = vmatprep.subr.mxu0 %v5836
      %5874 = vmatpush2.msra.mxu0 %v5835
      %5875 = vmatprep.subr.mxu0 %v5834
      %5876 = vmatpush2.msra.mxu0 %v5833
      %5877 = vmatprep.subr.mxu0 %v5832
      %5878 = vmatpush2.msra.mxu0 %v5831
      %5879 = vmatprep.subr.mxu0 %v5830
      %5880 = vmatpush2.msra.mxu0 %v5829
      %5881 = vmatprep.subr.mxu0 %v5828
      %5882 = vmatpush2.msra.mxu0 %v5827
      %5883 = vmatprep.subr.mxu0 %v5826
      %5884 = vmatpush2.msra.mxu0 %v5825
      %5885 = vmatprep.subr.mxu0 %v5824
      %5886 = vmatpush2.msra.mxu0 %v5823
      %5887 = vmatprep.subr.mxu0 %v5822
      %5888 = vmatpush2.msra.mxu0 %v5821
      %5889 = vmatprep.subr.mxu0 %v5820
      %5890 = vmatpush2.msra.mxu0 %v5819
      %5891 = vmatprep.subr.mxu0 %v5818
      %5892 = vmatpush2.msra.mxu0 %v5817
      %5893 = vmatprep.subr.mxu0 %v5816
      %5894 = vmatpush2.msra.mxu0 %v5815
      %5895 = vmatprep.subr.mxu0 %v5814
      %5896 = vmatpush2.msra.mxu0 %v5813
      %5897 = vmatprep.subr.mxu0 %v5812
      %5898 = vmatpush2.msra.mxu0 %v5811
      %5899 = vmatprep.subr.mxu0 %v5810
      %5900 = vmatpush2.msra.mxu0 %v5809
      %5901 = vmatprep.subr.mxu0 %v5808
      %5902 = vmatpush2.msra.mxu0 %v5807
      %5903 = vmatprep.mubr.f32.mxu0 %v5774
      %5904 = vmatmul.mubr.f32.gmra.mxu0 %v5773
      %v5905 = vpop.f32.mrf.mxu0
      %v5906 = vadd.f32 0.0, %v5905
      %v5907 = vpop.f32.mrf.mxu0
      %v5908 = vadd.f32 0.0, %v5907
      %5909 = vdwg.mxu0
      %v5910 = vmul.f32 %v5906, %v5906
      %v5911 = vmul.f32 %v5908, %v5908
      %v5914 = vrot.slane %v5910, 7
      %v5915 = vrot.slane %v5911, 7
      %v5918 = vsub.f32 %v5906, %v5914
      %v5919 = vsub.f32 %v5908, %v5915
      %v5920 = vadd.f32 %v5918, 1e-05
      %v5921 = vadd.f32 %v5919, 1e-05
      %v5922 = vrsqrt.pop %v5920
      %v5923 = vrsqrt.pop %v5921
      %v5924 = vld [vmem:[#allocation2] sm:$0xff]
      %v5925 = vld [vmem:[#allocation2 + $0x8] sm:$0xff]
      %v5926 = vld [vmem:[#allocation2 + $0x10] sm:$0xff]
      %v5927 = vld [vmem:[#allocation2 + $0x18] sm:$0xff]
      %v5928 = vld [vmem:[#allocation2 + $0x20] sm:$0xff]
      %v5929 = vld [vmem:[#allocation2 + $0x28] sm:$0xff]
      %v5930 = vld [vmem:[#allocation2 + $0x30] sm:$0xff]
      %v5931 = vld [vmem:[#allocation2 + $0x38] sm:$0xff]
      %v5932 = vld [vmem:[#allocation2 + $0x40] sm:$0xff]
      %v5933 = vld [vmem:[#allocation2 + $0x48] sm:$0xff]
      %v5934 = vld [vmem:[#allocation2 + $0x50] sm:$0xff]
      %v5935 = vld [vmem:[#allocation2 + $0x58] sm:$0xff]
      %v5936 = vld [vmem:[#allocation2 + $0x60] sm:$0xff]
      %v5937 = vld [vmem:[#allocation2 + $0x68] sm:$0xff]
      %v5938 = vld [vmem:[#allocation2 + $0x70] sm:$0xff]
      %v5939 = vld [vmem:[#allocation2 + $0x78] sm:$0xff]
      %v5940 = vlaneseq
      %v5941 = vshrl.u32 %v5940, 7
      %v5942 = vsub.s32 0, %v5941
      %v5943 = vrot.slane %v5906, %v5942
      %v5944 = vlaneseq
      %v5945 = vshrl.u32 %v5944, 7
      %v5946 = vsub.s32 0, %v5945
      %v5947 = vrot.slane %v5908, %v5946
      %v5948 = vsub.f32 %v5924, %v5943
      %v5949 = vsub.f32 %v5925, %v5947
      %v5950 = vsub.f32 %v5926, %v5943
      %v5951 = vsub.f32 %v5927, %v5947
      %v5952 = vsub.f32 %v5928, %v5943
      %v5953 = vsub.f32 %v5929, %v5947
      %v5954 = vsub.f32 %v5930, %v5943
      %v5955 = vsub.f32 %v5931, %v5947
      %v5956 = vsub.f32 %v5932, %v5943
      %v5957 = vsub.f32 %v5933, %v5947
      %v5958 = vsub.f32 %v5934, %v5943
      %v5959 = vsub.f32 %v5935, %v5947
      %v5960 = vsub.f32 %v5936, %v5943
      %v5961 = vsub.f32 %v5937, %v5947
      %v5962 = vsub.f32 %v5938, %v5943
      %v5963 = vsub.f32 %v5939, %v5947
      %v5964 = vlaneseq
      %v5965 = vshrl.u32 %v5964, 7
      %v5966 = vsub.s32 1, %v5965
      %v5967 = vrot.slane %v5922, %v5966
      %v5968 = vlaneseq
      %v5969 = vshrl.u32 %v5968, 7
      %v5970 = vsub.s32 1, %v5969
      %v5971 = vrot.slane %v5923, %v5970
      %v5972 = vmul.f32 %v5948, %v5967
      %v5973 = vmul.f32 %v5949, %v5971
      %v5974 = vmul.f32 %v5950, %v5967
      %v5975 = vmul.f32 %v5951, %v5971
      %v5976 = vmul.f32 %v5952, %v5967
      %v5977 = vmul.f32 %v5953, %v5971
      %v5978 = vmul.f32 %v5954, %v5967
      %v5979 = vmul.f32 %v5955, %v5971
      %v5980 = vmul.f32 %v5956, %v5967
      %v5981 = vmul.f32 %v5957, %v5971
      %v5982 = vmul.f32 %v5958, %v5967
      %v5983 = vmul.f32 %v5959, %v5971
      %v5984 = vmul.f32 %v5960, %v5967
      %v5985 = vmul.f32 %v5961, %v5971
      %v5986 = vmul.f32 %v5962, %v5967
      %v5987 = vmul.f32 %v5963, %v5971
      %v5988 = vld [vmem:[%s3] sm:$0x3]
      %v5990 = vlaneseq
      %v5991 = vshrl.u32 %v5990, 7
      %v5992 = vsub.s32 0, %v5991
      %v5993 = vrot.slane %v5988, %v5992
      %v5994 = vlaneseq
      %v5995 = vshrl.u32 %v5994, 7
      %v5996 = vsub.s32 1, %v5995
      %v5997 = vrot.slane %v5988, %v5996
      %v6000 = vmul.f32 %v5972, %v5993
      %v6001 = vmul.f32 %v5973, %v5997
      %v6002 = vmul.f32 %v5974, %v5993
      %v6003 = vmul.f32 %v5975, %v5997
      %v6004 = vmul.f32 %v5976, %v5993
      %v6005 = vmul.f32 %v5977, %v5997
      %v6006 = vmul.f32 %v5978, %v5993
      %v6007 = vmul.f32 %v5979, %v5997
      %v6008 = vmul.f32 %v5980, %v5993
      %v6009 = vmul.f32 %v5981, %v5997
      %v6010 = vmul.f32 %v5982, %v5993
      %v6011 = vmul.f32 %v5983, %v5997
      %v6012 = vmul.f32 %v5984, %v5993
      %v6013 = vmul.f32 %v5985, %v5997
      %v6014 = vmul.f32 %v5986, %v5993
      %v6015 = vmul.f32 %v5987, %v5997
      %v6016 = vld [vmem:[%s4] sm:$0x3]
      %v6018 = vlaneseq
      %v6019 = vshrl.u32 %v6018, 7
      %v6020 = vsub.s32 0, %v6019
      %v6021 = vrot.slane %v6016, %v6020
      %v6022 = vlaneseq
      %v6023 = vshrl.u32 %v6022, 7
      %v6024 = vsub.s32 1, %v6023
      %v6025 = vrot.slane %v6016, %v6024
      %v6028 = vadd.f32 %v6000, %v6021
      %v6029 = vadd.f32 %v6001, %v6025
      %v6030 = vadd.f32 %v6002, %v6021
      %v6031 = vadd.f32 %v6003, %v6025
      %v6032 = vadd.f32 %v6004, %v6021
      %v6033 = vadd.f32 %v6005, %v6025
      %v6034 = vadd.f32 %v6006, %v6021
      %v6035 = vadd.f32 %v6007, %v6025
      %v6036 = vadd.f32 %v6008, %v6021
      %v6037 = vadd.f32 %v6009, %v6025
      %v6038 = vadd.f32 %v6010, %v6021
      %v6039 = vadd.f32 %v6011, %v6025
      %v6040 = vadd.f32 %v6012, %v6021
      %v6041 = vadd.f32 %v6013, %v6025
      %v6042 = vadd.f32 %v6014, %v6021
      %v6043 = vadd.f32 %v6015, %v6025
      %6044 = vst [vmem:[%s251] sm:$0xff] %v6028
      %6045 = vst [vmem:[%s251 + $0x8] sm:$0xff] %v6029
      %6046 = vst [vmem:[%s251 + $0x10] sm:$0xff] %v6030
      %6047 = vst [vmem:[%s251 + $0x18] sm:$0xff] %v6031
      %6048 = vst [vmem:[%s251 + $0x20] sm:$0xff] %v6032
      %6049 = vst [vmem:[%s251 + $0x28] sm:$0xff] %v6033
      %6050 = vst [vmem:[%s251 + $0x30] sm:$0xff] %v6034
      %6051 = vst [vmem:[%s251 + $0x38] sm:$0xff] %v6035
      %6052 = vst [vmem:[%s251 + $0x40] sm:$0xff] %v6036
      %6053 = vst [vmem:[%s251 + $0x48] sm:$0xff] %v6037
      %6054 = vst [vmem:[%s251 + $0x50] sm:$0xff] %v6038
      %6055 = vst [vmem:[%s251 + $0x58] sm:$0xff] %v6039
      %6056 = vst [vmem:[%s251 + $0x60] sm:$0xff] %v6040
      %6057 = vst [vmem:[%s251 + $0x68] sm:$0xff] %v6041
      %6058 = vst [vmem:[%s251 + $0x70] sm:$0xff] %v6042
      %6059 = vst [vmem:[%s251 + $0x78] sm:$0xff] %v6043
      %p6060 = scmp.lt.s32.totalorder %s17, 3
      %s6061 = scalar_select %p6060, %s17, 3
      %s6062 = smul.addr %s6061, 16
      %s6063 = smul.addr %s6062, 8
      %s6064 = scalar_lea.vmem %s6, %s6063
      // Predicated region
      $region45: #{upblock_forward.4} parent=43 // pred_check
        %p6065 = pneg %p166
      $region46: #{upblock_forward.4} parent=43 // pred_check_branch
        %6067 = sbr.rel (%p6065) target = $region48
      $region47: #{upblock_forward.4} parent=43 // pred_region
        _
      $region48: #{upblock_forward.4} parent=43 // pred_fallthru
        _
    $region44: #{upblock_forward.4} parent=5 // pred_fallthru
      _
    %p6068 = scmp.le.s32.totalorder 2, %s12
    // Predicated region
    $region49: #{upblock_forward.4} parent=5 // pred_check
      %p6069 = pneg %p6068
    $region50: #{upblock_forward.4} parent=5 // pred_check_branch
      %6071 = sbr.rel (%p6069) target = $region52
    $region51: #{upblock_forward.4} parent=5 // pred_region
      %s6072 = ssub.s32 %s12, 2
      // Predicated region
      $region53: #{upblock_forward.4} parent=51 // pred_check
        %p6073 = pneg %p172
      $region54: #{upblock_forward.4} parent=51 // pred_check_branch
        %6075 = sbr.rel (%p6073) target = $region56
      $region55: #{upblock_forward.4} parent=51 // pred_region
        %p6076 = scmp.lt.s32.totalorder %s18, 3
        %s6077 = scalar_select %p6076, %s18, 3
        %s6078 = smul.addr %s6077, 16
        %s6079 = smul.addr %s6078, 8
        %s6080 = scalar_lea.vmem %s6, %s6079
      $region56: #{upblock_forward.4} parent=51 // pred_fallthru
        _
    $region52: #{upblock_forward.4} parent=5 // pred_fallthru
      _
  $region6: #{upblock_forward.4} parent=0 // loop_footer
    %s16 = sadd.s32 1, %s12
  $region7: #{upblock_forward.4} parent=0 // loop_footer_branch
    %11 = sbr.rel target = $region3
  $region8: #{upblock_forward.4} parent=0 // loop_exit
    _

</llo_original>
